<compile_context>
chip_gen: v7x
topology: tpu7x:2x2x1
jax: 0.10.0
libtpu: 0.0.40
codegen_flags: <defaults>
</compile_context>

<pallas_src>
import functools

import jax
import jax.numpy as jnp
from jax.experimental import pallas as pl
from jax.experimental.pallas import tpu as pltpu


_VMEM_LIMIT = 32 * 1024 * 1024  # explicit scoped-VMEM budget, safe on v5e/v6e/v7x


def _round_up(v, m):
    return (v + m - 1) // m * m


# ----------------------------------------------------------------------------
# Pallas kernels
# ----------------------------------------------------------------------------
def _act(x, act):
    if act == "relu":
        return jnp.maximum(x, 0.0)
    if act == "leaky":
        return jnp.where(x >= 0.0, x, 0.2 * x)
    if act == "tanh":
        return jnp.tanh(x)
    return x


def _matmul_bias_act_kernel(a_ref, w_ref, b_ref, o_ref, acc_ref, *, act):
    """grid = (M tiles, N tiles, K tiles); K (last axis) is the reduction."""
    k = pl.program_id(2)

    @pl.when(k == 0)
    def _():
        acc_ref[...] = jnp.zeros_like(acc_ref)

    acc_ref[...] += jnp.dot(a_ref[...], w_ref[...],
                            preferred_element_type=jnp.float32)

    @pl.when(k == pl.num_programs(2) - 1)
    def _():
        y = acc_ref[...] + b_ref[...]               # f32 epilogue (v5e-safe)
        o_ref[...] = _act(y, act).astype(o_ref.dtype)


def matmul_bias_act(a, w, b, act="none", out_dtype=jnp.bfloat16):
    """a: (M, K), w: (K, Cout), b: (Cout,) -> (M, Cout); bias+activation fused.

    bf16 MXU inputs, f32 accumulator scratch, lane-aligned M/K/Cout tiles that
    double-buffer comfortably inside scoped VMEM on v5e/v6e/v7x.
    """
    M, K = a.shape
    _, Cout = w.shape

    tm = 256 if M >= 256 else _round_up(M, 16)
    kp = _round_up(K, 128)
    tk = kp if kp <= 512 else 512
    kp = _round_up(K, tk)
    np_ = _round_up(Cout, 128)                      # lane-dense output (Cout=3 too)
    tn = 256 if np_ % 256 == 0 else 128
    mp = _round_up(M, tm)

    a = a.astype(jnp.bfloat16)
    w = w.astype(jnp.bfloat16)
    if (mp, kp) != (M, K):
        a = jnp.pad(a, ((0, mp - M), (0, kp - K)))
    if (kp, np_) != (K, Cout):
        w = jnp.pad(w, ((0, kp - K), (0, np_ - Cout)))
    b2 = jnp.pad(b.astype(jnp.float32), (0, np_ - Cout)).reshape(1, np_)

    out = pl.pallas_call(
        functools.partial(_matmul_bias_act_kernel, act=act),
        out_shape=jax.ShapeDtypeStruct((mp, np_), out_dtype),
        grid=(mp // tm, np_ // tn, kp // tk),
        in_specs=[
            pl.BlockSpec((tm, tk), lambda i, j, k: (i, k)),
            pl.BlockSpec((tk, tn), lambda i, j, k: (k, j)),
            pl.BlockSpec((1, tn), lambda i, j, k: (0, j)),
        ],
        out_specs=pl.BlockSpec((tm, tn), lambda i, j, k: (i, j)),
        scratch_shapes=[pltpu.VMEM((tm, tn), jnp.float32)],
        compiler_params=pltpu.CompilerParams(
            dimension_semantics=("parallel", "parallel", "arbitrary"),
            vmem_limit_bytes=_VMEM_LIMIT),
    )(a, w, b2)
    return out[:M, :Cout]


def _instnorm_act_kernel(x_ref, o_ref, *, act, eps):
    x = x_ref[...].astype(jnp.float32)              # (1, H*W, Ct)
    mean = jnp.mean(x, axis=1, keepdims=True)
    xc = x - mean
    var = jnp.mean(xc * xc, axis=1, keepdims=True)  # biased var (PyTorch InstanceNorm)
    y = xc * jax.lax.rsqrt(var + eps)
    o_ref[...] = _act(y, act).astype(o_ref.dtype)


def instnorm_act(x, act="none", eps=1e-5):
    """InstanceNorm2d (affine=False) + fused activation; NHWC in/out (bf16)."""
    N, H, W, C = x.shape
    hw = H * W
    x3 = x.reshape(N, hw, C)
    ct = 128 if C % 128 == 0 else C                 # lane tile (full C if < 128)
    y3 = pl.pallas_call(
        functools.partial(_instnorm_act_kernel, act=act, eps=eps),
        out_shape=jax.ShapeDtypeStruct((N, hw, C), x.dtype),
        grid=(N, C // ct),
        in_specs=[pl.BlockSpec((1, hw, ct), lambda n, cb: (n, 0, cb))],
        out_specs=pl.BlockSpec((1, hw, ct), lambda n, cb: (n, 0, cb)),
        compiler_params=pltpu.CompilerParams(
            dimension_semantics=("parallel", "parallel"),
            vmem_limit_bytes=_VMEM_LIMIT),
    )(x3)
    return y3.reshape(N, H, W, C)


# ----------------------------------------------------------------------------
# Conv lowering (glue: NHWC patch extraction / padding; compute: Pallas matmul)
# ----------------------------------------------------------------------------
def _im2col_nhwc(xp, kh, kw, stride):
    """xp: padded NHWC -> (N*Ho*Wo, kh*kw*C); patch order = (i, j, c), c fastest."""
    N, Hp, Wp, C = xp.shape
    ho = (Hp - kh) // stride + 1
    wo = (Wp - kw) // stride + 1
    cols = []
    for i in range(kh):
        for j in range(kw):
            cols.append(xp[:, i:i + stride * ho:stride, j:j + stride * wo:stride, :])
    a = jnp.concatenate(cols, axis=-1)              # (N, Ho, Wo, kh*kw*C)
    return a.reshape(N * ho * wo, kh * kw * C), ho, wo


def conv2d_reflect(x, w, b, act="none"):
    """PyTorch Conv2d(k=4, s=2, p=1, padding_mode='reflect'); x NHWC, w (Cout,Cin,4,4)."""
    N = x.shape[0]
    Cout, Cin, kh, kw = w.shape
    xp = jnp.pad(x, ((0, 0), (1, 1), (1, 1), (0, 0)), mode="reflect")
    a, ho, wo = _im2col_nhwc(xp, kh, kw, 2)
    w2 = w.transpose(2, 3, 1, 0).reshape(kh * kw * Cin, Cout)
    y = matmul_bias_act(a, w2, b, act=act)
    return y.reshape(N, ho, wo, Cout)


def conv_transpose2d(x, w, b, act="none"):
    """PyTorch ConvTranspose2d(k=4, s=2, p=1); x NHWC, w (Cin, Cout, 4, 4).

    Output-parity decomposition (no zero dilation):
      out[2q+a, 2r+pb] = sum_{dh,dw} xpad_{a,pb}[q+dh, r+dw] * w[:, :, K_a[dh], K_pb[dw]]
    with K_0 = [3, 1], K_1 = [2, 0]; pad 1 at top/left for parity 0, bottom/right for 1.
    """
    N, H, W, Cin = x.shape
    Cout = w.shape[1]
    parity = []
    for pa in range(2):
        kh_idx = [3, 1] if pa == 0 else [2, 0]
        ph = (1, 0) if pa == 0 else (0, 1)
        row = []
        for pb in range(2):
            kw_idx = [3, 1] if pb == 0 else [2, 0]
            pw = (1, 0) if pb == 0 else (0, 1)
            xp = jnp.pad(x, ((0, 0), ph, pw, (0, 0)))
            a, _, _ = _im2col_nhwc(xp, 2, 2, 1)                 # (N*H*W, 4*Cin)
            wsub = w[:, :, kh_idx, :][:, :, :, kw_idx]          # (Cin, Cout, 2, 2)
            w2 = wsub.transpose(2, 3, 0, 1).reshape(4 * Cin, Cout)
            y = matmul_bias_act(a, w2, b, act=act)
            row.append(y.reshape(N, H, W, Cout))
        parity.append(jnp.stack(row, axis=3))                   # (N, H, W, 2, Cout)
    y = jnp.stack(parity, axis=2)                                # (N, H, 2, W, 2, Cout)
    return y.reshape(N, 2 * H, 2 * W, Cout)


# ----------------------------------------------------------------------------
# UnetGenerator structure (deterministic synthetic parameters)
# ----------------------------------------------------------------------------
def _conv_params(key, cin, cout, k=4, scale=0.05):
    kw_, kb_ = jax.random.split(key)
    w = scale * jax.random.normal(kw_, (cout, cin, k, k), jnp.float32)
    b = scale * jax.random.normal(kb_, (cout,), jnp.float32)
    return w, b


def _convT_params(key, cin, cout, k=4, scale=0.05):
    kw_, kb_ = jax.random.split(key)
    w = scale * jax.random.normal(kw_, (cin, cout, k, k), jnp.float32)
    b = scale * jax.random.normal(kb_, (cout,), jnp.float32)
    return w, b


def build_unet_block(key, in_depth, inner_depth, out_depth, sub=None, layer_pos="innermost"):
    k1, k2 = jax.random.split(key)
    dw, db = _conv_params(k1, in_depth, inner_depth)
    up_in = inner_depth if layer_pos == "innermost" else inner_depth * 2
    uw, ub = _convT_params(k2, up_in, out_depth)
    return {"pos": layer_pos, "down_w": dw, "down_b": db, "up_w": uw, "up_b": ub, "sub": sub}


def build_unet_generator(key, in_depth=3, out_depths=3, n_feature=64, n_down=8):
    nf = n_feature
    keys = iter(jax.random.split(key, n_down + 1))
    blk = build_unet_block(next(keys), nf * 8, nf * 8, nf * 8, None, "innermost")
    for _ in range(n_down - 5):
        blk = build_unet_block(next(keys), nf * 8, nf * 8, nf * 8, blk, "middle")
    blk = build_unet_block(next(keys), nf * 4, nf * 8, nf * 4, blk, "middle")
    blk = build_unet_block(next(keys), nf * 2, nf * 4, nf * 2, blk, "middle")
    blk = build_unet_block(next(keys), nf, nf * 2, nf, blk, "middle")
    blk = build_unet_block(next(keys), in_depth, nf, out_depths, blk, "outermost")
    return blk


def apply_unet_block(block, x):
    """x is NHWC; skip concat is along the (lane-contiguous) channel axis."""
    pos = block["pos"]
    if pos == "innermost":
        # down_conv -> ReLU -> up_conv -> InstanceNorm -> ReLU ; concat skip
        h = conv2d_reflect(x, block["down_w"], block["down_b"], act="relu")
        h = conv_transpose2d(h, block["up_w"], block["up_b"], act="none")
        h = instnorm_act(h, act="relu")
        return jnp.concatenate([x, h], axis=-1)
    if pos == "middle":
        # down_conv -> InstanceNorm -> LeakyReLU(0.2) -> sub -> up_conv -> InstanceNorm -> ReLU
        # (use_dropout=False everywhere in UnetGenerator, so Dropout is Identity)
        h = conv2d_reflect(x, block["down_w"], block["down_b"], act="none")
        h = instnorm_act(h, act="leaky")
        h = apply_unet_block(block["sub"], h)
        h = conv_transpose2d(h, block["up_w"], block["up_b"], act="none")
        h = instnorm_act(h, act="relu")
        return jnp.concatenate([x, h], axis=-1)
    # outermost: down_conv -> LeakyReLU(0.2) -> sub -> up_conv -> Tanh (no skip concat)
    h = conv2d_reflect(x, block["down_w"], block["down_b"], act="leaky")
    h = apply_unet_block(block["sub"], h)
    h = conv_transpose2d(h, block["up_w"], block["up_b"], act="tanh")
    return h


def unet_forward(params, x_nchw):
    x = jnp.transpose(x_nchw, (0, 2, 3, 1))          # single NCHW->NHWC at the boundary
    y = apply_unet_block(params, x)
    return jnp.transpose(y, (0, 3, 1, 2)).astype(jnp.float32)


if __name__ == "__main__":
    key = jax.random.PRNGKey(0)
    kp, kx = jax.random.split(key)
    # Small config consistent with the module: nf=8, n_down=5 (the nf*8 "middle"
    # loop runs n_down-5 times), input 32x32 so the innermost block sees 2x2 -> 1x1.
    gen = build_unet_generator(kp, in_depth=3, out_depths=3, n_feature=8, n_down=5)
    x = jax.random.normal(kx, (2, 3, 32, 32), jnp.float32)

    fwd = jax.jit(lambda inp: unet_forward(gen, inp))
    y = jax.block_until_ready(fwd(x))

    assert y.shape == (2, 3, 32, 32), y.shape
    assert bool(jnp.all(jnp.isfinite(y)))
    print("KERNEL_OK")
</pallas_src>

<mosaic_0001>
module attributes {stable_mosaic.version = 11 : i64} {
  func.func @_matmul_bias_act_kernel(%arg0: i32, %arg1: i32, %arg2: i32, %arg3: memref<256x128xbf16, #tpu.memory_space<vmem>>, %arg4: memref<128x128xbf16, #tpu.memory_space<vmem>>, %arg5: memref<1x128xf32, #tpu.memory_space<vmem>>, %arg6: memref<256x128xbf16, #tpu.memory_space<vmem>>, %arg7: memref<256x128xf32, #tpu.memory_space<vmem>>) attributes {dimension_semantics = [#tpu.dimension_semantics<parallel>, #tpu.dimension_semantics<parallel>, #tpu.dimension_semantics<arbitrary>], iteration_bounds = array<i64: 2, 1, 1>, scalar_prefetch = 0 : i64, scratch_operands = 1 : i64, tpu.core_type = #tpu.core_type<tc>, window_params = [{transform_indices = @transform_0, window_bounds = array<i64: 256, 128>}, {transform_indices = @transform_1, window_bounds = array<i64: 128, 128>}, {transform_indices = @transform_2, window_bounds = array<i64: 1, 128>}, {transform_indices = @transform_3, window_bounds = array<i64: 256, 128>}]} {
    %c0_i32 = arith.constant 0 : i32
    %0 = arith.cmpi eq, %arg2, %c0_i32 : i32
    %1 = arith.extui %0 : i1 to i32
    %c0_i32_0 = arith.constant 0 : i32
    %2 = arith.cmpi ne, %1, %c0_i32_0 : i32
    scf.if %2 {
      %cst_10 = arith.constant 0.000000e+00 : f32
      %12 = vector.broadcast %cst_10 : f32 to vector<256x128xf32>
      %c0_11 = arith.constant 0 : index
      %c0_12 = arith.constant 0 : index
      %13 = vector.load %arg7[%c0_11, %c0_12] : memref<256x128xf32, #tpu.memory_space<vmem>>, vector<256x128xf32>
      tpu.vector_store %arg7[%c0_11, %c0_12], %12 {strides = array<i32>} : memref<256x128xf32, #tpu.memory_space<vmem>>, vector<256x128xf32>,
    } else {
    }
    %c0 = arith.constant 0 : index
    %c0_1 = arith.constant 0 : index
    %3 = vector.load %arg7[%c0, %c0_1] : memref<256x128xf32, #tpu.memory_space<vmem>>, vector<256x128xf32>
    %c0_2 = arith.constant 0 : index
    %c0_3 = arith.constant 0 : index
    %4 = vector.load %arg3[%c0_2, %c0_3] : memref<256x128xbf16, #tpu.memory_space<vmem>>, vector<256x128xbf16>
    %c0_4 = arith.constant 0 : index
    %c0_5 = arith.constant 0 : index
    %5 = vector.load %arg4[%c0_4, %c0_5] : memref<128x128xbf16, #tpu.memory_space<vmem>>, vector<128x128xbf16>
    %cst = arith.constant dense<0.000000e+00> : vector<256x128xf32>
    %6 = tpu.matmul %4, %5, %cst {dimension_numbers = #tpu.dot_dimension_numbers<[1], [0], [0], [1], [0, 0, 1, 1], [], []>} : vector<256x128xbf16>, vector<128x128xbf16>, vector<256x128xf32> -> vector<256x128xf32>
    %7 = arith.addf %3, %6 : vector<256x128xf32>
    %c0_6 = arith.constant 0 : index
    %c0_7 = arith.constant 0 : index
    %8 = vector.load %arg7[%c0_6, %c0_7] : memref<256x128xf32, #tpu.memory_space<vmem>>, vector<256x128xf32>
    tpu.vector_store %arg7[%c0_6, %c0_7], %7 {strides = array<i32>} : memref<256x128xf32, #tpu.memory_space<vmem>>, vector<256x128xf32>,
    %c0_i32_8 = arith.constant 0 : i32
    %9 = arith.cmpi eq, %arg2, %c0_i32_8 : i32
    %10 = arith.extui %9 : i1 to i32
    %c0_i32_9 = arith.constant 0 : i32
    %11 = arith.cmpi ne, %10, %c0_i32_9 : i32
    scf.if %11 {
      %c0_10 = arith.constant 0 : index
      %c0_11 = arith.constant 0 : index
      %12 = vector.load %arg7[%c0_10, %c0_11] : memref<256x128xf32, #tpu.memory_space<vmem>>, vector<256x128xf32>
      %c0_12 = arith.constant 0 : index
      %c0_13 = arith.constant 0 : index
      %13 = vector.load %arg5[%c0_12, %c0_13] : memref<1x128xf32, #tpu.memory_space<vmem>>, vector<1x128xf32>
      %14 = vector.broadcast %13 : vector<1x128xf32> to vector<256x128xf32>
      %15 = arith.addf %12, %14 : vector<256x128xf32>
      %cst_14 = arith.constant 0.000000e+00 : f32
      %16 = vector.broadcast %cst_14 : f32 to vector<256x128xf32>
      %17 = arith.cmpf oge, %15, %16 : vector<256x128xf32>
      %cst_15 = arith.constant 2.000000e-01 : f32
      %18 = vector.broadcast %cst_15 : f32 to vector<256x128xf32>
      %19 = arith.mulf %18, %15 : vector<256x128xf32>
      %20 = arith.select %17, %15, %19 : vector<256x128xi1>, vector<256x128xf32>
      %21 = arith.truncf %20 : vector<256x128xf32> to vector<256x128xbf16>
      %c0_16 = arith.constant 0 : index
      %c0_17 = arith.constant 0 : index
      %22 = vector.load %arg6[%c0_16, %c0_17] : memref<256x128xbf16, #tpu.memory_space<vmem>>, vector<256x128xbf16>
      tpu.vector_store %arg6[%c0_16, %c0_17], %21 {strides = array<i32>} : memref<256x128xbf16, #tpu.memory_space<vmem>>, vector<256x128xbf16>,
    } else {
    }
    return
  }
  func.func @transform_0(%arg0: i32, %arg1: i32, %arg2: i32) -> (i32, i32) {
    %c0_i32 = arith.constant 0 : i32
    return %arg0, %arg2 : i32, i32
  }
  func.func @transform_1(%arg0: i32, %arg1: i32, %arg2: i32) -> (i32, i32) {
    %c0_i32 = arith.constant 0 : i32
    return %arg2, %arg1 : i32, i32
  }
  func.func @transform_2(%arg0: i32, %arg1: i32, %arg2: i32) -> (i32, i32) {
    %c0_i32 = arith.constant 0 : i32
    %c0_i32_0 = arith.constant 0 : i32
    return %c0_i32, %arg1 : i32, i32
  }
  func.func @transform_3(%arg0: i32, %arg1: i32, %arg2: i32) -> (i32, i32) {
    %c0_i32 = arith.constant 0 : i32
    return %arg0, %arg1 : i32, i32
  }
}

module attributes {stable_mosaic.version = 11 : i64} {
  func.func @_matmul_bias_act_kernel(%arg0: i32, %arg1: i32, %arg2: i32, %arg3: memref<128x128xbf16, #tpu.memory_space<vmem>>, %arg4: memref<128x128xbf16, #tpu.memory_space<vmem>>, %arg5: memref<1x128xf32, #tpu.memory_space<vmem>>, %arg6: memref<128x128xbf16, #tpu.memory_space<vmem>>, %arg7: memref<128x128xf32, #tpu.memory_space<vmem>>) attributes {dimension_semantics = [#tpu.dimension_semantics<parallel>, #tpu.dimension_semantics<parallel>, #tpu.dimension_semantics<arbitrary>], iteration_bounds = array<i64: 1, 1, 1>, scalar_prefetch = 0 : i64, scratch_operands = 1 : i64, tpu.core_type = #tpu.core_type<tc>, window_params = [{transform_indices = @transform_0, window_bounds = array<i64: 128, 128>}, {transform_indices = @transform_1, window_bounds = array<i64: 128, 128>}, {transform_indices = @transform_2, window_bounds = array<i64: 1, 128>}, {transform_indices = @transform_3, window_bounds = array<i64: 128, 128>}]} {
    %c0_i32 = arith.constant 0 : i32
    %0 = arith.cmpi eq, %arg2, %c0_i32 : i32
    %1 = arith.extui %0 : i1 to i32
    %c0_i32_0 = arith.constant 0 : i32
    %2 = arith.cmpi ne, %1, %c0_i32_0 : i32
    scf.if %2 {
      %cst_10 = arith.constant 0.000000e+00 : f32
      %12 = vector.broadcast %cst_10 : f32 to vector<128x128xf32>
      %c0_11 = arith.constant 0 : index
      %c0_12 = arith.constant 0 : index
      %13 = vector.load %arg7[%c0_11, %c0_12] : memref<128x128xf32, #tpu.memory_space<vmem>>, vector<128x128xf32>
      tpu.vector_store %arg7[%c0_11, %c0_12], %12 {strides = array<i32>} : memref<128x128xf32, #tpu.memory_space<vmem>>, vector<128x128xf32>,
    } else {
    }
    %c0 = arith.constant 0 : index
    %c0_1 = arith.constant 0 : index
    %3 = vector.load %arg7[%c0, %c0_1] : memref<128x128xf32, #tpu.memory_space<vmem>>, vector<128x128xf32>
    %c0_2 = arith.constant 0 : index
    %c0_3 = arith.constant 0 : index
    %4 = vector.load %arg3[%c0_2, %c0_3] : memref<128x128xbf16, #tpu.memory_space<vmem>>, vector<128x128xbf16>
    %c0_4 = arith.constant 0 : index
    %c0_5 = arith.constant 0 : index
    %5 = vector.load %arg4[%c0_4, %c0_5] : memref<128x128xbf16, #tpu.memory_space<vmem>>, vector<128x128xbf16>
    %cst = arith.constant dense<0.000000e+00> : vector<128x128xf32>
    %6 = tpu.matmul %4, %5, %cst {dimension_numbers = #tpu.dot_dimension_numbers<[1], [0], [0], [1], [0, 0, 1, 1], [], []>} : vector<128x128xbf16>, vector<128x128xbf16>, vector<128x128xf32> -> vector<128x128xf32>
    %7 = arith.addf %3, %6 : vector<128x128xf32>
    %c0_6 = arith.constant 0 : index
    %c0_7 = arith.constant 0 : index
    %8 = vector.load %arg7[%c0_6, %c0_7] : memref<128x128xf32, #tpu.memory_space<vmem>>, vector<128x128xf32>
    tpu.vector_store %arg7[%c0_6, %c0_7], %7 {strides = array<i32>} : memref<128x128xf32, #tpu.memory_space<vmem>>, vector<128x128xf32>,
    %c0_i32_8 = arith.constant 0 : i32
    %9 = arith.cmpi eq, %arg2, %c0_i32_8 : i32
    %10 = arith.extui %9 : i1 to i32
    %c0_i32_9 = arith.constant 0 : i32
    %11 = arith.cmpi ne, %10, %c0_i32_9 : i32
    scf.if %11 {
      %c0_10 = arith.constant 0 : index
      %c0_11 = arith.constant 0 : index
      %12 = vector.load %arg7[%c0_10, %c0_11] : memref<128x128xf32, #tpu.memory_space<vmem>>, vector<128x128xf32>
      %c0_12 = arith.constant 0 : index
      %c0_13 = arith.constant 0 : index
      %13 = vector.load %arg5[%c0_12, %c0_13] : memref<1x128xf32, #tpu.memory_space<vmem>>, vector<1x128xf32>
      %14 = vector.broadcast %13 : vector<1x128xf32> to vector<128x128xf32>
      %15 = arith.addf %12, %14 : vector<128x128xf32>
      %16 = arith.truncf %15 : vector<128x128xf32> to vector<128x128xbf16>
      %c0_14 = arith.constant 0 : index
      %c0_15 = arith.constant 0 : index
      %17 = vector.load %arg6[%c0_14, %c0_15] : memref<128x128xbf16, #tpu.memory_space<vmem>>, vector<128x128xbf16>
      tpu.vector_store %arg6[%c0_14, %c0_15], %16 {strides = array<i32>} : memref<128x128xbf16, #tpu.memory_space<vmem>>, vector<128x128xbf16>,
    } else {
    }
    return
  }
  func.func @transform_0(%arg0: i32, %arg1: i32, %arg2: i32) -> (i32, i32) {
    %c0_i32 = arith.constant 0 : i32
    return %arg0, %arg2 : i32, i32
  }
  func.func @transform_1(%arg0: i32, %arg1: i32, %arg2: i32) -> (i32, i32) {
    %c0_i32 = arith.constant 0 : i32
    return %arg2, %arg1 : i32, i32
  }
  func.func @transform_2(%arg0: i32, %arg1: i32, %arg2: i32) -> (i32, i32) {
    %c0_i32 = arith.constant 0 : i32
    %c0_i32_0 = arith.constant 0 : i32
    return %c0_i32, %arg1 : i32, i32
  }
  func.func @transform_3(%arg0: i32, %arg1: i32, %arg2: i32) -> (i32, i32) {
    %c0_i32 = arith.constant 0 : i32
    return %arg0, %arg1 : i32, i32
  }
}

module attributes {stable_mosaic.version = 11 : i64} {
  func.func @_instnorm_act_kernel(%arg0: i32, %arg1: i32, %arg2: memref<1x64x16xbf16, #tpu.memory_space<vmem>>, %arg3: memref<1x64x16xbf16, #tpu.memory_space<vmem>>) attributes {dimension_semantics = [#tpu.dimension_semantics<parallel>, #tpu.dimension_semantics<parallel>], iteration_bounds = array<i64: 2, 1>, scalar_prefetch = 0 : i64, scratch_operands = 0 : i64, tpu.core_type = #tpu.core_type<tc>, window_params = [{transform_indices = @transform_0, window_bounds = array<i64: 1, 64, 16>}, {transform_indices = @transform_1, window_bounds = array<i64: 1, 64, 16>}]} {
    %c0 = arith.constant 0 : index
    %c0_0 = arith.constant 0 : index
    %c0_1 = arith.constant 0 : index
    %0 = vector.load %arg2[%c0, %c0_0, %c0_1] : memref<1x64x16xbf16, #tpu.memory_space<vmem>>, vector<1x64x16xbf16>
    %1 = arith.extf %0 : vector<1x64x16xbf16> to vector<1x64x16xf32>
    %cst = arith.constant dense<0.000000e+00> : vector<1x16xf32>
    %2 = vector.multi_reduction <add>, %1, %cst [1] : vector<1x64x16xf32> to vector<1x16xf32>
    %3 = vector.shape_cast %2 : vector<1x16xf32> to vector<1x1x16xf32>
    %cst_2 = arith.constant 6.400000e+01 : f32
    %4 = vector.broadcast %cst_2 : f32 to vector<1x1x16xf32>
    %5 = arith.divf %3, %4 : vector<1x1x16xf32>
    %6 = vector.broadcast %5 : vector<1x1x16xf32> to vector<1x64x16xf32>
    %7 = arith.subf %1, %6 : vector<1x64x16xf32>
    %8 = arith.mulf %7, %7 : vector<1x64x16xf32>
    %cst_3 = arith.constant dense<0.000000e+00> : vector<1x16xf32>
    %9 = vector.multi_reduction <add>, %8, %cst_3 [1] : vector<1x64x16xf32> to vector<1x16xf32>
    %10 = vector.shape_cast %9 : vector<1x16xf32> to vector<1x1x16xf32>
    %cst_4 = arith.constant 6.400000e+01 : f32
    %11 = vector.broadcast %cst_4 : f32 to vector<1x1x16xf32>
    %12 = arith.divf %10, %11 : vector<1x1x16xf32>
    %cst_5 = arith.constant 9.99999974E-6 : f32
    %13 = vector.broadcast %cst_5 : f32 to vector<1x1x16xf32>
    %14 = arith.addf %12, %13 : vector<1x1x16xf32>
    %15 = math.rsqrt %14 : vector<1x1x16xf32>
    %16 = vector.broadcast %15 : vector<1x1x16xf32> to vector<1x64x16xf32>
    %17 = arith.mulf %7, %16 : vector<1x64x16xf32>
    %cst_6 = arith.constant 0.000000e+00 : f32
    %18 = vector.broadcast %cst_6 : f32 to vector<1x64x16xf32>
    %19 = arith.cmpf oge, %17, %18 : vector<1x64x16xf32>
    %cst_7 = arith.constant 2.000000e-01 : f32
    %20 = vector.broadcast %cst_7 : f32 to vector<1x64x16xf32>
    %21 = arith.mulf %20, %17 : vector<1x64x16xf32>
    %22 = arith.select %19, %17, %21 : vector<1x64x16xi1>, vector<1x64x16xf32>
    %23 = arith.truncf %22 : vector<1x64x16xf32> to vector<1x64x16xbf16>
    %c0_8 = arith.constant 0 : index
    %c0_9 = arith.constant 0 : index
    %c0_10 = arith.constant 0 : index
    %24 = vector.load %arg3[%c0_8, %c0_9, %c0_10] : memref<1x64x16xbf16, #tpu.memory_space<vmem>>, vector<1x64x16xbf16>
    tpu.vector_store %arg3[%c0_8, %c0_9, %c0_10], %23 {strides = array<i32>} : memref<1x64x16xbf16, #tpu.memory_space<vmem>>, vector<1x64x16xbf16>,
    return
  }
  func.func @transform_0(%arg0: i32, %arg1: i32) -> (i32, i32, i32) {
    %c0_i32 = arith.constant 0 : i32
    %c0_i32_0 = arith.constant 0 : i32
    return %arg0, %c0_i32, %arg1 : i32, i32, i32
  }
  func.func @transform_1(%arg0: i32, %arg1: i32) -> (i32, i32, i32) {
    %c0_i32 = arith.constant 0 : i32
    %c0_i32_0 = arith.constant 0 : i32
    return %arg0, %c0_i32, %arg1 : i32, i32, i32
  }
}

module attributes {stable_mosaic.version = 11 : i64} {
  func.func @_instnorm_act_kernel(%arg0: i32, %arg1: i32, %arg2: memref<1x16x32xbf16, #tpu.memory_space<vmem>>, %arg3: memref<1x16x32xbf16, #tpu.memory_space<vmem>>) attributes {dimension_semantics = [#tpu.dimension_semantics<parallel>, #tpu.dimension_semantics<parallel>], iteration_bounds = array<i64: 2, 1>, scalar_prefetch = 0 : i64, scratch_operands = 0 : i64, tpu.core_type = #tpu.core_type<tc>, window_params = [{transform_indices = @transform_0, window_bounds = array<i64: 1, 16, 32>}, {transform_indices = @transform_1, window_bounds = array<i64: 1, 16, 32>}]} {
    %c0 = arith.constant 0 : index
    %c0_0 = arith.constant 0 : index
    %c0_1 = arith.constant 0 : index
    %0 = vector.load %arg2[%c0, %c0_0, %c0_1] : memref<1x16x32xbf16, #tpu.memory_space<vmem>>, vector<1x16x32xbf16>
    %1 = arith.extf %0 : vector<1x16x32xbf16> to vector<1x16x32xf32>
    %cst = arith.constant dense<0.000000e+00> : vector<1x32xf32>
    %2 = vector.multi_reduction <add>, %1, %cst [1] : vector<1x16x32xf32> to vector<1x32xf32>
    %3 = vector.shape_cast %2 : vector<1x32xf32> to vector<1x1x32xf32>
    %cst_2 = arith.constant 1.600000e+01 : f32
    %4 = vector.broadcast %cst_2 : f32 to vector<1x1x32xf32>
    %5 = arith.divf %3, %4 : vector<1x1x32xf32>
    %6 = vector.broadcast %5 : vector<1x1x32xf32> to vector<1x16x32xf32>
    %7 = arith.subf %1, %6 : vector<1x16x32xf32>
    %8 = arith.mulf %7, %7 : vector<1x16x32xf32>
    %cst_3 = arith.constant dense<0.000000e+00> : vector<1x32xf32>
    %9 = vector.multi_reduction <add>, %8, %cst_3 [1] : vector<1x16x32xf32> to vector<1x32xf32>
    %10 = vector.shape_cast %9 : vector<1x32xf32> to vector<1x1x32xf32>
    %cst_4 = arith.constant 1.600000e+01 : f32
    %11 = vector.broadcast %cst_4 : f32 to vector<1x1x32xf32>
    %12 = arith.divf %10, %11 : vector<1x1x32xf32>
    %cst_5 = arith.constant 9.99999974E-6 : f32
    %13 = vector.broadcast %cst_5 : f32 to vector<1x1x32xf32>
    %14 = arith.addf %12, %13 : vector<1x1x32xf32>
    %15 = math.rsqrt %14 : vector<1x1x32xf32>
    %16 = vector.broadcast %15 : vector<1x1x32xf32> to vector<1x16x32xf32>
    %17 = arith.mulf %7, %16 : vector<1x16x32xf32>
    %cst_6 = arith.constant 0.000000e+00 : f32
    %18 = vector.broadcast %cst_6 : f32 to vector<1x16x32xf32>
    %19 = arith.cmpf oge, %17, %18 : vector<1x16x32xf32>
    %cst_7 = arith.constant 2.000000e-01 : f32
    %20 = vector.broadcast %cst_7 : f32 to vector<1x16x32xf32>
    %21 = arith.mulf %20, %17 : vector<1x16x32xf32>
    %22 = arith.select %19, %17, %21 : vector<1x16x32xi1>, vector<1x16x32xf32>
    %23 = arith.truncf %22 : vector<1x16x32xf32> to vector<1x16x32xbf16>
    %c0_8 = arith.constant 0 : index
    %c0_9 = arith.constant 0 : index
    %c0_10 = arith.constant 0 : index
    %24 = vector.load %arg3[%c0_8, %c0_9, %c0_10] : memref<1x16x32xbf16, #tpu.memory_space<vmem>>, vector<1x16x32xbf16>
    tpu.vector_store %arg3[%c0_8, %c0_9, %c0_10], %23 {strides = array<i32>} : memref<1x16x32xbf16, #tpu.memory_space<vmem>>, vector<1x16x32xbf16>,
    return
  }
  func.func @transform_0(%arg0: i32, %arg1: i32) -> (i32, i32, i32) {
    %c0_i32 = arith.constant 0 : i32
    %c0_i32_0 = arith.constant 0 : i32
    return %arg0, %c0_i32, %arg1 : i32, i32, i32
  }
  func.func @transform_1(%arg0: i32, %arg1: i32) -> (i32, i32, i32) {
    %c0_i32 = arith.constant 0 : i32
    %c0_i32_0 = arith.constant 0 : i32
    return %arg0, %c0_i32, %arg1 : i32, i32, i32
  }
}

module attributes {stable_mosaic.version = 11 : i64} {
  func.func @_matmul_bias_act_kernel(%arg0: i32, %arg1: i32, %arg2: i32, %arg3: memref<32x256xbf16, #tpu.memory_space<vmem>>, %arg4: memref<256x128xbf16, #tpu.memory_space<vmem>>, %arg5: memref<1x128xf32, #tpu.memory_space<vmem>>, %arg6: memref<32x128xbf16, #tpu.memory_space<vmem>>, %arg7: memref<32x128xf32, #tpu.memory_space<vmem>>) attributes {dimension_semantics = [#tpu.dimension_semantics<parallel>, #tpu.dimension_semantics<parallel>, #tpu.dimension_semantics<arbitrary>], iteration_bounds = array<i64: 1, 1, 1>, scalar_prefetch = 0 : i64, scratch_operands = 1 : i64, tpu.core_type = #tpu.core_type<tc>, window_params = [{transform_indices = @transform_0, window_bounds = array<i64: 32, 256>}, {transform_indices = @transform_1, window_bounds = array<i64: 256, 128>}, {transform_indices = @transform_2, window_bounds = array<i64: 1, 128>}, {transform_indices = @transform_3, window_bounds = array<i64: 32, 128>}]} {
    %c0_i32 = arith.constant 0 : i32
    %0 = arith.cmpi eq, %arg2, %c0_i32 : i32
    %1 = arith.extui %0 : i1 to i32
    %c0_i32_0 = arith.constant 0 : i32
    %2 = arith.cmpi ne, %1, %c0_i32_0 : i32
    scf.if %2 {
      %cst_10 = arith.constant 0.000000e+00 : f32
      %12 = vector.broadcast %cst_10 : f32 to vector<32x128xf32>
      %c0_11 = arith.constant 0 : index
      %c0_12 = arith.constant 0 : index
      %13 = vector.load %arg7[%c0_11, %c0_12] : memref<32x128xf32, #tpu.memory_space<vmem>>, vector<32x128xf32>
      tpu.vector_store %arg7[%c0_11, %c0_12], %12 {strides = array<i32>} : memref<32x128xf32, #tpu.memory_space<vmem>>, vector<32x128xf32>,
    } else {
    }
    %c0 = arith.constant 0 : index
    %c0_1 = arith.constant 0 : index
    %3 = vector.load %arg7[%c0, %c0_1] : memref<32x128xf32, #tpu.memory_space<vmem>>, vector<32x128xf32>
    %c0_2 = arith.constant 0 : index
    %c0_3 = arith.constant 0 : index
    %4 = vector.load %arg3[%c0_2, %c0_3] : memref<32x256xbf16, #tpu.memory_space<vmem>>, vector<32x256xbf16>
    %c0_4 = arith.constant 0 : index
    %c0_5 = arith.constant 0 : index
    %5 = vector.load %arg4[%c0_4, %c0_5] : memref<256x128xbf16, #tpu.memory_space<vmem>>, vector<256x128xbf16>
    %cst = arith.constant dense<0.000000e+00> : vector<32x128xf32>
    %6 = tpu.matmul %4, %5, %cst {dimension_numbers = #tpu.dot_dimension_numbers<[1], [0], [0], [1], [0, 0, 1, 1], [], []>} : vector<32x256xbf16>, vector<256x128xbf16>, vector<32x128xf32> -> vector<32x128xf32>
    %7 = arith.addf %3, %6 : vector<32x128xf32>
    %c0_6 = arith.constant 0 : index
    %c0_7 = arith.constant 0 : index
    %8 = vector.load %arg7[%c0_6, %c0_7] : memref<32x128xf32, #tpu.memory_space<vmem>>, vector<32x128xf32>
    tpu.vector_store %arg7[%c0_6, %c0_7], %7 {strides = array<i32>} : memref<32x128xf32, #tpu.memory_space<vmem>>, vector<32x128xf32>,
    %c0_i32_8 = arith.constant 0 : i32
    %9 = arith.cmpi eq, %arg2, %c0_i32_8 : i32
    %10 = arith.extui %9 : i1 to i32
    %c0_i32_9 = arith.constant 0 : i32
    %11 = arith.cmpi ne, %10, %c0_i32_9 : i32
    scf.if %11 {
      %c0_10 = arith.constant 0 : index
      %c0_11 = arith.constant 0 : index
      %12 = vector.load %arg7[%c0_10, %c0_11] : memref<32x128xf32, #tpu.memory_space<vmem>>, vector<32x128xf32>
      %c0_12 = arith.constant 0 : index
      %c0_13 = arith.constant 0 : index
      %13 = vector.load %arg5[%c0_12, %c0_13] : memref<1x128xf32, #tpu.memory_space<vmem>>, vector<1x128xf32>
      %14 = vector.broadcast %13 : vector<1x128xf32> to vector<32x128xf32>
      %15 = arith.addf %12, %14 : vector<32x128xf32>
      %16 = arith.truncf %15 : vector<32x128xf32> to vector<32x128xbf16>
      %c0_14 = arith.constant 0 : index
      %c0_15 = arith.constant 0 : index
      %17 = vector.load %arg6[%c0_14, %c0_15] : memref<32x128xbf16, #tpu.memory_space<vmem>>, vector<32x128xbf16>
      tpu.vector_store %arg6[%c0_14, %c0_15], %16 {strides = array<i32>} : memref<32x128xbf16, #tpu.memory_space<vmem>>, vector<32x128xbf16>,
    } else {
    }
    return
  }
  func.func @transform_0(%arg0: i32, %arg1: i32, %arg2: i32) -> (i32, i32) {
    %c0_i32 = arith.constant 0 : i32
    return %arg0, %arg2 : i32, i32
  }
  func.func @transform_1(%arg0: i32, %arg1: i32, %arg2: i32) -> (i32, i32) {
    %c0_i32 = arith.constant 0 : i32
    return %arg2, %arg1 : i32, i32
  }
  func.func @transform_2(%arg0: i32, %arg1: i32, %arg2: i32) -> (i32, i32) {
    %c0_i32 = arith.constant 0 : i32
    %c0_i32_0 = arith.constant 0 : i32
    return %c0_i32, %arg1 : i32, i32
  }
  func.func @transform_3(%arg0: i32, %arg1: i32, %arg2: i32) -> (i32, i32) {
    %c0_i32 = arith.constant 0 : i32
    return %arg0, %arg1 : i32, i32
  }
}

module attributes {stable_mosaic.version = 11 : i64} {
  func.func @_matmul_bias_act_kernel(%arg0: i32, %arg1: i32, %arg2: i32, %arg3: memref<16x512xbf16, #tpu.memory_space<vmem>>, %arg4: memref<512x128xbf16, #tpu.memory_space<vmem>>, %arg5: memref<1x128xf32, #tpu.memory_space<vmem>>, %arg6: memref<16x128xbf16, #tpu.memory_space<vmem>>, %arg7: memref<16x128xf32, #tpu.memory_space<vmem>>) attributes {dimension_semantics = [#tpu.dimension_semantics<parallel>, #tpu.dimension_semantics<parallel>, #tpu.dimension_semantics<arbitrary>], iteration_bounds = array<i64: 1, 1, 1>, scalar_prefetch = 0 : i64, scratch_operands = 1 : i64, tpu.core_type = #tpu.core_type<tc>, window_params = [{transform_indices = @transform_0, window_bounds = array<i64: 16, 512>}, {transform_indices = @transform_1, window_bounds = array<i64: 512, 128>}, {transform_indices = @transform_2, window_bounds = array<i64: 1, 128>}, {transform_indices = @transform_3, window_bounds = array<i64: 16, 128>}]} {
    %c0_i32 = arith.constant 0 : i32
    %0 = arith.cmpi eq, %arg2, %c0_i32 : i32
    %1 = arith.extui %0 : i1 to i32
    %c0_i32_0 = arith.constant 0 : i32
    %2 = arith.cmpi ne, %1, %c0_i32_0 : i32
    scf.if %2 {
      %cst_10 = arith.constant 0.000000e+00 : f32
      %12 = vector.broadcast %cst_10 : f32 to vector<16x128xf32>
      %c0_11 = arith.constant 0 : index
      %c0_12 = arith.constant 0 : index
      %13 = vector.load %arg7[%c0_11, %c0_12] : memref<16x128xf32, #tpu.memory_space<vmem>>, vector<16x128xf32>
      tpu.vector_store %arg7[%c0_11, %c0_12], %12 {strides = array<i32>} : memref<16x128xf32, #tpu.memory_space<vmem>>, vector<16x128xf32>,
    } else {
    }
    %c0 = arith.constant 0 : index
    %c0_1 = arith.constant 0 : index
    %3 = vector.load %arg7[%c0, %c0_1] : memref<16x128xf32, #tpu.memory_space<vmem>>, vector<16x128xf32>
    %c0_2 = arith.constant 0 : index
    %c0_3 = arith.constant 0 : index
    %4 = vector.load %arg3[%c0_2, %c0_3] : memref<16x512xbf16, #tpu.memory_space<vmem>>, vector<16x512xbf16>
    %c0_4 = arith.constant 0 : index
    %c0_5 = arith.constant 0 : index
    %5 = vector.load %arg4[%c0_4, %c0_5] : memref<512x128xbf16, #tpu.memory_space<vmem>>, vector<512x128xbf16>
    %cst = arith.constant dense<0.000000e+00> : vector<16x128xf32>
    %6 = tpu.matmul %4, %5, %cst {dimension_numbers = #tpu.dot_dimension_numbers<[1], [0], [0], [1], [0, 0, 1, 1], [], []>} : vector<16x512xbf16>, vector<512x128xbf16>, vector<16x128xf32> -> vector<16x128xf32>
    %7 = arith.addf %3, %6 : vector<16x128xf32>
    %c0_6 = arith.constant 0 : index
    %c0_7 = arith.constant 0 : index
    %8 = vector.load %arg7[%c0_6, %c0_7] : memref<16x128xf32, #tpu.memory_space<vmem>>, vector<16x128xf32>
    tpu.vector_store %arg7[%c0_6, %c0_7], %7 {strides = array<i32>} : memref<16x128xf32, #tpu.memory_space<vmem>>, vector<16x128xf32>,
    %c0_i32_8 = arith.constant 0 : i32
    %9 = arith.cmpi eq, %arg2, %c0_i32_8 : i32
    %10 = arith.extui %9 : i1 to i32
    %c0_i32_9 = arith.constant 0 : i32
    %11 = arith.cmpi ne, %10, %c0_i32_9 : i32
    scf.if %11 {
      %c0_10 = arith.constant 0 : index
      %c0_11 = arith.constant 0 : index
      %12 = vector.load %arg7[%c0_10, %c0_11] : memref<16x128xf32, #tpu.memory_space<vmem>>, vector<16x128xf32>
      %c0_12 = arith.constant 0 : index
      %c0_13 = arith.constant 0 : index
      %13 = vector.load %arg5[%c0_12, %c0_13] : memref<1x128xf32, #tpu.memory_space<vmem>>, vector<1x128xf32>
      %14 = vector.broadcast %13 : vector<1x128xf32> to vector<16x128xf32>
      %15 = arith.addf %12, %14 : vector<16x128xf32>
      %16 = arith.truncf %15 : vector<16x128xf32> to vector<16x128xbf16>
      %c0_14 = arith.constant 0 : index
      %c0_15 = arith.constant 0 : index
      %17 = vector.load %arg6[%c0_14, %c0_15] : memref<16x128xbf16, #tpu.memory_space<vmem>>, vector<16x128xbf16>
      tpu.vector_store %arg6[%c0_14, %c0_15], %16 {strides = array<i32>} : memref<16x128xbf16, #tpu.memory_space<vmem>>, vector<16x128xbf16>,
    } else {
    }
    return
  }
  func.func @transform_0(%arg0: i32, %arg1: i32, %arg2: i32) -> (i32, i32) {
    %c0_i32 = arith.constant 0 : i32
    return %arg0, %arg2 : i32, i32
  }
  func.func @transform_1(%arg0: i32, %arg1: i32, %arg2: i32) -> (i32, i32) {
    %c0_i32 = arith.constant 0 : i32
    return %arg2, %arg1 : i32, i32
  }
  func.func @transform_2(%arg0: i32, %arg1: i32, %arg2: i32) -> (i32, i32) {
    %c0_i32 = arith.constant 0 : i32
    %c0_i32_0 = arith.constant 0 : i32
    return %c0_i32, %arg1 : i32, i32
  }
  func.func @transform_3(%arg0: i32, %arg1: i32, %arg2: i32) -> (i32, i32) {
    %c0_i32 = arith.constant 0 : i32
    return %arg0, %arg1 : i32, i32
  }
}

module attributes {stable_mosaic.version = 11 : i64} {
  func.func @_instnorm_act_kernel(%arg0: i32, %arg1: i32, %arg2: memref<1x4x64xbf16, #tpu.memory_space<vmem>>, %arg3: memref<1x4x64xbf16, #tpu.memory_space<vmem>>) attributes {dimension_semantics = [#tpu.dimension_semantics<parallel>, #tpu.dimension_semantics<parallel>], iteration_bounds = array<i64: 2, 1>, scalar_prefetch = 0 : i64, scratch_operands = 0 : i64, tpu.core_type = #tpu.core_type<tc>, window_params = [{transform_indices = @transform_0, window_bounds = array<i64: 1, 4, 64>}, {transform_indices = @transform_1, window_bounds = array<i64: 1, 4, 64>}]} {
    %c0 = arith.constant 0 : index
    %c0_0 = arith.constant 0 : index
    %c0_1 = arith.constant 0 : index
    %0 = vector.load %arg2[%c0, %c0_0, %c0_1] : memref<1x4x64xbf16, #tpu.memory_space<vmem>>, vector<1x4x64xbf16>
    %1 = arith.extf %0 : vector<1x4x64xbf16> to vector<1x4x64xf32>
    %cst = arith.constant dense<0.000000e+00> : vector<1x64xf32>
    %2 = vector.multi_reduction <add>, %1, %cst [1] : vector<1x4x64xf32> to vector<1x64xf32>
    %3 = vector.shape_cast %2 : vector<1x64xf32> to vector<1x1x64xf32>
    %cst_2 = arith.constant 4.000000e+00 : f32
    %4 = vector.broadcast %cst_2 : f32 to vector<1x1x64xf32>
    %5 = arith.divf %3, %4 : vector<1x1x64xf32>
    %6 = vector.broadcast %5 : vector<1x1x64xf32> to vector<1x4x64xf32>
    %7 = arith.subf %1, %6 : vector<1x4x64xf32>
    %8 = arith.mulf %7, %7 : vector<1x4x64xf32>
    %cst_3 = arith.constant dense<0.000000e+00> : vector<1x64xf32>
    %9 = vector.multi_reduction <add>, %8, %cst_3 [1] : vector<1x4x64xf32> to vector<1x64xf32>
    %10 = vector.shape_cast %9 : vector<1x64xf32> to vector<1x1x64xf32>
    %cst_4 = arith.constant 4.000000e+00 : f32
    %11 = vector.broadcast %cst_4 : f32 to vector<1x1x64xf32>
    %12 = arith.divf %10, %11 : vector<1x1x64xf32>
    %cst_5 = arith.constant 9.99999974E-6 : f32
    %13 = vector.broadcast %cst_5 : f32 to vector<1x1x64xf32>
    %14 = arith.addf %12, %13 : vector<1x1x64xf32>
    %15 = math.rsqrt %14 : vector<1x1x64xf32>
    %16 = vector.broadcast %15 : vector<1x1x64xf32> to vector<1x4x64xf32>
    %17 = arith.mulf %7, %16 : vector<1x4x64xf32>
    %cst_6 = arith.constant 0.000000e+00 : f32
    %18 = vector.broadcast %cst_6 : f32 to vector<1x4x64xf32>
    %19 = arith.cmpf oge, %17, %18 : vector<1x4x64xf32>
    %cst_7 = arith.constant 2.000000e-01 : f32
    %20 = vector.broadcast %cst_7 : f32 to vector<1x4x64xf32>
    %21 = arith.mulf %20, %17 : vector<1x4x64xf32>
    %22 = arith.select %19, %17, %21 : vector<1x4x64xi1>, vector<1x4x64xf32>
    %23 = arith.truncf %22 : vector<1x4x64xf32> to vector<1x4x64xbf16>
    %c0_8 = arith.constant 0 : index
    %c0_9 = arith.constant 0 : index
    %c0_10 = arith.constant 0 : index
    %24 = vector.load %arg3[%c0_8, %c0_9, %c0_10] : memref<1x4x64xbf16, #tpu.memory_space<vmem>>, vector<1x4x64xbf16>
    tpu.vector_store %arg3[%c0_8, %c0_9, %c0_10], %23 {strides = array<i32>} : memref<1x4x64xbf16, #tpu.memory_space<vmem>>, vector<1x4x64xbf16>,
    return
  }
  func.func @transform_0(%arg0: i32, %arg1: i32) -> (i32, i32, i32) {
    %c0_i32 = arith.constant 0 : i32
    %c0_i32_0 = arith.constant 0 : i32
    return %arg0, %c0_i32, %arg1 : i32, i32, i32
  }
  func.func @transform_1(%arg0: i32, %arg1: i32) -> (i32, i32, i32) {
    %c0_i32 = arith.constant 0 : i32
    %c0_i32_0 = arith.constant 0 : i32
    return %arg0, %c0_i32, %arg1 : i32, i32, i32
  }
}

module attributes {stable_mosaic.version = 11 : i64} {
  func.func @_matmul_bias_act_kernel(%arg0: i32, %arg1: i32, %arg2: i32, %arg3: memref<16x512xbf16, #tpu.memory_space<vmem>>, %arg4: memref<512x128xbf16, #tpu.memory_space<vmem>>, %arg5: memref<1x128xf32, #tpu.memory_space<vmem>>, %arg6: memref<16x128xbf16, #tpu.memory_space<vmem>>, %arg7: memref<16x128xf32, #tpu.memory_space<vmem>>) attributes {dimension_semantics = [#tpu.dimension_semantics<parallel>, #tpu.dimension_semantics<parallel>, #tpu.dimension_semantics<arbitrary>], iteration_bounds = array<i64: 1, 1, 2>, scalar_prefetch = 0 : i64, scratch_operands = 1 : i64, tpu.core_type = #tpu.core_type<tc>, window_params = [{transform_indices = @transform_0, window_bounds = array<i64: 16, 512>}, {transform_indices = @transform_1, window_bounds = array<i64: 512, 128>}, {transform_indices = @transform_2, window_bounds = array<i64: 1, 128>}, {transform_indices = @transform_3, window_bounds = array<i64: 16, 128>}]} {
    %c0_i32 = arith.constant 0 : i32
    %0 = arith.cmpi eq, %arg2, %c0_i32 : i32
    %1 = arith.extui %0 : i1 to i32
    %c0_i32_0 = arith.constant 0 : i32
    %2 = arith.cmpi ne, %1, %c0_i32_0 : i32
    scf.if %2 {
      %cst_9 = arith.constant 0.000000e+00 : f32
      %12 = vector.broadcast %cst_9 : f32 to vector<16x128xf32>
      %c0_10 = arith.constant 0 : index
      %c0_11 = arith.constant 0 : index
      %13 = vector.load %arg7[%c0_10, %c0_11] : memref<16x128xf32, #tpu.memory_space<vmem>>, vector<16x128xf32>
      tpu.vector_store %arg7[%c0_10, %c0_11], %12 {strides = array<i32>} : memref<16x128xf32, #tpu.memory_space<vmem>>, vector<16x128xf32>,
    } else {
    }
    %c0 = arith.constant 0 : index
    %c0_1 = arith.constant 0 : index
    %3 = vector.load %arg7[%c0, %c0_1] : memref<16x128xf32, #tpu.memory_space<vmem>>, vector<16x128xf32>
    %c0_2 = arith.constant 0 : index
    %c0_3 = arith.constant 0 : index
    %4 = vector.load %arg3[%c0_2, %c0_3] : memref<16x512xbf16, #tpu.memory_space<vmem>>, vector<16x512xbf16>
    %c0_4 = arith.constant 0 : index
    %c0_5 = arith.constant 0 : index
    %5 = vector.load %arg4[%c0_4, %c0_5] : memref<512x128xbf16, #tpu.memory_space<vmem>>, vector<512x128xbf16>
    %cst = arith.constant dense<0.000000e+00> : vector<16x128xf32>
    %6 = tpu.matmul %4, %5, %cst {dimension_numbers = #tpu.dot_dimension_numbers<[1], [0], [0], [1], [0, 0, 1, 1], [], []>} : vector<16x512xbf16>, vector<512x128xbf16>, vector<16x128xf32> -> vector<16x128xf32>
    %7 = arith.addf %3, %6 : vector<16x128xf32>
    %c0_6 = arith.constant 0 : index
    %c0_7 = arith.constant 0 : index
    %8 = vector.load %arg7[%c0_6, %c0_7] : memref<16x128xf32, #tpu.memory_space<vmem>>, vector<16x128xf32>
    tpu.vector_store %arg7[%c0_6, %c0_7], %7 {strides = array<i32>} : memref<16x128xf32, #tpu.memory_space<vmem>>, vector<16x128xf32>,
    %c1_i32 = arith.constant 1 : i32
    %9 = arith.cmpi eq, %arg2, %c1_i32 : i32
    %10 = arith.extui %9 : i1 to i32
    %c0_i32_8 = arith.constant 0 : i32
    %11 = arith.cmpi ne, %10, %c0_i32_8 : i32
    scf.if %11 {
      %c0_9 = arith.constant 0 : index
      %c0_10 = arith.constant 0 : index
      %12 = vector.load %arg7[%c0_9, %c0_10] : memref<16x128xf32, #tpu.memory_space<vmem>>, vector<16x128xf32>
      %c0_11 = arith.constant 0 : index
      %c0_12 = arith.constant 0 : index
      %13 = vector.load %arg5[%c0_11, %c0_12] : memref<1x128xf32, #tpu.memory_space<vmem>>, vector<1x128xf32>
      %14 = vector.broadcast %13 : vector<1x128xf32> to vector<16x128xf32>
      %15 = arith.addf %12, %14 : vector<16x128xf32>
      %cst_13 = arith.constant 0.000000e+00 : f32
      %16 = vector.broadcast %cst_13 : f32 to vector<16x128xf32>
      %17 = arith.maximumf %15, %16 : vector<16x128xf32>
      %18 = arith.truncf %17 : vector<16x128xf32> to vector<16x128xbf16>
      %c0_14 = arith.constant 0 : index
      %c0_15 = arith.constant 0 : index
      %19 = vector.load %arg6[%c0_14, %c0_15] : memref<16x128xbf16, #tpu.memory_space<vmem>>, vector<16x128xbf16>
      tpu.vector_store %arg6[%c0_14, %c0_15], %18 {strides = array<i32>} : memref<16x128xbf16, #tpu.memory_space<vmem>>, vector<16x128xbf16>,
    } else {
    }
    return
  }
  func.func @transform_0(%arg0: i32, %arg1: i32, %arg2: i32) -> (i32, i32) {
    %c0_i32 = arith.constant 0 : i32
    return %arg0, %arg2 : i32, i32
  }
  func.func @transform_1(%arg0: i32, %arg1: i32, %arg2: i32) -> (i32, i32) {
    %c0_i32 = arith.constant 0 : i32
    return %arg2, %arg1 : i32, i32
  }
  func.func @transform_2(%arg0: i32, %arg1: i32, %arg2: i32) -> (i32, i32) {
    %c0_i32 = arith.constant 0 : i32
    %c0_i32_0 = arith.constant 0 : i32
    return %c0_i32, %arg1 : i32, i32
  }
  func.func @transform_3(%arg0: i32, %arg1: i32, %arg2: i32) -> (i32, i32) {
    %c0_i32 = arith.constant 0 : i32
    return %arg0, %arg1 : i32, i32
  }
}

module attributes {stable_mosaic.version = 11 : i64} {
  func.func @_matmul_bias_act_kernel(%arg0: i32, %arg1: i32, %arg2: i32, %arg3: memref<16x256xbf16, #tpu.memory_space<vmem>>, %arg4: memref<256x128xbf16, #tpu.memory_space<vmem>>, %arg5: memref<1x128xf32, #tpu.memory_space<vmem>>, %arg6: memref<16x128xbf16, #tpu.memory_space<vmem>>, %arg7: memref<16x128xf32, #tpu.memory_space<vmem>>) attributes {dimension_semantics = [#tpu.dimension_semantics<parallel>, #tpu.dimension_semantics<parallel>, #tpu.dimension_semantics<arbitrary>], iteration_bounds = array<i64: 1, 1, 1>, scalar_prefetch = 0 : i64, scratch_operands = 1 : i64, tpu.core_type = #tpu.core_type<tc>, window_params = [{transform_indices = @transform_0, window_bounds = array<i64: 16, 256>}, {transform_indices = @transform_1, window_bounds = array<i64: 256, 128>}, {transform_indices = @transform_2, window_bounds = array<i64: 1, 128>}, {transform_indices = @transform_3, window_bounds = array<i64: 16, 128>}]} {
    %c0_i32 = arith.constant 0 : i32
    %0 = arith.cmpi eq, %arg2, %c0_i32 : i32
    %1 = arith.extui %0 : i1 to i32
    %c0_i32_0 = arith.constant 0 : i32
    %2 = arith.cmpi ne, %1, %c0_i32_0 : i32
    scf.if %2 {
      %cst_10 = arith.constant 0.000000e+00 : f32
      %12 = vector.broadcast %cst_10 : f32 to vector<16x128xf32>
      %c0_11 = arith.constant 0 : index
      %c0_12 = arith.constant 0 : index
      %13 = vector.load %arg7[%c0_11, %c0_12] : memref<16x128xf32, #tpu.memory_space<vmem>>, vector<16x128xf32>
      tpu.vector_store %arg7[%c0_11, %c0_12], %12 {strides = array<i32>} : memref<16x128xf32, #tpu.memory_space<vmem>>, vector<16x128xf32>,
    } else {
    }
    %c0 = arith.constant 0 : index
    %c0_1 = arith.constant 0 : index
    %3 = vector.load %arg7[%c0, %c0_1] : memref<16x128xf32, #tpu.memory_space<vmem>>, vector<16x128xf32>
    %c0_2 = arith.constant 0 : index
    %c0_3 = arith.constant 0 : index
    %4 = vector.load %arg3[%c0_2, %c0_3] : memref<16x256xbf16, #tpu.memory_space<vmem>>, vector<16x256xbf16>
    %c0_4 = arith.constant 0 : index
    %c0_5 = arith.constant 0 : index
    %5 = vector.load %arg4[%c0_4, %c0_5] : memref<256x128xbf16, #tpu.memory_space<vmem>>, vector<256x128xbf16>
    %cst = arith.constant dense<0.000000e+00> : vector<16x128xf32>
    %6 = tpu.matmul %4, %5, %cst {dimension_numbers = #tpu.dot_dimension_numbers<[1], [0], [0], [1], [0, 0, 1, 1], [], []>} : vector<16x256xbf16>, vector<256x128xbf16>, vector<16x128xf32> -> vector<16x128xf32>
    %7 = arith.addf %3, %6 : vector<16x128xf32>
    %c0_6 = arith.constant 0 : index
    %c0_7 = arith.constant 0 : index
    %8 = vector.load %arg7[%c0_6, %c0_7] : memref<16x128xf32, #tpu.memory_space<vmem>>, vector<16x128xf32>
    tpu.vector_store %arg7[%c0_6, %c0_7], %7 {strides = array<i32>} : memref<16x128xf32, #tpu.memory_space<vmem>>, vector<16x128xf32>,
    %c0_i32_8 = arith.constant 0 : i32
    %9 = arith.cmpi eq, %arg2, %c0_i32_8 : i32
    %10 = arith.extui %9 : i1 to i32
    %c0_i32_9 = arith.constant 0 : i32
    %11 = arith.cmpi ne, %10, %c0_i32_9 : i32
    scf.if %11 {
      %c0_10 = arith.constant 0 : index
      %c0_11 = arith.constant 0 : index
      %12 = vector.load %arg7[%c0_10, %c0_11] : memref<16x128xf32, #tpu.memory_space<vmem>>, vector<16x128xf32>
      %c0_12 = arith.constant 0 : index
      %c0_13 = arith.constant 0 : index
      %13 = vector.load %arg5[%c0_12, %c0_13] : memref<1x128xf32, #tpu.memory_space<vmem>>, vector<1x128xf32>
      %14 = vector.broadcast %13 : vector<1x128xf32> to vector<16x128xf32>
      %15 = arith.addf %12, %14 : vector<16x128xf32>
      %16 = arith.truncf %15 : vector<16x128xf32> to vector<16x128xbf16>
      %c0_14 = arith.constant 0 : index
      %c0_15 = arith.constant 0 : index
      %17 = vector.load %arg6[%c0_14, %c0_15] : memref<16x128xbf16, #tpu.memory_space<vmem>>, vector<16x128xbf16>
      tpu.vector_store %arg6[%c0_14, %c0_15], %16 {strides = array<i32>} : memref<16x128xbf16, #tpu.memory_space<vmem>>, vector<16x128xbf16>,
    } else {
    }
    return
  }
  func.func @transform_0(%arg0: i32, %arg1: i32, %arg2: i32) -> (i32, i32) {
    %c0_i32 = arith.constant 0 : i32
    return %arg0, %arg2 : i32, i32
  }
  func.func @transform_1(%arg0: i32, %arg1: i32, %arg2: i32) -> (i32, i32) {
    %c0_i32 = arith.constant 0 : i32
    return %arg2, %arg1 : i32, i32
  }
  func.func @transform_2(%arg0: i32, %arg1: i32, %arg2: i32) -> (i32, i32) {
    %c0_i32 = arith.constant 0 : i32
    %c0_i32_0 = arith.constant 0 : i32
    return %c0_i32, %arg1 : i32, i32
  }
  func.func @transform_3(%arg0: i32, %arg1: i32, %arg2: i32) -> (i32, i32) {
    %c0_i32 = arith.constant 0 : i32
    return %arg0, %arg1 : i32, i32
  }
}

module attributes {stable_mosaic.version = 11 : i64} {
  func.func @_instnorm_act_kernel(%arg0: i32, %arg1: i32, %arg2: memref<1x4x64xbf16, #tpu.memory_space<vmem>>, %arg3: memref<1x4x64xbf16, #tpu.memory_space<vmem>>) attributes {dimension_semantics = [#tpu.dimension_semantics<parallel>, #tpu.dimension_semantics<parallel>], iteration_bounds = array<i64: 2, 1>, scalar_prefetch = 0 : i64, scratch_operands = 0 : i64, tpu.core_type = #tpu.core_type<tc>, window_params = [{transform_indices = @transform_0, window_bounds = array<i64: 1, 4, 64>}, {transform_indices = @transform_1, window_bounds = array<i64: 1, 4, 64>}]} {
    %c0 = arith.constant 0 : index
    %c0_0 = arith.constant 0 : index
    %c0_1 = arith.constant 0 : index
    %0 = vector.load %arg2[%c0, %c0_0, %c0_1] : memref<1x4x64xbf16, #tpu.memory_space<vmem>>, vector<1x4x64xbf16>
    %1 = arith.extf %0 : vector<1x4x64xbf16> to vector<1x4x64xf32>
    %cst = arith.constant dense<0.000000e+00> : vector<1x64xf32>
    %2 = vector.multi_reduction <add>, %1, %cst [1] : vector<1x4x64xf32> to vector<1x64xf32>
    %3 = vector.shape_cast %2 : vector<1x64xf32> to vector<1x1x64xf32>
    %cst_2 = arith.constant 4.000000e+00 : f32
    %4 = vector.broadcast %cst_2 : f32 to vector<1x1x64xf32>
    %5 = arith.divf %3, %4 : vector<1x1x64xf32>
    %6 = vector.broadcast %5 : vector<1x1x64xf32> to vector<1x4x64xf32>
    %7 = arith.subf %1, %6 : vector<1x4x64xf32>
    %8 = arith.mulf %7, %7 : vector<1x4x64xf32>
    %cst_3 = arith.constant dense<0.000000e+00> : vector<1x64xf32>
    %9 = vector.multi_reduction <add>, %8, %cst_3 [1] : vector<1x4x64xf32> to vector<1x64xf32>
    %10 = vector.shape_cast %9 : vector<1x64xf32> to vector<1x1x64xf32>
    %cst_4 = arith.constant 4.000000e+00 : f32
    %11 = vector.broadcast %cst_4 : f32 to vector<1x1x64xf32>
    %12 = arith.divf %10, %11 : vector<1x1x64xf32>
    %cst_5 = arith.constant 9.99999974E-6 : f32
    %13 = vector.broadcast %cst_5 : f32 to vector<1x1x64xf32>
    %14 = arith.addf %12, %13 : vector<1x1x64xf32>
    %15 = math.rsqrt %14 : vector<1x1x64xf32>
    %16 = vector.broadcast %15 : vector<1x1x64xf32> to vector<1x4x64xf32>
    %17 = arith.mulf %7, %16 : vector<1x4x64xf32>
    %cst_6 = arith.constant 0.000000e+00 : f32
    %18 = vector.broadcast %cst_6 : f32 to vector<1x4x64xf32>
    %19 = arith.maximumf %17, %18 : vector<1x4x64xf32>
    %20 = arith.truncf %19 : vector<1x4x64xf32> to vector<1x4x64xbf16>
    %c0_7 = arith.constant 0 : index
    %c0_8 = arith.constant 0 : index
    %c0_9 = arith.constant 0 : index
    %21 = vector.load %arg3[%c0_7, %c0_8, %c0_9] : memref<1x4x64xbf16, #tpu.memory_space<vmem>>, vector<1x4x64xbf16>
    tpu.vector_store %arg3[%c0_7, %c0_8, %c0_9], %20 {strides = array<i32>} : memref<1x4x64xbf16, #tpu.memory_space<vmem>>, vector<1x4x64xbf16>,
    return
  }
  func.func @transform_0(%arg0: i32, %arg1: i32) -> (i32, i32, i32) {
    %c0_i32 = arith.constant 0 : i32
    %c0_i32_0 = arith.constant 0 : i32
    return %arg0, %c0_i32, %arg1 : i32, i32, i32
  }
  func.func @transform_1(%arg0: i32, %arg1: i32) -> (i32, i32, i32) {
    %c0_i32 = arith.constant 0 : i32
    %c0_i32_0 = arith.constant 0 : i32
    return %arg0, %c0_i32, %arg1 : i32, i32, i32
  }
}

module attributes {stable_mosaic.version = 11 : i64} {
  func.func @_instnorm_act_kernel(%arg0: i32, %arg1: i32, %arg2: memref<1x16x32xbf16, #tpu.memory_space<vmem>>, %arg3: memref<1x16x32xbf16, #tpu.memory_space<vmem>>) attributes {dimension_semantics = [#tpu.dimension_semantics<parallel>, #tpu.dimension_semantics<parallel>], iteration_bounds = array<i64: 2, 1>, scalar_prefetch = 0 : i64, scratch_operands = 0 : i64, tpu.core_type = #tpu.core_type<tc>, window_params = [{transform_indices = @transform_0, window_bounds = array<i64: 1, 16, 32>}, {transform_indices = @transform_1, window_bounds = array<i64: 1, 16, 32>}]} {
    %c0 = arith.constant 0 : index
    %c0_0 = arith.constant 0 : index
    %c0_1 = arith.constant 0 : index
    %0 = vector.load %arg2[%c0, %c0_0, %c0_1] : memref<1x16x32xbf16, #tpu.memory_space<vmem>>, vector<1x16x32xbf16>
    %1 = arith.extf %0 : vector<1x16x32xbf16> to vector<1x16x32xf32>
    %cst = arith.constant dense<0.000000e+00> : vector<1x32xf32>
    %2 = vector.multi_reduction <add>, %1, %cst [1] : vector<1x16x32xf32> to vector<1x32xf32>
    %3 = vector.shape_cast %2 : vector<1x32xf32> to vector<1x1x32xf32>
    %cst_2 = arith.constant 1.600000e+01 : f32
    %4 = vector.broadcast %cst_2 : f32 to vector<1x1x32xf32>
    %5 = arith.divf %3, %4 : vector<1x1x32xf32>
    %6 = vector.broadcast %5 : vector<1x1x32xf32> to vector<1x16x32xf32>
    %7 = arith.subf %1, %6 : vector<1x16x32xf32>
    %8 = arith.mulf %7, %7 : vector<1x16x32xf32>
    %cst_3 = arith.constant dense<0.000000e+00> : vector<1x32xf32>
    %9 = vector.multi_reduction <add>, %8, %cst_3 [1] : vector<1x16x32xf32> to vector<1x32xf32>
    %10 = vector.shape_cast %9 : vector<1x32xf32> to vector<1x1x32xf32>
    %cst_4 = arith.constant 1.600000e+01 : f32
    %11 = vector.broadcast %cst_4 : f32 to vector<1x1x32xf32>
    %12 = arith.divf %10, %11 : vector<1x1x32xf32>
    %cst_5 = arith.constant 9.99999974E-6 : f32
    %13 = vector.broadcast %cst_5 : f32 to vector<1x1x32xf32>
    %14 = arith.addf %12, %13 : vector<1x1x32xf32>
    %15 = math.rsqrt %14 : vector<1x1x32xf32>
    %16 = vector.broadcast %15 : vector<1x1x32xf32> to vector<1x16x32xf32>
    %17 = arith.mulf %7, %16 : vector<1x16x32xf32>
    %cst_6 = arith.constant 0.000000e+00 : f32
    %18 = vector.broadcast %cst_6 : f32 to vector<1x16x32xf32>
    %19 = arith.maximumf %17, %18 : vector<1x16x32xf32>
    %20 = arith.truncf %19 : vector<1x16x32xf32> to vector<1x16x32xbf16>
    %c0_7 = arith.constant 0 : index
    %c0_8 = arith.constant 0 : index
    %c0_9 = arith.constant 0 : index
    %21 = vector.load %arg3[%c0_7, %c0_8, %c0_9] : memref<1x16x32xbf16, #tpu.memory_space<vmem>>, vector<1x16x32xbf16>
    tpu.vector_store %arg3[%c0_7, %c0_8, %c0_9], %20 {strides = array<i32>} : memref<1x16x32xbf16, #tpu.memory_space<vmem>>, vector<1x16x32xbf16>,
    return
  }
  func.func @transform_0(%arg0: i32, %arg1: i32) -> (i32, i32, i32) {
    %c0_i32 = arith.constant 0 : i32
    %c0_i32_0 = arith.constant 0 : i32
    return %arg0, %c0_i32, %arg1 : i32, i32, i32
  }
  func.func @transform_1(%arg0: i32, %arg1: i32) -> (i32, i32, i32) {
    %c0_i32 = arith.constant 0 : i32
    %c0_i32_0 = arith.constant 0 : i32
    return %arg0, %c0_i32, %arg1 : i32, i32, i32
  }
}

module attributes {stable_mosaic.version = 11 : i64} {
  func.func @_instnorm_act_kernel(%arg0: i32, %arg1: i32, %arg2: memref<1x64x16xbf16, #tpu.memory_space<vmem>>, %arg3: memref<1x64x16xbf16, #tpu.memory_space<vmem>>) attributes {dimension_semantics = [#tpu.dimension_semantics<parallel>, #tpu.dimension_semantics<parallel>], iteration_bounds = array<i64: 2, 1>, scalar_prefetch = 0 : i64, scratch_operands = 0 : i64, tpu.core_type = #tpu.core_type<tc>, window_params = [{transform_indices = @transform_0, window_bounds = array<i64: 1, 64, 16>}, {transform_indices = @transform_1, window_bounds = array<i64: 1, 64, 16>}]} {
    %c0 = arith.constant 0 : index
    %c0_0 = arith.constant 0 : index
    %c0_1 = arith.constant 0 : index
    %0 = vector.load %arg2[%c0, %c0_0, %c0_1] : memref<1x64x16xbf16, #tpu.memory_space<vmem>>, vector<1x64x16xbf16>
    %1 = arith.extf %0 : vector<1x64x16xbf16> to vector<1x64x16xf32>
    %cst = arith.constant dense<0.000000e+00> : vector<1x16xf32>
    %2 = vector.multi_reduction <add>, %1, %cst [1] : vector<1x64x16xf32> to vector<1x16xf32>
    %3 = vector.shape_cast %2 : vector<1x16xf32> to vector<1x1x16xf32>
    %cst_2 = arith.constant 6.400000e+01 : f32
    %4 = vector.broadcast %cst_2 : f32 to vector<1x1x16xf32>
    %5 = arith.divf %3, %4 : vector<1x1x16xf32>
    %6 = vector.broadcast %5 : vector<1x1x16xf32> to vector<1x64x16xf32>
    %7 = arith.subf %1, %6 : vector<1x64x16xf32>
    %8 = arith.mulf %7, %7 : vector<1x64x16xf32>
    %cst_3 = arith.constant dense<0.000000e+00> : vector<1x16xf32>
    %9 = vector.multi_reduction <add>, %8, %cst_3 [1] : vector<1x64x16xf32> to vector<1x16xf32>
    %10 = vector.shape_cast %9 : vector<1x16xf32> to vector<1x1x16xf32>
    %cst_4 = arith.constant 6.400000e+01 : f32
    %11 = vector.broadcast %cst_4 : f32 to vector<1x1x16xf32>
    %12 = arith.divf %10, %11 : vector<1x1x16xf32>
    %cst_5 = arith.constant 9.99999974E-6 : f32
    %13 = vector.broadcast %cst_5 : f32 to vector<1x1x16xf32>
    %14 = arith.addf %12, %13 : vector<1x1x16xf32>
    %15 = math.rsqrt %14 : vector<1x1x16xf32>
    %16 = vector.broadcast %15 : vector<1x1x16xf32> to vector<1x64x16xf32>
    %17 = arith.mulf %7, %16 : vector<1x64x16xf32>
    %cst_6 = arith.constant 0.000000e+00 : f32
    %18 = vector.broadcast %cst_6 : f32 to vector<1x64x16xf32>
    %19 = arith.maximumf %17, %18 : vector<1x64x16xf32>
    %20 = arith.truncf %19 : vector<1x64x16xf32> to vector<1x64x16xbf16>
    %c0_7 = arith.constant 0 : index
    %c0_8 = arith.constant 0 : index
    %c0_9 = arith.constant 0 : index
    %21 = vector.load %arg3[%c0_7, %c0_8, %c0_9] : memref<1x64x16xbf16, #tpu.memory_space<vmem>>, vector<1x64x16xbf16>
    tpu.vector_store %arg3[%c0_7, %c0_8, %c0_9], %20 {strides = array<i32>} : memref<1x64x16xbf16, #tpu.memory_space<vmem>>, vector<1x64x16xbf16>,
    return
  }
  func.func @transform_0(%arg0: i32, %arg1: i32) -> (i32, i32, i32) {
    %c0_i32 = arith.constant 0 : i32
    %c0_i32_0 = arith.constant 0 : i32
    return %arg0, %c0_i32, %arg1 : i32, i32, i32
  }
  func.func @transform_1(%arg0: i32, %arg1: i32) -> (i32, i32, i32) {
    %c0_i32 = arith.constant 0 : i32
    %c0_i32_0 = arith.constant 0 : i32
    return %arg0, %c0_i32, %arg1 : i32, i32, i32
  }
}

module attributes {stable_mosaic.version = 11 : i64} {
  func.func @_instnorm_act_kernel(%arg0: i32, %arg1: i32, %arg2: memref<1x256x8xbf16, #tpu.memory_space<vmem>>, %arg3: memref<1x256x8xbf16, #tpu.memory_space<vmem>>) attributes {dimension_semantics = [#tpu.dimension_semantics<parallel>, #tpu.dimension_semantics<parallel>], iteration_bounds = array<i64: 2, 1>, scalar_prefetch = 0 : i64, scratch_operands = 0 : i64, tpu.core_type = #tpu.core_type<tc>, window_params = [{transform_indices = @transform_0, window_bounds = array<i64: 1, 256, 8>}, {transform_indices = @transform_1, window_bounds = array<i64: 1, 256, 8>}]} {
    %c0 = arith.constant 0 : index
    %c0_0 = arith.constant 0 : index
    %c0_1 = arith.constant 0 : index
    %0 = vector.load %arg2[%c0, %c0_0, %c0_1] : memref<1x256x8xbf16, #tpu.memory_space<vmem>>, vector<1x256x8xbf16>
    %1 = arith.extf %0 : vector<1x256x8xbf16> to vector<1x256x8xf32>
    %cst = arith.constant dense<0.000000e+00> : vector<1x8xf32>
    %2 = vector.multi_reduction <add>, %1, %cst [1] : vector<1x256x8xf32> to vector<1x8xf32>
    %3 = vector.shape_cast %2 : vector<1x8xf32> to vector<1x1x8xf32>
    %cst_2 = arith.constant 2.560000e+02 : f32
    %4 = vector.broadcast %cst_2 : f32 to vector<1x1x8xf32>
    %5 = arith.divf %3, %4 : vector<1x1x8xf32>
    %6 = vector.broadcast %5 : vector<1x1x8xf32> to vector<1x256x8xf32>
    %7 = arith.subf %1, %6 : vector<1x256x8xf32>
    %8 = arith.mulf %7, %7 : vector<1x256x8xf32>
    %cst_3 = arith.constant dense<0.000000e+00> : vector<1x8xf32>
    %9 = vector.multi_reduction <add>, %8, %cst_3 [1] : vector<1x256x8xf32> to vector<1x8xf32>
    %10 = vector.shape_cast %9 : vector<1x8xf32> to vector<1x1x8xf32>
    %cst_4 = arith.constant 2.560000e+02 : f32
    %11 = vector.broadcast %cst_4 : f32 to vector<1x1x8xf32>
    %12 = arith.divf %10, %11 : vector<1x1x8xf32>
    %cst_5 = arith.constant 9.99999974E-6 : f32
    %13 = vector.broadcast %cst_5 : f32 to vector<1x1x8xf32>
    %14 = arith.addf %12, %13 : vector<1x1x8xf32>
    %15 = math.rsqrt %14 : vector<1x1x8xf32>
    %16 = vector.broadcast %15 : vector<1x1x8xf32> to vector<1x256x8xf32>
    %17 = arith.mulf %7, %16 : vector<1x256x8xf32>
    %cst_6 = arith.constant 0.000000e+00 : f32
    %18 = vector.broadcast %cst_6 : f32 to vector<1x256x8xf32>
    %19 = arith.maximumf %17, %18 : vector<1x256x8xf32>
    %20 = arith.truncf %19 : vector<1x256x8xf32> to vector<1x256x8xbf16>
    %c0_7 = arith.constant 0 : index
    %c0_8 = arith.constant 0 : index
    %c0_9 = arith.constant 0 : index
    %21 = vector.load %arg3[%c0_7, %c0_8, %c0_9] : memref<1x256x8xbf16, #tpu.memory_space<vmem>>, vector<1x256x8xbf16>
    tpu.vector_store %arg3[%c0_7, %c0_8, %c0_9], %20 {strides = array<i32>} : memref<1x256x8xbf16, #tpu.memory_space<vmem>>, vector<1x256x8xbf16>,
    return
  }
  func.func @transform_0(%arg0: i32, %arg1: i32) -> (i32, i32, i32) {
    %c0_i32 = arith.constant 0 : i32
    %c0_i32_0 = arith.constant 0 : i32
    return %arg0, %c0_i32, %arg1 : i32, i32, i32
  }
  func.func @transform_1(%arg0: i32, %arg1: i32) -> (i32, i32, i32) {
    %c0_i32 = arith.constant 0 : i32
    %c0_i32_0 = arith.constant 0 : i32
    return %arg0, %c0_i32, %arg1 : i32, i32, i32
  }
}

module attributes {stable_mosaic.version = 11 : i64} {
  func.func @_matmul_bias_act_kernel(%arg0: i32, %arg1: i32, %arg2: i32, %arg3: memref<256x128xbf16, #tpu.memory_space<vmem>>, %arg4: memref<128x128xbf16, #tpu.memory_space<vmem>>, %arg5: memref<1x128xf32, #tpu.memory_space<vmem>>, %arg6: memref<256x128xbf16, #tpu.memory_space<vmem>>, %arg7: memref<256x128xf32, #tpu.memory_space<vmem>>) attributes {dimension_semantics = [#tpu.dimension_semantics<parallel>, #tpu.dimension_semantics<parallel>, #tpu.dimension_semantics<arbitrary>], iteration_bounds = array<i64: 2, 1, 1>, scalar_prefetch = 0 : i64, scratch_operands = 1 : i64, tpu.core_type = #tpu.core_type<tc>, window_params = [{transform_indices = @transform_0, window_bounds = array<i64: 256, 128>}, {transform_indices = @transform_1, window_bounds = array<i64: 128, 128>}, {transform_indices = @transform_2, window_bounds = array<i64: 1, 128>}, {transform_indices = @transform_3, window_bounds = array<i64: 256, 128>}]} {
    %c0_i32 = arith.constant 0 : i32
    %0 = arith.cmpi eq, %arg2, %c0_i32 : i32
    %1 = arith.extui %0 : i1 to i32
    %c0_i32_0 = arith.constant 0 : i32
    %2 = arith.cmpi ne, %1, %c0_i32_0 : i32
    scf.if %2 {
      %cst_10 = arith.constant 0.000000e+00 : f32
      %12 = vector.broadcast %cst_10 : f32 to vector<256x128xf32>
      %c0_11 = arith.constant 0 : index
      %c0_12 = arith.constant 0 : index
      %13 = vector.load %arg7[%c0_11, %c0_12] : memref<256x128xf32, #tpu.memory_space<vmem>>, vector<256x128xf32>
      tpu.vector_store %arg7[%c0_11, %c0_12], %12 {strides = array<i32>} : memref<256x128xf32, #tpu.memory_space<vmem>>, vector<256x128xf32>,
    } else {
    }
    %c0 = arith.constant 0 : index
    %c0_1 = arith.constant 0 : index
    %3 = vector.load %arg7[%c0, %c0_1] : memref<256x128xf32, #tpu.memory_space<vmem>>, vector<256x128xf32>
    %c0_2 = arith.constant 0 : index
    %c0_3 = arith.constant 0 : index
    %4 = vector.load %arg3[%c0_2, %c0_3] : memref<256x128xbf16, #tpu.memory_space<vmem>>, vector<256x128xbf16>
    %c0_4 = arith.constant 0 : index
    %c0_5 = arith.constant 0 : index
    %5 = vector.load %arg4[%c0_4, %c0_5] : memref<128x128xbf16, #tpu.memory_space<vmem>>, vector<128x128xbf16>
    %cst = arith.constant dense<0.000000e+00> : vector<256x128xf32>
    %6 = tpu.matmul %4, %5, %cst {dimension_numbers = #tpu.dot_dimension_numbers<[1], [0], [0], [1], [0, 0, 1, 1], [], []>} : vector<256x128xbf16>, vector<128x128xbf16>, vector<256x128xf32> -> vector<256x128xf32>
    %7 = arith.addf %3, %6 : vector<256x128xf32>
    %c0_6 = arith.constant 0 : index
    %c0_7 = arith.constant 0 : index
    %8 = vector.load %arg7[%c0_6, %c0_7] : memref<256x128xf32, #tpu.memory_space<vmem>>, vector<256x128xf32>
    tpu.vector_store %arg7[%c0_6, %c0_7], %7 {strides = array<i32>} : memref<256x128xf32, #tpu.memory_space<vmem>>, vector<256x128xf32>,
    %c0_i32_8 = arith.constant 0 : i32
    %9 = arith.cmpi eq, %arg2, %c0_i32_8 : i32
    %10 = arith.extui %9 : i1 to i32
    %c0_i32_9 = arith.constant 0 : i32
    %11 = arith.cmpi ne, %10, %c0_i32_9 : i32
    scf.if %11 {
      %c0_10 = arith.constant 0 : index
      %c0_11 = arith.constant 0 : index
      %12 = vector.load %arg7[%c0_10, %c0_11] : memref<256x128xf32, #tpu.memory_space<vmem>>, vector<256x128xf32>
      %c0_12 = arith.constant 0 : index
      %c0_13 = arith.constant 0 : index
      %13 = vector.load %arg5[%c0_12, %c0_13] : memref<1x128xf32, #tpu.memory_space<vmem>>, vector<1x128xf32>
      %14 = vector.broadcast %13 : vector<1x128xf32> to vector<256x128xf32>
      %15 = arith.addf %12, %14 : vector<256x128xf32>
      %16 = math.tanh %15 : vector<256x128xf32>
      %17 = arith.truncf %16 : vector<256x128xf32> to vector<256x128xbf16>
      %c0_14 = arith.constant 0 : index
      %c0_15 = arith.constant 0 : index
      %18 = vector.load %arg6[%c0_14, %c0_15] : memref<256x128xbf16, #tpu.memory_space<vmem>>, vector<256x128xbf16>
      tpu.vector_store %arg6[%c0_14, %c0_15], %17 {strides = array<i32>} : memref<256x128xbf16, #tpu.memory_space<vmem>>, vector<256x128xbf16>,
    } else {
    }
    return
  }
  func.func @transform_0(%arg0: i32, %arg1: i32, %arg2: i32) -> (i32, i32) {
    %c0_i32 = arith.constant 0 : i32
    return %arg0, %arg2 : i32, i32
  }
  func.func @transform_1(%arg0: i32, %arg1: i32, %arg2: i32) -> (i32, i32) {
    %c0_i32 = arith.constant 0 : i32
    return %arg2, %arg1 : i32, i32
  }
  func.func @transform_2(%arg0: i32, %arg1: i32, %arg2: i32) -> (i32, i32) {
    %c0_i32 = arith.constant 0 : i32
    %c0_i32_0 = arith.constant 0 : i32
    return %c0_i32, %arg1 : i32, i32
  }
  func.func @transform_3(%arg0: i32, %arg1: i32, %arg2: i32) -> (i32, i32) {
    %c0_i32 = arith.constant 0 : i32
    return %arg0, %arg1 : i32, i32
  }
}

</mosaic_0001>

<llo_original>
// kernel: _lambda_.32
$region0: #{_lambda_.32}
  #allocation0 [shape = 'u32[]', space=smem, size = 0x4, offset = 0x4, fixed_abs, tag = 'smem constant byte address 0x4 - core index']
  #allocation1 [shape = 'u32[144,128]{1,0:T(1,128)}', space=vmem, size = 0x12000, scoped, tag = 'internal scratch']
  #allocation2 [shape = 'f32[256,128]{1,0:T(8,128)}', space=vmem, size = 0x20000, scoped, tag = 'scratch operand']
  %s0 = inlined_call_operand.vmem [shape: bf16[512,128], index: 0, kind: input, shape index: {}]
  %s1 = inlined_call_operand.vmem [shape: bf16[128,128], index: 1, kind: input, shape index: {}]
  %s2 = inlined_call_operand.vmem [shape: f32[1,128], index: 2, kind: input, shape index: {}]
  %s3 = inlined_call_operand.vmem [shape: bf16[512,128], index: 3, kind: output, shape index: {}]
  %s4 = sld [smem:[#allocation0]]
  $region53: #{_lambda_.32} parent=0
    _
  %s6 = ssub.s32 1, %s4
  %s7 = scalar_select 0, %s6, %s4
  loop: start=0, step=1, limit=4
  $region2: #{_lambda_.32} parent=0 // loop_pre_header
    _
  $region3: #{_lambda_.32} parent=0 // loop_header
    %s9 = sphi 0, %s13
    %p10 = scmp.ge.s32.totalorder %s9, 4
    %s16 = sphi 0, %s35
    %s17 = sphi 0, %s31
    %s18 = sphi 0, %s27
    %s19 = sphi 0, %s16
    %s20 = sphi 0, %s17
    %s21 = sphi 0, %s18
    %s22 = sphi 0, %s19
    %s23 = sphi 0, %s20
    %s24 = sphi 0, %s21
    %s40 = sphi 0, %s42
    %s43 = sphi 0, %s40
    %s44 = sphi 0, %s43
    %s60 = sphi 0, %s44
    %s68 = sphi 0, %s70
    %s71 = sphi 0, %s68
    %s72 = sphi 0, %s71
    %s88 = sphi 0, %s72
    %s94 = sphi 0, %s96
    %s97 = sphi 0, %s94
    %s98 = sphi 0, %s97
    %s114 = sphi 0, %s98
    %s122 = sphi 0, %s124
    %s125 = sphi 0, %s122
    %s126 = sphi 0, %s125
    %s142 = sphi 0, %s126
  $region4: #{_lambda_.32} parent=0 // loop_header_branch
    %12 = sbr.rel (%p10) target = $region8
  $region5: #{_lambda_.32} parent=0 // loop_body
    %s14 = ssub.s32 %s9, 1
    %s15 = ssub.s32 %s9, 2
    %s25 = sadd.s32 1, %s18
    %p26 = scmp.ge.s32.totalorder %s25, 1
    %s27 = scalar_select %p26, 0, %s25
    %s28 = sadd.s32 1, %s17
    %s29 = scalar_select %p26, %s28, %s17
    %p30 = scmp.ge.s32.totalorder %s29, 1
    %s31 = scalar_select %p30, 0, %s29
    %s32 = sadd.s32 1, %s16
    %s33 = scalar_select %p30, %s32, %s16
    %p34 = scmp.ge.s32.totalorder %s33, 2
    %s35 = scalar_select %p34, 0, %s33
    %s36 = ssub.s32 %s16, %s35
    %s37 = ssub.s32 %s18, %s27
    %s38 = sor.u32 %s36, %s37
    %p39 = scmp.eq.s32.totalorder %s38, 0
    %s41 = sadd.s32 %s40, 1
    %s42 = scalar_select %p39, %s40, %s41
    %p45 = pneg %p39
    %p46 = scmp.eq.s32.totalorder %s9, 1
    %p47 = por %p45, %p46
    %p48 = scmp.ne.s32.totalorder %s40, %s43
    %p49 = scmp.eq.s32.totalorder %s9, 0
    %p50 = por %p48, %p49
    %p51 = scmp.ne.s32.totalorder %s40, %s43
    %p52 = scmp.eq.s32.totalorder %s14, 1
    %p53 = por %p51, %p52
    %p54 = scmp.ne.s32.totalorder %s43, %s44
    %p55 = scmp.eq.s32.totalorder %s14, 0
    %p56 = por %p54, %p55
    %p57 = scmp.ne.s32.totalorder %s43, %s44
    %p58 = scmp.eq.s32.totalorder %s15, 1
    %p59 = por %p57, %p58
    %p61 = scmp.ne.s32.totalorder %s44, %s60
    %p62 = scmp.eq.s32.totalorder %s15, 0
    %p63 = por %p61, %p62
    %s64 = ssub.s32 %s18, %s27
    %s65 = ssub.s32 %s17, %s31
    %s66 = sor.u32 %s64, %s65
    %p67 = scmp.eq.s32.totalorder %s66, 0
    %s69 = sadd.s32 %s68, 1
    %s70 = scalar_select %p67, %s68, %s69
    %p73 = pneg %p67
    %p74 = scmp.eq.s32.totalorder %s9, 1
    %p75 = por %p73, %p74
    %p76 = scmp.ne.s32.totalorder %s68, %s71
    %p77 = scmp.eq.s32.totalorder %s9, 0
    %p78 = por %p76, %p77
    %p79 = scmp.ne.s32.totalorder %s68, %s71
    %p80 = scmp.eq.s32.totalorder %s14, 1
    %p81 = por %p79, %p80
    %p82 = scmp.ne.s32.totalorder %s71, %s72
    %p83 = scmp.eq.s32.totalorder %s14, 0
    %p84 = por %p82, %p83
    %p85 = scmp.ne.s32.totalorder %s71, %s72
    %p86 = scmp.eq.s32.totalorder %s15, 1
    %p87 = por %p85, %p86
    %p89 = scmp.ne.s32.totalorder %s72, %s88
    %p90 = scmp.eq.s32.totalorder %s15, 0
    %p91 = por %p89, %p90
    %s92 = ssub.s32 %s17, %s31
    %p93 = scmp.eq.s32.totalorder %s92, 0
    %s95 = sadd.s32 %s94, 1
    %s96 = scalar_select %p93, %s94, %s95
    %p99 = pneg %p93
    %p100 = scmp.eq.s32.totalorder %s9, 1
    %p101 = por %p99, %p100
    %p102 = scmp.ne.s32.totalorder %s94, %s97
    %p103 = scmp.eq.s32.totalorder %s9, 0
    %p104 = por %p102, %p103
    %p105 = scmp.ne.s32.totalorder %s94, %s97
    %p106 = scmp.eq.s32.totalorder %s14, 1
    %p107 = por %p105, %p106
    %p108 = scmp.ne.s32.totalorder %s97, %s98
    %p109 = scmp.eq.s32.totalorder %s14, 0
    %p110 = por %p108, %p109
    %p111 = scmp.ne.s32.totalorder %s97, %s98
    %p112 = scmp.eq.s32.totalorder %s15, 1
    %p113 = por %p111, %p112
    %p115 = scmp.ne.s32.totalorder %s98, %s114
    %p116 = scmp.eq.s32.totalorder %s15, 0
    %p117 = por %p115, %p116
    %s118 = ssub.s32 %s16, %s35
    %s119 = ssub.s32 %s17, %s31
    %s120 = sor.u32 %s118, %s119
    %p121 = scmp.eq.s32.totalorder %s120, 0
    %s123 = sadd.s32 %s122, 1
    %s124 = scalar_select %p121, %s122, %s123
    %p127 = pneg %p121
    %p128 = scmp.eq.s32.totalorder %s9, 1
    %p129 = por %p127, %p128
    %p130 = scmp.ne.s32.totalorder %s122, %s125
    %p131 = scmp.eq.s32.totalorder %s9, 0
    %p132 = por %p130, %p131
    %p133 = scmp.ne.s32.totalorder %s122, %s125
    %p134 = scmp.eq.s32.totalorder %s14, 1
    %p135 = por %p133, %p134
    %p136 = scmp.ne.s32.totalorder %s125, %s126
    %p137 = scmp.eq.s32.totalorder %s14, 0
    %p138 = por %p136, %p137
    %p139 = scmp.ne.s32.totalorder %s125, %s126
    %p140 = scmp.eq.s32.totalorder %s15, 1
    %p141 = por %p139, %p140
    %p143 = scmp.ne.s32.totalorder %s126, %s142
    %p144 = scmp.eq.s32.totalorder %s15, 0
    %p145 = por %p143, %p144
    %p146 = scmp.le.s32.totalorder 1, %s9
    %p147 = scmp.lt.s32.totalorder %s9, 3
    %p148 = pnand %p146, %p147
    %p149 = pneg %p148
    // Predicated region
    $region9: #{_lambda_.32} parent=5 // pred_check
      _
    $region10: #{_lambda_.32} parent=5 // pred_check_branch
      %151 = sbr.rel (%p148) target = $region12
    $region11: #{_lambda_.32} parent=5 // pred_region
      %s152 = ssub.s32 %s9, 1
      // Predicated region
      $region13: #{_lambda_.32} parent=11 // pred_check
        %p153 = pneg %p84
      $region14: #{_lambda_.32} parent=11 // pred_check_branch
        %155 = sbr.rel (%p153) target = $region16
      $region15: #{_lambda_.32} parent=11 // pred_region
        %s156 = smul.u32 16, %s21
        %p157 = scmp.lt.s32.totalorder %s156, 15
        %s158 = scalar_select %p157, %s156, 15
        %p159 = scmp.lt.s32.totalorder %s20, 0
        %s160 = scalar_select %p159, %s20, 0
        %s161 = sadd.s32 %s160, %s158
        %s162 = smul.addr %s161, 4
        %s163 = scalar_lea.vmem %s1, %s162
        %s164 = smul.u32 16, %s21
      $region16: #{_lambda_.32} parent=11 // pred_fallthru
        _
      // Predicated region
      $region17: #{_lambda_.32} parent=11 // pred_check
        %p165 = pneg %p110
      $region18: #{_lambda_.32} parent=11 // pred_check_branch
        %167 = sbr.rel (%p165) target = $region20
      $region19: #{_lambda_.32} parent=11 // pred_region
        %p168 = scmp.lt.s32.totalorder %s20, 0
        %s169 = scalar_select %p168, %s20, 0
        %s170 = scalar_lea.vmem %s2, %s169
      $region20: #{_lambda_.32} parent=11 // pred_fallthru
        _
    $region12: #{_lambda_.32} parent=5 // pred_fallthru
      _
    %p171 = scmp.lt.s32.totalorder %s9, 2
    // Predicated region
    $region21: #{_lambda_.32} parent=5 // pred_check
      %p172 = pneg %p171
    $region22: #{_lambda_.32} parent=5 // pred_check_branch
      %174 = sbr.rel (%p172) target = $region24
    $region23: #{_lambda_.32} parent=5 // pred_region
      // Predicated region
      $region25: #{_lambda_.32} parent=23 // pred_check
        %p175 = pneg %p50
      $region26: #{_lambda_.32} parent=23 // pred_check_branch
        %177 = sbr.rel (%p175) target = $region28
      $region27: #{_lambda_.32} parent=23 // pred_region
        %s178 = smul.u32 32, %s16
        %p179 = scmp.lt.s32.totalorder %s178, 63
        %s180 = scalar_select %p179, %s178, 63
        %p181 = scmp.lt.s32.totalorder %s18, 0
        %s182 = scalar_select %p181, %s18, 0
        %s183 = sadd.s32 %s182, %s180
        %s184 = smul.addr %s183, 4
        %s185 = scalar_lea.vmem %s0, %s184
        %s186 = smul.u32 32, %s16
      $region28: #{_lambda_.32} parent=23 // pred_fallthru
        _
    $region24: #{_lambda_.32} parent=5 // pred_fallthru
      _
    %p187 = scmp.le.s32.totalorder 1, %s9
    %p188 = scmp.lt.s32.totalorder %s9, 3
    %p189 = pnand %p187, %p188
    %p190 = pneg %p189
    // Predicated region
    $region29: #{_lambda_.32} parent=5 // pred_check
      _
    $region30: #{_lambda_.32} parent=5 // pred_check_branch
      %192 = sbr.rel (%p189) target = $region32
    $region31: #{_lambda_.32} parent=5 // pred_region
      %s193 = ssub.s32 %s9, 1
      %s194 = smul.u32 32, %s19
      %p195 = scmp.lt.s32.totalorder %s194, 63
      %s196 = scalar_select %p195, %s194, 63
      %p197 = scmp.lt.s32.totalorder %s21, 0
      %s198 = scalar_select %p197, %s21, 0
      %s199 = sadd.s32 %s198, %s196
      %s200 = smul.addr %s199, 4
      %s201 = scalar_lea.vmem %s0, %s200
      %p202 = pneg %p56
      %p203 = pneg %p53
      %s204 = smul.u32 16, %s21
      %p205 = scmp.lt.s32.totalorder %s204, 15
      %s206 = scalar_select %p205, %s204, 15
      %p207 = scmp.lt.s32.totalorder %s20, 0
      %s208 = scalar_select %p207, %s20, 0
      %s209 = sadd.s32 %s208, %s206
      %s210 = smul.addr %s209, 4
      %s211 = scalar_lea.vmem %s1, %s210
      %p212 = pneg %p84
      %p213 = pneg %p81
      %p214 = scmp.lt.s32.totalorder %s20, 0
      %s215 = scalar_select %p214, %s20, 0
      %s216 = scalar_lea.vmem %s2, %s215
      %p217 = pneg %p110
      %p218 = pneg %p107
      %p219 = pneg %p138
      %p220 = pneg %p135
      %s221 = smul.u32 32, %s19
      %p222 = scmp.lt.s32.totalorder %s221, 63
      %s223 = scalar_select %p222, %s221, 63
      %p224 = scmp.lt.s32.totalorder %s20, 0
      %s225 = scalar_select %p224, %s20, 0
      %s226 = sadd.s32 %s225, %s223
      %s227 = smul.addr %s226, 4
      %s228 = scalar_lea.vmem %s3, %s227
      %s229 = smul.u32 32, %s19
      %p230 = scmp.lt.s32.totalorder %s229, 63
      %s231 = scalar_select %p230, %s229, 63
      %p232 = scmp.lt.s32.totalorder %s21, 0
      %s233 = scalar_select %p232, %s21, 0
      %s234 = sadd.s32 %s233, %s231
      %s235 = smul.addr %s234, 4
      %s236 = scalar_lea.vmem %s0, %s235
      %s237 = smul.u32 32, %s19
      %s238 = smul.u32 16, %s21
      %p239 = scmp.lt.s32.totalorder %s238, 15
      %s240 = scalar_select %p239, %s238, 15
      %p241 = scmp.lt.s32.totalorder %s20, 0
      %s242 = scalar_select %p241, %s20, 0
      %s243 = sadd.s32 %s242, %s240
      %s244 = smul.addr %s243, 4
      %s245 = scalar_lea.vmem %s1, %s244
      %s246 = smul.u32 16, %s21
      %p247 = scmp.lt.s32.totalorder %s20, 0
      %s248 = scalar_select %p247, %s20, 0
      %s249 = scalar_lea.vmem %s2, %s248
      %s250 = smul.u32 32, %s19
      %p251 = scmp.lt.s32.totalorder %s250, 63
      %s252 = scalar_select %p251, %s250, 63
      %p253 = scmp.lt.s32.totalorder %s20, 0
      %s254 = scalar_select %p253, %s20, 0
      %s255 = sadd.s32 %s254, %s252
      %s256 = smul.addr %s255, 4
      %s257 = scalar_lea.vmem %s3, %s256
      %s258 = smul.u32 32, %s19
      %p260 = scmp.eq.s32.totalorder %s21, 0
      // Predicated region
      $region33: #{_lambda_.32} parent=31 // pred_check
        %p261 = pneg %p260
      $region34: #{_lambda_.32} parent=31 // pred_check_branch
        %263 = sbr.rel (%p261) target = $region36
      $region35: #{_lambda_.32} parent=31 // pred_region
        %264 = vst [vmem:[#allocation2] sm:$0xff] 0.0
        %265 = vst [vmem:[#allocation2 + $0x8] sm:$0xff] 0.0
        %266 = vst [vmem:[#allocation2 + $0x10] sm:$0xff] 0.0
        %267 = vst [vmem:[#allocation2 + $0x18] sm:$0xff] 0.0
        %268 = vst [vmem:[#allocation2 + $0x20] sm:$0xff] 0.0
        %269 = vst [vmem:[#allocation2 + $0x28] sm:$0xff] 0.0
        %270 = vst [vmem:[#allocation2 + $0x30] sm:$0xff] 0.0
        %271 = vst [vmem:[#allocation2 + $0x38] sm:$0xff] 0.0
        %272 = vst [vmem:[#allocation2 + $0x40] sm:$0xff] 0.0
        %273 = vst [vmem:[#allocation2 + $0x48] sm:$0xff] 0.0
        %274 = vst [vmem:[#allocation2 + $0x50] sm:$0xff] 0.0
        %275 = vst [vmem:[#allocation2 + $0x58] sm:$0xff] 0.0
        %276 = vst [vmem:[#allocation2 + $0x60] sm:$0xff] 0.0
        %277 = vst [vmem:[#allocation2 + $0x68] sm:$0xff] 0.0
        %278 = vst [vmem:[#allocation2 + $0x70] sm:$0xff] 0.0
        %279 = vst [vmem:[#allocation2 + $0x78] sm:$0xff] 0.0
        %280 = vst [vmem:[#allocation2 + $0x80] sm:$0xff] 0.0
        %281 = vst [vmem:[#allocation2 + $0x88] sm:$0xff] 0.0
        %282 = vst [vmem:[#allocation2 + $0x90] sm:$0xff] 0.0
        %283 = vst [vmem:[#allocation2 + $0x98] sm:$0xff] 0.0
        %284 = vst [vmem:[#allocation2 + $0xa0] sm:$0xff] 0.0
        %285 = vst [vmem:[#allocation2 + $0xa8] sm:$0xff] 0.0
        %286 = vst [vmem:[#allocation2 + $0xb0] sm:$0xff] 0.0
        %287 = vst [vmem:[#allocation2 + $0xb8] sm:$0xff] 0.0
        %288 = vst [vmem:[#allocation2 + $0xc0] sm:$0xff] 0.0
        %289 = vst [vmem:[#allocation2 + $0xc8] sm:$0xff] 0.0
        %290 = vst [vmem:[#allocation2 + $0xd0] sm:$0xff] 0.0
        %291 = vst [vmem:[#allocation2 + $0xd8] sm:$0xff] 0.0
        %292 = vst [vmem:[#allocation2 + $0xe0] sm:$0xff] 0.0
        %293 = vst [vmem:[#allocation2 + $0xe8] sm:$0xff] 0.0
        %294 = vst [vmem:[#allocation2 + $0xf0] sm:$0xff] 0.0
        %295 = vst [vmem:[#allocation2 + $0xf8] sm:$0xff] 0.0
      $region36: #{_lambda_.32} parent=31 // pred_fallthru
        _
      %v296 = vld [vmem:[#allocation2] sm:$0xff]
      %v297 = vld [vmem:[#allocation2 + $0x8] sm:$0xff]
      %v298 = vld [vmem:[#allocation2 + $0x10] sm:$0xff]
      %v299 = vld [vmem:[#allocation2 + $0x18] sm:$0xff]
      %v300 = vld [vmem:[#allocation2 + $0x20] sm:$0xff]
      %v301 = vld [vmem:[#allocation2 + $0x28] sm:$0xff]
      %v302 = vld [vmem:[#allocation2 + $0x30] sm:$0xff]
      %v303 = vld [vmem:[#allocation2 + $0x38] sm:$0xff]
      %v304 = vld [vmem:[#allocation2 + $0x40] sm:$0xff]
      %v305 = vld [vmem:[#allocation2 + $0x48] sm:$0xff]
      %v306 = vld [vmem:[#allocation2 + $0x50] sm:$0xff]
      %v307 = vld [vmem:[#allocation2 + $0x58] sm:$0xff]
      %v308 = vld [vmem:[#allocation2 + $0x60] sm:$0xff]
      %v309 = vld [vmem:[#allocation2 + $0x68] sm:$0xff]
      %v310 = vld [vmem:[#allocation2 + $0x70] sm:$0xff]
      %v311 = vld [vmem:[#allocation2 + $0x78] sm:$0xff]
      %v312 = vld [vmem:[#allocation2 + $0x80] sm:$0xff]
      %v313 = vld [vmem:[#allocation2 + $0x88] sm:$0xff]
      %v314 = vld [vmem:[#allocation2 + $0x90] sm:$0xff]
      %v315 = vld [vmem:[#allocation2 + $0x98] sm:$0xff]
      %v316 = vld [vmem:[#allocation2 + $0xa0] sm:$0xff]
      %v317 = vld [vmem:[#allocation2 + $0xa8] sm:$0xff]
      %v318 = vld [vmem:[#allocation2 + $0xb0] sm:$0xff]
      %v319 = vld [vmem:[#allocation2 + $0xb8] sm:$0xff]
      %v320 = vld [vmem:[#allocation2 + $0xc0] sm:$0xff]
      %v321 = vld [vmem:[#allocation2 + $0xc8] sm:$0xff]
      %v322 = vld [vmem:[#allocation2 + $0xd0] sm:$0xff]
      %v323 = vld [vmem:[#allocation2 + $0xd8] sm:$0xff]
      %v324 = vld [vmem:[#allocation2 + $0xe0] sm:$0xff]
      %v325 = vld [vmem:[#allocation2 + $0xe8] sm:$0xff]
      %v326 = vld [vmem:[#allocation2 + $0xf0] sm:$0xff]
      %v327 = vld [vmem:[#allocation2 + $0xf8] sm:$0xff]
      %v328 = vld [vmem:[%s236] sm:$0xf]
      %v329 = vld [vmem:[%s236 + $0x4] sm:$0xf]
      %v330 = vld [vmem:[%s236 + $0x8] sm:$0xf]
      %v331 = vld [vmem:[%s236 + $0xc] sm:$0xf]
      %v332 = vld [vmem:[%s236 + $0x10] sm:$0xf]
      %v333 = vld [vmem:[%s236 + $0x14] sm:$0xf]
      %v334 = vld [vmem:[%s236 + $0x18] sm:$0xf]
      %v335 = vld [vmem:[%s236 + $0x1c] sm:$0xf]
      %v336 = vld [vmem:[%s236 + $0x20] sm:$0xf]
      %v337 = vld [vmem:[%s236 + $0x24] sm:$0xf]
      %v338 = vld [vmem:[%s236 + $0x28] sm:$0xf]
      %v339 = vld [vmem:[%s236 + $0x2c] sm:$0xf]
      %v340 = vld [vmem:[%s236 + $0x30] sm:$0xf]
      %v341 = vld [vmem:[%s236 + $0x34] sm:$0xf]
      %v342 = vld [vmem:[%s236 + $0x38] sm:$0xf]
      %v343 = vld [vmem:[%s236 + $0x3c] sm:$0xf]
      %v344 = vld [vmem:[%s236 + $0x40] sm:$0xf]
      %v345 = vld [vmem:[%s236 + $0x44] sm:$0xf]
      %v346 = vld [vmem:[%s236 + $0x48] sm:$0xf]
      %v347 = vld [vmem:[%s236 + $0x4c] sm:$0xf]
      %v348 = vld [vmem:[%s236 + $0x50] sm:$0xf]
      %v349 = vld [vmem:[%s236 + $0x54] sm:$0xf]
      %v350 = vld [vmem:[%s236 + $0x58] sm:$0xf]
      %v351 = vld [vmem:[%s236 + $0x5c] sm:$0xf]
      %v352 = vld [vmem:[%s236 + $0x60] sm:$0xf]
      %v353 = vld [vmem:[%s236 + $0x64] sm:$0xf]
      %v354 = vld [vmem:[%s236 + $0x68] sm:$0xf]
      %v355 = vld [vmem:[%s236 + $0x6c] sm:$0xf]
      %v356 = vld [vmem:[%s236 + $0x70] sm:$0xf]
      %v357 = vld [vmem:[%s236 + $0x74] sm:$0xf]
      %v358 = vld [vmem:[%s236 + $0x78] sm:$0xf]
      %v359 = vld [vmem:[%s236 + $0x7c] sm:$0xf]
      %v360 = vld [vmem:[%s245] sm:$0xf]
      %v361 = vld [vmem:[%s245 + $0x4] sm:$0xf]
      %v362 = vld [vmem:[%s245 + $0x8] sm:$0xf]
      %v363 = vld [vmem:[%s245 + $0xc] sm:$0xf]
      %v364 = vld [vmem:[%s245 + $0x10] sm:$0xf]
      %v365 = vld [vmem:[%s245 + $0x14] sm:$0xf]
      %v366 = vld [vmem:[%s245 + $0x18] sm:$0xf]
      %v367 = vld [vmem:[%s245 + $0x1c] sm:$0xf]
      %v368 = vld [vmem:[%s245 + $0x20] sm:$0xf]
      %v369 = vld [vmem:[%s245 + $0x24] sm:$0xf]
      %v370 = vld [vmem:[%s245 + $0x28] sm:$0xf]
      %v371 = vld [vmem:[%s245 + $0x2c] sm:$0xf]
      %v372 = vld [vmem:[%s245 + $0x30] sm:$0xf]
      %v373 = vld [vmem:[%s245 + $0x34] sm:$0xf]
      %v374 = vld [vmem:[%s245 + $0x38] sm:$0xf]
      %v375 = vld [vmem:[%s245 + $0x3c] sm:$0xf]
      %v408 = vunpack.c.l.b16 %v328
      %v409 = vunpack.c.l.b16 %v329
      %v410 = vunpack.c.l.b16 %v330
      %v411 = vunpack.c.l.b16 %v331
      %v412 = vunpack.c.l.b16 %v332
      %v413 = vunpack.c.l.b16 %v333
      %v414 = vunpack.c.l.b16 %v334
      %v415 = vunpack.c.l.b16 %v335
      %v416 = vunpack.c.l.b16 %v336
      %v417 = vunpack.c.l.b16 %v337
      %v418 = vunpack.c.l.b16 %v338
      %v419 = vunpack.c.l.b16 %v339
      %v420 = vunpack.c.l.b16 %v340
      %v421 = vunpack.c.l.b16 %v341
      %v422 = vunpack.c.l.b16 %v342
      %v423 = vunpack.c.l.b16 %v343
      %v424 = vunpack.c.l.b16 %v344
      %v425 = vunpack.c.l.b16 %v345
      %v426 = vunpack.c.l.b16 %v346
      %v427 = vunpack.c.l.b16 %v347
      %v428 = vunpack.c.l.b16 %v348
      %v429 = vunpack.c.l.b16 %v349
      %v430 = vunpack.c.l.b16 %v350
      %v431 = vunpack.c.l.b16 %v351
      %v432 = vunpack.c.l.b16 %v352
      %v433 = vunpack.c.l.b16 %v353
      %v434 = vunpack.c.l.b16 %v354
      %v435 = vunpack.c.l.b16 %v355
      %v436 = vunpack.c.l.b16 %v356
      %v437 = vunpack.c.l.b16 %v357
      %v438 = vunpack.c.l.b16 %v358
      %v439 = vunpack.c.l.b16 %v359
      %v440 = vpack.c.b16 %v409, %v408
      %v441 = vpack.c.b16 %v411, %v410
      %v442 = vpack.c.b16 %v413, %v412
      %v443 = vpack.c.b16 %v415, %v414
      %v444 = vpack.c.b16 %v417, %v416
      %v445 = vpack.c.b16 %v419, %v418
      %v446 = vpack.c.b16 %v421, %v420
      %v447 = vpack.c.b16 %v423, %v422
      %v448 = vpack.c.b16 %v425, %v424
      %v449 = vpack.c.b16 %v427, %v426
      %v450 = vpack.c.b16 %v429, %v428
      %v451 = vpack.c.b16 %v431, %v430
      %v452 = vpack.c.b16 %v433, %v432
      %v453 = vpack.c.b16 %v435, %v434
      %v454 = vpack.c.b16 %v437, %v436
      %v455 = vpack.c.b16 %v439, %v438
      %v488 = vunpack.c.l.b16 %v360
      %v489 = vunpack.c.l.b16 %v361
      %v490 = vunpack.c.l.b16 %v362
      %v491 = vunpack.c.l.b16 %v363
      %v492 = vunpack.c.l.b16 %v364
      %v493 = vunpack.c.l.b16 %v365
      %v494 = vunpack.c.l.b16 %v366
      %v495 = vunpack.c.l.b16 %v367
      %v496 = vunpack.c.l.b16 %v368
      %v497 = vunpack.c.l.b16 %v369
      %v498 = vunpack.c.l.b16 %v370
      %v499 = vunpack.c.l.b16 %v371
      %v500 = vunpack.c.l.b16 %v372
      %v501 = vunpack.c.l.b16 %v373
      %v502 = vunpack.c.l.b16 %v374
      %v503 = vunpack.c.l.b16 %v375
      %v504 = vpack.c.b16 %v489, %v488
      %v505 = vpack.c.b16 %v491, %v490
      %v506 = vpack.c.b16 %v493, %v492
      %v507 = vpack.c.b16 %v495, %v494
      %v508 = vpack.c.b16 %v497, %v496
      %v509 = vpack.c.b16 %v499, %v498
      %v510 = vpack.c.b16 %v501, %v500
      %v511 = vpack.c.b16 %v503, %v502
      %520 = vmatprep.subr.bf16.mxu0 0
      %521 = vmatpush1.bf16.msra.mxu0 %v504
      %522 = vmatprep.subr.bf16.mxu0 0
      %523 = vmatpush1.bf16.msra.mxu0 %v505
      %524 = vmatprep.subr.bf16.mxu0 0
      %525 = vmatpush1.bf16.msra.mxu0 %v506
      %526 = vmatprep.subr.bf16.mxu0 0
      %527 = vmatpush1.bf16.msra.mxu0 %v507
      %528 = vmatprep.subr.bf16.mxu0 0
      %529 = vmatpush1.bf16.msra.mxu0 %v508
      %530 = vmatprep.subr.bf16.mxu0 0
      %531 = vmatpush1.bf16.msra.mxu0 %v509
      %532 = vmatprep.subr.bf16.mxu0 0
      %533 = vmatpush1.bf16.msra.mxu0 %v510
      %534 = vmatprep.subr.bf16.mxu0 0
      %535 = vmatpush1.bf16.msra.mxu0 %v511
      %536 = vmatprep.subr.bf16.mxu0 0
      %537 = vmatpush1.bf16.msra.mxu0 0
      %538 = vmatprep.subr.bf16.mxu0 0
      %539 = vmatpush1.bf16.msra.mxu0 0
      %540 = vmatprep.subr.bf16.mxu0 0
      %541 = vmatpush1.bf16.msra.mxu0 0
      %542 = vmatprep.subr.bf16.mxu0 0
      %543 = vmatpush1.bf16.msra.mxu0 0
      %544 = vmatprep.subr.bf16.mxu0 0
      %545 = vmatpush1.bf16.msra.mxu0 0
      %546 = vmatprep.subr.bf16.mxu0 0
      %547 = vmatpush1.bf16.msra.mxu0 0
      %548 = vmatprep.subr.bf16.mxu0 0
      %549 = vmatpush1.bf16.msra.mxu0 0
      %550 = vmatprep.subr.bf16.mxu0 0
      %551 = vmatpush1.bf16.msra.mxu0 0
      %552 = vmatprep.mubr.bf16.mxu0 0
      %553 = vmatmul.mubr.bf16.gmra.mrb[0].mxu0 %v440
      %v554 = vpop.f32.mrb[0].mxu0
      %v555 = vadd.f32 0.0, %v554
      %v556 = vpop.f32.mrb[0].mxu0
      %v557 = vpop.f32.mrb[0].mxu0
      %v558 = vadd.f32 0.0, %v557
      %v559 = vpop.f32.mrb[0].mxu0
      %560 = vmatprep.mubr.bf16.mxu0 0
      %561 = vmatmul.mubr.bf16.gmra.mrb[0].mxu0 %v441
      %v562 = vpop.f32.mrb[0].mxu0
      %v563 = vadd.f32 0.0, %v562
      %v564 = vpop.f32.mrb[0].mxu0
      %v565 = vpop.f32.mrb[0].mxu0
      %v566 = vadd.f32 0.0, %v565
      %v567 = vpop.f32.mrb[0].mxu0
      %568 = vmatprep.mubr.bf16.mxu0 0
      %569 = vmatmul.mubr.bf16.gmra.mrb[0].mxu0 %v442
      %v570 = vpop.f32.mrb[0].mxu0
      %v571 = vadd.f32 0.0, %v570
      %v572 = vpop.f32.mrb[0].mxu0
      %v573 = vpop.f32.mrb[0].mxu0
      %v574 = vadd.f32 0.0, %v573
      %v575 = vpop.f32.mrb[0].mxu0
      %576 = vmatprep.mubr.bf16.mxu0 0
      %577 = vmatmul.mubr.bf16.gmra.mrb[0].mxu0 %v443
      %v578 = vpop.f32.mrb[0].mxu0
      %v579 = vadd.f32 0.0, %v578
      %v580 = vpop.f32.mrb[0].mxu0
      %v581 = vpop.f32.mrb[0].mxu0
      %v582 = vadd.f32 0.0, %v581
      %v583 = vpop.f32.mrb[0].mxu0
      %584 = vmatprep.mubr.bf16.mxu0 0
      %585 = vmatmul.mubr.bf16.gmra.mrb[0].mxu0 %v444
      %v586 = vpop.f32.mrb[0].mxu0
      %v587 = vadd.f32 0.0, %v586
      %v588 = vpop.f32.mrb[0].mxu0
      %v589 = vpop.f32.mrb[0].mxu0
      %v590 = vadd.f32 0.0, %v589
      %v591 = vpop.f32.mrb[0].mxu0
      %592 = vmatprep.mubr.bf16.mxu0 0
      %593 = vmatmul.mubr.bf16.gmra.mrb[0].mxu0 %v445
      %v594 = vpop.f32.mrb[0].mxu0
      %v595 = vadd.f32 0.0, %v594
      %v596 = vpop.f32.mrb[0].mxu0
      %v597 = vpop.f32.mrb[0].mxu0
      %v598 = vadd.f32 0.0, %v597
      %v599 = vpop.f32.mrb[0].mxu0
      %600 = vmatprep.mubr.bf16.mxu0 0
      %601 = vmatmul.mubr.bf16.gmra.mrb[0].mxu0 %v446
      %v602 = vpop.f32.mrb[0].mxu0
      %v603 = vadd.f32 0.0, %v602
      %v604 = vpop.f32.mrb[0].mxu0
      %v605 = vpop.f32.mrb[0].mxu0
      %v606 = vadd.f32 0.0, %v605
      %v607 = vpop.f32.mrb[0].mxu0
      %608 = vmatprep.mubr.bf16.mxu0 0
      %609 = vmatmul.mubr.bf16.gmra.mrb[0].mxu0 %v447
      %v610 = vpop.f32.mrb[0].mxu0
      %v611 = vadd.f32 0.0, %v610
      %v612 = vpop.f32.mrb[0].mxu0
      %v613 = vpop.f32.mrb[0].mxu0
      %v614 = vadd.f32 0.0, %v613
      %v615 = vpop.f32.mrb[0].mxu0
      %616 = vmatprep.mubr.bf16.mxu0 0
      %617 = vmatmul.mubr.bf16.gmra.mrb[0].mxu0 %v448
      %v618 = vpop.f32.mrb[0].mxu0
      %v619 = vadd.f32 0.0, %v618
      %v620 = vpop.f32.mrb[0].mxu0
      %v621 = vpop.f32.mrb[0].mxu0
      %v622 = vadd.f32 0.0, %v621
      %v623 = vpop.f32.mrb[0].mxu0
      %624 = vmatprep.mubr.bf16.mxu0 0
      %625 = vmatmul.mubr.bf16.gmra.mrb[0].mxu0 %v449
      %v626 = vpop.f32.mrb[0].mxu0
      %v627 = vadd.f32 0.0, %v626
      %v628 = vpop.f32.mrb[0].mxu0
      %v629 = vpop.f32.mrb[0].mxu0
      %v630 = vadd.f32 0.0, %v629
      %v631 = vpop.f32.mrb[0].mxu0
      %632 = vmatprep.mubr.bf16.mxu0 0
      %633 = vmatmul.mubr.bf16.gmra.mrb[0].mxu0 %v450
      %v634 = vpop.f32.mrb[0].mxu0
      %v635 = vadd.f32 0.0, %v634
      %v636 = vpop.f32.mrb[0].mxu0
      %v637 = vpop.f32.mrb[0].mxu0
      %v638 = vadd.f32 0.0, %v637
      %v639 = vpop.f32.mrb[0].mxu0
      %640 = vmatprep.mubr.bf16.mxu0 0
      %641 = vmatmul.mubr.bf16.gmra.mrb[0].mxu0 %v451
      %v642 = vpop.f32.mrb[0].mxu0
      %v643 = vadd.f32 0.0, %v642
      %v644 = vpop.f32.mrb[0].mxu0
      %v645 = vpop.f32.mrb[0].mxu0
      %v646 = vadd.f32 0.0, %v645
      %v647 = vpop.f32.mrb[0].mxu0
      %648 = vmatprep.mubr.bf16.mxu0 0
      %649 = vmatmul.mubr.bf16.gmra.mrb[0].mxu0 %v452
      %v650 = vpop.f32.mrb[0].mxu0
      %v651 = vadd.f32 0.0, %v650
      %v652 = vpop.f32.mrb[0].mxu0
      %v653 = vpop.f32.mrb[0].mxu0
      %v654 = vadd.f32 0.0, %v653
      %v655 = vpop.f32.mrb[0].mxu0
      %656 = vmatprep.mubr.bf16.mxu0 0
      %657 = vmatmul.mubr.bf16.gmra.mrb[0].mxu0 %v453
      %v658 = vpop.f32.mrb[0].mxu0
      %v659 = vadd.f32 0.0, %v658
      %v660 = vpop.f32.mrb[0].mxu0
      %v661 = vpop.f32.mrb[0].mxu0
      %v662 = vadd.f32 0.0, %v661
      %v663 = vpop.f32.mrb[0].mxu0
      %664 = vmatprep.mubr.bf16.mxu0 0
      %665 = vmatmul.mubr.bf16.gmra.mrb[0].mxu0 %v454
      %v666 = vpop.f32.mrb[0].mxu0
      %v667 = vadd.f32 0.0, %v666
      %v668 = vpop.f32.mrb[0].mxu0
      %v669 = vpop.f32.mrb[0].mxu0
      %v670 = vadd.f32 0.0, %v669
      %v671 = vpop.f32.mrb[0].mxu0
      %672 = vmatprep.mubr.bf16.mxu0 0
      %673 = vmatmul.mubr.bf16.gmra.mrb[0].mxu0 %v455
      %v674 = vpop.f32.mrb[0].mxu0
      %v675 = vadd.f32 0.0, %v674
      %v676 = vpop.f32.mrb[0].mxu0
      %v677 = vpop.f32.mrb[0].mxu0
      %v678 = vadd.f32 0.0, %v677
      %v679 = vpop.f32.mrb[0].mxu0
      %680 = vdwg.mxu0
      %v681 = vadd.f32 %v296, %v555
      %v682 = vadd.f32 %v297, %v558
      %v683 = vadd.f32 %v298, %v563
      %v684 = vadd.f32 %v299, %v566
      %v685 = vadd.f32 %v300, %v571
      %v686 = vadd.f32 %v301, %v574
      %v687 = vadd.f32 %v302, %v579
      %v688 = vadd.f32 %v303, %v582
      %v689 = vadd.f32 %v304, %v587
      %v690 = vadd.f32 %v305, %v590
      %v691 = vadd.f32 %v306, %v595
      %v692 = vadd.f32 %v307, %v598
      %v693 = vadd.f32 %v308, %v603
      %v694 = vadd.f32 %v309, %v606
      %v695 = vadd.f32 %v310, %v611
      %v696 = vadd.f32 %v311, %v614
      %v697 = vadd.f32 %v312, %v619
      %v698 = vadd.f32 %v313, %v622
      %v699 = vadd.f32 %v314, %v627
      %v700 = vadd.f32 %v315, %v630
      %v701 = vadd.f32 %v316, %v635
      %v702 = vadd.f32 %v317, %v638
      %v703 = vadd.f32 %v318, %v643
      %v704 = vadd.f32 %v319, %v646
      %v705 = vadd.f32 %v320, %v651
      %v706 = vadd.f32 %v321, %v654
      %v707 = vadd.f32 %v322, %v659
      %v708 = vadd.f32 %v323, %v662
      %v709 = vadd.f32 %v324, %v667
      %v710 = vadd.f32 %v325, %v670
      %v711 = vadd.f32 %v326, %v675
      %v712 = vadd.f32 %v327, %v678
      %713 = vst [vmem:[#allocation2] sm:$0xff] %v681
      %714 = vst [vmem:[#allocation2 + $0x8] sm:$0xff] %v682
      %715 = vst [vmem:[#allocation2 + $0x10] sm:$0xff] %v683
      %716 = vst [vmem:[#allocation2 + $0x18] sm:$0xff] %v684
      %717 = vst [vmem:[#allocation2 + $0x20] sm:$0xff] %v685
      %718 = vst [vmem:[#allocation2 + $0x28] sm:$0xff] %v686
      %719 = vst [vmem:[#allocation2 + $0x30] sm:$0xff] %v687
      %720 = vst [vmem:[#allocation2 + $0x38] sm:$0xff] %v688
      %721 = vst [vmem:[#allocation2 + $0x40] sm:$0xff] %v689
      %722 = vst [vmem:[#allocation2 + $0x48] sm:$0xff] %v690
      %723 = vst [vmem:[#allocation2 + $0x50] sm:$0xff] %v691
      %724 = vst [vmem:[#allocation2 + $0x58] sm:$0xff] %v692
      %725 = vst [vmem:[#allocation2 + $0x60] sm:$0xff] %v693
      %726 = vst [vmem:[#allocation2 + $0x68] sm:$0xff] %v694
      %727 = vst [vmem:[#allocation2 + $0x70] sm:$0xff] %v695
      %728 = vst [vmem:[#allocation2 + $0x78] sm:$0xff] %v696
      %729 = vst [vmem:[#allocation2 + $0x80] sm:$0xff] %v697
      %730 = vst [vmem:[#allocation2 + $0x88] sm:$0xff] %v698
      %731 = vst [vmem:[#allocation2 + $0x90] sm:$0xff] %v699
      %732 = vst [vmem:[#allocation2 + $0x98] sm:$0xff] %v700
      %733 = vst [vmem:[#allocation2 + $0xa0] sm:$0xff] %v701
      %734 = vst [vmem:[#allocation2 + $0xa8] sm:$0xff] %v702
      %735 = vst [vmem:[#allocation2 + $0xb0] sm:$0xff] %v703
      %736 = vst [vmem:[#allocation2 + $0xb8] sm:$0xff] %v704
      %737 = vst [vmem:[#allocation2 + $0xc0] sm:$0xff] %v705
      %738 = vst [vmem:[#allocation2 + $0xc8] sm:$0xff] %v706
      %739 = vst [vmem:[#allocation2 + $0xd0] sm:$0xff] %v707
      %740 = vst [vmem:[#allocation2 + $0xd8] sm:$0xff] %v708
      %741 = vst [vmem:[#allocation2 + $0xe0] sm:$0xff] %v709
      %742 = vst [vmem:[#allocation2 + $0xe8] sm:$0xff] %v710
      %743 = vst [vmem:[#allocation2 + $0xf0] sm:$0xff] %v711
      %744 = vst [vmem:[#allocation2 + $0xf8] sm:$0xff] %v712
      // Predicated region
      $region37: #{_lambda_.32} parent=31 // pred_check
        %p745 = pneg %p260
      $region38: #{_lambda_.32} parent=31 // pred_check_branch
        %747 = sbr.rel (%p745) target = $region40
      $region39: #{_lambda_.32} parent=31 // pred_region
        %v748 = vld [vmem:[#allocation2] sm:$0xff]
        %v749 = vld [vmem:[#allocation2 + $0x8] sm:$0xff]
        %v750 = vld [vmem:[#allocation2 + $0x10] sm:$0xff]
        %v751 = vld [vmem:[#allocation2 + $0x18] sm:$0xff]
        %v752 = vld [vmem:[#allocation2 + $0x20] sm:$0xff]
        %v753 = vld [vmem:[#allocation2 + $0x28] sm:$0xff]
        %v754 = vld [vmem:[#allocation2 + $0x30] sm:$0xff]
        %v755 = vld [vmem:[#allocation2 + $0x38] sm:$0xff]
        %v756 = vld [vmem:[#allocation2 + $0x40] sm:$0xff]
        %v757 = vld [vmem:[#allocation2 + $0x48] sm:$0xff]
        %v758 = vld [vmem:[#allocation2 + $0x50] sm:$0xff]
        %v759 = vld [vmem:[#allocation2 + $0x58] sm:$0xff]
        %v760 = vld [vmem:[#allocation2 + $0x60] sm:$0xff]
        %v761 = vld [vmem:[#allocation2 + $0x68] sm:$0xff]
        %v762 = vld [vmem:[#allocation2 + $0x70] sm:$0xff]
        %v763 = vld [vmem:[#allocation2 + $0x78] sm:$0xff]
        %v764 = vld [vmem:[#allocation2 + $0x80] sm:$0xff]
        %v765 = vld [vmem:[#allocation2 + $0x88] sm:$0xff]
        %v766 = vld [vmem:[#allocation2 + $0x90] sm:$0xff]
        %v767 = vld [vmem:[#allocation2 + $0x98] sm:$0xff]
        %v768 = vld [vmem:[#allocation2 + $0xa0] sm:$0xff]
        %v769 = vld [vmem:[#allocation2 + $0xa8] sm:$0xff]
        %v770 = vld [vmem:[#allocation2 + $0xb0] sm:$0xff]
        %v771 = vld [vmem:[#allocation2 + $0xb8] sm:$0xff]
        %v772 = vld [vmem:[#allocation2 + $0xc0] sm:$0xff]
        %v773 = vld [vmem:[#allocation2 + $0xc8] sm:$0xff]
        %v774 = vld [vmem:[#allocation2 + $0xd0] sm:$0xff]
        %v775 = vld [vmem:[#allocation2 + $0xd8] sm:$0xff]
        %v776 = vld [vmem:[#allocation2 + $0xe0] sm:$0xff]
        %v777 = vld [vmem:[#allocation2 + $0xe8] sm:$0xff]
        %v778 = vld [vmem:[#allocation2 + $0xf0] sm:$0xff]
        %v779 = vld [vmem:[#allocation2 + $0xf8] sm:$0xff]
        %v780 = vld [vmem:[%s249] sm:$0x1]
        %v782 = vlaneseq
        %v783 = vshrl.u32 %v782, 7
        %v784 = vsub.s32 0, %v783
        %v785 = vrot.slane %v780, %v784
        %v787 = vadd.f32 %v748, %v785
        %v788 = vadd.f32 %v749, %v785
        %v789 = vadd.f32 %v750, %v785
        %v790 = vadd.f32 %v751, %v785
        %v791 = vadd.f32 %v752, %v785
        %v792 = vadd.f32 %v753, %v785
        %v793 = vadd.f32 %v754, %v785
        %v794 = vadd.f32 %v755, %v785
        %v795 = vadd.f32 %v756, %v785
        %v796 = vadd.f32 %v757, %v785
        %v797 = vadd.f32 %v758, %v785
        %v798 = vadd.f32 %v759, %v785
        %v799 = vadd.f32 %v760, %v785
        %v800 = vadd.f32 %v761, %v785
        %v801 = vadd.f32 %v762, %v785
        %v802 = vadd.f32 %v763, %v785
        %v803 = vadd.f32 %v764, %v785
        %v804 = vadd.f32 %v765, %v785
        %v805 = vadd.f32 %v766, %v785
        %v806 = vadd.f32 %v767, %v785
        %v807 = vadd.f32 %v768, %v785
        %v808 = vadd.f32 %v769, %v785
        %v809 = vadd.f32 %v770, %v785
        %v810 = vadd.f32 %v771, %v785
        %v811 = vadd.f32 %v772, %v785
        %v812 = vadd.f32 %v773, %v785
        %v813 = vadd.f32 %v774, %v785
        %v814 = vadd.f32 %v775, %v785
        %v815 = vadd.f32 %v776, %v785
        %v816 = vadd.f32 %v777, %v785
        %v817 = vadd.f32 %v778, %v785
        %v818 = vadd.f32 %v779, %v785
        %vm819 = vcmp.ge.f32.partialorder %v787, 0.0
        %vm820 = vcmp.ge.f32.partialorder %v788, 0.0
        %vm821 = vcmp.ge.f32.partialorder %v789, 0.0
        %vm822 = vcmp.ge.f32.partialorder %v790, 0.0
        %vm823 = vcmp.ge.f32.partialorder %v791, 0.0
        %vm824 = vcmp.ge.f32.partialorder %v792, 0.0
        %vm825 = vcmp.ge.f32.partialorder %v793, 0.0
        %vm826 = vcmp.ge.f32.partialorder %v794, 0.0
        %vm827 = vcmp.ge.f32.partialorder %v795, 0.0
        %vm828 = vcmp.ge.f32.partialorder %v796, 0.0
        %vm829 = vcmp.ge.f32.partialorder %v797, 0.0
        %vm830 = vcmp.ge.f32.partialorder %v798, 0.0
        %vm831 = vcmp.ge.f32.partialorder %v799, 0.0
        %vm832 = vcmp.ge.f32.partialorder %v800, 0.0
        %vm833 = vcmp.ge.f32.partialorder %v801, 0.0
        %vm834 = vcmp.ge.f32.partialorder %v802, 0.0
        %vm835 = vcmp.ge.f32.partialorder %v803, 0.0
        %vm836 = vcmp.ge.f32.partialorder %v804, 0.0
        %vm837 = vcmp.ge.f32.partialorder %v805, 0.0
        %vm838 = vcmp.ge.f32.partialorder %v806, 0.0
        %vm839 = vcmp.ge.f32.partialorder %v807, 0.0
        %vm840 = vcmp.ge.f32.partialorder %v808, 0.0
        %vm841 = vcmp.ge.f32.partialorder %v809, 0.0
        %vm842 = vcmp.ge.f32.partialorder %v810, 0.0
        %vm843 = vcmp.ge.f32.partialorder %v811, 0.0
        %vm844 = vcmp.ge.f32.partialorder %v812, 0.0
        %vm845 = vcmp.ge.f32.partialorder %v813, 0.0
        %vm846 = vcmp.ge.f32.partialorder %v814, 0.0
        %vm847 = vcmp.ge.f32.partialorder %v815, 0.0
        %vm848 = vcmp.ge.f32.partialorder %v816, 0.0
        %vm849 = vcmp.ge.f32.partialorder %v817, 0.0
        %vm850 = vcmp.ge.f32.partialorder %v818, 0.0
        %v851 = vmul.f32 %v787, 0.2
        %v852 = vmul.f32 %v788, 0.2
        %v853 = vmul.f32 %v789, 0.2
        %v854 = vmul.f32 %v790, 0.2
        %v855 = vmul.f32 %v791, 0.2
        %v856 = vmul.f32 %v792, 0.2
        %v857 = vmul.f32 %v793, 0.2
        %v858 = vmul.f32 %v794, 0.2
        %v859 = vmul.f32 %v795, 0.2
        %v860 = vmul.f32 %v796, 0.2
        %v861 = vmul.f32 %v797, 0.2
        %v862 = vmul.f32 %v798, 0.2
        %v863 = vmul.f32 %v799, 0.2
        %v864 = vmul.f32 %v800, 0.2
        %v865 = vmul.f32 %v801, 0.2
        %v866 = vmul.f32 %v802, 0.2
        %v867 = vmul.f32 %v803, 0.2
        %v868 = vmul.f32 %v804, 0.2
        %v869 = vmul.f32 %v805, 0.2
        %v870 = vmul.f32 %v806, 0.2
        %v871 = vmul.f32 %v807, 0.2
        %v872 = vmul.f32 %v808, 0.2
        %v873 = vmul.f32 %v809, 0.2
        %v874 = vmul.f32 %v810, 0.2
        %v875 = vmul.f32 %v811, 0.2
        %v876 = vmul.f32 %v812, 0.2
        %v877 = vmul.f32 %v813, 0.2
        %v878 = vmul.f32 %v814, 0.2
        %v879 = vmul.f32 %v815, 0.2
        %v880 = vmul.f32 %v816, 0.2
        %v881 = vmul.f32 %v817, 0.2
        %v882 = vmul.f32 %v818, 0.2
        %v883 = vsel %vm819, %v787, %v851
        %v884 = vsel %vm820, %v788, %v852
        %v885 = vsel %vm821, %v789, %v853
        %v886 = vsel %vm822, %v790, %v854
        %v887 = vsel %vm823, %v791, %v855
        %v888 = vsel %vm824, %v792, %v856
        %v889 = vsel %vm825, %v793, %v857
        %v890 = vsel %vm826, %v794, %v858
        %v891 = vsel %vm827, %v795, %v859
        %v892 = vsel %vm828, %v796, %v860
        %v893 = vsel %vm829, %v797, %v861
        %v894 = vsel %vm830, %v798, %v862
        %v895 = vsel %vm831, %v799, %v863
        %v896 = vsel %vm832, %v800, %v864
        %v897 = vsel %vm833, %v801, %v865
        %v898 = vsel %vm834, %v802, %v866
        %v899 = vsel %vm835, %v803, %v867
        %v900 = vsel %vm836, %v804, %v868
        %v901 = vsel %vm837, %v805, %v869
        %v902 = vsel %vm838, %v806, %v870
        %v903 = vsel %vm839, %v807, %v871
        %v904 = vsel %vm840, %v808, %v872
        %v905 = vsel %vm841, %v809, %v873
        %v906 = vsel %vm842, %v810, %v874
        %v907 = vsel %vm843, %v811, %v875
        %v908 = vsel %vm844, %v812, %v876
        %v909 = vsel %vm845, %v813, %v877
        %v910 = vsel %vm846, %v814, %v878
        %v911 = vsel %vm847, %v815, %v879
        %v912 = vsel %vm848, %v816, %v880
        %v913 = vsel %vm849, %v817, %v881
        %v914 = vsel %vm850, %v818, %v882
        %v915 = vpack.c.bf16 %v884, %v883
        %v916 = vpack.c.bf16 %v886, %v885
        %v917 = vpack.c.bf16 %v888, %v887
        %v918 = vpack.c.bf16 %v890, %v889
        %v919 = vpack.c.bf16 %v892, %v891
        %v920 = vpack.c.bf16 %v894, %v893
        %v921 = vpack.c.bf16 %v896, %v895
        %v922 = vpack.c.bf16 %v898, %v897
        %v923 = vpack.c.bf16 %v900, %v899
        %v924 = vpack.c.bf16 %v902, %v901
        %v925 = vpack.c.bf16 %v904, %v903
        %v926 = vpack.c.bf16 %v906, %v905
        %v927 = vpack.c.bf16 %v908, %v907
        %v928 = vpack.c.bf16 %v910, %v909
        %v929 = vpack.c.bf16 %v912, %v911
        %v930 = vpack.c.bf16 %v914, %v913
        %v947 = vunpack.c.l.b16 %v915
        %v948 = vunpack.c.h.b16 %v915
        %v949 = vunpack.c.l.b16 %v916
        %v950 = vunpack.c.h.b16 %v916
        %v951 = vunpack.c.l.b16 %v917
        %v952 = vunpack.c.h.b16 %v917
        %v953 = vunpack.c.l.b16 %v918
        %v954 = vunpack.c.h.b16 %v918
        %v955 = vunpack.c.l.b16 %v919
        %v956 = vunpack.c.h.b16 %v919
        %v957 = vunpack.c.l.b16 %v920
        %v958 = vunpack.c.h.b16 %v920
        %v959 = vunpack.c.l.b16 %v921
        %v960 = vunpack.c.h.b16 %v921
        %v961 = vunpack.c.l.b16 %v922
        %v962 = vunpack.c.h.b16 %v922
        %v963 = vunpack.c.l.b16 %v923
        %v964 = vunpack.c.h.b16 %v923
        %v965 = vunpack.c.l.b16 %v924
        %v966 = vunpack.c.h.b16 %v924
        %v967 = vunpack.c.l.b16 %v925
        %v968 = vunpack.c.h.b16 %v925
        %v969 = vunpack.c.l.b16 %v926
        %v970 = vunpack.c.h.b16 %v926
        %v971 = vunpack.c.l.b16 %v927
        %v972 = vunpack.c.h.b16 %v927
        %v973 = vunpack.c.l.b16 %v928
        %v974 = vunpack.c.h.b16 %v928
        %v975 = vunpack.c.l.b16 %v929
        %v976 = vunpack.c.h.b16 %v929
        %v977 = vunpack.c.l.b16 %v930
        %v978 = vunpack.c.h.b16 %v930
        %v979 = vpack.c.b16 %v947, %v947
        %v980 = vpack.c.b16 %v948, %v948
        %v981 = vpack.c.b16 %v949, %v949
        %v982 = vpack.c.b16 %v950, %v950
        %v983 = vpack.c.b16 %v951, %v951
        %v984 = vpack.c.b16 %v952, %v952
        %v985 = vpack.c.b16 %v953, %v953
        %v986 = vpack.c.b16 %v954, %v954
        %v987 = vpack.c.b16 %v955, %v955
        %v988 = vpack.c.b16 %v956, %v956
        %v989 = vpack.c.b16 %v957, %v957
        %v990 = vpack.c.b16 %v958, %v958
        %v991 = vpack.c.b16 %v959, %v959
        %v992 = vpack.c.b16 %v960, %v960
        %v993 = vpack.c.b16 %v961, %v961
        %v994 = vpack.c.b16 %v962, %v962
        %v995 = vpack.c.b16 %v963, %v963
        %v996 = vpack.c.b16 %v964, %v964
        %v997 = vpack.c.b16 %v965, %v965
        %v998 = vpack.c.b16 %v966, %v966
        %v999 = vpack.c.b16 %v967, %v967
        %v1000 = vpack.c.b16 %v968, %v968
        %v1001 = vpack.c.b16 %v969, %v969
        %v1002 = vpack.c.b16 %v970, %v970
        %v1003 = vpack.c.b16 %v971, %v971
        %v1004 = vpack.c.b16 %v972, %v972
        %v1005 = vpack.c.b16 %v973, %v973
        %v1006 = vpack.c.b16 %v974, %v974
        %v1007 = vpack.c.b16 %v975, %v975
        %v1008 = vpack.c.b16 %v976, %v976
        %v1009 = vpack.c.b16 %v977, %v977
        %v1010 = vpack.c.b16 %v978, %v978
        %1043 = vst [vmem:[%s257] sm:$0xf] %v979
        %1044 = vst [vmem:[%s257 + $0x4] sm:$0xf] %v980
        %1045 = vst [vmem:[%s257 + $0x8] sm:$0xf] %v981
        %1046 = vst [vmem:[%s257 + $0xc] sm:$0xf] %v982
        %1047 = vst [vmem:[%s257 + $0x10] sm:$0xf] %v983
        %1048 = vst [vmem:[%s257 + $0x14] sm:$0xf] %v984
        %1049 = vst [vmem:[%s257 + $0x18] sm:$0xf] %v985
        %1050 = vst [vmem:[%s257 + $0x1c] sm:$0xf] %v986
        %1051 = vst [vmem:[%s257 + $0x20] sm:$0xf] %v987
        %1052 = vst [vmem:[%s257 + $0x24] sm:$0xf] %v988
        %1053 = vst [vmem:[%s257 + $0x28] sm:$0xf] %v989
        %1054 = vst [vmem:[%s257 + $0x2c] sm:$0xf] %v990
        %1055 = vst [vmem:[%s257 + $0x30] sm:$0xf] %v991
        %1056 = vst [vmem:[%s257 + $0x34] sm:$0xf] %v992
        %1057 = vst [vmem:[%s257 + $0x38] sm:$0xf] %v993
        %1058 = vst [vmem:[%s257 + $0x3c] sm:$0xf] %v994
        %1059 = vst [vmem:[%s257 + $0x40] sm:$0xf] %v995
        %1060 = vst [vmem:[%s257 + $0x44] sm:$0xf] %v996
        %1061 = vst [vmem:[%s257 + $0x48] sm:$0xf] %v997
        %1062 = vst [vmem:[%s257 + $0x4c] sm:$0xf] %v998
        %1063 = vst [vmem:[%s257 + $0x50] sm:$0xf] %v999
        %1064 = vst [vmem:[%s257 + $0x54] sm:$0xf] %v1000
        %1065 = vst [vmem:[%s257 + $0x58] sm:$0xf] %v1001
        %1066 = vst [vmem:[%s257 + $0x5c] sm:$0xf] %v1002
        %1067 = vst [vmem:[%s257 + $0x60] sm:$0xf] %v1003
        %1068 = vst [vmem:[%s257 + $0x64] sm:$0xf] %v1004
        %1069 = vst [vmem:[%s257 + $0x68] sm:$0xf] %v1005
        %1070 = vst [vmem:[%s257 + $0x6c] sm:$0xf] %v1006
        %1071 = vst [vmem:[%s257 + $0x70] sm:$0xf] %v1007
        %1072 = vst [vmem:[%s257 + $0x74] sm:$0xf] %v1008
        %1073 = vst [vmem:[%s257 + $0x78] sm:$0xf] %v1009
        %1074 = vst [vmem:[%s257 + $0x7c] sm:$0xf] %v1010
      $region40: #{_lambda_.32} parent=31 // pred_fallthru
        _
      %s1075 = smul.u32 32, %s19
      %p1076 = scmp.lt.s32.totalorder %s1075, 63
      %s1077 = scalar_select %p1076, %s1075, 63
      %p1078 = scmp.lt.s32.totalorder %s20, 0
      %s1079 = scalar_select %p1078, %s20, 0
      %s1080 = sadd.s32 %s1079, %s1077
      %s1081 = smul.addr %s1080, 4
      %s1082 = scalar_lea.vmem %s3, %s1081
      // Predicated region
      $region41: #{_lambda_.32} parent=31 // pred_check
        %p1083 = pneg %p135
      $region42: #{_lambda_.32} parent=31 // pred_check_branch
        %1085 = sbr.rel (%p1083) target = $region44
      $region43: #{_lambda_.32} parent=31 // pred_region
        %s1086 = smul.u32 32, %s19
      $region44: #{_lambda_.32} parent=31 // pred_fallthru
        _
    $region32: #{_lambda_.32} parent=5 // pred_fallthru
      _
    %p1087 = scmp.le.s32.totalorder 2, %s9
    // Predicated region
    $region45: #{_lambda_.32} parent=5 // pred_check
      %p1088 = pneg %p1087
    $region46: #{_lambda_.32} parent=5 // pred_check_branch
      %1090 = sbr.rel (%p1088) target = $region48
    $region47: #{_lambda_.32} parent=5 // pred_region
      %s1091 = ssub.s32 %s9, 2
      // Predicated region
      $region49: #{_lambda_.32} parent=47 // pred_check
        %p1092 = pneg %p141
      $region50: #{_lambda_.32} parent=47 // pred_check_branch
        %1094 = sbr.rel (%p1092) target = $region52
      $region51: #{_lambda_.32} parent=47 // pred_region
        %s1095 = smul.u32 32, %s22
        %p1096 = scmp.lt.s32.totalorder %s1095, 63
        %s1097 = scalar_select %p1096, %s1095, 63
        %p1098 = scmp.lt.s32.totalorder %s23, 0
        %s1099 = scalar_select %p1098, %s23, 0
        %s1100 = sadd.s32 %s1099, %s1097
        %s1101 = smul.addr %s1100, 4
        %s1102 = scalar_lea.vmem %s3, %s1101
      $region52: #{_lambda_.32} parent=47 // pred_fallthru
        _
    $region48: #{_lambda_.32} parent=5 // pred_fallthru
      _
  $region6: #{_lambda_.32} parent=0 // loop_footer
    %s13 = sadd.s32 1, %s9
  $region7: #{_lambda_.32} parent=0 // loop_footer_branch
    %8 = sbr.rel target = $region3
  $region8: #{_lambda_.32} parent=0 // loop_exit
    _

// kernel: _lambda_.33
$region0: #{_lambda_.33}
  #allocation0 [shape = 'u32[]', space=smem, size = 0x4, offset = 0x4, fixed_abs, tag = 'smem constant byte address 0x4 - core index']
  #allocation1 [shape = 'u32[144,128]{1,0:T(1,128)}', space=vmem, size = 0x12000, scoped, tag = 'internal scratch']
  #allocation2 [shape = 'f32[128,128]{1,0:T(8,128)}', space=vmem, size = 0x10000, scoped, tag = 'scratch operand']
  %s0 = inlined_call_operand.vmem [shape: bf16[128,128], index: 0, kind: input, shape index: {}]
  %s1 = inlined_call_operand.vmem [shape: bf16[128,128], index: 1, kind: input, shape index: {}]
  %s2 = inlined_call_operand.vmem [shape: f32[1,128], index: 2, kind: input, shape index: {}]
  %s3 = inlined_call_operand.vmem [shape: bf16[128,128], index: 3, kind: output, shape index: {}]
  %s4 = sld [smem:[#allocation0]]
  $region30: #{_lambda_.33} parent=0
    _
  %s6 = ssub.s32 1, %s4
  %s7 = scalar_select 0, %s6, %s4
  // Predicated region
  $region2: #{_lambda_.33} parent=0 // pred_check
    _
  $region3: #{_lambda_.33} parent=0 // pred_check_branch
    %9 = sbr.rel (0) target = $region5
  $region4: #{_lambda_.33} parent=0 // pred_region
    _
  $region5: #{_lambda_.33} parent=0 // pred_fallthru
    _
  // Predicated region
  $region6: #{_lambda_.33} parent=0 // pred_check
    _
  $region7: #{_lambda_.33} parent=0 // pred_check_branch
    %11 = sbr.rel (0) target = $region9
  $region8: #{_lambda_.33} parent=0 // pred_region
    _
  $region9: #{_lambda_.33} parent=0 // pred_fallthru
    _
  // Predicated region
  $region10: #{_lambda_.33} parent=0 // pred_check
    _
  $region11: #{_lambda_.33} parent=0 // pred_check_branch
    %13 = sbr.rel (0) target = $region13
  $region12: #{_lambda_.33} parent=0 // pred_region
    _
  $region13: #{_lambda_.33} parent=0 // pred_fallthru
    _
  %p15 = scmp.eq.s32.totalorder 0, 0
  // Predicated region
  $region14: #{_lambda_.33} parent=0 // pred_check
    %p16 = pneg %p15
  $region15: #{_lambda_.33} parent=0 // pred_check_branch
    %18 = sbr.rel (%p16) target = $region17
  $region16: #{_lambda_.33} parent=0 // pred_region
    %19 = vst [vmem:[#allocation2] sm:$0xff] 0.0
    %20 = vst [vmem:[#allocation2 + $0x8] sm:$0xff] 0.0
    %21 = vst [vmem:[#allocation2 + $0x10] sm:$0xff] 0.0
    %22 = vst [vmem:[#allocation2 + $0x18] sm:$0xff] 0.0
    %23 = vst [vmem:[#allocation2 + $0x20] sm:$0xff] 0.0
    %24 = vst [vmem:[#allocation2 + $0x28] sm:$0xff] 0.0
    %25 = vst [vmem:[#allocation2 + $0x30] sm:$0xff] 0.0
    %26 = vst [vmem:[#allocation2 + $0x38] sm:$0xff] 0.0
    %27 = vst [vmem:[#allocation2 + $0x40] sm:$0xff] 0.0
    %28 = vst [vmem:[#allocation2 + $0x48] sm:$0xff] 0.0
    %29 = vst [vmem:[#allocation2 + $0x50] sm:$0xff] 0.0
    %30 = vst [vmem:[#allocation2 + $0x58] sm:$0xff] 0.0
    %31 = vst [vmem:[#allocation2 + $0x60] sm:$0xff] 0.0
    %32 = vst [vmem:[#allocation2 + $0x68] sm:$0xff] 0.0
    %33 = vst [vmem:[#allocation2 + $0x70] sm:$0xff] 0.0
    %34 = vst [vmem:[#allocation2 + $0x78] sm:$0xff] 0.0
  $region17: #{_lambda_.33} parent=0 // pred_fallthru
    _
  %v35 = vld [vmem:[#allocation2] sm:$0xff]
  %v36 = vld [vmem:[#allocation2 + $0x8] sm:$0xff]
  %v37 = vld [vmem:[#allocation2 + $0x10] sm:$0xff]
  %v38 = vld [vmem:[#allocation2 + $0x18] sm:$0xff]
  %v39 = vld [vmem:[#allocation2 + $0x20] sm:$0xff]
  %v40 = vld [vmem:[#allocation2 + $0x28] sm:$0xff]
  %v41 = vld [vmem:[#allocation2 + $0x30] sm:$0xff]
  %v42 = vld [vmem:[#allocation2 + $0x38] sm:$0xff]
  %v43 = vld [vmem:[#allocation2 + $0x40] sm:$0xff]
  %v44 = vld [vmem:[#allocation2 + $0x48] sm:$0xff]
  %v45 = vld [vmem:[#allocation2 + $0x50] sm:$0xff]
  %v46 = vld [vmem:[#allocation2 + $0x58] sm:$0xff]
  %v47 = vld [vmem:[#allocation2 + $0x60] sm:$0xff]
  %v48 = vld [vmem:[#allocation2 + $0x68] sm:$0xff]
  %v49 = vld [vmem:[#allocation2 + $0x70] sm:$0xff]
  %v50 = vld [vmem:[#allocation2 + $0x78] sm:$0xff]
  %v51 = vld [vmem:[%s0] sm:$0xf]
  %v52 = vld [vmem:[%s0 + $0x4] sm:$0xf]
  %v53 = vld [vmem:[%s0 + $0x8] sm:$0xf]
  %v54 = vld [vmem:[%s0 + $0xc] sm:$0xf]
  %v55 = vld [vmem:[%s0 + $0x10] sm:$0xf]
  %v56 = vld [vmem:[%s0 + $0x14] sm:$0xf]
  %v57 = vld [vmem:[%s0 + $0x18] sm:$0xf]
  %v58 = vld [vmem:[%s0 + $0x1c] sm:$0xf]
  %v59 = vld [vmem:[%s0 + $0x20] sm:$0xf]
  %v60 = vld [vmem:[%s0 + $0x24] sm:$0xf]
  %v61 = vld [vmem:[%s0 + $0x28] sm:$0xf]
  %v62 = vld [vmem:[%s0 + $0x2c] sm:$0xf]
  %v63 = vld [vmem:[%s0 + $0x30] sm:$0xf]
  %v64 = vld [vmem:[%s0 + $0x34] sm:$0xf]
  %v65 = vld [vmem:[%s0 + $0x38] sm:$0xf]
  %v66 = vld [vmem:[%s0 + $0x3c] sm:$0xf]
  %v67 = vld [vmem:[%s1] sm:$0xf]
  %v68 = vld [vmem:[%s1 + $0x4] sm:$0xf]
  %v69 = vld [vmem:[%s1 + $0x8] sm:$0xf]
  %v70 = vld [vmem:[%s1 + $0xc] sm:$0xf]
  %v71 = vld [vmem:[%s1 + $0x10] sm:$0xf]
  %v72 = vld [vmem:[%s1 + $0x14] sm:$0xf]
  %v73 = vld [vmem:[%s1 + $0x18] sm:$0xf]
  %v74 = vld [vmem:[%s1 + $0x1c] sm:$0xf]
  %v75 = vld [vmem:[%s1 + $0x20] sm:$0xf]
  %v76 = vld [vmem:[%s1 + $0x24] sm:$0xf]
  %v77 = vld [vmem:[%s1 + $0x28] sm:$0xf]
  %v78 = vld [vmem:[%s1 + $0x2c] sm:$0xf]
  %v79 = vld [vmem:[%s1 + $0x30] sm:$0xf]
  %v80 = vld [vmem:[%s1 + $0x34] sm:$0xf]
  %v81 = vld [vmem:[%s1 + $0x38] sm:$0xf]
  %v82 = vld [vmem:[%s1 + $0x3c] sm:$0xf]
  %v99 = vunpack.c.l.b16 %v51
  %v100 = vunpack.c.l.b16 %v52
  %v101 = vunpack.c.l.b16 %v53
  %v102 = vunpack.c.l.b16 %v54
  %v103 = vunpack.c.l.b16 %v55
  %v104 = vunpack.c.l.b16 %v56
  %v105 = vunpack.c.l.b16 %v57
  %v106 = vunpack.c.l.b16 %v58
  %v107 = vunpack.c.l.b16 %v59
  %v108 = vunpack.c.l.b16 %v60
  %v109 = vunpack.c.l.b16 %v61
  %v110 = vunpack.c.l.b16 %v62
  %v111 = vunpack.c.l.b16 %v63
  %v112 = vunpack.c.l.b16 %v64
  %v113 = vunpack.c.l.b16 %v65
  %v114 = vunpack.c.l.b16 %v66
  %v115 = vpack.c.b16 %v100, %v99
  %v116 = vpack.c.b16 %v102, %v101
  %v117 = vpack.c.b16 %v104, %v103
  %v118 = vpack.c.b16 %v106, %v105
  %v119 = vpack.c.b16 %v108, %v107
  %v120 = vpack.c.b16 %v110, %v109
  %v121 = vpack.c.b16 %v112, %v111
  %v122 = vpack.c.b16 %v114, %v113
  %v147 = vunpack.c.l.b16 %v67
  %v148 = vunpack.c.l.b16 %v68
  %v149 = vunpack.c.l.b16 %v69
  %v150 = vunpack.c.l.b16 %v70
  %v151 = vunpack.c.l.b16 %v71
  %v152 = vunpack.c.l.b16 %v72
  %v153 = vunpack.c.l.b16 %v73
  %v154 = vunpack.c.l.b16 %v74
  %v155 = vunpack.c.l.b16 %v75
  %v156 = vunpack.c.l.b16 %v76
  %v157 = vunpack.c.l.b16 %v77
  %v158 = vunpack.c.l.b16 %v78
  %v159 = vunpack.c.l.b16 %v79
  %v160 = vunpack.c.l.b16 %v80
  %v161 = vunpack.c.l.b16 %v81
  %v162 = vunpack.c.l.b16 %v82
  %v163 = vpack.c.b16 %v148, %v147
  %v164 = vpack.c.b16 %v150, %v149
  %v165 = vpack.c.b16 %v152, %v151
  %v166 = vpack.c.b16 %v154, %v153
  %v167 = vpack.c.b16 %v156, %v155
  %v168 = vpack.c.b16 %v158, %v157
  %v169 = vpack.c.b16 %v160, %v159
  %v170 = vpack.c.b16 %v162, %v161
  %179 = vmatprep.subr.bf16.mxu0 0
  %180 = vmatpush1.bf16.msra.mxu0 %v163
  %181 = vmatprep.subr.bf16.mxu0 0
  %182 = vmatpush1.bf16.msra.mxu0 %v164
  %183 = vmatprep.subr.bf16.mxu0 0
  %184 = vmatpush1.bf16.msra.mxu0 %v165
  %185 = vmatprep.subr.bf16.mxu0 0
  %186 = vmatpush1.bf16.msra.mxu0 %v166
  %187 = vmatprep.subr.bf16.mxu0 0
  %188 = vmatpush1.bf16.msra.mxu0 %v167
  %189 = vmatprep.subr.bf16.mxu0 0
  %190 = vmatpush1.bf16.msra.mxu0 %v168
  %191 = vmatprep.subr.bf16.mxu0 0
  %192 = vmatpush1.bf16.msra.mxu0 %v169
  %193 = vmatprep.subr.bf16.mxu0 0
  %194 = vmatpush1.bf16.msra.mxu0 %v170
  %195 = vmatprep.subr.bf16.mxu0 0
  %196 = vmatpush1.bf16.msra.mxu0 0
  %197 = vmatprep.subr.bf16.mxu0 0
  %198 = vmatpush1.bf16.msra.mxu0 0
  %199 = vmatprep.subr.bf16.mxu0 0
  %200 = vmatpush1.bf16.msra.mxu0 0
  %201 = vmatprep.subr.bf16.mxu0 0
  %202 = vmatpush1.bf16.msra.mxu0 0
  %203 = vmatprep.subr.bf16.mxu0 0
  %204 = vmatpush1.bf16.msra.mxu0 0
  %205 = vmatprep.subr.bf16.mxu0 0
  %206 = vmatpush1.bf16.msra.mxu0 0
  %207 = vmatprep.subr.bf16.mxu0 0
  %208 = vmatpush1.bf16.msra.mxu0 0
  %209 = vmatprep.subr.bf16.mxu0 0
  %210 = vmatpush1.bf16.msra.mxu0 0
  %211 = vmatprep.mubr.bf16.mxu0 0
  %212 = vmatmul.mubr.bf16.gmra.mrb[0].mxu0 %v115
  %v213 = vpop.f32.mrb[0].mxu0
  %v214 = vadd.f32 0.0, %v213
  %v215 = vpop.f32.mrb[0].mxu0
  %v216 = vpop.f32.mrb[0].mxu0
  %v217 = vadd.f32 0.0, %v216
  %v218 = vpop.f32.mrb[0].mxu0
  %219 = vmatprep.mubr.bf16.mxu0 0
  %220 = vmatmul.mubr.bf16.gmra.mrb[0].mxu0 %v116
  %v221 = vpop.f32.mrb[0].mxu0
  %v222 = vadd.f32 0.0, %v221
  %v223 = vpop.f32.mrb[0].mxu0
  %v224 = vpop.f32.mrb[0].mxu0
  %v225 = vadd.f32 0.0, %v224
  %v226 = vpop.f32.mrb[0].mxu0
  %227 = vmatprep.mubr.bf16.mxu0 0
  %228 = vmatmul.mubr.bf16.gmra.mrb[0].mxu0 %v117
  %v229 = vpop.f32.mrb[0].mxu0
  %v230 = vadd.f32 0.0, %v229
  %v231 = vpop.f32.mrb[0].mxu0
  %v232 = vpop.f32.mrb[0].mxu0
  %v233 = vadd.f32 0.0, %v232
  %v234 = vpop.f32.mrb[0].mxu0
  %235 = vmatprep.mubr.bf16.mxu0 0
  %236 = vmatmul.mubr.bf16.gmra.mrb[0].mxu0 %v118
  %v237 = vpop.f32.mrb[0].mxu0
  %v238 = vadd.f32 0.0, %v237
  %v239 = vpop.f32.mrb[0].mxu0
  %v240 = vpop.f32.mrb[0].mxu0
  %v241 = vadd.f32 0.0, %v240
  %v242 = vpop.f32.mrb[0].mxu0
  %243 = vmatprep.mubr.bf16.mxu0 0
  %244 = vmatmul.mubr.bf16.gmra.mrb[0].mxu0 %v119
  %v245 = vpop.f32.mrb[0].mxu0
  %v246 = vadd.f32 0.0, %v245
  %v247 = vpop.f32.mrb[0].mxu0
  %v248 = vpop.f32.mrb[0].mxu0
  %v249 = vadd.f32 0.0, %v248
  %v250 = vpop.f32.mrb[0].mxu0
  %251 = vmatprep.mubr.bf16.mxu0 0
  %252 = vmatmul.mubr.bf16.gmra.mrb[0].mxu0 %v120
  %v253 = vpop.f32.mrb[0].mxu0
  %v254 = vadd.f32 0.0, %v253
  %v255 = vpop.f32.mrb[0].mxu0
  %v256 = vpop.f32.mrb[0].mxu0
  %v257 = vadd.f32 0.0, %v256
  %v258 = vpop.f32.mrb[0].mxu0
  %259 = vmatprep.mubr.bf16.mxu0 0
  %260 = vmatmul.mubr.bf16.gmra.mrb[0].mxu0 %v121
  %v261 = vpop.f32.mrb[0].mxu0
  %v262 = vadd.f32 0.0, %v261
  %v263 = vpop.f32.mrb[0].mxu0
  %v264 = vpop.f32.mrb[0].mxu0
  %v265 = vadd.f32 0.0, %v264
  %v266 = vpop.f32.mrb[0].mxu0
  %267 = vmatprep.mubr.bf16.mxu0 0
  %268 = vmatmul.mubr.bf16.gmra.mrb[0].mxu0 %v122
  %v269 = vpop.f32.mrb[0].mxu0
  %v270 = vadd.f32 0.0, %v269
  %v271 = vpop.f32.mrb[0].mxu0
  %v272 = vpop.f32.mrb[0].mxu0
  %v273 = vadd.f32 0.0, %v272
  %v274 = vpop.f32.mrb[0].mxu0
  %275 = vdwg.mxu0
  %v276 = vadd.f32 %v35, %v214
  %v277 = vadd.f32 %v36, %v217
  %v278 = vadd.f32 %v37, %v222
  %v279 = vadd.f32 %v38, %v225
  %v280 = vadd.f32 %v39, %v230
  %v281 = vadd.f32 %v40, %v233
  %v282 = vadd.f32 %v41, %v238
  %v283 = vadd.f32 %v42, %v241
  %v284 = vadd.f32 %v43, %v246
  %v285 = vadd.f32 %v44, %v249
  %v286 = vadd.f32 %v45, %v254
  %v287 = vadd.f32 %v46, %v257
  %v288 = vadd.f32 %v47, %v262
  %v289 = vadd.f32 %v48, %v265
  %v290 = vadd.f32 %v49, %v270
  %v291 = vadd.f32 %v50, %v273
  %292 = vst [vmem:[#allocation2] sm:$0xff] %v276
  %293 = vst [vmem:[#allocation2 + $0x8] sm:$0xff] %v277
  %294 = vst [vmem:[#allocation2 + $0x10] sm:$0xff] %v278
  %295 = vst [vmem:[#allocation2 + $0x18] sm:$0xff] %v279
  %296 = vst [vmem:[#allocation2 + $0x20] sm:$0xff] %v280
  %297 = vst [vmem:[#allocation2 + $0x28] sm:$0xff] %v281
  %298 = vst [vmem:[#allocation2 + $0x30] sm:$0xff] %v282
  %299 = vst [vmem:[#allocation2 + $0x38] sm:$0xff] %v283
  %300 = vst [vmem:[#allocation2 + $0x40] sm:$0xff] %v284
  %301 = vst [vmem:[#allocation2 + $0x48] sm:$0xff] %v285
  %302 = vst [vmem:[#allocation2 + $0x50] sm:$0xff] %v286
  %303 = vst [vmem:[#allocation2 + $0x58] sm:$0xff] %v287
  %304 = vst [vmem:[#allocation2 + $0x60] sm:$0xff] %v288
  %305 = vst [vmem:[#allocation2 + $0x68] sm:$0xff] %v289
  %306 = vst [vmem:[#allocation2 + $0x70] sm:$0xff] %v290
  %307 = vst [vmem:[#allocation2 + $0x78] sm:$0xff] %v291
  // Predicated region
  $region18: #{_lambda_.33} parent=0 // pred_check
    %p308 = pneg %p15
  $region19: #{_lambda_.33} parent=0 // pred_check_branch
    %310 = sbr.rel (%p308) target = $region21
  $region20: #{_lambda_.33} parent=0 // pred_region
    %v311 = vld [vmem:[#allocation2] sm:$0xff]
    %v312 = vld [vmem:[#allocation2 + $0x8] sm:$0xff]
    %v313 = vld [vmem:[#allocation2 + $0x10] sm:$0xff]
    %v314 = vld [vmem:[#allocation2 + $0x18] sm:$0xff]
    %v315 = vld [vmem:[#allocation2 + $0x20] sm:$0xff]
    %v316 = vld [vmem:[#allocation2 + $0x28] sm:$0xff]
    %v317 = vld [vmem:[#allocation2 + $0x30] sm:$0xff]
    %v318 = vld [vmem:[#allocation2 + $0x38] sm:$0xff]
    %v319 = vld [vmem:[#allocation2 + $0x40] sm:$0xff]
    %v320 = vld [vmem:[#allocation2 + $0x48] sm:$0xff]
    %v321 = vld [vmem:[#allocation2 + $0x50] sm:$0xff]
    %v322 = vld [vmem:[#allocation2 + $0x58] sm:$0xff]
    %v323 = vld [vmem:[#allocation2 + $0x60] sm:$0xff]
    %v324 = vld [vmem:[#allocation2 + $0x68] sm:$0xff]
    %v325 = vld [vmem:[#allocation2 + $0x70] sm:$0xff]
    %v326 = vld [vmem:[#allocation2 + $0x78] sm:$0xff]
    %v327 = vld [vmem:[%s2] sm:$0x1]
    %v329 = vlaneseq
    %v330 = vshrl.u32 %v329, 7
    %v331 = vsub.s32 0, %v330
    %v332 = vrot.slane %v327, %v331
    %v334 = vadd.f32 %v311, %v332
    %v335 = vadd.f32 %v312, %v332
    %v336 = vadd.f32 %v313, %v332
    %v337 = vadd.f32 %v314, %v332
    %v338 = vadd.f32 %v315, %v332
    %v339 = vadd.f32 %v316, %v332
    %v340 = vadd.f32 %v317, %v332
    %v341 = vadd.f32 %v318, %v332
    %v342 = vadd.f32 %v319, %v332
    %v343 = vadd.f32 %v320, %v332
    %v344 = vadd.f32 %v321, %v332
    %v345 = vadd.f32 %v322, %v332
    %v346 = vadd.f32 %v323, %v332
    %v347 = vadd.f32 %v324, %v332
    %v348 = vadd.f32 %v325, %v332
    %v349 = vadd.f32 %v326, %v332
    %v350 = vpack.c.bf16 %v335, %v334
    %v351 = vpack.c.bf16 %v337, %v336
    %v352 = vpack.c.bf16 %v339, %v338
    %v353 = vpack.c.bf16 %v341, %v340
    %v354 = vpack.c.bf16 %v343, %v342
    %v355 = vpack.c.bf16 %v345, %v344
    %v356 = vpack.c.bf16 %v347, %v346
    %v357 = vpack.c.bf16 %v349, %v348
    %v366 = vunpack.c.l.b16 %v350
    %v367 = vunpack.c.h.b16 %v350
    %v368 = vunpack.c.l.b16 %v351
    %v369 = vunpack.c.h.b16 %v351
    %v370 = vunpack.c.l.b16 %v352
    %v371 = vunpack.c.h.b16 %v352
    %v372 = vunpack.c.l.b16 %v353
    %v373 = vunpack.c.h.b16 %v353
    %v374 = vunpack.c.l.b16 %v354
    %v375 = vunpack.c.h.b16 %v354
    %v376 = vunpack.c.l.b16 %v355
    %v377 = vunpack.c.h.b16 %v355
    %v378 = vunpack.c.l.b16 %v356
    %v379 = vunpack.c.h.b16 %v356
    %v380 = vunpack.c.l.b16 %v357
    %v381 = vunpack.c.h.b16 %v357
    %v382 = vpack.c.b16 %v366, %v366
    %v383 = vpack.c.b16 %v367, %v367
    %v384 = vpack.c.b16 %v368, %v368
    %v385 = vpack.c.b16 %v369, %v369
    %v386 = vpack.c.b16 %v370, %v370
    %v387 = vpack.c.b16 %v371, %v371
    %v388 = vpack.c.b16 %v372, %v372
    %v389 = vpack.c.b16 %v373, %v373
    %v390 = vpack.c.b16 %v374, %v374
    %v391 = vpack.c.b16 %v375, %v375
    %v392 = vpack.c.b16 %v376, %v376
    %v393 = vpack.c.b16 %v377, %v377
    %v394 = vpack.c.b16 %v378, %v378
    %v395 = vpack.c.b16 %v379, %v379
    %v396 = vpack.c.b16 %v380, %v380
    %v397 = vpack.c.b16 %v381, %v381
    %414 = vst [vmem:[%s3] sm:$0xf] %v382
    %415 = vst [vmem:[%s3 + $0x4] sm:$0xf] %v383
    %416 = vst [vmem:[%s3 + $0x8] sm:$0xf] %v384
    %417 = vst [vmem:[%s3 + $0xc] sm:$0xf] %v385
    %418 = vst [vmem:[%s3 + $0x10] sm:$0xf] %v386
    %419 = vst [vmem:[%s3 + $0x14] sm:$0xf] %v387
    %420 = vst [vmem:[%s3 + $0x18] sm:$0xf] %v388
    %421 = vst [vmem:[%s3 + $0x1c] sm:$0xf] %v389
    %422 = vst [vmem:[%s3 + $0x20] sm:$0xf] %v390
    %423 = vst [vmem:[%s3 + $0x24] sm:$0xf] %v391
    %424 = vst [vmem:[%s3 + $0x28] sm:$0xf] %v392
    %425 = vst [vmem:[%s3 + $0x2c] sm:$0xf] %v393
    %426 = vst [vmem:[%s3 + $0x30] sm:$0xf] %v394
    %427 = vst [vmem:[%s3 + $0x34] sm:$0xf] %v395
    %428 = vst [vmem:[%s3 + $0x38] sm:$0xf] %v396
    %429 = vst [vmem:[%s3 + $0x3c] sm:$0xf] %v397
  $region21: #{_lambda_.33} parent=0 // pred_fallthru
    _
  // Predicated region
  $region22: #{_lambda_.33} parent=0 // pred_check
    _
  $region23: #{_lambda_.33} parent=0 // pred_check_branch
    %431 = sbr.rel (0) target = $region25
  $region24: #{_lambda_.33} parent=0 // pred_region
    _
  $region25: #{_lambda_.33} parent=0 // pred_fallthru
    _
  // Predicated region
  $region26: #{_lambda_.33} parent=0 // pred_check
    _
  $region27: #{_lambda_.33} parent=0 // pred_check_branch
    %433 = sbr.rel (0) target = $region29
  $region28: #{_lambda_.33} parent=0 // pred_region
    _
  $region29: #{_lambda_.33} parent=0 // pred_fallthru
    _

// kernel: _lambda_.34
$region0: #{_lambda_.34}
  #allocation0 [shape = 'u32[]', space=smem, size = 0x4, offset = 0x4, fixed_abs, tag = 'smem constant byte address 0x4 - core index']
  #allocation1 [shape = 'u32[144,128]{1,0:T(1,128)}', space=vmem, size = 0x12000, scoped, tag = 'internal scratch']
  %s0 = inlined_call_operand.vmem [shape: bf16[2,64,16], index: 0, kind: input, shape index: {}]
  %s1 = inlined_call_operand.vmem [shape: bf16[2,64,16], index: 1, kind: output, shape index: {}]
  %s2 = sld [smem:[#allocation0]]
  $region37: #{_lambda_.34} parent=0
    _
  %s4 = ssub.s32 1, %s2
  %s5 = scalar_select 0, %s4, %s2
  loop: start=0, step=1, limit=4
  $region2: #{_lambda_.34} parent=0 // loop_pre_header
    _
  $region3: #{_lambda_.34} parent=0 // loop_header
    %s7 = sphi 0, %s11
    %p8 = scmp.ge.s32.totalorder %s7, 4
    %s14 = sphi 0, %s26
    %s15 = sphi 0, %s22
    %s16 = sphi 0, %s14
    %s17 = sphi 0, %s15
    %s18 = sphi 0, %s16
    %s19 = sphi 0, %s17
    %s31 = sphi 0, %s33
    %s34 = sphi 0, %s31
    %s35 = sphi 0, %s34
    %s51 = sphi 0, %s35
    %s59 = sphi 0, %s61
    %s62 = sphi 0, %s59
    %s63 = sphi 0, %s62
    %s79 = sphi 0, %s63
  $region4: #{_lambda_.34} parent=0 // loop_header_branch
    %10 = sbr.rel (%p8) target = $region8
  $region5: #{_lambda_.34} parent=0 // loop_body
    %s12 = ssub.s32 %s7, 1
    %s13 = ssub.s32 %s7, 2
    %s20 = sadd.s32 1, %s15
    %p21 = scmp.ge.s32.totalorder %s20, 1
    %s22 = scalar_select %p21, 0, %s20
    %s23 = sadd.s32 1, %s14
    %s24 = scalar_select %p21, %s23, %s14
    %p25 = scmp.ge.s32.totalorder %s24, 2
    %s26 = scalar_select %p25, 0, %s24
    %s27 = ssub.s32 %s14, %s26
    %s28 = ssub.s32 %s15, %s22
    %s29 = sor.u32 %s27, %s28
    %p30 = scmp.eq.s32.totalorder %s29, 0
    %s32 = sadd.s32 %s31, 1
    %s33 = scalar_select %p30, %s31, %s32
    %p36 = pneg %p30
    %p37 = scmp.eq.s32.totalorder %s7, 1
    %p38 = por %p36, %p37
    %p39 = scmp.ne.s32.totalorder %s31, %s34
    %p40 = scmp.eq.s32.totalorder %s7, 0
    %p41 = por %p39, %p40
    %p42 = scmp.ne.s32.totalorder %s31, %s34
    %p43 = scmp.eq.s32.totalorder %s12, 1
    %p44 = por %p42, %p43
    %p45 = scmp.ne.s32.totalorder %s34, %s35
    %p46 = scmp.eq.s32.totalorder %s12, 0
    %p47 = por %p45, %p46
    %p48 = scmp.ne.s32.totalorder %s34, %s35
    %p49 = scmp.eq.s32.totalorder %s13, 1
    %p50 = por %p48, %p49
    %p52 = scmp.ne.s32.totalorder %s35, %s51
    %p53 = scmp.eq.s32.totalorder %s13, 0
    %p54 = por %p52, %p53
    %s55 = ssub.s32 %s14, %s26
    %s56 = ssub.s32 %s15, %s22
    %s57 = sor.u32 %s55, %s56
    %p58 = scmp.eq.s32.totalorder %s57, 0
    %s60 = sadd.s32 %s59, 1
    %s61 = scalar_select %p58, %s59, %s60
    %p64 = pneg %p58
    %p65 = scmp.eq.s32.totalorder %s7, 1
    %p66 = por %p64, %p65
    %p67 = scmp.ne.s32.totalorder %s59, %s62
    %p68 = scmp.eq.s32.totalorder %s7, 0
    %p69 = por %p67, %p68
    %p70 = scmp.ne.s32.totalorder %s59, %s62
    %p71 = scmp.eq.s32.totalorder %s12, 1
    %p72 = por %p70, %p71
    %p73 = scmp.ne.s32.totalorder %s62, %s63
    %p74 = scmp.eq.s32.totalorder %s12, 0
    %p75 = por %p73, %p74
    %p76 = scmp.ne.s32.totalorder %s62, %s63
    %p77 = scmp.eq.s32.totalorder %s13, 1
    %p78 = por %p76, %p77
    %p80 = scmp.ne.s32.totalorder %s63, %s79
    %p81 = scmp.eq.s32.totalorder %s13, 0
    %p82 = por %p80, %p81
    %p83 = scmp.le.s32.totalorder 1, %s7
    %p84 = scmp.lt.s32.totalorder %s7, 3
    %p85 = pnand %p83, %p84
    %p86 = pneg %p85
    // Predicated region
    $region9: #{_lambda_.34} parent=5 // pred_check
      _
    $region10: #{_lambda_.34} parent=5 // pred_check_branch
      %88 = sbr.rel (%p85) target = $region12
    $region11: #{_lambda_.34} parent=5 // pred_region
      %s89 = ssub.s32 %s7, 1
    $region12: #{_lambda_.34} parent=5 // pred_fallthru
      _
    %p90 = scmp.lt.s32.totalorder %s7, 2
    // Predicated region
    $region13: #{_lambda_.34} parent=5 // pred_check
      %p91 = pneg %p90
    $region14: #{_lambda_.34} parent=5 // pred_check_branch
      %93 = sbr.rel (%p91) target = $region16
    $region15: #{_lambda_.34} parent=5 // pred_region
      // Predicated region
      $region17: #{_lambda_.34} parent=15 // pred_check
        %p94 = pneg %p41
      $region18: #{_lambda_.34} parent=15 // pred_check_branch
        %96 = sbr.rel (%p94) target = $region20
      $region19: #{_lambda_.34} parent=15 // pred_region
        %p97 = scmp.lt.s32.totalorder %s14, 1
        %s98 = scalar_select %p97, %s14, 1
        %p99 = scmp.lt.s32.totalorder %s15, 0
        %s100 = scalar_select %p99, %s15, 0
        %s101 = smul.addr %s98, 8
        %s102 = sadd.s32 %s100, %s101
        %s103 = smul.addr %s102, 4
        %s104 = scalar_lea.vmem %s0, %s103
      $region20: #{_lambda_.34} parent=15 // pred_fallthru
        _
    $region16: #{_lambda_.34} parent=5 // pred_fallthru
      _
    %p105 = scmp.le.s32.totalorder 1, %s7
    %p106 = scmp.lt.s32.totalorder %s7, 3
    %p107 = pnand %p105, %p106
    %p108 = pneg %p107
    // Predicated region
    $region21: #{_lambda_.34} parent=5 // pred_check
      _
    $region22: #{_lambda_.34} parent=5 // pred_check_branch
      %110 = sbr.rel (%p107) target = $region24
    $region23: #{_lambda_.34} parent=5 // pred_region
      %s111 = ssub.s32 %s7, 1
      %p112 = scmp.lt.s32.totalorder %s16, 1
      %s113 = scalar_select %p112, %s16, 1
      %p114 = scmp.lt.s32.totalorder %s17, 0
      %s115 = scalar_select %p114, %s17, 0
      %s116 = smul.addr %s113, 8
      %s117 = sadd.s32 %s115, %s116
      %s118 = smul.addr %s117, 4
      %s119 = scalar_lea.vmem %s0, %s118
      %p120 = pneg %p47
      %p121 = pneg %p44
      %p122 = pneg %p75
      %p123 = pneg %p72
      %p124 = scmp.lt.s32.totalorder %s16, 1
      %s125 = scalar_select %p124, %s16, 1
      %p126 = scmp.lt.s32.totalorder %s17, 0
      %s127 = scalar_select %p126, %s17, 0
      %s128 = smul.addr %s125, 8
      %s129 = sadd.s32 %s127, %s128
      %s130 = smul.addr %s129, 4
      %s131 = scalar_lea.vmem %s1, %s130
      %p132 = scmp.lt.s32.totalorder %s16, 1
      %s133 = scalar_select %p132, %s16, 1
      %p134 = scmp.lt.s32.totalorder %s17, 0
      %s135 = scalar_select %p134, %s17, 0
      %s136 = smul.addr %s133, 8
      %s137 = sadd.s32 %s135, %s136
      %s138 = smul.addr %s137, 4
      %s139 = scalar_lea.vmem %s0, %s138
      %p140 = scmp.lt.s32.totalorder %s16, 1
      %s141 = scalar_select %p140, %s16, 1
      %p142 = scmp.lt.s32.totalorder %s17, 0
      %s143 = scalar_select %p142, %s17, 0
      %s144 = smul.addr %s141, 8
      %s145 = sadd.s32 %s143, %s144
      %s146 = smul.addr %s145, 4
      %s147 = scalar_lea.vmem %s1, %s146
      %v148 = vld [vmem:[%s139] sm:$0xf]
      %v149 = vld [vmem:[%s139 + $0x4] sm:$0xf]
      %v150 = vld [vmem:[%s139 + $0x8] sm:$0xf]
      %v151 = vld [vmem:[%s139 + $0xc] sm:$0xf]
      %v152 = vld [vmem:[%s139 + $0x10] sm:$0xf]
      %v153 = vld [vmem:[%s139 + $0x14] sm:$0xf]
      %v154 = vld [vmem:[%s139 + $0x18] sm:$0xf]
      %v155 = vld [vmem:[%s139 + $0x1c] sm:$0xf]
      %v156 = vunpack.c.l.bf16 %v148
      %v157 = vunpack.c.l.bf16 %v149
      %v158 = vunpack.c.l.bf16 %v150
      %v159 = vunpack.c.l.bf16 %v151
      %v160 = vunpack.c.l.bf16 %v152
      %v161 = vunpack.c.l.bf16 %v153
      %v162 = vunpack.c.l.bf16 %v154
      %v163 = vunpack.c.l.bf16 %v155
      %vm164 = vcmask 130048
      %v165 = vsel %vm164, %v156, 0.0
      %v166 = vsel %vm164, %v157, 0.0
      %v167 = vadd.f32 %v165, %v166
      %v168 = vsel %vm164, %v158, 0.0
      %v169 = vadd.f32 %v167, %v168
      %v170 = vsel %vm164, %v159, 0.0
      %v171 = vadd.f32 %v169, %v170
      %v172 = vsel %vm164, %v160, 0.0
      %v173 = vadd.f32 %v171, %v172
      %v174 = vsel %vm164, %v161, 0.0
      %v175 = vadd.f32 %v173, %v174
      %v176 = vsel %vm164, %v162, 0.0
      %v177 = vadd.f32 %v175, %v176
      %v178 = vsel %vm164, %v163, 0.0
      %v179 = vadd.f32 %v177, %v178
      %v180 = vrot.slane %v179, 4
      %v181 = vadd.f32 %v179, %v180
      %v182 = vrot.slane %v181, 2
      %v183 = vadd.f32 %v181, %v182
      %v184 = vrot.slane %v183, 1
      %v185 = vadd.f32 %v183, %v184
      %v186 = vrcp.pop 64.0
      %v187 = vmul.f32 %v185, %v186
      %v188 = vsub.f32 %v156, %v187
      %v189 = vsub.f32 %v157, %v187
      %v190 = vsub.f32 %v158, %v187
      %v191 = vsub.f32 %v159, %v187
      %v192 = vsub.f32 %v160, %v187
      %v193 = vsub.f32 %v161, %v187
      %v194 = vsub.f32 %v162, %v187
      %v195 = vsub.f32 %v163, %v187
      %v196 = vmul.f32 %v188, %v188
      %v197 = vmul.f32 %v189, %v189
      %v198 = vmul.f32 %v190, %v190
      %v199 = vmul.f32 %v191, %v191
      %v200 = vmul.f32 %v192, %v192
      %v201 = vmul.f32 %v193, %v193
      %v202 = vmul.f32 %v194, %v194
      %v203 = vmul.f32 %v195, %v195
      %v204 = vsel %vm164, %v196, 0.0
      %v205 = vsel %vm164, %v197, 0.0
      %v206 = vadd.f32 %v204, %v205
      %v207 = vsel %vm164, %v198, 0.0
      %v208 = vadd.f32 %v206, %v207
      %v209 = vsel %vm164, %v199, 0.0
      %v210 = vadd.f32 %v208, %v209
      %v211 = vsel %vm164, %v200, 0.0
      %v212 = vadd.f32 %v210, %v211
      %v213 = vsel %vm164, %v201, 0.0
      %v214 = vadd.f32 %v212, %v213
      %v215 = vsel %vm164, %v202, 0.0
      %v216 = vadd.f32 %v214, %v215
      %v217 = vsel %vm164, %v203, 0.0
      %v218 = vadd.f32 %v216, %v217
      %v219 = vrot.slane %v218, 4
      %v220 = vadd.f32 %v218, %v219
      %v221 = vrot.slane %v220, 2
      %v222 = vadd.f32 %v220, %v221
      %v223 = vrot.slane %v222, 1
      %v224 = vadd.f32 %v222, %v223
      %v225 = vmul.f32 %v224, %v186
      %v226 = vadd.f32 %v225, 1e-05
      %v227 = vrsqrt.pop %v226
      %v228 = vmul.f32 %v188, %v227
      %v229 = vmul.f32 %v189, %v227
      %v230 = vmul.f32 %v190, %v227
      %v231 = vmul.f32 %v191, %v227
      %v232 = vmul.f32 %v192, %v227
      %v233 = vmul.f32 %v193, %v227
      %v234 = vmul.f32 %v194, %v227
      %v235 = vmul.f32 %v195, %v227
      %vm236 = vcmp.ge.f32.partialorder %v228, 0.0
      %vm237 = vcmp.ge.f32.partialorder %v229, 0.0
      %vm238 = vcmp.ge.f32.partialorder %v230, 0.0
      %vm239 = vcmp.ge.f32.partialorder %v231, 0.0
      %vm240 = vcmp.ge.f32.partialorder %v232, 0.0
      %vm241 = vcmp.ge.f32.partialorder %v233, 0.0
      %vm242 = vcmp.ge.f32.partialorder %v234, 0.0
      %vm243 = vcmp.ge.f32.partialorder %v235, 0.0
      %v244 = vmul.f32 %v228, 0.2
      %v245 = vmul.f32 %v229, 0.2
      %v246 = vmul.f32 %v230, 0.2
      %v247 = vmul.f32 %v231, 0.2
      %v248 = vmul.f32 %v232, 0.2
      %v249 = vmul.f32 %v233, 0.2
      %v250 = vmul.f32 %v234, 0.2
      %v251 = vmul.f32 %v235, 0.2
      %v252 = vsel %vm236, %v228, %v244
      %v253 = vsel %vm237, %v229, %v245
      %v254 = vsel %vm238, %v230, %v246
      %v255 = vsel %vm239, %v231, %v247
      %v256 = vsel %vm240, %v232, %v248
      %v257 = vsel %vm241, %v233, %v249
      %v258 = vsel %vm242, %v234, %v250
      %v259 = vsel %vm243, %v235, %v251
      %v260 = vpack.c.bf16 %v253, %v252
      %v261 = vpack.c.bf16 %v255, %v254
      %v262 = vpack.c.bf16 %v257, %v256
      %v263 = vpack.c.bf16 %v259, %v258
      %v268 = vunpack.c.l.b16 %v260
      %v269 = vunpack.c.h.b16 %v260
      %v270 = vunpack.c.l.b16 %v261
      %v271 = vunpack.c.h.b16 %v261
      %v272 = vunpack.c.l.b16 %v262
      %v273 = vunpack.c.h.b16 %v262
      %v274 = vunpack.c.l.b16 %v263
      %v275 = vunpack.c.h.b16 %v263
      %v276 = vpack.c.b16 %v268, %v268
      %v277 = vpack.c.b16 %v269, %v269
      %v278 = vpack.c.b16 %v270, %v270
      %v279 = vpack.c.b16 %v271, %v271
      %v280 = vpack.c.b16 %v272, %v272
      %v281 = vpack.c.b16 %v273, %v273
      %v282 = vpack.c.b16 %v274, %v274
      %v283 = vpack.c.b16 %v275, %v275
      %vm292 = vcmask 125952
      %293 = vst.msk [vmem:[%s147] sm:$0xf] %vm292, %v276
      %294 = vst.msk [vmem:[%s147 + $0x4] sm:$0xf] %vm292, %v277
      %295 = vst.msk [vmem:[%s147 + $0x8] sm:$0xf] %vm292, %v278
      %296 = vst.msk [vmem:[%s147 + $0xc] sm:$0xf] %vm292, %v279
      %297 = vst.msk [vmem:[%s147 + $0x10] sm:$0xf] %vm292, %v280
      %298 = vst.msk [vmem:[%s147 + $0x14] sm:$0xf] %vm292, %v281
      %299 = vst.msk [vmem:[%s147 + $0x18] sm:$0xf] %vm292, %v282
      %300 = vst.msk [vmem:[%s147 + $0x1c] sm:$0xf] %vm292, %v283
      %p301 = scmp.lt.s32.totalorder %s16, 1
      %s302 = scalar_select %p301, %s16, 1
      %p303 = scmp.lt.s32.totalorder %s17, 0
      %s304 = scalar_select %p303, %s17, 0
      %s305 = smul.addr %s302, 8
      %s306 = sadd.s32 %s304, %s305
      %s307 = smul.addr %s306, 4
      %s308 = scalar_lea.vmem %s1, %s307
      // Predicated region
      $region25: #{_lambda_.34} parent=23 // pred_check
        %p309 = pneg %p72
      $region26: #{_lambda_.34} parent=23 // pred_check_branch
        %311 = sbr.rel (%p309) target = $region28
      $region27: #{_lambda_.34} parent=23 // pred_region
        _
      $region28: #{_lambda_.34} parent=23 // pred_fallthru
        _
    $region24: #{_lambda_.34} parent=5 // pred_fallthru
      _
    %p312 = scmp.le.s32.totalorder 2, %s7
    // Predicated region
    $region29: #{_lambda_.34} parent=5 // pred_check
      %p313 = pneg %p312
    $region30: #{_lambda_.34} parent=5 // pred_check_branch
      %315 = sbr.rel (%p313) target = $region32
    $region31: #{_lambda_.34} parent=5 // pred_region
      %s316 = ssub.s32 %s7, 2
      // Predicated region
      $region33: #{_lambda_.34} parent=31 // pred_check
        %p317 = pneg %p78
      $region34: #{_lambda_.34} parent=31 // pred_check_branch
        %319 = sbr.rel (%p317) target = $region36
      $region35: #{_lambda_.34} parent=31 // pred_region
        %p320 = scmp.lt.s32.totalorder %s18, 1
        %s321 = scalar_select %p320, %s18, 1
        %p322 = scmp.lt.s32.totalorder %s19, 0
        %s323 = scalar_select %p322, %s19, 0
        %s324 = smul.addr %s321, 8
        %s325 = sadd.s32 %s323, %s324
        %s326 = smul.addr %s325, 4
        %s327 = scalar_lea.vmem %s1, %s326
      $region36: #{_lambda_.34} parent=31 // pred_fallthru
        _
    $region32: #{_lambda_.34} parent=5 // pred_fallthru
      _
  $region6: #{_lambda_.34} parent=0 // loop_footer
    %s11 = sadd.s32 1, %s7
  $region7: #{_lambda_.34} parent=0 // loop_footer_branch
    %6 = sbr.rel target = $region3
  $region8: #{_lambda_.34} parent=0 // loop_exit
    _

// kernel: _lambda_.36
$region0: #{_lambda_.36}
  #allocation0 [shape = 'u32[]', space=smem, size = 0x4, offset = 0x4, fixed_abs, tag = 'smem constant byte address 0x4 - core index']
  #allocation1 [shape = 'u32[144,128]{1,0:T(1,128)}', space=vmem, size = 0x12000, scoped, tag = 'internal scratch']
  %s0 = inlined_call_operand.vmem [shape: bf16[2,16,32], index: 0, kind: input, shape index: {}]
  %s1 = inlined_call_operand.vmem [shape: bf16[2,16,32], index: 1, kind: output, shape index: {}]
  %s2 = sld [smem:[#allocation0]]
  $region37: #{_lambda_.36} parent=0
    _
  %s4 = ssub.s32 1, %s2
  %s5 = scalar_select 0, %s4, %s2
  loop: start=0, step=1, limit=4
  $region2: #{_lambda_.36} parent=0 // loop_pre_header
    _
  $region3: #{_lambda_.36} parent=0 // loop_header
    %s7 = sphi 0, %s11
    %p8 = scmp.ge.s32.totalorder %s7, 4
    %s14 = sphi 0, %s26
    %s15 = sphi 0, %s22
    %s16 = sphi 0, %s14
    %s17 = sphi 0, %s15
    %s18 = sphi 0, %s16
    %s19 = sphi 0, %s17
    %s31 = sphi 0, %s33
    %s34 = sphi 0, %s31
    %s35 = sphi 0, %s34
    %s51 = sphi 0, %s35
    %s59 = sphi 0, %s61
    %s62 = sphi 0, %s59
    %s63 = sphi 0, %s62
    %s79 = sphi 0, %s63
  $region4: #{_lambda_.36} parent=0 // loop_header_branch
    %10 = sbr.rel (%p8) target = $region8
  $region5: #{_lambda_.36} parent=0 // loop_body
    %s12 = ssub.s32 %s7, 1
    %s13 = ssub.s32 %s7, 2
    %s20 = sadd.s32 1, %s15
    %p21 = scmp.ge.s32.totalorder %s20, 1
    %s22 = scalar_select %p21, 0, %s20
    %s23 = sadd.s32 1, %s14
    %s24 = scalar_select %p21, %s23, %s14
    %p25 = scmp.ge.s32.totalorder %s24, 2
    %s26 = scalar_select %p25, 0, %s24
    %s27 = ssub.s32 %s14, %s26
    %s28 = ssub.s32 %s15, %s22
    %s29 = sor.u32 %s27, %s28
    %p30 = scmp.eq.s32.totalorder %s29, 0
    %s32 = sadd.s32 %s31, 1
    %s33 = scalar_select %p30, %s31, %s32
    %p36 = pneg %p30
    %p37 = scmp.eq.s32.totalorder %s7, 1
    %p38 = por %p36, %p37
    %p39 = scmp.ne.s32.totalorder %s31, %s34
    %p40 = scmp.eq.s32.totalorder %s7, 0
    %p41 = por %p39, %p40
    %p42 = scmp.ne.s32.totalorder %s31, %s34
    %p43 = scmp.eq.s32.totalorder %s12, 1
    %p44 = por %p42, %p43
    %p45 = scmp.ne.s32.totalorder %s34, %s35
    %p46 = scmp.eq.s32.totalorder %s12, 0
    %p47 = por %p45, %p46
    %p48 = scmp.ne.s32.totalorder %s34, %s35
    %p49 = scmp.eq.s32.totalorder %s13, 1
    %p50 = por %p48, %p49
    %p52 = scmp.ne.s32.totalorder %s35, %s51
    %p53 = scmp.eq.s32.totalorder %s13, 0
    %p54 = por %p52, %p53
    %s55 = ssub.s32 %s14, %s26
    %s56 = ssub.s32 %s15, %s22
    %s57 = sor.u32 %s55, %s56
    %p58 = scmp.eq.s32.totalorder %s57, 0
    %s60 = sadd.s32 %s59, 1
    %s61 = scalar_select %p58, %s59, %s60
    %p64 = pneg %p58
    %p65 = scmp.eq.s32.totalorder %s7, 1
    %p66 = por %p64, %p65
    %p67 = scmp.ne.s32.totalorder %s59, %s62
    %p68 = scmp.eq.s32.totalorder %s7, 0
    %p69 = por %p67, %p68
    %p70 = scmp.ne.s32.totalorder %s59, %s62
    %p71 = scmp.eq.s32.totalorder %s12, 1
    %p72 = por %p70, %p71
    %p73 = scmp.ne.s32.totalorder %s62, %s63
    %p74 = scmp.eq.s32.totalorder %s12, 0
    %p75 = por %p73, %p74
    %p76 = scmp.ne.s32.totalorder %s62, %s63
    %p77 = scmp.eq.s32.totalorder %s13, 1
    %p78 = por %p76, %p77
    %p80 = scmp.ne.s32.totalorder %s63, %s79
    %p81 = scmp.eq.s32.totalorder %s13, 0
    %p82 = por %p80, %p81
    %p83 = scmp.le.s32.totalorder 1, %s7
    %p84 = scmp.lt.s32.totalorder %s7, 3
    %p85 = pnand %p83, %p84
    %p86 = pneg %p85
    // Predicated region
    $region9: #{_lambda_.36} parent=5 // pred_check
      _
    $region10: #{_lambda_.36} parent=5 // pred_check_branch
      %88 = sbr.rel (%p85) target = $region12
    $region11: #{_lambda_.36} parent=5 // pred_region
      %s89 = ssub.s32 %s7, 1
    $region12: #{_lambda_.36} parent=5 // pred_fallthru
      _
    %p90 = scmp.lt.s32.totalorder %s7, 2
    // Predicated region
    $region13: #{_lambda_.36} parent=5 // pred_check
      %p91 = pneg %p90
    $region14: #{_lambda_.36} parent=5 // pred_check_branch
      %93 = sbr.rel (%p91) target = $region16
    $region15: #{_lambda_.36} parent=5 // pred_region
      // Predicated region
      $region17: #{_lambda_.36} parent=15 // pred_check
        %p94 = pneg %p41
      $region18: #{_lambda_.36} parent=15 // pred_check_branch
        %96 = sbr.rel (%p94) target = $region20
      $region19: #{_lambda_.36} parent=15 // pred_region
        %p97 = scmp.lt.s32.totalorder %s14, 1
        %s98 = scalar_select %p97, %s14, 1
        %p99 = scmp.lt.s32.totalorder %s15, 0
        %s100 = scalar_select %p99, %s15, 0
        %s101 = smul.addr %s98, 2
        %s102 = sadd.s32 %s100, %s101
        %s103 = smul.addr %s102, 4
        %s104 = scalar_lea.vmem %s0, %s103
      $region20: #{_lambda_.36} parent=15 // pred_fallthru
        _
    $region16: #{_lambda_.36} parent=5 // pred_fallthru
      _
    %p105 = scmp.le.s32.totalorder 1, %s7
    %p106 = scmp.lt.s32.totalorder %s7, 3
    %p107 = pnand %p105, %p106
    %p108 = pneg %p107
    // Predicated region
    $region21: #{_lambda_.36} parent=5 // pred_check
      _
    $region22: #{_lambda_.36} parent=5 // pred_check_branch
      %110 = sbr.rel (%p107) target = $region24
    $region23: #{_lambda_.36} parent=5 // pred_region
      %s111 = ssub.s32 %s7, 1
      %p112 = scmp.lt.s32.totalorder %s16, 1
      %s113 = scalar_select %p112, %s16, 1
      %p114 = scmp.lt.s32.totalorder %s17, 0
      %s115 = scalar_select %p114, %s17, 0
      %s116 = smul.addr %s113, 2
      %s117 = sadd.s32 %s115, %s116
      %s118 = smul.addr %s117, 4
      %s119 = scalar_lea.vmem %s0, %s118
      %p120 = pneg %p47
      %p121 = pneg %p44
      %p122 = pneg %p75
      %p123 = pneg %p72
      %p124 = scmp.lt.s32.totalorder %s16, 1
      %s125 = scalar_select %p124, %s16, 1
      %p126 = scmp.lt.s32.totalorder %s17, 0
      %s127 = scalar_select %p126, %s17, 0
      %s128 = smul.addr %s125, 2
      %s129 = sadd.s32 %s127, %s128
      %s130 = smul.addr %s129, 4
      %s131 = scalar_lea.vmem %s1, %s130
      %p132 = scmp.lt.s32.totalorder %s16, 1
      %s133 = scalar_select %p132, %s16, 1
      %p134 = scmp.lt.s32.totalorder %s17, 0
      %s135 = scalar_select %p134, %s17, 0
      %s136 = smul.addr %s133, 2
      %s137 = sadd.s32 %s135, %s136
      %s138 = smul.addr %s137, 4
      %s139 = scalar_lea.vmem %s0, %s138
      %p140 = scmp.lt.s32.totalorder %s16, 1
      %s141 = scalar_select %p140, %s16, 1
      %p142 = scmp.lt.s32.totalorder %s17, 0
      %s143 = scalar_select %p142, %s17, 0
      %s144 = smul.addr %s141, 2
      %s145 = sadd.s32 %s143, %s144
      %s146 = smul.addr %s145, 4
      %s147 = scalar_lea.vmem %s1, %s146
      %v148 = vld [vmem:[%s139] sm:$0xf]
      %v149 = vld [vmem:[%s139 + $0x4] sm:$0xf]
      %v150 = vunpack.c.l.bf16 %v148
      %v151 = vunpack.c.l.bf16 %v149
      %vm152 = vcmask 261120
      %v153 = vsel %vm152, %v150, 0.0
      %v154 = vsel %vm152, %v151, 0.0
      %v155 = vadd.f32 %v153, %v154
      %v156 = vrot.slane %v155, 4
      %v157 = vadd.f32 %v155, %v156
      %v158 = vrot.slane %v157, 2
      %v159 = vadd.f32 %v157, %v158
      %v160 = vrot.slane %v159, 1
      %v161 = vadd.f32 %v159, %v160
      %v162 = vrcp.pop 16.0
      %v163 = vmul.f32 %v161, %v162
      %v164 = vsub.f32 %v150, %v163
      %v165 = vsub.f32 %v151, %v163
      %v166 = vmul.f32 %v164, %v164
      %v167 = vmul.f32 %v165, %v165
      %v168 = vsel %vm152, %v166, 0.0
      %v169 = vsel %vm152, %v167, 0.0
      %v170 = vadd.f32 %v168, %v169
      %v171 = vrot.slane %v170, 4
      %v172 = vadd.f32 %v170, %v171
      %v173 = vrot.slane %v172, 2
      %v174 = vadd.f32 %v172, %v173
      %v175 = vrot.slane %v174, 1
      %v176 = vadd.f32 %v174, %v175
      %v177 = vmul.f32 %v176, %v162
      %v178 = vadd.f32 %v177, 1e-05
      %v179 = vrsqrt.pop %v178
      %v180 = vmul.f32 %v164, %v179
      %v181 = vmul.f32 %v165, %v179
      %vm182 = vcmp.ge.f32.partialorder %v180, 0.0
      %vm183 = vcmp.ge.f32.partialorder %v181, 0.0
      %v184 = vmul.f32 %v180, 0.2
      %v185 = vmul.f32 %v181, 0.2
      %v186 = vsel %vm182, %v180, %v184
      %v187 = vsel %vm183, %v181, %v185
      %v188 = vpack.c.bf16 %v187, %v186
      %v190 = vunpack.c.l.b16 %v188
      %v191 = vunpack.c.h.b16 %v188
      %v192 = vpack.c.b16 %v190, %v190
      %v193 = vpack.c.b16 %v191, %v191
      %vm196 = vcmask 257024
      %197 = vst.msk [vmem:[%s147] sm:$0xf] %vm196, %v192
      %198 = vst.msk [vmem:[%s147 + $0x4] sm:$0xf] %vm196, %v193
      %p199 = scmp.lt.s32.totalorder %s16, 1
      %s200 = scalar_select %p199, %s16, 1
      %p201 = scmp.lt.s32.totalorder %s17, 0
      %s202 = scalar_select %p201, %s17, 0
      %s203 = smul.addr %s200, 2
      %s204 = sadd.s32 %s202, %s203
      %s205 = smul.addr %s204, 4
      %s206 = scalar_lea.vmem %s1, %s205
      // Predicated region
      $region25: #{_lambda_.36} parent=23 // pred_check
        %p207 = pneg %p72
      $region26: #{_lambda_.36} parent=23 // pred_check_branch
        %209 = sbr.rel (%p207) target = $region28
      $region27: #{_lambda_.36} parent=23 // pred_region
        _
      $region28: #{_lambda_.36} parent=23 // pred_fallthru
        _
    $region24: #{_lambda_.36} parent=5 // pred_fallthru
      _
    %p210 = scmp.le.s32.totalorder 2, %s7
    // Predicated region
    $region29: #{_lambda_.36} parent=5 // pred_check
      %p211 = pneg %p210
    $region30: #{_lambda_.36} parent=5 // pred_check_branch
      %213 = sbr.rel (%p211) target = $region32
    $region31: #{_lambda_.36} parent=5 // pred_region
      %s214 = ssub.s32 %s7, 2
      // Predicated region
      $region33: #{_lambda_.36} parent=31 // pred_check
        %p215 = pneg %p78
      $region34: #{_lambda_.36} parent=31 // pred_check_branch
        %217 = sbr.rel (%p215) target = $region36
      $region35: #{_lambda_.36} parent=31 // pred_region
        %p218 = scmp.lt.s32.totalorder %s18, 1
        %s219 = scalar_select %p218, %s18, 1
        %p220 = scmp.lt.s32.totalorder %s19, 0
        %s221 = scalar_select %p220, %s19, 0
        %s222 = smul.addr %s219, 2
        %s223 = sadd.s32 %s221, %s222
        %s224 = smul.addr %s223, 4
        %s225 = scalar_lea.vmem %s1, %s224
      $region36: #{_lambda_.36} parent=31 // pred_fallthru
        _
    $region32: #{_lambda_.36} parent=5 // pred_fallthru
      _
  $region6: #{_lambda_.36} parent=0 // loop_footer
    %s11 = sadd.s32 1, %s7
  $region7: #{_lambda_.36} parent=0 // loop_footer_branch
    %6 = sbr.rel target = $region3
  $region8: #{_lambda_.36} parent=0 // loop_exit
    _

// kernel: _lambda_.35
$region0: #{_lambda_.35}
  #allocation0 [shape = 'u32[]', space=smem, size = 0x4, offset = 0x4, fixed_abs, tag = 'smem constant byte address 0x4 - core index']
  #allocation1 [shape = 'u32[144,128]{1,0:T(1,128)}', space=vmem, size = 0x12000, scoped, tag = 'internal scratch']
  #allocation2 [shape = 'f32[32,128]{1,0:T(8,128)}', space=vmem, size = 0x4000, scoped, tag = 'scratch operand']
  %s0 = inlined_call_operand.vmem [shape: bf16[32,256], index: 0, kind: input, shape index: {}]
  %s1 = inlined_call_operand.vmem [shape: bf16[256,128], index: 1, kind: input, shape index: {}]
  %s2 = inlined_call_operand.vmem [shape: f32[1,128], index: 2, kind: input, shape index: {}]
  %s3 = inlined_call_operand.vmem [shape: bf16[32,128], index: 3, kind: output, shape index: {}]
  %s4 = sld [smem:[#allocation0]]
  $region30: #{_lambda_.35} parent=0
    _
  %s6 = ssub.s32 1, %s4
  %s7 = scalar_select 0, %s6, %s4
  // Predicated region
  $region2: #{_lambda_.35} parent=0 // pred_check
    _
  $region3: #{_lambda_.35} parent=0 // pred_check_branch
    %9 = sbr.rel (0) target = $region5
  $region4: #{_lambda_.35} parent=0 // pred_region
    _
  $region5: #{_lambda_.35} parent=0 // pred_fallthru
    _
  // Predicated region
  $region6: #{_lambda_.35} parent=0 // pred_check
    _
  $region7: #{_lambda_.35} parent=0 // pred_check_branch
    %11 = sbr.rel (0) target = $region9
  $region8: #{_lambda_.35} parent=0 // pred_region
    _
  $region9: #{_lambda_.35} parent=0 // pred_fallthru
    _
  // Predicated region
  $region10: #{_lambda_.35} parent=0 // pred_check
    _
  $region11: #{_lambda_.35} parent=0 // pred_check_branch
    %13 = sbr.rel (0) target = $region13
  $region12: #{_lambda_.35} parent=0 // pred_region
    _
  $region13: #{_lambda_.35} parent=0 // pred_fallthru
    _
  %p15 = scmp.eq.s32.totalorder 0, 0
  // Predicated region
  $region14: #{_lambda_.35} parent=0 // pred_check
    %p16 = pneg %p15
  $region15: #{_lambda_.35} parent=0 // pred_check_branch
    %18 = sbr.rel (%p16) target = $region17
  $region16: #{_lambda_.35} parent=0 // pred_region
    %19 = vst [vmem:[#allocation2] sm:$0xff] 0.0
    %20 = vst [vmem:[#allocation2 + $0x8] sm:$0xff] 0.0
    %21 = vst [vmem:[#allocation2 + $0x10] sm:$0xff] 0.0
    %22 = vst [vmem:[#allocation2 + $0x18] sm:$0xff] 0.0
  $region17: #{_lambda_.35} parent=0 // pred_fallthru
    _
  %v23 = vld [vmem:[#allocation2] sm:$0xff]
  %v24 = vld [vmem:[#allocation2 + $0x8] sm:$0xff]
  %v25 = vld [vmem:[#allocation2 + $0x10] sm:$0xff]
  %v26 = vld [vmem:[#allocation2 + $0x18] sm:$0xff]
  %v27 = vld [vmem:[%s0] sm:$0xff]
  %v28 = vld [vmem:[%s0 + $0x8] sm:$0xff]
  %v29 = vld [vmem:[%s0 + $0x10] sm:$0xff]
  %v30 = vld [vmem:[%s0 + $0x18] sm:$0xff]
  %v31 = vld [vmem:[%s1] sm:$0xf]
  %v32 = vld [vmem:[%s1 + $0x4] sm:$0xf]
  %v33 = vld [vmem:[%s1 + $0x8] sm:$0xf]
  %v34 = vld [vmem:[%s1 + $0xc] sm:$0xf]
  %v35 = vld [vmem:[%s1 + $0x10] sm:$0xf]
  %v36 = vld [vmem:[%s1 + $0x14] sm:$0xf]
  %v37 = vld [vmem:[%s1 + $0x18] sm:$0xf]
  %v38 = vld [vmem:[%s1 + $0x1c] sm:$0xf]
  %v39 = vld [vmem:[%s1 + $0x20] sm:$0xf]
  %v40 = vld [vmem:[%s1 + $0x24] sm:$0xf]
  %v41 = vld [vmem:[%s1 + $0x28] sm:$0xf]
  %v42 = vld [vmem:[%s1 + $0x2c] sm:$0xf]
  %v43 = vld [vmem:[%s1 + $0x30] sm:$0xf]
  %v44 = vld [vmem:[%s1 + $0x34] sm:$0xf]
  %v45 = vld [vmem:[%s1 + $0x38] sm:$0xf]
  %v46 = vld [vmem:[%s1 + $0x3c] sm:$0xf]
  %v47 = vld [vmem:[%s1 + $0x40] sm:$0xf]
  %v48 = vld [vmem:[%s1 + $0x44] sm:$0xf]
  %v49 = vld [vmem:[%s1 + $0x48] sm:$0xf]
  %v50 = vld [vmem:[%s1 + $0x4c] sm:$0xf]
  %v51 = vld [vmem:[%s1 + $0x50] sm:$0xf]
  %v52 = vld [vmem:[%s1 + $0x54] sm:$0xf]
  %v53 = vld [vmem:[%s1 + $0x58] sm:$0xf]
  %v54 = vld [vmem:[%s1 + $0x5c] sm:$0xf]
  %v55 = vld [vmem:[%s1 + $0x60] sm:$0xf]
  %v56 = vld [vmem:[%s1 + $0x64] sm:$0xf]
  %v57 = vld [vmem:[%s1 + $0x68] sm:$0xf]
  %v58 = vld [vmem:[%s1 + $0x6c] sm:$0xf]
  %v59 = vld [vmem:[%s1 + $0x70] sm:$0xf]
  %v60 = vld [vmem:[%s1 + $0x74] sm:$0xf]
  %v61 = vld [vmem:[%s1 + $0x78] sm:$0xf]
  %v62 = vld [vmem:[%s1 + $0x7c] sm:$0xf]
  %v67 = vunpack.c.l.b16 %v27
  %v68 = vunpack.c.h.b16 %v27
  %v69 = vunpack.c.l.b16 %v28
  %v70 = vunpack.c.h.b16 %v28
  %v71 = vunpack.c.l.b16 %v29
  %v72 = vunpack.c.h.b16 %v29
  %v73 = vunpack.c.l.b16 %v30
  %v74 = vunpack.c.h.b16 %v30
  %v75 = vpack.c.b16 %v69, %v67
  %v76 = vpack.c.b16 %v70, %v68
  %v77 = vpack.c.b16 %v73, %v71
  %v78 = vpack.c.b16 %v74, %v72
  %v115 = vunpack.c.l.b16 %v31
  %v116 = vunpack.c.l.b16 %v32
  %v117 = vunpack.c.l.b16 %v33
  %v118 = vunpack.c.l.b16 %v34
  %v119 = vunpack.c.l.b16 %v35
  %v120 = vunpack.c.l.b16 %v36
  %v121 = vunpack.c.l.b16 %v37
  %v122 = vunpack.c.l.b16 %v38
  %v123 = vunpack.c.l.b16 %v39
  %v124 = vunpack.c.l.b16 %v40
  %v125 = vunpack.c.l.b16 %v41
  %v126 = vunpack.c.l.b16 %v42
  %v127 = vunpack.c.l.b16 %v43
  %v128 = vunpack.c.l.b16 %v44
  %v129 = vunpack.c.l.b16 %v45
  %v130 = vunpack.c.l.b16 %v46
  %v131 = vunpack.c.l.b16 %v47
  %v132 = vunpack.c.l.b16 %v48
  %v133 = vunpack.c.l.b16 %v49
  %v134 = vunpack.c.l.b16 %v50
  %v135 = vunpack.c.l.b16 %v51
  %v136 = vunpack.c.l.b16 %v52
  %v137 = vunpack.c.l.b16 %v53
  %v138 = vunpack.c.l.b16 %v54
  %v139 = vunpack.c.l.b16 %v55
  %v140 = vunpack.c.l.b16 %v56
  %v141 = vunpack.c.l.b16 %v57
  %v142 = vunpack.c.l.b16 %v58
  %v143 = vunpack.c.l.b16 %v59
  %v144 = vunpack.c.l.b16 %v60
  %v145 = vunpack.c.l.b16 %v61
  %v146 = vunpack.c.l.b16 %v62
  %v147 = vpack.c.b16 %v116, %v115
  %v148 = vpack.c.b16 %v118, %v117
  %v149 = vpack.c.b16 %v120, %v119
  %v150 = vpack.c.b16 %v122, %v121
  %v151 = vpack.c.b16 %v124, %v123
  %v152 = vpack.c.b16 %v126, %v125
  %v153 = vpack.c.b16 %v128, %v127
  %v154 = vpack.c.b16 %v130, %v129
  %v155 = vpack.c.b16 %v132, %v131
  %v156 = vpack.c.b16 %v134, %v133
  %v157 = vpack.c.b16 %v136, %v135
  %v158 = vpack.c.b16 %v138, %v137
  %v159 = vpack.c.b16 %v140, %v139
  %v160 = vpack.c.b16 %v142, %v141
  %v161 = vpack.c.b16 %v144, %v143
  %v162 = vpack.c.b16 %v146, %v145
  %179 = vmatprep.subr.bf16.mxu0 0
  %180 = vmatpush1.bf16.msra.mxu0 %v147
  %181 = vmatprep.subr.bf16.mxu0 0
  %182 = vmatpush1.bf16.msra.mxu0 %v148
  %183 = vmatprep.subr.bf16.mxu0 0
  %184 = vmatpush1.bf16.msra.mxu0 %v149
  %185 = vmatprep.subr.bf16.mxu0 0
  %186 = vmatpush1.bf16.msra.mxu0 %v150
  %187 = vmatprep.subr.bf16.mxu0 0
  %188 = vmatpush1.bf16.msra.mxu0 %v151
  %189 = vmatprep.subr.bf16.mxu0 0
  %190 = vmatpush1.bf16.msra.mxu0 %v152
  %191 = vmatprep.subr.bf16.mxu0 0
  %192 = vmatpush1.bf16.msra.mxu0 %v153
  %193 = vmatprep.subr.bf16.mxu0 0
  %194 = vmatpush1.bf16.msra.mxu0 %v154
  %195 = vmatprep.subr.bf16.mxu0 0
  %196 = vmatpush1.bf16.msra.mxu0 %v155
  %197 = vmatprep.subr.bf16.mxu0 0
  %198 = vmatpush1.bf16.msra.mxu0 %v156
  %199 = vmatprep.subr.bf16.mxu0 0
  %200 = vmatpush1.bf16.msra.mxu0 %v157
  %201 = vmatprep.subr.bf16.mxu0 0
  %202 = vmatpush1.bf16.msra.mxu0 %v158
  %203 = vmatprep.subr.bf16.mxu0 0
  %204 = vmatpush1.bf16.msra.mxu0 %v159
  %205 = vmatprep.subr.bf16.mxu0 0
  %206 = vmatpush1.bf16.msra.mxu0 %v160
  %207 = vmatprep.subr.bf16.mxu0 0
  %208 = vmatpush1.bf16.msra.mxu0 %v161
  %209 = vmatprep.subr.bf16.mxu0 0
  %210 = vmatpush1.bf16.msra.mxu0 %v162
  %211 = vmatprep.mubr.bf16.mxu0 %v76
  %212 = vmatmul.mubr.bf16.gmra.mrb[0].mxu0 %v75
  %v213 = vpop.f32.mrb[0].mxu0
  %v214 = vadd.f32 0.0, %v213
  %v215 = vpop.f32.mrb[0].mxu0
  %v216 = vpop.f32.mrb[0].mxu0
  %v217 = vadd.f32 0.0, %v216
  %v218 = vpop.f32.mrb[0].mxu0
  %219 = vmatprep.mubr.bf16.mxu0 %v78
  %220 = vmatmul.mubr.bf16.gmra.mrb[0].mxu0 %v77
  %v221 = vpop.f32.mrb[0].mxu0
  %v222 = vadd.f32 0.0, %v221
  %v223 = vpop.f32.mrb[0].mxu0
  %v224 = vpop.f32.mrb[0].mxu0
  %v225 = vadd.f32 0.0, %v224
  %v226 = vpop.f32.mrb[0].mxu0
  %227 = vdwg.mxu0
  %v228 = vadd.f32 %v23, %v214
  %v229 = vadd.f32 %v24, %v217
  %v230 = vadd.f32 %v25, %v222
  %v231 = vadd.f32 %v26, %v225
  %232 = vst [vmem:[#allocation2] sm:$0xff] %v228
  %233 = vst [vmem:[#allocation2 + $0x8] sm:$0xff] %v229
  %234 = vst [vmem:[#allocation2 + $0x10] sm:$0xff] %v230
  %235 = vst [vmem:[#allocation2 + $0x18] sm:$0xff] %v231
  // Predicated region
  $region18: #{_lambda_.35} parent=0 // pred_check
    %p236 = pneg %p15
  $region19: #{_lambda_.35} parent=0 // pred_check_branch
    %238 = sbr.rel (%p236) target = $region21
  $region20: #{_lambda_.35} parent=0 // pred_region
    %v239 = vld [vmem:[#allocation2] sm:$0xff]
    %v240 = vld [vmem:[#allocation2 + $0x8] sm:$0xff]
    %v241 = vld [vmem:[#allocation2 + $0x10] sm:$0xff]
    %v242 = vld [vmem:[#allocation2 + $0x18] sm:$0xff]
    %v243 = vld [vmem:[%s2] sm:$0x1]
    %v245 = vlaneseq
    %v246 = vshrl.u32 %v245, 7
    %v247 = vsub.s32 0, %v246
    %v248 = vrot.slane %v243, %v247
    %v250 = vadd.f32 %v239, %v248
    %v251 = vadd.f32 %v240, %v248
    %v252 = vadd.f32 %v241, %v248
    %v253 = vadd.f32 %v242, %v248
    %v254 = vpack.c.bf16 %v251, %v250
    %v255 = vpack.c.bf16 %v253, %v252
    %v258 = vunpack.c.l.b16 %v254
    %v259 = vunpack.c.h.b16 %v254
    %v260 = vunpack.c.l.b16 %v255
    %v261 = vunpack.c.h.b16 %v255
    %v262 = vpack.c.b16 %v258, %v258
    %v263 = vpack.c.b16 %v259, %v259
    %v264 = vpack.c.b16 %v260, %v260
    %v265 = vpack.c.b16 %v261, %v261
    %270 = vst [vmem:[%s3] sm:$0xf] %v262
    %271 = vst [vmem:[%s3 + $0x4] sm:$0xf] %v263
    %272 = vst [vmem:[%s3 + $0x8] sm:$0xf] %v264
    %273 = vst [vmem:[%s3 + $0xc] sm:$0xf] %v265
  $region21: #{_lambda_.35} parent=0 // pred_fallthru
    _
  // Predicated region
  $region22: #{_lambda_.35} parent=0 // pred_check
    _
  $region23: #{_lambda_.35} parent=0 // pred_check_branch
    %275 = sbr.rel (0) target = $region25
  $region24: #{_lambda_.35} parent=0 // pred_region
    _
  $region25: #{_lambda_.35} parent=0 // pred_fallthru
    _
  // Predicated region
  $region26: #{_lambda_.35} parent=0 // pred_check
    _
  $region27: #{_lambda_.35} parent=0 // pred_check_branch
    %277 = sbr.rel (0) target = $region29
  $region28: #{_lambda_.35} parent=0 // pred_region
    _
  $region29: #{_lambda_.35} parent=0 // pred_fallthru
    _

// kernel: _lambda_.38
$region0: #{_lambda_.38}
  #allocation0 [shape = 'u32[]', space=smem, size = 0x4, offset = 0x4, fixed_abs, tag = 'smem constant byte address 0x4 - core index']
  #allocation1 [shape = 'u32[144,128]{1,0:T(1,128)}', space=vmem, size = 0x12000, scoped, tag = 'internal scratch']
  %s0 = inlined_call_operand.vmem [shape: bf16[2,4,64], index: 0, kind: input, shape index: {}]
  %s1 = inlined_call_operand.vmem [shape: bf16[2,4,64], index: 1, kind: output, shape index: {}]
  %s2 = sld [smem:[#allocation0]]
  $region37: #{_lambda_.38} parent=0
    _
  %s4 = ssub.s32 1, %s2
  %s5 = scalar_select 0, %s4, %s2
  loop: start=0, step=1, limit=4
  $region2: #{_lambda_.38} parent=0 // loop_pre_header
    _
  $region3: #{_lambda_.38} parent=0 // loop_header
    %s7 = sphi 0, %s11
    %p8 = scmp.ge.s32.totalorder %s7, 4
    %s14 = sphi 0, %s26
    %s15 = sphi 0, %s22
    %s16 = sphi 0, %s14
    %s17 = sphi 0, %s15
    %s18 = sphi 0, %s16
    %s19 = sphi 0, %s17
    %s31 = sphi 0, %s33
    %s34 = sphi 0, %s31
    %s35 = sphi 0, %s34
    %s51 = sphi 0, %s35
    %s59 = sphi 0, %s61
    %s62 = sphi 0, %s59
    %s63 = sphi 0, %s62
    %s79 = sphi 0, %s63
  $region4: #{_lambda_.38} parent=0 // loop_header_branch
    %10 = sbr.rel (%p8) target = $region8
  $region5: #{_lambda_.38} parent=0 // loop_body
    %s12 = ssub.s32 %s7, 1
    %s13 = ssub.s32 %s7, 2
    %s20 = sadd.s32 1, %s15
    %p21 = scmp.ge.s32.totalorder %s20, 1
    %s22 = scalar_select %p21, 0, %s20
    %s23 = sadd.s32 1, %s14
    %s24 = scalar_select %p21, %s23, %s14
    %p25 = scmp.ge.s32.totalorder %s24, 2
    %s26 = scalar_select %p25, 0, %s24
    %s27 = ssub.s32 %s14, %s26
    %s28 = ssub.s32 %s15, %s22
    %s29 = sor.u32 %s27, %s28
    %p30 = scmp.eq.s32.totalorder %s29, 0
    %s32 = sadd.s32 %s31, 1
    %s33 = scalar_select %p30, %s31, %s32
    %p36 = pneg %p30
    %p37 = scmp.eq.s32.totalorder %s7, 1
    %p38 = por %p36, %p37
    %p39 = scmp.ne.s32.totalorder %s31, %s34
    %p40 = scmp.eq.s32.totalorder %s7, 0
    %p41 = por %p39, %p40
    %p42 = scmp.ne.s32.totalorder %s31, %s34
    %p43 = scmp.eq.s32.totalorder %s12, 1
    %p44 = por %p42, %p43
    %p45 = scmp.ne.s32.totalorder %s34, %s35
    %p46 = scmp.eq.s32.totalorder %s12, 0
    %p47 = por %p45, %p46
    %p48 = scmp.ne.s32.totalorder %s34, %s35
    %p49 = scmp.eq.s32.totalorder %s13, 1
    %p50 = por %p48, %p49
    %p52 = scmp.ne.s32.totalorder %s35, %s51
    %p53 = scmp.eq.s32.totalorder %s13, 0
    %p54 = por %p52, %p53
    %s55 = ssub.s32 %s14, %s26
    %s56 = ssub.s32 %s15, %s22
    %s57 = sor.u32 %s55, %s56
    %p58 = scmp.eq.s32.totalorder %s57, 0
    %s60 = sadd.s32 %s59, 1
    %s61 = scalar_select %p58, %s59, %s60
    %p64 = pneg %p58
    %p65 = scmp.eq.s32.totalorder %s7, 1
    %p66 = por %p64, %p65
    %p67 = scmp.ne.s32.totalorder %s59, %s62
    %p68 = scmp.eq.s32.totalorder %s7, 0
    %p69 = por %p67, %p68
    %p70 = scmp.ne.s32.totalorder %s59, %s62
    %p71 = scmp.eq.s32.totalorder %s12, 1
    %p72 = por %p70, %p71
    %p73 = scmp.ne.s32.totalorder %s62, %s63
    %p74 = scmp.eq.s32.totalorder %s12, 0
    %p75 = por %p73, %p74
    %p76 = scmp.ne.s32.totalorder %s62, %s63
    %p77 = scmp.eq.s32.totalorder %s13, 1
    %p78 = por %p76, %p77
    %p80 = scmp.ne.s32.totalorder %s63, %s79
    %p81 = scmp.eq.s32.totalorder %s13, 0
    %p82 = por %p80, %p81
    %p83 = scmp.le.s32.totalorder 1, %s7
    %p84 = scmp.lt.s32.totalorder %s7, 3
    %p85 = pnand %p83, %p84
    %p86 = pneg %p85
    // Predicated region
    $region9: #{_lambda_.38} parent=5 // pred_check
      _
    $region10: #{_lambda_.38} parent=5 // pred_check_branch
      %88 = sbr.rel (%p85) target = $region12
    $region11: #{_lambda_.38} parent=5 // pred_region
      %s89 = ssub.s32 %s7, 1
    $region12: #{_lambda_.38} parent=5 // pred_fallthru
      _
    %p90 = scmp.lt.s32.totalorder %s7, 2
    // Predicated region
    $region13: #{_lambda_.38} parent=5 // pred_check
      %p91 = pneg %p90
    $region14: #{_lambda_.38} parent=5 // pred_check_branch
      %93 = sbr.rel (%p91) target = $region16
    $region15: #{_lambda_.38} parent=5 // pred_region
      // Predicated region
      $region17: #{_lambda_.38} parent=15 // pred_check
        %p94 = pneg %p41
      $region18: #{_lambda_.38} parent=15 // pred_check_branch
        %96 = sbr.rel (%p94) target = $region20
      $region19: #{_lambda_.38} parent=15 // pred_region
        %p97 = scmp.lt.s32.totalorder %s14, 1
        %s98 = scalar_select %p97, %s14, 1
        %p99 = scmp.lt.s32.totalorder %s15, 0
        %s100 = scalar_select %p99, %s15, 0
        %s101 = sadd.s32 %s100, %s98
        %s102 = smul.addr %s101, 2
        %s103 = scalar_lea.vmem %s0, %s102
      $region20: #{_lambda_.38} parent=15 // pred_fallthru
        _
    $region16: #{_lambda_.38} parent=5 // pred_fallthru
      _
    %p104 = scmp.le.s32.totalorder 1, %s7
    %p105 = scmp.lt.s32.totalorder %s7, 3
    %p106 = pnand %p104, %p105
    %p107 = pneg %p106
    // Predicated region
    $region21: #{_lambda_.38} parent=5 // pred_check
      _
    $region22: #{_lambda_.38} parent=5 // pred_check_branch
      %109 = sbr.rel (%p106) target = $region24
    $region23: #{_lambda_.38} parent=5 // pred_region
      %s110 = ssub.s32 %s7, 1
      %p111 = scmp.lt.s32.totalorder %s16, 1
      %s112 = scalar_select %p111, %s16, 1
      %p113 = scmp.lt.s32.totalorder %s17, 0
      %s114 = scalar_select %p113, %s17, 0
      %s115 = sadd.s32 %s114, %s112
      %s116 = smul.addr %s115, 2
      %s117 = scalar_lea.vmem %s0, %s116
      %p118 = pneg %p47
      %p119 = pneg %p44
      %p120 = pneg %p75
      %p121 = pneg %p72
      %p122 = scmp.lt.s32.totalorder %s16, 1
      %s123 = scalar_select %p122, %s16, 1
      %p124 = scmp.lt.s32.totalorder %s17, 0
      %s125 = scalar_select %p124, %s17, 0
      %s126 = sadd.s32 %s125, %s123
      %s127 = smul.addr %s126, 2
      %s128 = scalar_lea.vmem %s1, %s127
      %p129 = scmp.lt.s32.totalorder %s16, 1
      %s130 = scalar_select %p129, %s16, 1
      %p131 = scmp.lt.s32.totalorder %s17, 0
      %s132 = scalar_select %p131, %s17, 0
      %s133 = sadd.s32 %s132, %s130
      %s134 = smul.addr %s133, 2
      %s135 = scalar_lea.vmem %s0, %s134
      %p136 = scmp.lt.s32.totalorder %s16, 1
      %s137 = scalar_select %p136, %s16, 1
      %p138 = scmp.lt.s32.totalorder %s17, 0
      %s139 = scalar_select %p138, %s17, 0
      %s140 = sadd.s32 %s139, %s137
      %s141 = smul.addr %s140, 2
      %s142 = scalar_lea.vmem %s1, %s141
      %v143 = vld [vmem:[%s135] sm:$0x3]
      %v144 = vunpack.c.l.bf16 %v143
      %vm145 = vcmask 519168
      %v146 = vsel %vm145, %v144, 0.0
      %v147 = vrot.slane %v146, 4
      %v148 = vadd.f32 %v146, %v147
      %v149 = vrot.slane %v148, 2
      %v150 = vadd.f32 %v148, %v149
      %v151 = vrot.slane %v150, 1
      %v152 = vadd.f32 %v150, %v151
      %v153 = vrcp.pop 4.0
      %v154 = vmul.f32 %v152, %v153
      %v155 = vsub.f32 %v144, %v154
      %v156 = vmul.f32 %v155, %v155
      %v157 = vsel %vm145, %v156, 0.0
      %v158 = vrot.slane %v157, 4
      %v159 = vadd.f32 %v157, %v158
      %v160 = vrot.slane %v159, 2
      %v161 = vadd.f32 %v159, %v160
      %v162 = vrot.slane %v161, 1
      %v163 = vadd.f32 %v161, %v162
      %v164 = vmul.f32 %v163, %v153
      %v165 = vadd.f32 %v164, 1e-05
      %v166 = vrsqrt.pop %v165
      %v167 = vmul.f32 %v155, %v166
      %vm168 = vcmp.ge.f32.partialorder %v167, 0.0
      %v169 = vmul.f32 %v167, 0.2
      %v170 = vsel %vm168, %v167, %v169
      %v171 = vpack.c.bf16 %v170, %v170
      %vm172 = vcmask 517120
      %173 = vst.msk [vmem:[%s142] sm:$0x3] %vm172, %v171
      %p174 = scmp.lt.s32.totalorder %s16, 1
      %s175 = scalar_select %p174, %s16, 1
      %p176 = scmp.lt.s32.totalorder %s17, 0
      %s177 = scalar_select %p176, %s17, 0
      %s178 = sadd.s32 %s177, %s175
      %s179 = smul.addr %s178, 2
      %s180 = scalar_lea.vmem %s1, %s179
      // Predicated region
      $region25: #{_lambda_.38} parent=23 // pred_check
        %p181 = pneg %p72
      $region26: #{_lambda_.38} parent=23 // pred_check_branch
        %183 = sbr.rel (%p181) target = $region28
      $region27: #{_lambda_.38} parent=23 // pred_region
        _
      $region28: #{_lambda_.38} parent=23 // pred_fallthru
        _
    $region24: #{_lambda_.38} parent=5 // pred_fallthru
      _
    %p184 = scmp.le.s32.totalorder 2, %s7
    // Predicated region
    $region29: #{_lambda_.38} parent=5 // pred_check
      %p185 = pneg %p184
    $region30: #{_lambda_.38} parent=5 // pred_check_branch
      %187 = sbr.rel (%p185) target = $region32
    $region31: #{_lambda_.38} parent=5 // pred_region
      %s188 = ssub.s32 %s7, 2
      // Predicated region
      $region33: #{_lambda_.38} parent=31 // pred_check
        %p189 = pneg %p78
      $region34: #{_lambda_.38} parent=31 // pred_check_branch
        %191 = sbr.rel (%p189) target = $region36
      $region35: #{_lambda_.38} parent=31 // pred_region
        %p192 = scmp.lt.s32.totalorder %s18, 1
        %s193 = scalar_select %p192, %s18, 1
        %p194 = scmp.lt.s32.totalorder %s19, 0
        %s195 = scalar_select %p194, %s19, 0
        %s196 = sadd.s32 %s195, %s193
        %s197 = smul.addr %s196, 2
        %s198 = scalar_lea.vmem %s1, %s197
      $region36: #{_lambda_.38} parent=31 // pred_fallthru
        _
    $region32: #{_lambda_.38} parent=5 // pred_fallthru
      _
  $region6: #{_lambda_.38} parent=0 // loop_footer
    %s11 = sadd.s32 1, %s7
  $region7: #{_lambda_.38} parent=0 // loop_footer_branch
    %6 = sbr.rel target = $region3
  $region8: #{_lambda_.38} parent=0 // loop_exit
    _

// kernel: _lambda_.37
$region0: #{_lambda_.37}
  #allocation0 [shape = 'u32[]', space=smem, size = 0x4, offset = 0x4, fixed_abs, tag = 'smem constant byte address 0x4 - core index']
  #allocation1 [shape = 'u32[144,128]{1,0:T(1,128)}', space=vmem, size = 0x12000, scoped, tag = 'internal scratch']
  #allocation2 [shape = 'f32[16,128]{1,0:T(8,128)}', space=vmem, size = 0x2000, scoped, tag = 'scratch operand']
  %s0 = inlined_call_operand.vmem [shape: bf16[16,512], index: 0, kind: input, shape index: {}]
  %s1 = inlined_call_operand.vmem [shape: bf16[512,128], index: 1, kind: input, shape index: {}]
  %s2 = inlined_call_operand.vmem [shape: f32[1,128], index: 2, kind: input, shape index: {}]
  %s3 = inlined_call_operand.vmem [shape: bf16[16,128], index: 3, kind: output, shape index: {}]
  %s4 = sld [smem:[#allocation0]]
  $region30: #{_lambda_.37} parent=0
    _
  %s6 = ssub.s32 1, %s4
  %s7 = scalar_select 0, %s6, %s4
  // Predicated region
  $region2: #{_lambda_.37} parent=0 // pred_check
    _
  $region3: #{_lambda_.37} parent=0 // pred_check_branch
    %9 = sbr.rel (0) target = $region5
  $region4: #{_lambda_.37} parent=0 // pred_region
    _
  $region5: #{_lambda_.37} parent=0 // pred_fallthru
    _
  // Predicated region
  $region6: #{_lambda_.37} parent=0 // pred_check
    _
  $region7: #{_lambda_.37} parent=0 // pred_check_branch
    %11 = sbr.rel (0) target = $region9
  $region8: #{_lambda_.37} parent=0 // pred_region
    _
  $region9: #{_lambda_.37} parent=0 // pred_fallthru
    _
  // Predicated region
  $region10: #{_lambda_.37} parent=0 // pred_check
    _
  $region11: #{_lambda_.37} parent=0 // pred_check_branch
    %13 = sbr.rel (0) target = $region13
  $region12: #{_lambda_.37} parent=0 // pred_region
    _
  $region13: #{_lambda_.37} parent=0 // pred_fallthru
    _
  %p15 = scmp.eq.s32.totalorder 0, 0
  // Predicated region
  $region14: #{_lambda_.37} parent=0 // pred_check
    %p16 = pneg %p15
  $region15: #{_lambda_.37} parent=0 // pred_check_branch
    %18 = sbr.rel (%p16) target = $region17
  $region16: #{_lambda_.37} parent=0 // pred_region
    %19 = vst [vmem:[#allocation2] sm:$0xff] 0.0
    %20 = vst [vmem:[#allocation2 + $0x8] sm:$0xff] 0.0
  $region17: #{_lambda_.37} parent=0 // pred_fallthru
    _
  %v21 = vld [vmem:[#allocation2] sm:$0xff]
  %v22 = vld [vmem:[#allocation2 + $0x8] sm:$0xff]
  %v23 = vld [vmem:[%s0] sm:$0xff]
  %v24 = vld [vmem:[%s0 + $0x8] sm:$0xff]
  %v25 = vld [vmem:[%s0 + $0x10] sm:$0xff]
  %v26 = vld [vmem:[%s0 + $0x18] sm:$0xff]
  %v27 = vld [vmem:[%s1] sm:$0xf]
  %v28 = vld [vmem:[%s1 + $0x4] sm:$0xf]
  %v29 = vld [vmem:[%s1 + $0x8] sm:$0xf]
  %v30 = vld [vmem:[%s1 + $0xc] sm:$0xf]
  %v31 = vld [vmem:[%s1 + $0x10] sm:$0xf]
  %v32 = vld [vmem:[%s1 + $0x14] sm:$0xf]
  %v33 = vld [vmem:[%s1 + $0x18] sm:$0xf]
  %v34 = vld [vmem:[%s1 + $0x1c] sm:$0xf]
  %v35 = vld [vmem:[%s1 + $0x20] sm:$0xf]
  %v36 = vld [vmem:[%s1 + $0x24] sm:$0xf]
  %v37 = vld [vmem:[%s1 + $0x28] sm:$0xf]
  %v38 = vld [vmem:[%s1 + $0x2c] sm:$0xf]
  %v39 = vld [vmem:[%s1 + $0x30] sm:$0xf]
  %v40 = vld [vmem:[%s1 + $0x34] sm:$0xf]
  %v41 = vld [vmem:[%s1 + $0x38] sm:$0xf]
  %v42 = vld [vmem:[%s1 + $0x3c] sm:$0xf]
  %v43 = vld [vmem:[%s1 + $0x40] sm:$0xf]
  %v44 = vld [vmem:[%s1 + $0x44] sm:$0xf]
  %v45 = vld [vmem:[%s1 + $0x48] sm:$0xf]
  %v46 = vld [vmem:[%s1 + $0x4c] sm:$0xf]
  %v47 = vld [vmem:[%s1 + $0x50] sm:$0xf]
  %v48 = vld [vmem:[%s1 + $0x54] sm:$0xf]
  %v49 = vld [vmem:[%s1 + $0x58] sm:$0xf]
  %v50 = vld [vmem:[%s1 + $0x5c] sm:$0xf]
  %v51 = vld [vmem:[%s1 + $0x60] sm:$0xf]
  %v52 = vld [vmem:[%s1 + $0x64] sm:$0xf]
  %v53 = vld [vmem:[%s1 + $0x68] sm:$0xf]
  %v54 = vld [vmem:[%s1 + $0x6c] sm:$0xf]
  %v55 = vld [vmem:[%s1 + $0x70] sm:$0xf]
  %v56 = vld [vmem:[%s1 + $0x74] sm:$0xf]
  %v57 = vld [vmem:[%s1 + $0x78] sm:$0xf]
  %v58 = vld [vmem:[%s1 + $0x7c] sm:$0xf]
  %v59 = vld [vmem:[%s1 + $0x80] sm:$0xf]
  %v60 = vld [vmem:[%s1 + $0x84] sm:$0xf]
  %v61 = vld [vmem:[%s1 + $0x88] sm:$0xf]
  %v62 = vld [vmem:[%s1 + $0x8c] sm:$0xf]
  %v63 = vld [vmem:[%s1 + $0x90] sm:$0xf]
  %v64 = vld [vmem:[%s1 + $0x94] sm:$0xf]
  %v65 = vld [vmem:[%s1 + $0x98] sm:$0xf]
  %v66 = vld [vmem:[%s1 + $0x9c] sm:$0xf]
  %v67 = vld [vmem:[%s1 + $0xa0] sm:$0xf]
  %v68 = vld [vmem:[%s1 + $0xa4] sm:$0xf]
  %v69 = vld [vmem:[%s1 + $0xa8] sm:$0xf]
  %v70 = vld [vmem:[%s1 + $0xac] sm:$0xf]
  %v71 = vld [vmem:[%s1 + $0xb0] sm:$0xf]
  %v72 = vld [vmem:[%s1 + $0xb4] sm:$0xf]
  %v73 = vld [vmem:[%s1 + $0xb8] sm:$0xf]
  %v74 = vld [vmem:[%s1 + $0xbc] sm:$0xf]
  %v75 = vld [vmem:[%s1 + $0xc0] sm:$0xf]
  %v76 = vld [vmem:[%s1 + $0xc4] sm:$0xf]
  %v77 = vld [vmem:[%s1 + $0xc8] sm:$0xf]
  %v78 = vld [vmem:[%s1 + $0xcc] sm:$0xf]
  %v79 = vld [vmem:[%s1 + $0xd0] sm:$0xf]
  %v80 = vld [vmem:[%s1 + $0xd4] sm:$0xf]
  %v81 = vld [vmem:[%s1 + $0xd8] sm:$0xf]
  %v82 = vld [vmem:[%s1 + $0xdc] sm:$0xf]
  %v83 = vld [vmem:[%s1 + $0xe0] sm:$0xf]
  %v84 = vld [vmem:[%s1 + $0xe4] sm:$0xf]
  %v85 = vld [vmem:[%s1 + $0xe8] sm:$0xf]
  %v86 = vld [vmem:[%s1 + $0xec] sm:$0xf]
  %v87 = vld [vmem:[%s1 + $0xf0] sm:$0xf]
  %v88 = vld [vmem:[%s1 + $0xf4] sm:$0xf]
  %v89 = vld [vmem:[%s1 + $0xf8] sm:$0xf]
  %v90 = vld [vmem:[%s1 + $0xfc] sm:$0xf]
  %v95 = vunpack.c.l.b16 %v23
  %v96 = vunpack.c.h.b16 %v23
  %v97 = vunpack.c.l.b16 %v24
  %v98 = vunpack.c.h.b16 %v24
  %v99 = vunpack.c.l.b16 %v25
  %v100 = vunpack.c.h.b16 %v25
  %v101 = vunpack.c.l.b16 %v26
  %v102 = vunpack.c.h.b16 %v26
  %v103 = vpack.c.b16 %v99, %v95
  %v104 = vpack.c.b16 %v100, %v96
  %v105 = vpack.c.b16 %v101, %v97
  %v106 = vpack.c.b16 %v102, %v98
  %v175 = vunpack.c.l.b16 %v27
  %v176 = vunpack.c.l.b16 %v28
  %v177 = vunpack.c.l.b16 %v29
  %v178 = vunpack.c.l.b16 %v30
  %v179 = vunpack.c.l.b16 %v31
  %v180 = vunpack.c.l.b16 %v32
  %v181 = vunpack.c.l.b16 %v33
  %v182 = vunpack.c.l.b16 %v34
  %v183 = vunpack.c.l.b16 %v35
  %v184 = vunpack.c.l.b16 %v36
  %v185 = vunpack.c.l.b16 %v37
  %v186 = vunpack.c.l.b16 %v38
  %v187 = vunpack.c.l.b16 %v39
  %v188 = vunpack.c.l.b16 %v40
  %v189 = vunpack.c.l.b16 %v41
  %v190 = vunpack.c.l.b16 %v42
  %v191 = vunpack.c.l.b16 %v43
  %v192 = vunpack.c.l.b16 %v44
  %v193 = vunpack.c.l.b16 %v45
  %v194 = vunpack.c.l.b16 %v46
  %v195 = vunpack.c.l.b16 %v47
  %v196 = vunpack.c.l.b16 %v48
  %v197 = vunpack.c.l.b16 %v49
  %v198 = vunpack.c.l.b16 %v50
  %v199 = vunpack.c.l.b16 %v51
  %v200 = vunpack.c.l.b16 %v52
  %v201 = vunpack.c.l.b16 %v53
  %v202 = vunpack.c.l.b16 %v54
  %v203 = vunpack.c.l.b16 %v55
  %v204 = vunpack.c.l.b16 %v56
  %v205 = vunpack.c.l.b16 %v57
  %v206 = vunpack.c.l.b16 %v58
  %v207 = vunpack.c.l.b16 %v59
  %v208 = vunpack.c.l.b16 %v60
  %v209 = vunpack.c.l.b16 %v61
  %v210 = vunpack.c.l.b16 %v62
  %v211 = vunpack.c.l.b16 %v63
  %v212 = vunpack.c.l.b16 %v64
  %v213 = vunpack.c.l.b16 %v65
  %v214 = vunpack.c.l.b16 %v66
  %v215 = vunpack.c.l.b16 %v67
  %v216 = vunpack.c.l.b16 %v68
  %v217 = vunpack.c.l.b16 %v69
  %v218 = vunpack.c.l.b16 %v70
  %v219 = vunpack.c.l.b16 %v71
  %v220 = vunpack.c.l.b16 %v72
  %v221 = vunpack.c.l.b16 %v73
  %v222 = vunpack.c.l.b16 %v74
  %v223 = vunpack.c.l.b16 %v75
  %v224 = vunpack.c.l.b16 %v76
  %v225 = vunpack.c.l.b16 %v77
  %v226 = vunpack.c.l.b16 %v78
  %v227 = vunpack.c.l.b16 %v79
  %v228 = vunpack.c.l.b16 %v80
  %v229 = vunpack.c.l.b16 %v81
  %v230 = vunpack.c.l.b16 %v82
  %v231 = vunpack.c.l.b16 %v83
  %v232 = vunpack.c.l.b16 %v84
  %v233 = vunpack.c.l.b16 %v85
  %v234 = vunpack.c.l.b16 %v86
  %v235 = vunpack.c.l.b16 %v87
  %v236 = vunpack.c.l.b16 %v88
  %v237 = vunpack.c.l.b16 %v89
  %v238 = vunpack.c.l.b16 %v90
  %v239 = vpack.c.b16 %v176, %v175
  %v240 = vpack.c.b16 %v178, %v177
  %v241 = vpack.c.b16 %v180, %v179
  %v242 = vpack.c.b16 %v182, %v181
  %v243 = vpack.c.b16 %v184, %v183
  %v244 = vpack.c.b16 %v186, %v185
  %v245 = vpack.c.b16 %v188, %v187
  %v246 = vpack.c.b16 %v190, %v189
  %v247 = vpack.c.b16 %v192, %v191
  %v248 = vpack.c.b16 %v194, %v193
  %v249 = vpack.c.b16 %v196, %v195
  %v250 = vpack.c.b16 %v198, %v197
  %v251 = vpack.c.b16 %v200, %v199
  %v252 = vpack.c.b16 %v202, %v201
  %v253 = vpack.c.b16 %v204, %v203
  %v254 = vpack.c.b16 %v206, %v205
  %v255 = vpack.c.b16 %v208, %v207
  %v256 = vpack.c.b16 %v210, %v209
  %v257 = vpack.c.b16 %v212, %v211
  %v258 = vpack.c.b16 %v214, %v213
  %v259 = vpack.c.b16 %v216, %v215
  %v260 = vpack.c.b16 %v218, %v217
  %v261 = vpack.c.b16 %v220, %v219
  %v262 = vpack.c.b16 %v222, %v221
  %v263 = vpack.c.b16 %v224, %v223
  %v264 = vpack.c.b16 %v226, %v225
  %v265 = vpack.c.b16 %v228, %v227
  %v266 = vpack.c.b16 %v230, %v229
  %v267 = vpack.c.b16 %v232, %v231
  %v268 = vpack.c.b16 %v234, %v233
  %v269 = vpack.c.b16 %v236, %v235
  %v270 = vpack.c.b16 %v238, %v237
  %303 = vmatprep.subr.bf16.mxu0 0
  %304 = vmatpush1.bf16.msra.mxu0 %v239
  %305 = vmatprep.subr.bf16.mxu0 0
  %306 = vmatpush1.bf16.msra.mxu0 %v240
  %307 = vmatprep.subr.bf16.mxu0 0
  %308 = vmatpush1.bf16.msra.mxu0 %v241
  %309 = vmatprep.subr.bf16.mxu0 0
  %310 = vmatpush1.bf16.msra.mxu0 %v242
  %311 = vmatprep.subr.bf16.mxu0 0
  %312 = vmatpush1.bf16.msra.mxu0 %v243
  %313 = vmatprep.subr.bf16.mxu0 0
  %314 = vmatpush1.bf16.msra.mxu0 %v244
  %315 = vmatprep.subr.bf16.mxu0 0
  %316 = vmatpush1.bf16.msra.mxu0 %v245
  %317 = vmatprep.subr.bf16.mxu0 0
  %318 = vmatpush1.bf16.msra.mxu0 %v246
  %319 = vmatprep.subr.bf16.mxu0 0
  %320 = vmatpush1.bf16.msra.mxu0 %v247
  %321 = vmatprep.subr.bf16.mxu0 0
  %322 = vmatpush1.bf16.msra.mxu0 %v248
  %323 = vmatprep.subr.bf16.mxu0 0
  %324 = vmatpush1.bf16.msra.mxu0 %v249
  %325 = vmatprep.subr.bf16.mxu0 0
  %326 = vmatpush1.bf16.msra.mxu0 %v250
  %327 = vmatprep.subr.bf16.mxu0 0
  %328 = vmatpush1.bf16.msra.mxu0 %v251
  %329 = vmatprep.subr.bf16.mxu0 0
  %330 = vmatpush1.bf16.msra.mxu0 %v252
  %331 = vmatprep.subr.bf16.mxu0 0
  %332 = vmatpush1.bf16.msra.mxu0 %v253
  %333 = vmatprep.subr.bf16.mxu0 0
  %334 = vmatpush1.bf16.msra.mxu0 %v254
  %335 = vmatprep.mubr.bf16.mxu0 %v104
  %336 = vmatmul.mubr.bf16.gmra.mrb[0].mxu0 %v103
  %v337 = vpop.f32.mrb[0].mxu0
  %v338 = vadd.f32 0.0, %v337
  %v339 = vpop.f32.mrb[0].mxu0
  %v340 = vpop.f32.mrb[0].mxu0
  %v341 = vadd.f32 0.0, %v340
  %v342 = vpop.f32.mrb[0].mxu0
  %343 = vdwg.mxu0
  %344 = vmatprep.subr.bf16.mxu0 0
  %345 = vmatpush1.bf16.msra.mxu0 %v255
  %346 = vmatprep.subr.bf16.mxu0 0
  %347 = vmatpush1.bf16.msra.mxu0 %v256
  %348 = vmatprep.subr.bf16.mxu0 0
  %349 = vmatpush1.bf16.msra.mxu0 %v257
  %350 = vmatprep.subr.bf16.mxu0 0
  %351 = vmatpush1.bf16.msra.mxu0 %v258
  %352 = vmatprep.subr.bf16.mxu0 0
  %353 = vmatpush1.bf16.msra.mxu0 %v259
  %354 = vmatprep.subr.bf16.mxu0 0
  %355 = vmatpush1.bf16.msra.mxu0 %v260
  %356 = vmatprep.subr.bf16.mxu0 0
  %357 = vmatpush1.bf16.msra.mxu0 %v261
  %358 = vmatprep.subr.bf16.mxu0 0
  %359 = vmatpush1.bf16.msra.mxu0 %v262
  %360 = vmatprep.subr.bf16.mxu0 0
  %361 = vmatpush1.bf16.msra.mxu0 %v263
  %362 = vmatprep.subr.bf16.mxu0 0
  %363 = vmatpush1.bf16.msra.mxu0 %v264
  %364 = vmatprep.subr.bf16.mxu0 0
  %365 = vmatpush1.bf16.msra.mxu0 %v265
  %366 = vmatprep.subr.bf16.mxu0 0
  %367 = vmatpush1.bf16.msra.mxu0 %v266
  %368 = vmatprep.subr.bf16.mxu0 0
  %369 = vmatpush1.bf16.msra.mxu0 %v267
  %370 = vmatprep.subr.bf16.mxu0 0
  %371 = vmatpush1.bf16.msra.mxu0 %v268
  %372 = vmatprep.subr.bf16.mxu0 0
  %373 = vmatpush1.bf16.msra.mxu0 %v269
  %374 = vmatprep.subr.bf16.mxu0 0
  %375 = vmatpush1.bf16.msra.mxu0 %v270
  %376 = vmatprep.mubr.bf16.mxu0 %v106
  %377 = vmatmul.mubr.bf16.gmra.mrb[0].mxu0 %v105
  %v378 = vpop.f32.mrb[0].mxu0
  %v379 = vadd.f32 %v338, %v378
  %v380 = vpop.f32.mrb[0].mxu0
  %v381 = vpop.f32.mrb[0].mxu0
  %v382 = vadd.f32 %v341, %v381
  %v383 = vpop.f32.mrb[0].mxu0
  %384 = vdwg.mxu0
  %v385 = vadd.f32 %v21, %v379
  %v386 = vadd.f32 %v22, %v382
  %387 = vst [vmem:[#allocation2] sm:$0xff] %v385
  %388 = vst [vmem:[#allocation2 + $0x8] sm:$0xff] %v386
  // Predicated region
  $region18: #{_lambda_.37} parent=0 // pred_check
    %p389 = pneg %p15
  $region19: #{_lambda_.37} parent=0 // pred_check_branch
    %391 = sbr.rel (%p389) target = $region21
  $region20: #{_lambda_.37} parent=0 // pred_region
    %v392 = vld [vmem:[#allocation2] sm:$0xff]
    %v393 = vld [vmem:[#allocation2 + $0x8] sm:$0xff]
    %v394 = vld [vmem:[%s2] sm:$0x1]
    %v396 = vlaneseq
    %v397 = vshrl.u32 %v396, 7
    %v398 = vsub.s32 0, %v397
    %v399 = vrot.slane %v394, %v398
    %v401 = vadd.f32 %v392, %v399
    %v402 = vadd.f32 %v393, %v399
    %v403 = vpack.c.bf16 %v402, %v401
    %v405 = vunpack.c.l.b16 %v403
    %v406 = vunpack.c.h.b16 %v403
    %v407 = vpack.c.b16 %v405, %v405
    %v408 = vpack.c.b16 %v406, %v406
    %411 = vst [vmem:[%s3] sm:$0xf] %v407
    %412 = vst [vmem:[%s3 + $0x4] sm:$0xf] %v408
  $region21: #{_lambda_.37} parent=0 // pred_fallthru
    _
  // Predicated region
  $region22: #{_lambda_.37} parent=0 // pred_check
    _
  $region23: #{_lambda_.37} parent=0 // pred_check_branch
    %414 = sbr.rel (0) target = $region25
  $region24: #{_lambda_.37} parent=0 // pred_region
    _
  $region25: #{_lambda_.37} parent=0 // pred_fallthru
    _
  // Predicated region
  $region26: #{_lambda_.37} parent=0 // pred_check
    _
  $region27: #{_lambda_.37} parent=0 // pred_check_branch
    %416 = sbr.rel (0) target = $region29
  $region28: #{_lambda_.37} parent=0 // pred_region
    _
  $region29: #{_lambda_.37} parent=0 // pred_fallthru
    _

// kernel: _lambda_.39
$region0: #{_lambda_.39}
  #allocation0 [shape = 'u32[]', space=smem, size = 0x4, offset = 0x4, fixed_abs, tag = 'smem constant byte address 0x4 - core index']
  #allocation1 [shape = 'u32[144,128]{1,0:T(1,128)}', space=vmem, size = 0x12000, scoped, tag = 'internal scratch']
  #allocation2 [shape = 'f32[16,128]{1,0:T(8,128)}', space=vmem, size = 0x2000, scoped, tag = 'scratch operand']
  %s0 = inlined_call_operand.vmem [shape: bf16[16,1024], index: 0, kind: input, shape index: {}]
  %s1 = inlined_call_operand.vmem [shape: bf16[1024,128], index: 1, kind: input, shape index: {}]
  %s2 = inlined_call_operand.vmem [shape: f32[1,128], index: 2, kind: input, shape index: {}]
  %s3 = inlined_call_operand.vmem [shape: bf16[16,128], index: 3, kind: output, shape index: {}]
  %s4 = sld [smem:[#allocation0]]
  $region76: #{_lambda_.39} parent=0
    _
  %s6 = ssub.s32 1, %s4
  %s7 = scalar_select 0, %s6, %s4
  $region1: #{_lambda_.39} parent=0
    #allocation3 [shape = 'u8[32768]{0}', space=vmem, size = 0x8000, scoped, tag = 'input window, operand 0']
    loop: start=0, step=1, limit=4
    $region2: #{_lambda_.39} parent=1 // loop_pre_header
      _
    $region3: #{_lambda_.39} parent=1 // loop_header
      %s9 = sphi 0, %s13
      %p10 = scmp.ge.s32.totalorder %s9, 4
      %s16 = sphi 0, %s35
      %s17 = sphi 0, %s31
      %s18 = sphi 0, %s27
      %s19 = sphi 0, %s16
      %s20 = sphi 0, %s17
      %s21 = sphi 0, %s18
      %s22 = sphi 0, %s19
      %s23 = sphi 0, %s20
      %s24 = sphi 0, %s21
      %s40 = sphi 0, %s42
      %s43 = sphi 0, %s40
      %s44 = sphi 0, %s43
      %s60 = sphi 0, %s44
      %s68 = sphi 0, %s70
      %s71 = sphi 0, %s68
      %s72 = sphi 0, %s71
      %s88 = sphi 0, %s72
      %s94 = sphi 0, %s96
      %s97 = sphi 0, %s94
      %s98 = sphi 0, %s97
      %s114 = sphi 0, %s98
      %s122 = sphi 0, %s124
      %s125 = sphi 0, %s122
      %s126 = sphi 0, %s125
      %s142 = sphi 0, %s126
    $region4: #{_lambda_.39} parent=1 // loop_header_branch
      %12 = sbr.rel (%p10) target = $region8
    $region5: #{_lambda_.39} parent=1 // loop_body
      %s14 = ssub.s32 %s9, 1
      %s15 = ssub.s32 %s9, 2
      %s25 = sadd.s32 1, %s18
      %p26 = scmp.ge.s32.totalorder %s25, 2
      %s27 = scalar_select %p26, 0, %s25
      %s28 = sadd.s32 1, %s17
      %s29 = scalar_select %p26, %s28, %s17
      %p30 = scmp.ge.s32.totalorder %s29, 1
      %s31 = scalar_select %p30, 0, %s29
      %s32 = sadd.s32 1, %s16
      %s33 = scalar_select %p30, %s32, %s16
      %p34 = scmp.ge.s32.totalorder %s33, 1
      %s35 = scalar_select %p34, 0, %s33
      %s36 = ssub.s32 %s16, %s35
      %s37 = ssub.s32 %s18, %s27
      %s38 = sor.u32 %s36, %s37
      %p39 = scmp.eq.s32.totalorder %s38, 0
      %s41 = sadd.s32 %s40, 1
      %s42 = scalar_select %p39, %s40, %s41
      %p45 = pneg %p39
      %p46 = scmp.eq.s32.totalorder %s9, 1
      %p47 = por %p45, %p46
      %p48 = scmp.ne.s32.totalorder %s40, %s43
      %p49 = scmp.eq.s32.totalorder %s9, 0
      %p50 = por %p48, %p49
      %p51 = scmp.ne.s32.totalorder %s40, %s43
      %p52 = scmp.eq.s32.totalorder %s14, 1
      %p53 = por %p51, %p52
      %p54 = scmp.ne.s32.totalorder %s43, %s44
      %p55 = scmp.eq.s32.totalorder %s14, 0
      %p56 = por %p54, %p55
      %p57 = scmp.ne.s32.totalorder %s43, %s44
      %p58 = scmp.eq.s32.totalorder %s15, 1
      %p59 = por %p57, %p58
      %p61 = scmp.ne.s32.totalorder %s44, %s60
      %p62 = scmp.eq.s32.totalorder %s15, 0
      %p63 = por %p61, %p62
      %s64 = ssub.s32 %s18, %s27
      %s65 = ssub.s32 %s17, %s31
      %s66 = sor.u32 %s64, %s65
      %p67 = scmp.eq.s32.totalorder %s66, 0
      %s69 = sadd.s32 %s68, 1
      %s70 = scalar_select %p67, %s68, %s69
      %p73 = pneg %p67
      %p74 = scmp.eq.s32.totalorder %s9, 1
      %p75 = por %p73, %p74
      %p76 = scmp.ne.s32.totalorder %s68, %s71
      %p77 = scmp.eq.s32.totalorder %s9, 0
      %p78 = por %p76, %p77
      %p79 = scmp.ne.s32.totalorder %s68, %s71
      %p80 = scmp.eq.s32.totalorder %s14, 1
      %p81 = por %p79, %p80
      %p82 = scmp.ne.s32.totalorder %s71, %s72
      %p83 = scmp.eq.s32.totalorder %s14, 0
      %p84 = por %p82, %p83
      %p85 = scmp.ne.s32.totalorder %s71, %s72
      %p86 = scmp.eq.s32.totalorder %s15, 1
      %p87 = por %p85, %p86
      %p89 = scmp.ne.s32.totalorder %s72, %s88
      %p90 = scmp.eq.s32.totalorder %s15, 0
      %p91 = por %p89, %p90
      %s92 = ssub.s32 %s17, %s31
      %p93 = scmp.eq.s32.totalorder %s92, 0
      %s95 = sadd.s32 %s94, 1
      %s96 = scalar_select %p93, %s94, %s95
      %p99 = pneg %p93
      %p100 = scmp.eq.s32.totalorder %s9, 1
      %p101 = por %p99, %p100
      %p102 = scmp.ne.s32.totalorder %s94, %s97
      %p103 = scmp.eq.s32.totalorder %s9, 0
      %p104 = por %p102, %p103
      %p105 = scmp.ne.s32.totalorder %s94, %s97
      %p106 = scmp.eq.s32.totalorder %s14, 1
      %p107 = por %p105, %p106
      %p108 = scmp.ne.s32.totalorder %s97, %s98
      %p109 = scmp.eq.s32.totalorder %s14, 0
      %p110 = por %p108, %p109
      %p111 = scmp.ne.s32.totalorder %s97, %s98
      %p112 = scmp.eq.s32.totalorder %s15, 1
      %p113 = por %p111, %p112
      %p115 = scmp.ne.s32.totalorder %s98, %s114
      %p116 = scmp.eq.s32.totalorder %s15, 0
      %p117 = por %p115, %p116
      %s118 = ssub.s32 %s16, %s35
      %s119 = ssub.s32 %s17, %s31
      %s120 = sor.u32 %s118, %s119
      %p121 = scmp.eq.s32.totalorder %s120, 0
      %s123 = sadd.s32 %s122, 1
      %s124 = scalar_select %p121, %s122, %s123
      %p127 = pneg %p121
      %p128 = scmp.eq.s32.totalorder %s9, 1
      %p129 = por %p127, %p128
      %p130 = scmp.ne.s32.totalorder %s122, %s125
      %p131 = scmp.eq.s32.totalorder %s9, 0
      %p132 = por %p130, %p131
      %p133 = scmp.ne.s32.totalorder %s122, %s125
      %p134 = scmp.eq.s32.totalorder %s14, 1
      %p135 = por %p133, %p134
      %p136 = scmp.ne.s32.totalorder %s125, %s126
      %p137 = scmp.eq.s32.totalorder %s14, 0
      %p138 = por %p136, %p137
      %p139 = scmp.ne.s32.totalorder %s125, %s126
      %p140 = scmp.eq.s32.totalorder %s15, 1
      %p141 = por %p139, %p140
      %p143 = scmp.ne.s32.totalorder %s126, %s142
      %p144 = scmp.eq.s32.totalorder %s15, 0
      %p145 = por %p143, %p144
      %p146 = scmp.le.s32.totalorder 1, %s9
      %p147 = scmp.lt.s32.totalorder %s9, 3
      %p148 = pnand %p146, %p147
      %p149 = pneg %p148
      // Predicated region
      $region9: #{_lambda_.39} parent=5 // pred_check
        _
      $region10: #{_lambda_.39} parent=5 // pred_check_branch
        %151 = sbr.rel (%p148) target = $region12
      $region11: #{_lambda_.39} parent=5 // pred_region
        %s152 = ssub.s32 %s9, 1
        // Predicated region
        $region13: #{_lambda_.39} parent=11 // pred_check
          %p153 = pneg %p110
        $region14: #{_lambda_.39} parent=11 // pred_check_branch
          %155 = sbr.rel (%p153) target = $region16
        $region15: #{_lambda_.39} parent=11 // pred_region
          %p156 = scmp.lt.s32.totalorder %s20, 0
          %s157 = scalar_select %p156, %s20, 0
          %s158 = scalar_lea.vmem %s2, %s157
        $region16: #{_lambda_.39} parent=11 // pred_fallthru
          _
      $region12: #{_lambda_.39} parent=5 // pred_fallthru
        _
      %p159 = scmp.lt.s32.totalorder %s9, 2
      // Predicated region
      $region17: #{_lambda_.39} parent=5 // pred_check
        %p160 = pneg %p159
      $region18: #{_lambda_.39} parent=5 // pred_check_branch
        %162 = sbr.rel (%p160) target = $region20
      $region19: #{_lambda_.39} parent=5 // pred_region
        // Predicated region
        $region21: #{_lambda_.39} parent=19 // pred_check
          %p163 = pneg %p50
        $region22: #{_lambda_.39} parent=19 // pred_check_branch
          %165 = sbr.rel (%p163) target = $region24
        $region23: #{_lambda_.39} parent=19 // pred_region
          %s166 = sand.u32 %s40, 1
          %s167 = sand.u32 %s40, 1
          %s168 = smul.addr %s167, 32
          %s169 = scalar_lea.vmem [#allocation3], %s168
          %s170 = smul.u32 2, %s16
          %s171 = smul.u32 4, %s18
          %s172 = smul.addr %s170, 8
          %s173 = sadd.s32 %s171, %s172
          %s174 = smul.addr %s173, 4
          %s175 = scalar_lea.vmem %s0, %s174
          // Predicated region
          $region25: #{_lambda_.39} parent=23 // pred_check
            _
          $region26: #{_lambda_.39} parent=23 // pred_check_branch
            %177 = sbr.rel (0) target = $region28
          $region27: #{_lambda_.39} parent=23 // pred_region
            // Predicated region
            $region29: #{_lambda_.39} parent=27 // pred_check
              _
            $region30: #{_lambda_.39} parent=27 // pred_check_branch
              %179 = sbr.rel (0) target = $region32
            $region31: #{_lambda_.39} parent=27 // pred_region
              loop: start=0, step=1, limit=1
              $region33: #{_lambda_.39} parent=31 // loop_pre_header
                _
              $region34: #{_lambda_.39} parent=31 // loop_header
                %s181 = sphi 0, %s185
                %p182 = scmp.ge.s32.totalorder %s181, 1
                %s186 = sphi %s175, %s175
                %s187 = sphi %s169, %s169
              $region35: #{_lambda_.39} parent=31 // loop_header_branch
                %184 = sbr.rel (%p182) target = $region39
              $region36: #{_lambda_.39} parent=31 // loop_body
                %v188 = vld [vmem:[%s186] sm:$0xff]
                %189 = vst [vmem:[%s187] sm:$0xff] %v188
                %v190 = vld [vmem:[%s186 + $0x8] sm:$0xff]
                %191 = vst [vmem:[%s187 + $0x8] sm:$0xff] %v190
                %v192 = vld [vmem:[%s186 + $0x20] sm:$0xff]
                %193 = vst [vmem:[%s187 + $0x10] sm:$0xff] %v192
                %v194 = vld [vmem:[%s186 + $0x28] sm:$0xff]
                %195 = vst [vmem:[%s187 + $0x18] sm:$0xff] %v194
              $region37: #{_lambda_.39} parent=31 // loop_footer
                %s185 = sadd.s32 1, %s181
              $region38: #{_lambda_.39} parent=31 // loop_footer_branch
                %180 = sbr.rel target = $region34
              $region39: #{_lambda_.39} parent=31 // loop_exit
                _
            $region32: #{_lambda_.39} parent=27 // pred_fallthru
              _
            // Predicated region
            $region40: #{_lambda_.39} parent=27 // pred_check
              _
            $region41: #{_lambda_.39} parent=27 // pred_check_branch
              %197 = sbr.rel target = $region43
            $region42: #{_lambda_.39} parent=27 // pred_region
              _
            $region43: #{_lambda_.39} parent=27 // pred_fallthru
              _
          $region28: #{_lambda_.39} parent=23 // pred_fallthru
            _
          %198 = vnop
        $region24: #{_lambda_.39} parent=19 // pred_fallthru
          _
        // Predicated region
        $region44: #{_lambda_.39} parent=19 // pred_check
          %p199 = pneg %p78
        $region45: #{_lambda_.39} parent=19 // pred_check_branch
          %201 = sbr.rel (%p199) target = $region47
        $region46: #{_lambda_.39} parent=19 // pred_region
          %s202 = smul.u32 64, %s18
          %p203 = scmp.lt.s32.totalorder %s202, 127
          %s204 = scalar_select %p203, %s202, 127
          %p205 = scmp.lt.s32.totalorder %s17, 0
          %s206 = scalar_select %p205, %s17, 0
          %s207 = sadd.s32 %s206, %s204
          %s208 = smul.addr %s207, 4
          %s209 = scalar_lea.vmem %s1, %s208
          %s210 = smul.u32 64, %s18
        $region47: #{_lambda_.39} parent=19 // pred_fallthru
          _
      $region20: #{_lambda_.39} parent=5 // pred_fallthru
        _
      %p211 = scmp.le.s32.totalorder 1, %s9
      %p212 = scmp.lt.s32.totalorder %s9, 3
      %p213 = pnand %p211, %p212
      %p214 = pneg %p213
      // Predicated region
      $region48: #{_lambda_.39} parent=5 // pred_check
        _
      $region49: #{_lambda_.39} parent=5 // pred_check_branch
        %216 = sbr.rel (%p213) target = $region51
      $region50: #{_lambda_.39} parent=5 // pred_region
        %s217 = ssub.s32 %s9, 1
        %s218 = sand.u32 %s43, 1
        %s219 = sand.u32 %s43, 1
        %s220 = smul.addr %s219, 32
        %s221 = scalar_lea.vmem [#allocation3], %s220
        // Predicated region
        $region52: #{_lambda_.39} parent=50 // pred_check
          %p222 = pneg %p56
        $region53: #{_lambda_.39} parent=50 // pred_check_branch
          %224 = sbr.rel (%p222) target = $region55
        $region54: #{_lambda_.39} parent=50 // pred_region
          _
        $region55: #{_lambda_.39} parent=50 // pred_fallthru
          _
        %s225 = sand.u32 %s43, 1
        %s226 = sand.u32 %s43, 1
        %s227 = smul.addr %s226, 32
        %s228 = scalar_lea.vmem [#allocation3], %s227
        %p229 = pneg %p56
        %p230 = pneg %p53
        %s231 = smul.u32 64, %s21
        %p232 = scmp.lt.s32.totalorder %s231, 127
        %s233 = scalar_select %p232, %s231, 127
        %p234 = scmp.lt.s32.totalorder %s20, 0
        %s235 = scalar_select %p234, %s20, 0
        %s236 = sadd.s32 %s235, %s233
        %s237 = smul.addr %s236, 4
        %s238 = scalar_lea.vmem %s1, %s237
        %p239 = pneg %p84
        %p240 = pneg %p81
        %p241 = scmp.lt.s32.totalorder %s20, 0
        %s242 = scalar_select %p241, %s20, 0
        %s243 = scalar_lea.vmem %s2, %s242
        %p244 = pneg %p110
        %p245 = pneg %p107
        %p246 = pneg %p138
        %p247 = pneg %p135
        %s248 = smul.u32 2, %s19
        %p249 = scmp.lt.s32.totalorder %s248, 1
        %s250 = scalar_select %p249, %s248, 1
        %p251 = scmp.lt.s32.totalorder %s20, 0
        %s252 = scalar_select %p251, %s20, 0
        %s253 = sadd.s32 %s252, %s250
        %s254 = smul.addr %s253, 4
        %s255 = scalar_lea.vmem %s3, %s254
        %s256 = smul.u32 2, %s19
        %s257 = smul.u32 4, %s21
        %s258 = smul.u32 64, %s21
        %p259 = scmp.lt.s32.totalorder %s258, 127
        %s260 = scalar_select %p259, %s258, 127
        %p261 = scmp.lt.s32.totalorder %s20, 0
        %s262 = scalar_select %p261, %s20, 0
        %s263 = sadd.s32 %s262, %s260
        %s264 = smul.addr %s263, 4
        %s265 = scalar_lea.vmem %s1, %s264
        %s266 = smul.u32 64, %s21
        %p267 = scmp.lt.s32.totalorder %s20, 0
        %s268 = scalar_select %p267, %s20, 0
        %s269 = scalar_lea.vmem %s2, %s268
        %s270 = smul.u32 2, %s19
        %p271 = scmp.lt.s32.totalorder %s270, 1
        %s272 = scalar_select %p271, %s270, 1
        %p273 = scmp.lt.s32.totalorder %s20, 0
        %s274 = scalar_select %p273, %s20, 0
        %s275 = sadd.s32 %s274, %s272
        %s276 = smul.addr %s275, 4
        %s277 = scalar_lea.vmem %s3, %s276
        %s278 = smul.u32 2, %s19
        %p280 = scmp.eq.s32.totalorder %s21, 0
        // Predicated region
        $region56: #{_lambda_.39} parent=50 // pred_check
          %p281 = pneg %p280
        $region57: #{_lambda_.39} parent=50 // pred_check_branch
          %283 = sbr.rel (%p281) target = $region59
        $region58: #{_lambda_.39} parent=50 // pred_region
          %284 = vst [vmem:[#allocation2] sm:$0xff] 0.0
          %285 = vst [vmem:[#allocation2 + $0x8] sm:$0xff] 0.0
        $region59: #{_lambda_.39} parent=50 // pred_fallthru
          _
        %v286 = vld [vmem:[#allocation2] sm:$0xff]
        %v287 = vld [vmem:[#allocation2 + $0x8] sm:$0xff]
        %v288 = vld [vmem:[%s221] sm:$0xff]
        %v289 = vld [vmem:[%s221 + $0x8] sm:$0xff]
        %v290 = vld [vmem:[%s221 + $0x10] sm:$0xff]
        %v291 = vld [vmem:[%s221 + $0x18] sm:$0xff]
        %v292 = vld [vmem:[%s265] sm:$0xf]
        %v293 = vld [vmem:[%s265 + $0x4] sm:$0xf]
        %v294 = vld [vmem:[%s265 + $0x8] sm:$0xf]
        %v295 = vld [vmem:[%s265 + $0xc] sm:$0xf]
        %v296 = vld [vmem:[%s265 + $0x10] sm:$0xf]
        %v297 = vld [vmem:[%s265 + $0x14] sm:$0xf]
        %v298 = vld [vmem:[%s265 + $0x18] sm:$0xf]
        %v299 = vld [vmem:[%s265 + $0x1c] sm:$0xf]
        %v300 = vld [vmem:[%s265 + $0x20] sm:$0xf]
        %v301 = vld [vmem:[%s265 + $0x24] sm:$0xf]
        %v302 = vld [vmem:[%s265 + $0x28] sm:$0xf]
        %v303 = vld [vmem:[%s265 + $0x2c] sm:$0xf]
        %v304 = vld [vmem:[%s265 + $0x30] sm:$0xf]
        %v305 = vld [vmem:[%s265 + $0x34] sm:$0xf]
        %v306 = vld [vmem:[%s265 + $0x38] sm:$0xf]
        %v307 = vld [vmem:[%s265 + $0x3c] sm:$0xf]
        %v308 = vld [vmem:[%s265 + $0x40] sm:$0xf]
        %v309 = vld [vmem:[%s265 + $0x44] sm:$0xf]
        %v310 = vld [vmem:[%s265 + $0x48] sm:$0xf]
        %v311 = vld [vmem:[%s265 + $0x4c] sm:$0xf]
        %v312 = vld [vmem:[%s265 + $0x50] sm:$0xf]
        %v313 = vld [vmem:[%s265 + $0x54] sm:$0xf]
        %v314 = vld [vmem:[%s265 + $0x58] sm:$0xf]
        %v315 = vld [vmem:[%s265 + $0x5c] sm:$0xf]
        %v316 = vld [vmem:[%s265 + $0x60] sm:$0xf]
        %v317 = vld [vmem:[%s265 + $0x64] sm:$0xf]
        %v318 = vld [vmem:[%s265 + $0x68] sm:$0xf]
        %v319 = vld [vmem:[%s265 + $0x6c] sm:$0xf]
        %v320 = vld [vmem:[%s265 + $0x70] sm:$0xf]
        %v321 = vld [vmem:[%s265 + $0x74] sm:$0xf]
        %v322 = vld [vmem:[%s265 + $0x78] sm:$0xf]
        %v323 = vld [vmem:[%s265 + $0x7c] sm:$0xf]
        %v324 = vld [vmem:[%s265 + $0x80] sm:$0xf]
        %v325 = vld [vmem:[%s265 + $0x84] sm:$0xf]
        %v326 = vld [vmem:[%s265 + $0x88] sm:$0xf]
        %v327 = vld [vmem:[%s265 + $0x8c] sm:$0xf]
        %v328 = vld [vmem:[%s265 + $0x90] sm:$0xf]
        %v329 = vld [vmem:[%s265 + $0x94] sm:$0xf]
        %v330 = vld [vmem:[%s265 + $0x98] sm:$0xf]
        %v331 = vld [vmem:[%s265 + $0x9c] sm:$0xf]
        %v332 = vld [vmem:[%s265 + $0xa0] sm:$0xf]
        %v333 = vld [vmem:[%s265 + $0xa4] sm:$0xf]
        %v334 = vld [vmem:[%s265 + $0xa8] sm:$0xf]
        %v335 = vld [vmem:[%s265 + $0xac] sm:$0xf]
        %v336 = vld [vmem:[%s265 + $0xb0] sm:$0xf]
        %v337 = vld [vmem:[%s265 + $0xb4] sm:$0xf]
        %v338 = vld [vmem:[%s265 + $0xb8] sm:$0xf]
        %v339 = vld [vmem:[%s265 + $0xbc] sm:$0xf]
        %v340 = vld [vmem:[%s265 + $0xc0] sm:$0xf]
        %v341 = vld [vmem:[%s265 + $0xc4] sm:$0xf]
        %v342 = vld [vmem:[%s265 + $0xc8] sm:$0xf]
        %v343 = vld [vmem:[%s265 + $0xcc] sm:$0xf]
        %v344 = vld [vmem:[%s265 + $0xd0] sm:$0xf]
        %v345 = vld [vmem:[%s265 + $0xd4] sm:$0xf]
        %v346 = vld [vmem:[%s265 + $0xd8] sm:$0xf]
        %v347 = vld [vmem:[%s265 + $0xdc] sm:$0xf]
        %v348 = vld [vmem:[%s265 + $0xe0] sm:$0xf]
        %v349 = vld [vmem:[%s265 + $0xe4] sm:$0xf]
        %v350 = vld [vmem:[%s265 + $0xe8] sm:$0xf]
        %v351 = vld [vmem:[%s265 + $0xec] sm:$0xf]
        %v352 = vld [vmem:[%s265 + $0xf0] sm:$0xf]
        %v353 = vld [vmem:[%s265 + $0xf4] sm:$0xf]
        %v354 = vld [vmem:[%s265 + $0xf8] sm:$0xf]
        %v355 = vld [vmem:[%s265 + $0xfc] sm:$0xf]
        %v360 = vunpack.c.l.b16 %v288
        %v361 = vunpack.c.h.b16 %v288
        %v362 = vunpack.c.l.b16 %v289
        %v363 = vunpack.c.h.b16 %v289
        %v364 = vunpack.c.l.b16 %v290
        %v365 = vunpack.c.h.b16 %v290
        %v366 = vunpack.c.l.b16 %v291
        %v367 = vunpack.c.h.b16 %v291
        %v368 = vpack.c.b16 %v364, %v360
        %v369 = vpack.c.b16 %v365, %v361
        %v370 = vpack.c.b16 %v366, %v362
        %v371 = vpack.c.b16 %v367, %v363
        %v440 = vunpack.c.l.b16 %v292
        %v441 = vunpack.c.l.b16 %v293
        %v442 = vunpack.c.l.b16 %v294
        %v443 = vunpack.c.l.b16 %v295
        %v444 = vunpack.c.l.b16 %v296
        %v445 = vunpack.c.l.b16 %v297
        %v446 = vunpack.c.l.b16 %v298
        %v447 = vunpack.c.l.b16 %v299
        %v448 = vunpack.c.l.b16 %v300
        %v449 = vunpack.c.l.b16 %v301
        %v450 = vunpack.c.l.b16 %v302
        %v451 = vunpack.c.l.b16 %v303
        %v452 = vunpack.c.l.b16 %v304
        %v453 = vunpack.c.l.b16 %v305
        %v454 = vunpack.c.l.b16 %v306
        %v455 = vunpack.c.l.b16 %v307
        %v456 = vunpack.c.l.b16 %v308
        %v457 = vunpack.c.l.b16 %v309
        %v458 = vunpack.c.l.b16 %v310
        %v459 = vunpack.c.l.b16 %v311
        %v460 = vunpack.c.l.b16 %v312
        %v461 = vunpack.c.l.b16 %v313
        %v462 = vunpack.c.l.b16 %v314
        %v463 = vunpack.c.l.b16 %v315
        %v464 = vunpack.c.l.b16 %v316
        %v465 = vunpack.c.l.b16 %v317
        %v466 = vunpack.c.l.b16 %v318
        %v467 = vunpack.c.l.b16 %v319
        %v468 = vunpack.c.l.b16 %v320
        %v469 = vunpack.c.l.b16 %v321
        %v470 = vunpack.c.l.b16 %v322
        %v471 = vunpack.c.l.b16 %v323
        %v472 = vunpack.c.l.b16 %v324
        %v473 = vunpack.c.l.b16 %v325
        %v474 = vunpack.c.l.b16 %v326
        %v475 = vunpack.c.l.b16 %v327
        %v476 = vunpack.c.l.b16 %v328
        %v477 = vunpack.c.l.b16 %v329
        %v478 = vunpack.c.l.b16 %v330
        %v479 = vunpack.c.l.b16 %v331
        %v480 = vunpack.c.l.b16 %v332
        %v481 = vunpack.c.l.b16 %v333
        %v482 = vunpack.c.l.b16 %v334
        %v483 = vunpack.c.l.b16 %v335
        %v484 = vunpack.c.l.b16 %v336
        %v485 = vunpack.c.l.b16 %v337
        %v486 = vunpack.c.l.b16 %v338
        %v487 = vunpack.c.l.b16 %v339
        %v488 = vunpack.c.l.b16 %v340
        %v489 = vunpack.c.l.b16 %v341
        %v490 = vunpack.c.l.b16 %v342
        %v491 = vunpack.c.l.b16 %v343
        %v492 = vunpack.c.l.b16 %v344
        %v493 = vunpack.c.l.b16 %v345
        %v494 = vunpack.c.l.b16 %v346
        %v495 = vunpack.c.l.b16 %v347
        %v496 = vunpack.c.l.b16 %v348
        %v497 = vunpack.c.l.b16 %v349
        %v498 = vunpack.c.l.b16 %v350
        %v499 = vunpack.c.l.b16 %v351
        %v500 = vunpack.c.l.b16 %v352
        %v501 = vunpack.c.l.b16 %v353
        %v502 = vunpack.c.l.b16 %v354
        %v503 = vunpack.c.l.b16 %v355
        %v504 = vpack.c.b16 %v441, %v440
        %v505 = vpack.c.b16 %v443, %v442
        %v506 = vpack.c.b16 %v445, %v444
        %v507 = vpack.c.b16 %v447, %v446
        %v508 = vpack.c.b16 %v449, %v448
        %v509 = vpack.c.b16 %v451, %v450
        %v510 = vpack.c.b16 %v453, %v452
        %v511 = vpack.c.b16 %v455, %v454
        %v512 = vpack.c.b16 %v457, %v456
        %v513 = vpack.c.b16 %v459, %v458
        %v514 = vpack.c.b16 %v461, %v460
        %v515 = vpack.c.b16 %v463, %v462
        %v516 = vpack.c.b16 %v465, %v464
        %v517 = vpack.c.b16 %v467, %v466
        %v518 = vpack.c.b16 %v469, %v468
        %v519 = vpack.c.b16 %v471, %v470
        %v520 = vpack.c.b16 %v473, %v472
        %v521 = vpack.c.b16 %v475, %v474
        %v522 = vpack.c.b16 %v477, %v476
        %v523 = vpack.c.b16 %v479, %v478
        %v524 = vpack.c.b16 %v481, %v480
        %v525 = vpack.c.b16 %v483, %v482
        %v526 = vpack.c.b16 %v485, %v484
        %v527 = vpack.c.b16 %v487, %v486
        %v528 = vpack.c.b16 %v489, %v488
        %v529 = vpack.c.b16 %v491, %v490
        %v530 = vpack.c.b16 %v493, %v492
        %v531 = vpack.c.b16 %v495, %v494
        %v532 = vpack.c.b16 %v497, %v496
        %v533 = vpack.c.b16 %v499, %v498
        %v534 = vpack.c.b16 %v501, %v500
        %v535 = vpack.c.b16 %v503, %v502
        %568 = vmatprep.subr.bf16.mxu0 0
        %569 = vmatpush1.bf16.msra.mxu0 %v504
        %570 = vmatprep.subr.bf16.mxu0 0
        %571 = vmatpush1.bf16.msra.mxu0 %v505
        %572 = vmatprep.subr.bf16.mxu0 0
        %573 = vmatpush1.bf16.msra.mxu0 %v506
        %574 = vmatprep.subr.bf16.mxu0 0
        %575 = vmatpush1.bf16.msra.mxu0 %v507
        %576 = vmatprep.subr.bf16.mxu0 0
        %577 = vmatpush1.bf16.msra.mxu0 %v508
        %578 = vmatprep.subr.bf16.mxu0 0
        %579 = vmatpush1.bf16.msra.mxu0 %v509
        %580 = vmatprep.subr.bf16.mxu0 0
        %581 = vmatpush1.bf16.msra.mxu0 %v510
        %582 = vmatprep.subr.bf16.mxu0 0
        %583 = vmatpush1.bf16.msra.mxu0 %v511
        %584 = vmatprep.subr.bf16.mxu0 0
        %585 = vmatpush1.bf16.msra.mxu0 %v512
        %586 = vmatprep.subr.bf16.mxu0 0
        %587 = vmatpush1.bf16.msra.mxu0 %v513
        %588 = vmatprep.subr.bf16.mxu0 0
        %589 = vmatpush1.bf16.msra.mxu0 %v514
        %590 = vmatprep.subr.bf16.mxu0 0
        %591 = vmatpush1.bf16.msra.mxu0 %v515
        %592 = vmatprep.subr.bf16.mxu0 0
        %593 = vmatpush1.bf16.msra.mxu0 %v516
        %594 = vmatprep.subr.bf16.mxu0 0
        %595 = vmatpush1.bf16.msra.mxu0 %v517
        %596 = vmatprep.subr.bf16.mxu0 0
        %597 = vmatpush1.bf16.msra.mxu0 %v518
        %598 = vmatprep.subr.bf16.mxu0 0
        %599 = vmatpush1.bf16.msra.mxu0 %v519
        %600 = vmatprep.mubr.bf16.mxu0 %v369
        %601 = vmatmul.mubr.bf16.gmra.mrb[0].mxu0 %v368
        %v602 = vpop.f32.mrb[0].mxu0
        %v603 = vadd.f32 0.0, %v602
        %v604 = vpop.f32.mrb[0].mxu0
        %v605 = vpop.f32.mrb[0].mxu0
        %v606 = vadd.f32 0.0, %v605
        %v607 = vpop.f32.mrb[0].mxu0
        %608 = vdwg.mxu0
        %609 = vmatprep.subr.bf16.mxu0 0
        %610 = vmatpush1.bf16.msra.mxu0 %v520
        %611 = vmatprep.subr.bf16.mxu0 0
        %612 = vmatpush1.bf16.msra.mxu0 %v521
        %613 = vmatprep.subr.bf16.mxu0 0
        %614 = vmatpush1.bf16.msra.mxu0 %v522
        %615 = vmatprep.subr.bf16.mxu0 0
        %616 = vmatpush1.bf16.msra.mxu0 %v523
        %617 = vmatprep.subr.bf16.mxu0 0
        %618 = vmatpush1.bf16.msra.mxu0 %v524
        %619 = vmatprep.subr.bf16.mxu0 0
        %620 = vmatpush1.bf16.msra.mxu0 %v525
        %621 = vmatprep.subr.bf16.mxu0 0
        %622 = vmatpush1.bf16.msra.mxu0 %v526
        %623 = vmatprep.subr.bf16.mxu0 0
        %624 = vmatpush1.bf16.msra.mxu0 %v527
        %625 = vmatprep.subr.bf16.mxu0 0
        %626 = vmatpush1.bf16.msra.mxu0 %v528
        %627 = vmatprep.subr.bf16.mxu0 0
        %628 = vmatpush1.bf16.msra.mxu0 %v529
        %629 = vmatprep.subr.bf16.mxu0 0
        %630 = vmatpush1.bf16.msra.mxu0 %v530
        %631 = vmatprep.subr.bf16.mxu0 0
        %632 = vmatpush1.bf16.msra.mxu0 %v531
        %633 = vmatprep.subr.bf16.mxu0 0
        %634 = vmatpush1.bf16.msra.mxu0 %v532
        %635 = vmatprep.subr.bf16.mxu0 0
        %636 = vmatpush1.bf16.msra.mxu0 %v533
        %637 = vmatprep.subr.bf16.mxu0 0
        %638 = vmatpush1.bf16.msra.mxu0 %v534
        %639 = vmatprep.subr.bf16.mxu0 0
        %640 = vmatpush1.bf16.msra.mxu0 %v535
        %641 = vmatprep.mubr.bf16.mxu0 %v371
        %642 = vmatmul.mubr.bf16.gmra.mrb[0].mxu0 %v370
        %v643 = vpop.f32.mrb[0].mxu0
        %v644 = vadd.f32 %v603, %v643
        %v645 = vpop.f32.mrb[0].mxu0
        %v646 = vpop.f32.mrb[0].mxu0
        %v647 = vadd.f32 %v606, %v646
        %v648 = vpop.f32.mrb[0].mxu0
        %649 = vdwg.mxu0
        %v650 = vadd.f32 %v286, %v644
        %v651 = vadd.f32 %v287, %v647
        %652 = vst [vmem:[#allocation2] sm:$0xff] %v650
        %653 = vst [vmem:[#allocation2 + $0x8] sm:$0xff] %v651
        %p654 = scmp.eq.s32.totalorder %s21, 1
        // Predicated region
        $region60: #{_lambda_.39} parent=50 // pred_check
          %p655 = pneg %p654
        $region61: #{_lambda_.39} parent=50 // pred_check_branch
          %657 = sbr.rel (%p655) target = $region63
        $region62: #{_lambda_.39} parent=50 // pred_region
          %v658 = vld [vmem:[#allocation2] sm:$0xff]
          %v659 = vld [vmem:[#allocation2 + $0x8] sm:$0xff]
          %v660 = vld [vmem:[%s269] sm:$0x1]
          %v662 = vlaneseq
          %v663 = vshrl.u32 %v662, 7
          %v664 = vsub.s32 0, %v663
          %v665 = vrot.slane %v660, %v664
          %v667 = vadd.f32 %v658, %v665
          %v668 = vadd.f32 %v659, %v665
          %v669 = vmax.f32 %v667, 0.0
          %v670 = vmax.f32 %v668, 0.0
          %v671 = vpack.c.bf16 %v670, %v669
          %v673 = vunpack.c.l.b16 %v671
          %v674 = vunpack.c.h.b16 %v671
          %v675 = vpack.c.b16 %v673, %v673
          %v676 = vpack.c.b16 %v674, %v674
          %679 = vst [vmem:[%s277] sm:$0xf] %v675
          %680 = vst [vmem:[%s277 + $0x4] sm:$0xf] %v676
        $region63: #{_lambda_.39} parent=50 // pred_fallthru
          _
        %s681 = smul.u32 2, %s19
        %p682 = scmp.lt.s32.totalorder %s681, 1
        %s683 = scalar_select %p682, %s681, 1
        %p684 = scmp.lt.s32.totalorder %s20, 0
        %s685 = scalar_select %p684, %s20, 0
        %s686 = sadd.s32 %s685, %s683
        %s687 = smul.addr %s686, 4
        %s688 = scalar_lea.vmem %s3, %s687
        // Predicated region
        $region64: #{_lambda_.39} parent=50 // pred_check
          %p689 = pneg %p135
        $region65: #{_lambda_.39} parent=50 // pred_check_branch
          %691 = sbr.rel (%p689) target = $region67
        $region66: #{_lambda_.39} parent=50 // pred_region
          %s692 = smul.u32 2, %s19
        $region67: #{_lambda_.39} parent=50 // pred_fallthru
          _
        // Predicated region
        $region68: #{_lambda_.39} parent=50 // pred_check
          %p693 = pneg %p135
        $region69: #{_lambda_.39} parent=50 // pred_check_branch
          %695 = sbr.rel (%p693) target = $region71
        $region70: #{_lambda_.39} parent=50 // pred_region
          %s696 = smul.u32 2, %s19
          %p697 = scmp.lt.s32.totalorder %s696, 1
          %s698 = scalar_select %p697, %s696, 1
          %p699 = scmp.lt.s32.totalorder %s20, 0
          %s700 = scalar_select %p699, %s20, 0
          %s701 = sadd.s32 %s700, %s698
          %s702 = smul.addr %s701, 4
          %s703 = scalar_lea.vmem %s3, %s702
        $region71: #{_lambda_.39} parent=50 // pred_fallthru
          _
      $region51: #{_lambda_.39} parent=5 // pred_fallthru
        _
      %p704 = scmp.le.s32.totalorder 2, %s9
      // Predicated region
      $region72: #{_lambda_.39} parent=5 // pred_check
        %p705 = pneg %p704
      $region73: #{_lambda_.39} parent=5 // pred_check_branch
        %707 = sbr.rel (%p705) target = $region75
      $region74: #{_lambda_.39} parent=5 // pred_region
        %s708 = ssub.s32 %s9, 2
      $region75: #{_lambda_.39} parent=5 // pred_fallthru
        _
    $region6: #{_lambda_.39} parent=1 // loop_footer
      %s13 = sadd.s32 1, %s9
    $region7: #{_lambda_.39} parent=1 // loop_footer_branch
      %8 = sbr.rel target = $region3
    $region8: #{_lambda_.39} parent=1 // loop_exit
      _

// kernel: _lambda_.40
$region0: #{_lambda_.40}
  #allocation0 [shape = 'u32[]', space=smem, size = 0x4, offset = 0x4, fixed_abs, tag = 'smem constant byte address 0x4 - core index']
  #allocation1 [shape = 'u32[144,128]{1,0:T(1,128)}', space=vmem, size = 0x12000, scoped, tag = 'internal scratch']
  #allocation2 [shape = 'f32[16,128]{1,0:T(8,128)}', space=vmem, size = 0x2000, scoped, tag = 'scratch operand']
  %s0 = inlined_call_operand.vmem [shape: bf16[16,256], index: 0, kind: input, shape index: {}]
  %s1 = inlined_call_operand.vmem [shape: bf16[256,128], index: 1, kind: input, shape index: {}]
  %s2 = inlined_call_operand.vmem [shape: f32[1,128], index: 2, kind: input, shape index: {}]
  %s3 = inlined_call_operand.vmem [shape: bf16[16,128], index: 3, kind: output, shape index: {}]
  %s4 = sld [smem:[#allocation0]]
  $region30: #{_lambda_.40} parent=0
    _
  %s6 = ssub.s32 1, %s4
  %s7 = scalar_select 0, %s6, %s4
  // Predicated region
  $region2: #{_lambda_.40} parent=0 // pred_check
    _
  $region3: #{_lambda_.40} parent=0 // pred_check_branch
    %9 = sbr.rel (0) target = $region5
  $region4: #{_lambda_.40} parent=0 // pred_region
    _
  $region5: #{_lambda_.40} parent=0 // pred_fallthru
    _
  // Predicated region
  $region6: #{_lambda_.40} parent=0 // pred_check
    _
  $region7: #{_lambda_.40} parent=0 // pred_check_branch
    %11 = sbr.rel (0) target = $region9
  $region8: #{_lambda_.40} parent=0 // pred_region
    _
  $region9: #{_lambda_.40} parent=0 // pred_fallthru
    _
  // Predicated region
  $region10: #{_lambda_.40} parent=0 // pred_check
    _
  $region11: #{_lambda_.40} parent=0 // pred_check_branch
    %13 = sbr.rel (0) target = $region13
  $region12: #{_lambda_.40} parent=0 // pred_region
    _
  $region13: #{_lambda_.40} parent=0 // pred_fallthru
    _
  %p15 = scmp.eq.s32.totalorder 0, 0
  // Predicated region
  $region14: #{_lambda_.40} parent=0 // pred_check
    %p16 = pneg %p15
  $region15: #{_lambda_.40} parent=0 // pred_check_branch
    %18 = sbr.rel (%p16) target = $region17
  $region16: #{_lambda_.40} parent=0 // pred_region
    %19 = vst [vmem:[#allocation2] sm:$0xff] 0.0
    %20 = vst [vmem:[#allocation2 + $0x8] sm:$0xff] 0.0
  $region17: #{_lambda_.40} parent=0 // pred_fallthru
    _
  %v21 = vld [vmem:[#allocation2] sm:$0xff]
  %v22 = vld [vmem:[#allocation2 + $0x8] sm:$0xff]
  %v23 = vld [vmem:[%s0] sm:$0xff]
  %v24 = vld [vmem:[%s0 + $0x8] sm:$0xff]
  %v25 = vld [vmem:[%s1] sm:$0xf]
  %v26 = vld [vmem:[%s1 + $0x4] sm:$0xf]
  %v27 = vld [vmem:[%s1 + $0x8] sm:$0xf]
  %v28 = vld [vmem:[%s1 + $0xc] sm:$0xf]
  %v29 = vld [vmem:[%s1 + $0x10] sm:$0xf]
  %v30 = vld [vmem:[%s1 + $0x14] sm:$0xf]
  %v31 = vld [vmem:[%s1 + $0x18] sm:$0xf]
  %v32 = vld [vmem:[%s1 + $0x1c] sm:$0xf]
  %v33 = vld [vmem:[%s1 + $0x20] sm:$0xf]
  %v34 = vld [vmem:[%s1 + $0x24] sm:$0xf]
  %v35 = vld [vmem:[%s1 + $0x28] sm:$0xf]
  %v36 = vld [vmem:[%s1 + $0x2c] sm:$0xf]
  %v37 = vld [vmem:[%s1 + $0x30] sm:$0xf]
  %v38 = vld [vmem:[%s1 + $0x34] sm:$0xf]
  %v39 = vld [vmem:[%s1 + $0x38] sm:$0xf]
  %v40 = vld [vmem:[%s1 + $0x3c] sm:$0xf]
  %v41 = vld [vmem:[%s1 + $0x40] sm:$0xf]
  %v42 = vld [vmem:[%s1 + $0x44] sm:$0xf]
  %v43 = vld [vmem:[%s1 + $0x48] sm:$0xf]
  %v44 = vld [vmem:[%s1 + $0x4c] sm:$0xf]
  %v45 = vld [vmem:[%s1 + $0x50] sm:$0xf]
  %v46 = vld [vmem:[%s1 + $0x54] sm:$0xf]
  %v47 = vld [vmem:[%s1 + $0x58] sm:$0xf]
  %v48 = vld [vmem:[%s1 + $0x5c] sm:$0xf]
  %v49 = vld [vmem:[%s1 + $0x60] sm:$0xf]
  %v50 = vld [vmem:[%s1 + $0x64] sm:$0xf]
  %v51 = vld [vmem:[%s1 + $0x68] sm:$0xf]
  %v52 = vld [vmem:[%s1 + $0x6c] sm:$0xf]
  %v53 = vld [vmem:[%s1 + $0x70] sm:$0xf]
  %v54 = vld [vmem:[%s1 + $0x74] sm:$0xf]
  %v55 = vld [vmem:[%s1 + $0x78] sm:$0xf]
  %v56 = vld [vmem:[%s1 + $0x7c] sm:$0xf]
  %v59 = vunpack.c.l.b16 %v23
  %v60 = vunpack.c.h.b16 %v23
  %v61 = vunpack.c.l.b16 %v24
  %v62 = vunpack.c.h.b16 %v24
  %v63 = vpack.c.b16 %v61, %v59
  %v64 = vpack.c.b16 %v62, %v60
  %v99 = vunpack.c.l.b16 %v25
  %v100 = vunpack.c.l.b16 %v26
  %v101 = vunpack.c.l.b16 %v27
  %v102 = vunpack.c.l.b16 %v28
  %v103 = vunpack.c.l.b16 %v29
  %v104 = vunpack.c.l.b16 %v30
  %v105 = vunpack.c.l.b16 %v31
  %v106 = vunpack.c.l.b16 %v32
  %v107 = vunpack.c.l.b16 %v33
  %v108 = vunpack.c.l.b16 %v34
  %v109 = vunpack.c.l.b16 %v35
  %v110 = vunpack.c.l.b16 %v36
  %v111 = vunpack.c.l.b16 %v37
  %v112 = vunpack.c.l.b16 %v38
  %v113 = vunpack.c.l.b16 %v39
  %v114 = vunpack.c.l.b16 %v40
  %v115 = vunpack.c.l.b16 %v41
  %v116 = vunpack.c.l.b16 %v42
  %v117 = vunpack.c.l.b16 %v43
  %v118 = vunpack.c.l.b16 %v44
  %v119 = vunpack.c.l.b16 %v45
  %v120 = vunpack.c.l.b16 %v46
  %v121 = vunpack.c.l.b16 %v47
  %v122 = vunpack.c.l.b16 %v48
  %v123 = vunpack.c.l.b16 %v49
  %v124 = vunpack.c.l.b16 %v50
  %v125 = vunpack.c.l.b16 %v51
  %v126 = vunpack.c.l.b16 %v52
  %v127 = vunpack.c.l.b16 %v53
  %v128 = vunpack.c.l.b16 %v54
  %v129 = vunpack.c.l.b16 %v55
  %v130 = vunpack.c.l.b16 %v56
  %v131 = vpack.c.b16 %v100, %v99
  %v132 = vpack.c.b16 %v102, %v101
  %v133 = vpack.c.b16 %v104, %v103
  %v134 = vpack.c.b16 %v106, %v105
  %v135 = vpack.c.b16 %v108, %v107
  %v136 = vpack.c.b16 %v110, %v109
  %v137 = vpack.c.b16 %v112, %v111
  %v138 = vpack.c.b16 %v114, %v113
  %v139 = vpack.c.b16 %v116, %v115
  %v140 = vpack.c.b16 %v118, %v117
  %v141 = vpack.c.b16 %v120, %v119
  %v142 = vpack.c.b16 %v122, %v121
  %v143 = vpack.c.b16 %v124, %v123
  %v144 = vpack.c.b16 %v126, %v125
  %v145 = vpack.c.b16 %v128, %v127
  %v146 = vpack.c.b16 %v130, %v129
  %163 = vmatprep.subr.bf16.mxu0 0
  %164 = vmatpush1.bf16.msra.mxu0 %v131
  %165 = vmatprep.subr.bf16.mxu0 0
  %166 = vmatpush1.bf16.msra.mxu0 %v132
  %167 = vmatprep.subr.bf16.mxu0 0
  %168 = vmatpush1.bf16.msra.mxu0 %v133
  %169 = vmatprep.subr.bf16.mxu0 0
  %170 = vmatpush1.bf16.msra.mxu0 %v134
  %171 = vmatprep.subr.bf16.mxu0 0
  %172 = vmatpush1.bf16.msra.mxu0 %v135
  %173 = vmatprep.subr.bf16.mxu0 0
  %174 = vmatpush1.bf16.msra.mxu0 %v136
  %175 = vmatprep.subr.bf16.mxu0 0
  %176 = vmatpush1.bf16.msra.mxu0 %v137
  %177 = vmatprep.subr.bf16.mxu0 0
  %178 = vmatpush1.bf16.msra.mxu0 %v138
  %179 = vmatprep.subr.bf16.mxu0 0
  %180 = vmatpush1.bf16.msra.mxu0 %v139
  %181 = vmatprep.subr.bf16.mxu0 0
  %182 = vmatpush1.bf16.msra.mxu0 %v140
  %183 = vmatprep.subr.bf16.mxu0 0
  %184 = vmatpush1.bf16.msra.mxu0 %v141
  %185 = vmatprep.subr.bf16.mxu0 0
  %186 = vmatpush1.bf16.msra.mxu0 %v142
  %187 = vmatprep.subr.bf16.mxu0 0
  %188 = vmatpush1.bf16.msra.mxu0 %v143
  %189 = vmatprep.subr.bf16.mxu0 0
  %190 = vmatpush1.bf16.msra.mxu0 %v144
  %191 = vmatprep.subr.bf16.mxu0 0
  %192 = vmatpush1.bf16.msra.mxu0 %v145
  %193 = vmatprep.subr.bf16.mxu0 0
  %194 = vmatpush1.bf16.msra.mxu0 %v146
  %195 = vmatprep.mubr.bf16.mxu0 %v64
  %196 = vmatmul.mubr.bf16.gmra.mrb[0].mxu0 %v63
  %v197 = vpop.f32.mrb[0].mxu0
  %v198 = vadd.f32 0.0, %v197
  %v199 = vpop.f32.mrb[0].mxu0
  %v200 = vpop.f32.mrb[0].mxu0
  %v201 = vadd.f32 0.0, %v200
  %v202 = vpop.f32.mrb[0].mxu0
  %203 = vdwg.mxu0
  %v204 = vadd.f32 %v21, %v198
  %v205 = vadd.f32 %v22, %v201
  %206 = vst [vmem:[#allocation2] sm:$0xff] %v204
  %207 = vst [vmem:[#allocation2 + $0x8] sm:$0xff] %v205
  // Predicated region
  $region18: #{_lambda_.40} parent=0 // pred_check
    %p208 = pneg %p15
  $region19: #{_lambda_.40} parent=0 // pred_check_branch
    %210 = sbr.rel (%p208) target = $region21
  $region20: #{_lambda_.40} parent=0 // pred_region
    %v211 = vld [vmem:[#allocation2] sm:$0xff]
    %v212 = vld [vmem:[#allocation2 + $0x8] sm:$0xff]
    %v213 = vld [vmem:[%s2] sm:$0x1]
    %v215 = vlaneseq
    %v216 = vshrl.u32 %v215, 7
    %v217 = vsub.s32 0, %v216
    %v218 = vrot.slane %v213, %v217
    %v220 = vadd.f32 %v211, %v218
    %v221 = vadd.f32 %v212, %v218
    %v222 = vpack.c.bf16 %v221, %v220
    %v224 = vunpack.c.l.b16 %v222
    %v225 = vunpack.c.h.b16 %v222
    %v226 = vpack.c.b16 %v224, %v224
    %v227 = vpack.c.b16 %v225, %v225
    %230 = vst [vmem:[%s3] sm:$0xf] %v226
    %231 = vst [vmem:[%s3 + $0x4] sm:$0xf] %v227
  $region21: #{_lambda_.40} parent=0 // pred_fallthru
    _
  // Predicated region
  $region22: #{_lambda_.40} parent=0 // pred_check
    _
  $region23: #{_lambda_.40} parent=0 // pred_check_branch
    %233 = sbr.rel (0) target = $region25
  $region24: #{_lambda_.40} parent=0 // pred_region
    _
  $region25: #{_lambda_.40} parent=0 // pred_fallthru
    _
  // Predicated region
  $region26: #{_lambda_.40} parent=0 // pred_check
    _
  $region27: #{_lambda_.40} parent=0 // pred_check_branch
    %235 = sbr.rel (0) target = $region29
  $region28: #{_lambda_.40} parent=0 // pred_region
    _
  $region29: #{_lambda_.40} parent=0 // pred_fallthru
    _

// kernel: _lambda_.44
$region0: #{_lambda_.44}
  #allocation0 [shape = 'u32[]', space=smem, size = 0x4, offset = 0x4, fixed_abs, tag = 'smem constant byte address 0x4 - core index']
  #allocation1 [shape = 'u32[144,128]{1,0:T(1,128)}', space=vmem, size = 0x12000, scoped, tag = 'internal scratch']
  %s0 = inlined_call_operand.vmem [shape: bf16[2,4,64], index: 0, kind: input, shape index: {}]
  %s1 = inlined_call_operand.vmem [shape: bf16[2,4,64], index: 1, kind: output, shape index: {}]
  %s2 = sld [smem:[#allocation0]]
  $region37: #{_lambda_.44} parent=0
    _
  %s4 = ssub.s32 1, %s2
  %s5 = scalar_select 0, %s4, %s2
  loop: start=0, step=1, limit=4
  $region2: #{_lambda_.44} parent=0 // loop_pre_header
    _
  $region3: #{_lambda_.44} parent=0 // loop_header
    %s7 = sphi 0, %s11
    %p8 = scmp.ge.s32.totalorder %s7, 4
    %s14 = sphi 0, %s26
    %s15 = sphi 0, %s22
    %s16 = sphi 0, %s14
    %s17 = sphi 0, %s15
    %s18 = sphi 0, %s16
    %s19 = sphi 0, %s17
    %s31 = sphi 0, %s33
    %s34 = sphi 0, %s31
    %s35 = sphi 0, %s34
    %s51 = sphi 0, %s35
    %s59 = sphi 0, %s61
    %s62 = sphi 0, %s59
    %s63 = sphi 0, %s62
    %s79 = sphi 0, %s63
  $region4: #{_lambda_.44} parent=0 // loop_header_branch
    %10 = sbr.rel (%p8) target = $region8
  $region5: #{_lambda_.44} parent=0 // loop_body
    %s12 = ssub.s32 %s7, 1
    %s13 = ssub.s32 %s7, 2
    %s20 = sadd.s32 1, %s15
    %p21 = scmp.ge.s32.totalorder %s20, 1
    %s22 = scalar_select %p21, 0, %s20
    %s23 = sadd.s32 1, %s14
    %s24 = scalar_select %p21, %s23, %s14
    %p25 = scmp.ge.s32.totalorder %s24, 2
    %s26 = scalar_select %p25, 0, %s24
    %s27 = ssub.s32 %s14, %s26
    %s28 = ssub.s32 %s15, %s22
    %s29 = sor.u32 %s27, %s28
    %p30 = scmp.eq.s32.totalorder %s29, 0
    %s32 = sadd.s32 %s31, 1
    %s33 = scalar_select %p30, %s31, %s32
    %p36 = pneg %p30
    %p37 = scmp.eq.s32.totalorder %s7, 1
    %p38 = por %p36, %p37
    %p39 = scmp.ne.s32.totalorder %s31, %s34
    %p40 = scmp.eq.s32.totalorder %s7, 0
    %p41 = por %p39, %p40
    %p42 = scmp.ne.s32.totalorder %s31, %s34
    %p43 = scmp.eq.s32.totalorder %s12, 1
    %p44 = por %p42, %p43
    %p45 = scmp.ne.s32.totalorder %s34, %s35
    %p46 = scmp.eq.s32.totalorder %s12, 0
    %p47 = por %p45, %p46
    %p48 = scmp.ne.s32.totalorder %s34, %s35
    %p49 = scmp.eq.s32.totalorder %s13, 1
    %p50 = por %p48, %p49
    %p52 = scmp.ne.s32.totalorder %s35, %s51
    %p53 = scmp.eq.s32.totalorder %s13, 0
    %p54 = por %p52, %p53
    %s55 = ssub.s32 %s14, %s26
    %s56 = ssub.s32 %s15, %s22
    %s57 = sor.u32 %s55, %s56
    %p58 = scmp.eq.s32.totalorder %s57, 0
    %s60 = sadd.s32 %s59, 1
    %s61 = scalar_select %p58, %s59, %s60
    %p64 = pneg %p58
    %p65 = scmp.eq.s32.totalorder %s7, 1
    %p66 = por %p64, %p65
    %p67 = scmp.ne.s32.totalorder %s59, %s62
    %p68 = scmp.eq.s32.totalorder %s7, 0
    %p69 = por %p67, %p68
    %p70 = scmp.ne.s32.totalorder %s59, %s62
    %p71 = scmp.eq.s32.totalorder %s12, 1
    %p72 = por %p70, %p71
    %p73 = scmp.ne.s32.totalorder %s62, %s63
    %p74 = scmp.eq.s32.totalorder %s12, 0
    %p75 = por %p73, %p74
    %p76 = scmp.ne.s32.totalorder %s62, %s63
    %p77 = scmp.eq.s32.totalorder %s13, 1
    %p78 = por %p76, %p77
    %p80 = scmp.ne.s32.totalorder %s63, %s79
    %p81 = scmp.eq.s32.totalorder %s13, 0
    %p82 = por %p80, %p81
    %p83 = scmp.le.s32.totalorder 1, %s7
    %p84 = scmp.lt.s32.totalorder %s7, 3
    %p85 = pnand %p83, %p84
    %p86 = pneg %p85
    // Predicated region
    $region9: #{_lambda_.44} parent=5 // pred_check
      _
    $region10: #{_lambda_.44} parent=5 // pred_check_branch
      %88 = sbr.rel (%p85) target = $region12
    $region11: #{_lambda_.44} parent=5 // pred_region
      %s89 = ssub.s32 %s7, 1
    $region12: #{_lambda_.44} parent=5 // pred_fallthru
      _
    %p90 = scmp.lt.s32.totalorder %s7, 2
    // Predicated region
    $region13: #{_lambda_.44} parent=5 // pred_check
      %p91 = pneg %p90
    $region14: #{_lambda_.44} parent=5 // pred_check_branch
      %93 = sbr.rel (%p91) target = $region16
    $region15: #{_lambda_.44} parent=5 // pred_region
      // Predicated region
      $region17: #{_lambda_.44} parent=15 // pred_check
        %p94 = pneg %p41
      $region18: #{_lambda_.44} parent=15 // pred_check_branch
        %96 = sbr.rel (%p94) target = $region20
      $region19: #{_lambda_.44} parent=15 // pred_region
        %p97 = scmp.lt.s32.totalorder %s14, 1
        %s98 = scalar_select %p97, %s14, 1
        %p99 = scmp.lt.s32.totalorder %s15, 0
        %s100 = scalar_select %p99, %s15, 0
        %s101 = sadd.s32 %s100, %s98
        %s102 = smul.addr %s101, 2
        %s103 = scalar_lea.vmem %s0, %s102
      $region20: #{_lambda_.44} parent=15 // pred_fallthru
        _
    $region16: #{_lambda_.44} parent=5 // pred_fallthru
      _
    %p104 = scmp.le.s32.totalorder 1, %s7
    %p105 = scmp.lt.s32.totalorder %s7, 3
    %p106 = pnand %p104, %p105
    %p107 = pneg %p106
    // Predicated region
    $region21: #{_lambda_.44} parent=5 // pred_check
      _
    $region22: #{_lambda_.44} parent=5 // pred_check_branch
      %109 = sbr.rel (%p106) target = $region24
    $region23: #{_lambda_.44} parent=5 // pred_region
      %s110 = ssub.s32 %s7, 1
      %p111 = scmp.lt.s32.totalorder %s16, 1
      %s112 = scalar_select %p111, %s16, 1
      %p113 = scmp.lt.s32.totalorder %s17, 0
      %s114 = scalar_select %p113, %s17, 0
      %s115 = sadd.s32 %s114, %s112
      %s116 = smul.addr %s115, 2
      %s117 = scalar_lea.vmem %s0, %s116
      %p118 = pneg %p47
      %p119 = pneg %p44
      %p120 = pneg %p75
      %p121 = pneg %p72
      %p122 = scmp.lt.s32.totalorder %s16, 1
      %s123 = scalar_select %p122, %s16, 1
      %p124 = scmp.lt.s32.totalorder %s17, 0
      %s125 = scalar_select %p124, %s17, 0
      %s126 = sadd.s32 %s125, %s123
      %s127 = smul.addr %s126, 2
      %s128 = scalar_lea.vmem %s1, %s127
      %p129 = scmp.lt.s32.totalorder %s16, 1
      %s130 = scalar_select %p129, %s16, 1
      %p131 = scmp.lt.s32.totalorder %s17, 0
      %s132 = scalar_select %p131, %s17, 0
      %s133 = sadd.s32 %s132, %s130
      %s134 = smul.addr %s133, 2
      %s135 = scalar_lea.vmem %s0, %s134
      %p136 = scmp.lt.s32.totalorder %s16, 1
      %s137 = scalar_select %p136, %s16, 1
      %p138 = scmp.lt.s32.totalorder %s17, 0
      %s139 = scalar_select %p138, %s17, 0
      %s140 = sadd.s32 %s139, %s137
      %s141 = smul.addr %s140, 2
      %s142 = scalar_lea.vmem %s1, %s141
      %v143 = vld [vmem:[%s135] sm:$0x3]
      %v144 = vunpack.c.l.bf16 %v143
      %vm145 = vcmask 519168
      %v146 = vsel %vm145, %v144, 0.0
      %v147 = vrot.slane %v146, 4
      %v148 = vadd.f32 %v146, %v147
      %v149 = vrot.slane %v148, 2
      %v150 = vadd.f32 %v148, %v149
      %v151 = vrot.slane %v150, 1
      %v152 = vadd.f32 %v150, %v151
      %v153 = vrcp.pop 4.0
      %v154 = vmul.f32 %v152, %v153
      %v155 = vsub.f32 %v144, %v154
      %v156 = vmul.f32 %v155, %v155
      %v157 = vsel %vm145, %v156, 0.0
      %v158 = vrot.slane %v157, 4
      %v159 = vadd.f32 %v157, %v158
      %v160 = vrot.slane %v159, 2
      %v161 = vadd.f32 %v159, %v160
      %v162 = vrot.slane %v161, 1
      %v163 = vadd.f32 %v161, %v162
      %v164 = vmul.f32 %v163, %v153
      %v165 = vadd.f32 %v164, 1e-05
      %v166 = vrsqrt.pop %v165
      %v167 = vmul.f32 %v155, %v166
      %v168 = vmax.f32 %v167, 0.0
      %v169 = vpack.c.bf16 %v168, %v168
      %vm170 = vcmask 517120
      %171 = vst.msk [vmem:[%s142] sm:$0x3] %vm170, %v169
      %p172 = scmp.lt.s32.totalorder %s16, 1
      %s173 = scalar_select %p172, %s16, 1
      %p174 = scmp.lt.s32.totalorder %s17, 0
      %s175 = scalar_select %p174, %s17, 0
      %s176 = sadd.s32 %s175, %s173
      %s177 = smul.addr %s176, 2
      %s178 = scalar_lea.vmem %s1, %s177
      // Predicated region
      $region25: #{_lambda_.44} parent=23 // pred_check
        %p179 = pneg %p72
      $region26: #{_lambda_.44} parent=23 // pred_check_branch
        %181 = sbr.rel (%p179) target = $region28
      $region27: #{_lambda_.44} parent=23 // pred_region
        _
      $region28: #{_lambda_.44} parent=23 // pred_fallthru
        _
    $region24: #{_lambda_.44} parent=5 // pred_fallthru
      _
    %p182 = scmp.le.s32.totalorder 2, %s7
    // Predicated region
    $region29: #{_lambda_.44} parent=5 // pred_check
      %p183 = pneg %p182
    $region30: #{_lambda_.44} parent=5 // pred_check_branch
      %185 = sbr.rel (%p183) target = $region32
    $region31: #{_lambda_.44} parent=5 // pred_region
      %s186 = ssub.s32 %s7, 2
      // Predicated region
      $region33: #{_lambda_.44} parent=31 // pred_check
        %p187 = pneg %p78
      $region34: #{_lambda_.44} parent=31 // pred_check_branch
        %189 = sbr.rel (%p187) target = $region36
      $region35: #{_lambda_.44} parent=31 // pred_region
        %p190 = scmp.lt.s32.totalorder %s18, 1
        %s191 = scalar_select %p190, %s18, 1
        %p192 = scmp.lt.s32.totalorder %s19, 0
        %s193 = scalar_select %p192, %s19, 0
        %s194 = sadd.s32 %s193, %s191
        %s195 = smul.addr %s194, 2
        %s196 = scalar_lea.vmem %s1, %s195
      $region36: #{_lambda_.44} parent=31 // pred_fallthru
        _
    $region32: #{_lambda_.44} parent=5 // pred_fallthru
      _
  $region6: #{_lambda_.44} parent=0 // loop_footer
    %s11 = sadd.s32 1, %s7
  $region7: #{_lambda_.44} parent=0 // loop_footer_branch
    %6 = sbr.rel target = $region3
  $region8: #{_lambda_.44} parent=0 // loop_exit
    _

// kernel: _lambda_.49
$region0: #{_lambda_.49}
  #allocation0 [shape = 'u32[]', space=smem, size = 0x4, offset = 0x4, fixed_abs, tag = 'smem constant byte address 0x4 - core index']
  #allocation1 [shape = 'u32[144,128]{1,0:T(1,128)}', space=vmem, size = 0x12000, scoped, tag = 'internal scratch']
  %s0 = inlined_call_operand.vmem [shape: bf16[2,16,32], index: 0, kind: input, shape index: {}]
  %s1 = inlined_call_operand.vmem [shape: bf16[2,16,32], index: 1, kind: output, shape index: {}]
  %s2 = sld [smem:[#allocation0]]
  $region37: #{_lambda_.49} parent=0
    _
  %s4 = ssub.s32 1, %s2
  %s5 = scalar_select 0, %s4, %s2
  loop: start=0, step=1, limit=4
  $region2: #{_lambda_.49} parent=0 // loop_pre_header
    _
  $region3: #{_lambda_.49} parent=0 // loop_header
    %s7 = sphi 0, %s11
    %p8 = scmp.ge.s32.totalorder %s7, 4
    %s14 = sphi 0, %s26
    %s15 = sphi 0, %s22
    %s16 = sphi 0, %s14
    %s17 = sphi 0, %s15
    %s18 = sphi 0, %s16
    %s19 = sphi 0, %s17
    %s31 = sphi 0, %s33
    %s34 = sphi 0, %s31
    %s35 = sphi 0, %s34
    %s51 = sphi 0, %s35
    %s59 = sphi 0, %s61
    %s62 = sphi 0, %s59
    %s63 = sphi 0, %s62
    %s79 = sphi 0, %s63
  $region4: #{_lambda_.49} parent=0 // loop_header_branch
    %10 = sbr.rel (%p8) target = $region8
  $region5: #{_lambda_.49} parent=0 // loop_body
    %s12 = ssub.s32 %s7, 1
    %s13 = ssub.s32 %s7, 2
    %s20 = sadd.s32 1, %s15
    %p21 = scmp.ge.s32.totalorder %s20, 1
    %s22 = scalar_select %p21, 0, %s20
    %s23 = sadd.s32 1, %s14
    %s24 = scalar_select %p21, %s23, %s14
    %p25 = scmp.ge.s32.totalorder %s24, 2
    %s26 = scalar_select %p25, 0, %s24
    %s27 = ssub.s32 %s14, %s26
    %s28 = ssub.s32 %s15, %s22
    %s29 = sor.u32 %s27, %s28
    %p30 = scmp.eq.s32.totalorder %s29, 0
    %s32 = sadd.s32 %s31, 1
    %s33 = scalar_select %p30, %s31, %s32
    %p36 = pneg %p30
    %p37 = scmp.eq.s32.totalorder %s7, 1
    %p38 = por %p36, %p37
    %p39 = scmp.ne.s32.totalorder %s31, %s34
    %p40 = scmp.eq.s32.totalorder %s7, 0
    %p41 = por %p39, %p40
    %p42 = scmp.ne.s32.totalorder %s31, %s34
    %p43 = scmp.eq.s32.totalorder %s12, 1
    %p44 = por %p42, %p43
    %p45 = scmp.ne.s32.totalorder %s34, %s35
    %p46 = scmp.eq.s32.totalorder %s12, 0
    %p47 = por %p45, %p46
    %p48 = scmp.ne.s32.totalorder %s34, %s35
    %p49 = scmp.eq.s32.totalorder %s13, 1
    %p50 = por %p48, %p49
    %p52 = scmp.ne.s32.totalorder %s35, %s51
    %p53 = scmp.eq.s32.totalorder %s13, 0
    %p54 = por %p52, %p53
    %s55 = ssub.s32 %s14, %s26
    %s56 = ssub.s32 %s15, %s22
    %s57 = sor.u32 %s55, %s56
    %p58 = scmp.eq.s32.totalorder %s57, 0
    %s60 = sadd.s32 %s59, 1
    %s61 = scalar_select %p58, %s59, %s60
    %p64 = pneg %p58
    %p65 = scmp.eq.s32.totalorder %s7, 1
    %p66 = por %p64, %p65
    %p67 = scmp.ne.s32.totalorder %s59, %s62
    %p68 = scmp.eq.s32.totalorder %s7, 0
    %p69 = por %p67, %p68
    %p70 = scmp.ne.s32.totalorder %s59, %s62
    %p71 = scmp.eq.s32.totalorder %s12, 1
    %p72 = por %p70, %p71
    %p73 = scmp.ne.s32.totalorder %s62, %s63
    %p74 = scmp.eq.s32.totalorder %s12, 0
    %p75 = por %p73, %p74
    %p76 = scmp.ne.s32.totalorder %s62, %s63
    %p77 = scmp.eq.s32.totalorder %s13, 1
    %p78 = por %p76, %p77
    %p80 = scmp.ne.s32.totalorder %s63, %s79
    %p81 = scmp.eq.s32.totalorder %s13, 0
    %p82 = por %p80, %p81
    %p83 = scmp.le.s32.totalorder 1, %s7
    %p84 = scmp.lt.s32.totalorder %s7, 3
    %p85 = pnand %p83, %p84
    %p86 = pneg %p85
    // Predicated region
    $region9: #{_lambda_.49} parent=5 // pred_check
      _
    $region10: #{_lambda_.49} parent=5 // pred_check_branch
      %88 = sbr.rel (%p85) target = $region12
    $region11: #{_lambda_.49} parent=5 // pred_region
      %s89 = ssub.s32 %s7, 1
    $region12: #{_lambda_.49} parent=5 // pred_fallthru
      _
    %p90 = scmp.lt.s32.totalorder %s7, 2
    // Predicated region
    $region13: #{_lambda_.49} parent=5 // pred_check
      %p91 = pneg %p90
    $region14: #{_lambda_.49} parent=5 // pred_check_branch
      %93 = sbr.rel (%p91) target = $region16
    $region15: #{_lambda_.49} parent=5 // pred_region
      // Predicated region
      $region17: #{_lambda_.49} parent=15 // pred_check
        %p94 = pneg %p41
      $region18: #{_lambda_.49} parent=15 // pred_check_branch
        %96 = sbr.rel (%p94) target = $region20
      $region19: #{_lambda_.49} parent=15 // pred_region
        %p97 = scmp.lt.s32.totalorder %s14, 1
        %s98 = scalar_select %p97, %s14, 1
        %p99 = scmp.lt.s32.totalorder %s15, 0
        %s100 = scalar_select %p99, %s15, 0
        %s101 = smul.addr %s98, 2
        %s102 = sadd.s32 %s100, %s101
        %s103 = smul.addr %s102, 4
        %s104 = scalar_lea.vmem %s0, %s103
      $region20: #{_lambda_.49} parent=15 // pred_fallthru
        _
    $region16: #{_lambda_.49} parent=5 // pred_fallthru
      _
    %p105 = scmp.le.s32.totalorder 1, %s7
    %p106 = scmp.lt.s32.totalorder %s7, 3
    %p107 = pnand %p105, %p106
    %p108 = pneg %p107
    // Predicated region
    $region21: #{_lambda_.49} parent=5 // pred_check
      _
    $region22: #{_lambda_.49} parent=5 // pred_check_branch
      %110 = sbr.rel (%p107) target = $region24
    $region23: #{_lambda_.49} parent=5 // pred_region
      %s111 = ssub.s32 %s7, 1
      %p112 = scmp.lt.s32.totalorder %s16, 1
      %s113 = scalar_select %p112, %s16, 1
      %p114 = scmp.lt.s32.totalorder %s17, 0
      %s115 = scalar_select %p114, %s17, 0
      %s116 = smul.addr %s113, 2
      %s117 = sadd.s32 %s115, %s116
      %s118 = smul.addr %s117, 4
      %s119 = scalar_lea.vmem %s0, %s118
      %p120 = pneg %p47
      %p121 = pneg %p44
      %p122 = pneg %p75
      %p123 = pneg %p72
      %p124 = scmp.lt.s32.totalorder %s16, 1
      %s125 = scalar_select %p124, %s16, 1
      %p126 = scmp.lt.s32.totalorder %s17, 0
      %s127 = scalar_select %p126, %s17, 0
      %s128 = smul.addr %s125, 2
      %s129 = sadd.s32 %s127, %s128
      %s130 = smul.addr %s129, 4
      %s131 = scalar_lea.vmem %s1, %s130
      %p132 = scmp.lt.s32.totalorder %s16, 1
      %s133 = scalar_select %p132, %s16, 1
      %p134 = scmp.lt.s32.totalorder %s17, 0
      %s135 = scalar_select %p134, %s17, 0
      %s136 = smul.addr %s133, 2
      %s137 = sadd.s32 %s135, %s136
      %s138 = smul.addr %s137, 4
      %s139 = scalar_lea.vmem %s0, %s138
      %p140 = scmp.lt.s32.totalorder %s16, 1
      %s141 = scalar_select %p140, %s16, 1
      %p142 = scmp.lt.s32.totalorder %s17, 0
      %s143 = scalar_select %p142, %s17, 0
      %s144 = smul.addr %s141, 2
      %s145 = sadd.s32 %s143, %s144
      %s146 = smul.addr %s145, 4
      %s147 = scalar_lea.vmem %s1, %s146
      %v148 = vld [vmem:[%s139] sm:$0xf]
      %v149 = vld [vmem:[%s139 + $0x4] sm:$0xf]
      %v150 = vunpack.c.l.bf16 %v148
      %v151 = vunpack.c.l.bf16 %v149
      %vm152 = vcmask 261120
      %v153 = vsel %vm152, %v150, 0.0
      %v154 = vsel %vm152, %v151, 0.0
      %v155 = vadd.f32 %v153, %v154
      %v156 = vrot.slane %v155, 4
      %v157 = vadd.f32 %v155, %v156
      %v158 = vrot.slane %v157, 2
      %v159 = vadd.f32 %v157, %v158
      %v160 = vrot.slane %v159, 1
      %v161 = vadd.f32 %v159, %v160
      %v162 = vrcp.pop 16.0
      %v163 = vmul.f32 %v161, %v162
      %v164 = vsub.f32 %v150, %v163
      %v165 = vsub.f32 %v151, %v163
      %v166 = vmul.f32 %v164, %v164
      %v167 = vmul.f32 %v165, %v165
      %v168 = vsel %vm152, %v166, 0.0
      %v169 = vsel %vm152, %v167, 0.0
      %v170 = vadd.f32 %v168, %v169
      %v171 = vrot.slane %v170, 4
      %v172 = vadd.f32 %v170, %v171
      %v173 = vrot.slane %v172, 2
      %v174 = vadd.f32 %v172, %v173
      %v175 = vrot.slane %v174, 1
      %v176 = vadd.f32 %v174, %v175
      %v177 = vmul.f32 %v176, %v162
      %v178 = vadd.f32 %v177, 1e-05
      %v179 = vrsqrt.pop %v178
      %v180 = vmul.f32 %v164, %v179
      %v181 = vmul.f32 %v165, %v179
      %v182 = vmax.f32 %v180, 0.0
      %v183 = vmax.f32 %v181, 0.0
      %v184 = vpack.c.bf16 %v183, %v182
      %v186 = vunpack.c.l.b16 %v184
      %v187 = vunpack.c.h.b16 %v184
      %v188 = vpack.c.b16 %v186, %v186
      %v189 = vpack.c.b16 %v187, %v187
      %vm192 = vcmask 257024
      %193 = vst.msk [vmem:[%s147] sm:$0xf] %vm192, %v188
      %194 = vst.msk [vmem:[%s147 + $0x4] sm:$0xf] %vm192, %v189
      %p195 = scmp.lt.s32.totalorder %s16, 1
      %s196 = scalar_select %p195, %s16, 1
      %p197 = scmp.lt.s32.totalorder %s17, 0
      %s198 = scalar_select %p197, %s17, 0
      %s199 = smul.addr %s196, 2
      %s200 = sadd.s32 %s198, %s199
      %s201 = smul.addr %s200, 4
      %s202 = scalar_lea.vmem %s1, %s201
      // Predicated region
      $region25: #{_lambda_.49} parent=23 // pred_check
        %p203 = pneg %p72
      $region26: #{_lambda_.49} parent=23 // pred_check_branch
        %205 = sbr.rel (%p203) target = $region28
      $region27: #{_lambda_.49} parent=23 // pred_region
        _
      $region28: #{_lambda_.49} parent=23 // pred_fallthru
        _
    $region24: #{_lambda_.49} parent=5 // pred_fallthru
      _
    %p206 = scmp.le.s32.totalorder 2, %s7
    // Predicated region
    $region29: #{_lambda_.49} parent=5 // pred_check
      %p207 = pneg %p206
    $region30: #{_lambda_.49} parent=5 // pred_check_branch
      %209 = sbr.rel (%p207) target = $region32
    $region31: #{_lambda_.49} parent=5 // pred_region
      %s210 = ssub.s32 %s7, 2
      // Predicated region
      $region33: #{_lambda_.49} parent=31 // pred_check
        %p211 = pneg %p78
      $region34: #{_lambda_.49} parent=31 // pred_check_branch
        %213 = sbr.rel (%p211) target = $region36
      $region35: #{_lambda_.49} parent=31 // pred_region
        %p214 = scmp.lt.s32.totalorder %s18, 1
        %s215 = scalar_select %p214, %s18, 1
        %p216 = scmp.lt.s32.totalorder %s19, 0
        %s217 = scalar_select %p216, %s19, 0
        %s218 = smul.addr %s215, 2
        %s219 = sadd.s32 %s217, %s218
        %s220 = smul.addr %s219, 4
        %s221 = scalar_lea.vmem %s1, %s220
      $region36: #{_lambda_.49} parent=31 // pred_fallthru
        _
    $region32: #{_lambda_.49} parent=5 // pred_fallthru
      _
  $region6: #{_lambda_.49} parent=0 // loop_footer
    %s11 = sadd.s32 1, %s7
  $region7: #{_lambda_.49} parent=0 // loop_footer_branch
    %6 = sbr.rel target = $region3
  $region8: #{_lambda_.49} parent=0 // loop_exit
    _

// kernel: _lambda_.54
$region0: #{_lambda_.54}
  #allocation0 [shape = 'u32[]', space=smem, size = 0x4, offset = 0x4, fixed_abs, tag = 'smem constant byte address 0x4 - core index']
  #allocation1 [shape = 'u32[144,128]{1,0:T(1,128)}', space=vmem, size = 0x12000, scoped, tag = 'internal scratch']
  %s0 = inlined_call_operand.vmem [shape: bf16[2,64,16], index: 0, kind: input, shape index: {}]
  %s1 = inlined_call_operand.vmem [shape: bf16[2,64,16], index: 1, kind: output, shape index: {}]
  %s2 = sld [smem:[#allocation0]]
  $region37: #{_lambda_.54} parent=0
    _
  %s4 = ssub.s32 1, %s2
  %s5 = scalar_select 0, %s4, %s2
  loop: start=0, step=1, limit=4
  $region2: #{_lambda_.54} parent=0 // loop_pre_header
    _
  $region3: #{_lambda_.54} parent=0 // loop_header
    %s7 = sphi 0, %s11
    %p8 = scmp.ge.s32.totalorder %s7, 4
    %s14 = sphi 0, %s26
    %s15 = sphi 0, %s22
    %s16 = sphi 0, %s14
    %s17 = sphi 0, %s15
    %s18 = sphi 0, %s16
    %s19 = sphi 0, %s17
    %s31 = sphi 0, %s33
    %s34 = sphi 0, %s31
    %s35 = sphi 0, %s34
    %s51 = sphi 0, %s35
    %s59 = sphi 0, %s61
    %s62 = sphi 0, %s59
    %s63 = sphi 0, %s62
    %s79 = sphi 0, %s63
  $region4: #{_lambda_.54} parent=0 // loop_header_branch
    %10 = sbr.rel (%p8) target = $region8
  $region5: #{_lambda_.54} parent=0 // loop_body
    %s12 = ssub.s32 %s7, 1
    %s13 = ssub.s32 %s7, 2
    %s20 = sadd.s32 1, %s15
    %p21 = scmp.ge.s32.totalorder %s20, 1
    %s22 = scalar_select %p21, 0, %s20
    %s23 = sadd.s32 1, %s14
    %s24 = scalar_select %p21, %s23, %s14
    %p25 = scmp.ge.s32.totalorder %s24, 2
    %s26 = scalar_select %p25, 0, %s24
    %s27 = ssub.s32 %s14, %s26
    %s28 = ssub.s32 %s15, %s22
    %s29 = sor.u32 %s27, %s28
    %p30 = scmp.eq.s32.totalorder %s29, 0
    %s32 = sadd.s32 %s31, 1
    %s33 = scalar_select %p30, %s31, %s32
    %p36 = pneg %p30
    %p37 = scmp.eq.s32.totalorder %s7, 1
    %p38 = por %p36, %p37
    %p39 = scmp.ne.s32.totalorder %s31, %s34
    %p40 = scmp.eq.s32.totalorder %s7, 0
    %p41 = por %p39, %p40
    %p42 = scmp.ne.s32.totalorder %s31, %s34
    %p43 = scmp.eq.s32.totalorder %s12, 1
    %p44 = por %p42, %p43
    %p45 = scmp.ne.s32.totalorder %s34, %s35
    %p46 = scmp.eq.s32.totalorder %s12, 0
    %p47 = por %p45, %p46
    %p48 = scmp.ne.s32.totalorder %s34, %s35
    %p49 = scmp.eq.s32.totalorder %s13, 1
    %p50 = por %p48, %p49
    %p52 = scmp.ne.s32.totalorder %s35, %s51
    %p53 = scmp.eq.s32.totalorder %s13, 0
    %p54 = por %p52, %p53
    %s55 = ssub.s32 %s14, %s26
    %s56 = ssub.s32 %s15, %s22
    %s57 = sor.u32 %s55, %s56
    %p58 = scmp.eq.s32.totalorder %s57, 0
    %s60 = sadd.s32 %s59, 1
    %s61 = scalar_select %p58, %s59, %s60
    %p64 = pneg %p58
    %p65 = scmp.eq.s32.totalorder %s7, 1
    %p66 = por %p64, %p65
    %p67 = scmp.ne.s32.totalorder %s59, %s62
    %p68 = scmp.eq.s32.totalorder %s7, 0
    %p69 = por %p67, %p68
    %p70 = scmp.ne.s32.totalorder %s59, %s62
    %p71 = scmp.eq.s32.totalorder %s12, 1
    %p72 = por %p70, %p71
    %p73 = scmp.ne.s32.totalorder %s62, %s63
    %p74 = scmp.eq.s32.totalorder %s12, 0
    %p75 = por %p73, %p74
    %p76 = scmp.ne.s32.totalorder %s62, %s63
    %p77 = scmp.eq.s32.totalorder %s13, 1
    %p78 = por %p76, %p77
    %p80 = scmp.ne.s32.totalorder %s63, %s79
    %p81 = scmp.eq.s32.totalorder %s13, 0
    %p82 = por %p80, %p81
    %p83 = scmp.le.s32.totalorder 1, %s7
    %p84 = scmp.lt.s32.totalorder %s7, 3
    %p85 = pnand %p83, %p84
    %p86 = pneg %p85
    // Predicated region
    $region9: #{_lambda_.54} parent=5 // pred_check
      _
    $region10: #{_lambda_.54} parent=5 // pred_check_branch
      %88 = sbr.rel (%p85) target = $region12
    $region11: #{_lambda_.54} parent=5 // pred_region
      %s89 = ssub.s32 %s7, 1
    $region12: #{_lambda_.54} parent=5 // pred_fallthru
      _
    %p90 = scmp.lt.s32.totalorder %s7, 2
    // Predicated region
    $region13: #{_lambda_.54} parent=5 // pred_check
      %p91 = pneg %p90
    $region14: #{_lambda_.54} parent=5 // pred_check_branch
      %93 = sbr.rel (%p91) target = $region16
    $region15: #{_lambda_.54} parent=5 // pred_region
      // Predicated region
      $region17: #{_lambda_.54} parent=15 // pred_check
        %p94 = pneg %p41
      $region18: #{_lambda_.54} parent=15 // pred_check_branch
        %96 = sbr.rel (%p94) target = $region20
      $region19: #{_lambda_.54} parent=15 // pred_region
        %p97 = scmp.lt.s32.totalorder %s14, 1
        %s98 = scalar_select %p97, %s14, 1
        %p99 = scmp.lt.s32.totalorder %s15, 0
        %s100 = scalar_select %p99, %s15, 0
        %s101 = smul.addr %s98, 8
        %s102 = sadd.s32 %s100, %s101
        %s103 = smul.addr %s102, 4
        %s104 = scalar_lea.vmem %s0, %s103
      $region20: #{_lambda_.54} parent=15 // pred_fallthru
        _
    $region16: #{_lambda_.54} parent=5 // pred_fallthru
      _
    %p105 = scmp.le.s32.totalorder 1, %s7
    %p106 = scmp.lt.s32.totalorder %s7, 3
    %p107 = pnand %p105, %p106
    %p108 = pneg %p107
    // Predicated region
    $region21: #{_lambda_.54} parent=5 // pred_check
      _
    $region22: #{_lambda_.54} parent=5 // pred_check_branch
      %110 = sbr.rel (%p107) target = $region24
    $region23: #{_lambda_.54} parent=5 // pred_region
      %s111 = ssub.s32 %s7, 1
      %p112 = scmp.lt.s32.totalorder %s16, 1
      %s113 = scalar_select %p112, %s16, 1
      %p114 = scmp.lt.s32.totalorder %s17, 0
      %s115 = scalar_select %p114, %s17, 0
      %s116 = smul.addr %s113, 8
      %s117 = sadd.s32 %s115, %s116
      %s118 = smul.addr %s117, 4
      %s119 = scalar_lea.vmem %s0, %s118
      %p120 = pneg %p47
      %p121 = pneg %p44
      %p122 = pneg %p75
      %p123 = pneg %p72
      %p124 = scmp.lt.s32.totalorder %s16, 1
      %s125 = scalar_select %p124, %s16, 1
      %p126 = scmp.lt.s32.totalorder %s17, 0
      %s127 = scalar_select %p126, %s17, 0
      %s128 = smul.addr %s125, 8
      %s129 = sadd.s32 %s127, %s128
      %s130 = smul.addr %s129, 4
      %s131 = scalar_lea.vmem %s1, %s130
      %p132 = scmp.lt.s32.totalorder %s16, 1
      %s133 = scalar_select %p132, %s16, 1
      %p134 = scmp.lt.s32.totalorder %s17, 0
      %s135 = scalar_select %p134, %s17, 0
      %s136 = smul.addr %s133, 8
      %s137 = sadd.s32 %s135, %s136
      %s138 = smul.addr %s137, 4
      %s139 = scalar_lea.vmem %s0, %s138
      %p140 = scmp.lt.s32.totalorder %s16, 1
      %s141 = scalar_select %p140, %s16, 1
      %p142 = scmp.lt.s32.totalorder %s17, 0
      %s143 = scalar_select %p142, %s17, 0
      %s144 = smul.addr %s141, 8
      %s145 = sadd.s32 %s143, %s144
      %s146 = smul.addr %s145, 4
      %s147 = scalar_lea.vmem %s1, %s146
      %v148 = vld [vmem:[%s139] sm:$0xf]
      %v149 = vld [vmem:[%s139 + $0x4] sm:$0xf]
      %v150 = vld [vmem:[%s139 + $0x8] sm:$0xf]
      %v151 = vld [vmem:[%s139 + $0xc] sm:$0xf]
      %v152 = vld [vmem:[%s139 + $0x10] sm:$0xf]
      %v153 = vld [vmem:[%s139 + $0x14] sm:$0xf]
      %v154 = vld [vmem:[%s139 + $0x18] sm:$0xf]
      %v155 = vld [vmem:[%s139 + $0x1c] sm:$0xf]
      %v156 = vunpack.c.l.bf16 %v148
      %v157 = vunpack.c.l.bf16 %v149
      %v158 = vunpack.c.l.bf16 %v150
      %v159 = vunpack.c.l.bf16 %v151
      %v160 = vunpack.c.l.bf16 %v152
      %v161 = vunpack.c.l.bf16 %v153
      %v162 = vunpack.c.l.bf16 %v154
      %v163 = vunpack.c.l.bf16 %v155
      %vm164 = vcmask 130048
      %v165 = vsel %vm164, %v156, 0.0
      %v166 = vsel %vm164, %v157, 0.0
      %v167 = vadd.f32 %v165, %v166
      %v168 = vsel %vm164, %v158, 0.0
      %v169 = vadd.f32 %v167, %v168
      %v170 = vsel %vm164, %v159, 0.0
      %v171 = vadd.f32 %v169, %v170
      %v172 = vsel %vm164, %v160, 0.0
      %v173 = vadd.f32 %v171, %v172
      %v174 = vsel %vm164, %v161, 0.0
      %v175 = vadd.f32 %v173, %v174
      %v176 = vsel %vm164, %v162, 0.0
      %v177 = vadd.f32 %v175, %v176
      %v178 = vsel %vm164, %v163, 0.0
      %v179 = vadd.f32 %v177, %v178
      %v180 = vrot.slane %v179, 4
      %v181 = vadd.f32 %v179, %v180
      %v182 = vrot.slane %v181, 2
      %v183 = vadd.f32 %v181, %v182
      %v184 = vrot.slane %v183, 1
      %v185 = vadd.f32 %v183, %v184
      %v186 = vrcp.pop 64.0
      %v187 = vmul.f32 %v185, %v186
      %v188 = vsub.f32 %v156, %v187
      %v189 = vsub.f32 %v157, %v187
      %v190 = vsub.f32 %v158, %v187
      %v191 = vsub.f32 %v159, %v187
      %v192 = vsub.f32 %v160, %v187
      %v193 = vsub.f32 %v161, %v187
      %v194 = vsub.f32 %v162, %v187
      %v195 = vsub.f32 %v163, %v187
      %v196 = vmul.f32 %v188, %v188
      %v197 = vmul.f32 %v189, %v189
      %v198 = vmul.f32 %v190, %v190
      %v199 = vmul.f32 %v191, %v191
      %v200 = vmul.f32 %v192, %v192
      %v201 = vmul.f32 %v193, %v193
      %v202 = vmul.f32 %v194, %v194
      %v203 = vmul.f32 %v195, %v195
      %v204 = vsel %vm164, %v196, 0.0
      %v205 = vsel %vm164, %v197, 0.0
      %v206 = vadd.f32 %v204, %v205
      %v207 = vsel %vm164, %v198, 0.0
      %v208 = vadd.f32 %v206, %v207
      %v209 = vsel %vm164, %v199, 0.0
      %v210 = vadd.f32 %v208, %v209
      %v211 = vsel %vm164, %v200, 0.0
      %v212 = vadd.f32 %v210, %v211
      %v213 = vsel %vm164, %v201, 0.0
      %v214 = vadd.f32 %v212, %v213
      %v215 = vsel %vm164, %v202, 0.0
      %v216 = vadd.f32 %v214, %v215
      %v217 = vsel %vm164, %v203, 0.0
      %v218 = vadd.f32 %v216, %v217
      %v219 = vrot.slane %v218, 4
      %v220 = vadd.f32 %v218, %v219
      %v221 = vrot.slane %v220, 2
      %v222 = vadd.f32 %v220, %v221
      %v223 = vrot.slane %v222, 1
      %v224 = vadd.f32 %v222, %v223
      %v225 = vmul.f32 %v224, %v186
      %v226 = vadd.f32 %v225, 1e-05
      %v227 = vrsqrt.pop %v226
      %v228 = vmul.f32 %v188, %v227
      %v229 = vmul.f32 %v189, %v227
      %v230 = vmul.f32 %v190, %v227
      %v231 = vmul.f32 %v191, %v227
      %v232 = vmul.f32 %v192, %v227
      %v233 = vmul.f32 %v193, %v227
      %v234 = vmul.f32 %v194, %v227
      %v235 = vmul.f32 %v195, %v227
      %v236 = vmax.f32 %v228, 0.0
      %v237 = vmax.f32 %v229, 0.0
      %v238 = vmax.f32 %v230, 0.0
      %v239 = vmax.f32 %v231, 0.0
      %v240 = vmax.f32 %v232, 0.0
      %v241 = vmax.f32 %v233, 0.0
      %v242 = vmax.f32 %v234, 0.0
      %v243 = vmax.f32 %v235, 0.0
      %v244 = vpack.c.bf16 %v237, %v236
      %v245 = vpack.c.bf16 %v239, %v238
      %v246 = vpack.c.bf16 %v241, %v240
      %v247 = vpack.c.bf16 %v243, %v242
      %v252 = vunpack.c.l.b16 %v244
      %v253 = vunpack.c.h.b16 %v244
      %v254 = vunpack.c.l.b16 %v245
      %v255 = vunpack.c.h.b16 %v245
      %v256 = vunpack.c.l.b16 %v246
      %v257 = vunpack.c.h.b16 %v246
      %v258 = vunpack.c.l.b16 %v247
      %v259 = vunpack.c.h.b16 %v247
      %v260 = vpack.c.b16 %v252, %v252
      %v261 = vpack.c.b16 %v253, %v253
      %v262 = vpack.c.b16 %v254, %v254
      %v263 = vpack.c.b16 %v255, %v255
      %v264 = vpack.c.b16 %v256, %v256
      %v265 = vpack.c.b16 %v257, %v257
      %v266 = vpack.c.b16 %v258, %v258
      %v267 = vpack.c.b16 %v259, %v259
      %vm276 = vcmask 125952
      %277 = vst.msk [vmem:[%s147] sm:$0xf] %vm276, %v260
      %278 = vst.msk [vmem:[%s147 + $0x4] sm:$0xf] %vm276, %v261
      %279 = vst.msk [vmem:[%s147 + $0x8] sm:$0xf] %vm276, %v262
      %280 = vst.msk [vmem:[%s147 + $0xc] sm:$0xf] %vm276, %v263
      %281 = vst.msk [vmem:[%s147 + $0x10] sm:$0xf] %vm276, %v264
      %282 = vst.msk [vmem:[%s147 + $0x14] sm:$0xf] %vm276, %v265
      %283 = vst.msk [vmem:[%s147 + $0x18] sm:$0xf] %vm276, %v266
      %284 = vst.msk [vmem:[%s147 + $0x1c] sm:$0xf] %vm276, %v267
      %p285 = scmp.lt.s32.totalorder %s16, 1
      %s286 = scalar_select %p285, %s16, 1
      %p287 = scmp.lt.s32.totalorder %s17, 0
      %s288 = scalar_select %p287, %s17, 0
      %s289 = smul.addr %s286, 8
      %s290 = sadd.s32 %s288, %s289
      %s291 = smul.addr %s290, 4
      %s292 = scalar_lea.vmem %s1, %s291
      // Predicated region
      $region25: #{_lambda_.54} parent=23 // pred_check
        %p293 = pneg %p72
      $region26: #{_lambda_.54} parent=23 // pred_check_branch
        %295 = sbr.rel (%p293) target = $region28
      $region27: #{_lambda_.54} parent=23 // pred_region
        _
      $region28: #{_lambda_.54} parent=23 // pred_fallthru
        _
    $region24: #{_lambda_.54} parent=5 // pred_fallthru
      _
    %p296 = scmp.le.s32.totalorder 2, %s7
    // Predicated region
    $region29: #{_lambda_.54} parent=5 // pred_check
      %p297 = pneg %p296
    $region30: #{_lambda_.54} parent=5 // pred_check_branch
      %299 = sbr.rel (%p297) target = $region32
    $region31: #{_lambda_.54} parent=5 // pred_region
      %s300 = ssub.s32 %s7, 2
      // Predicated region
      $region33: #{_lambda_.54} parent=31 // pred_check
        %p301 = pneg %p78
      $region34: #{_lambda_.54} parent=31 // pred_check_branch
        %303 = sbr.rel (%p301) target = $region36
      $region35: #{_lambda_.54} parent=31 // pred_region
        %p304 = scmp.lt.s32.totalorder %s18, 1
        %s305 = scalar_select %p304, %s18, 1
        %p306 = scmp.lt.s32.totalorder %s19, 0
        %s307 = scalar_select %p306, %s19, 0
        %s308 = smul.addr %s305, 8
        %s309 = sadd.s32 %s307, %s308
        %s310 = smul.addr %s309, 4
        %s311 = scalar_lea.vmem %s1, %s310
      $region36: #{_lambda_.54} parent=31 // pred_fallthru
        _
    $region32: #{_lambda_.54} parent=5 // pred_fallthru
      _
  $region6: #{_lambda_.54} parent=0 // loop_footer
    %s11 = sadd.s32 1, %s7
  $region7: #{_lambda_.54} parent=0 // loop_footer_branch
    %6 = sbr.rel target = $region3
  $region8: #{_lambda_.54} parent=0 // loop_exit
    _

// kernel: _lambda_.59
$region0: #{_lambda_.59}
  #allocation0 [shape = 'u32[]', space=smem, size = 0x4, offset = 0x4, fixed_abs, tag = 'smem constant byte address 0x4 - core index']
  #allocation1 [shape = 'u32[144,128]{1,0:T(1,128)}', space=vmem, size = 0x12000, scoped, tag = 'internal scratch']
  %s0 = inlined_call_operand.vmem [shape: bf16[2,256,8], index: 0, kind: input, shape index: {}]
  %s1 = inlined_call_operand.vmem [shape: bf16[2,256,8], index: 1, kind: output, shape index: {}]
  %s2 = sld [smem:[#allocation0]]
  $region37: #{_lambda_.59} parent=0
    _
  %s4 = ssub.s32 1, %s2
  %s5 = scalar_select 0, %s4, %s2
  loop: start=0, step=1, limit=4
  $region2: #{_lambda_.59} parent=0 // loop_pre_header
    _
  $region3: #{_lambda_.59} parent=0 // loop_header
    %s7 = sphi 0, %s11
    %p8 = scmp.ge.s32.totalorder %s7, 4
    %s14 = sphi 0, %s26
    %s15 = sphi 0, %s22
    %s16 = sphi 0, %s14
    %s17 = sphi 0, %s15
    %s18 = sphi 0, %s16
    %s19 = sphi 0, %s17
    %s31 = sphi 0, %s33
    %s34 = sphi 0, %s31
    %s35 = sphi 0, %s34
    %s51 = sphi 0, %s35
    %s59 = sphi 0, %s61
    %s62 = sphi 0, %s59
    %s63 = sphi 0, %s62
    %s79 = sphi 0, %s63
  $region4: #{_lambda_.59} parent=0 // loop_header_branch
    %10 = sbr.rel (%p8) target = $region8
  $region5: #{_lambda_.59} parent=0 // loop_body
    %s12 = ssub.s32 %s7, 1
    %s13 = ssub.s32 %s7, 2
    %s20 = sadd.s32 1, %s15
    %p21 = scmp.ge.s32.totalorder %s20, 1
    %s22 = scalar_select %p21, 0, %s20
    %s23 = sadd.s32 1, %s14
    %s24 = scalar_select %p21, %s23, %s14
    %p25 = scmp.ge.s32.totalorder %s24, 2
    %s26 = scalar_select %p25, 0, %s24
    %s27 = ssub.s32 %s14, %s26
    %s28 = ssub.s32 %s15, %s22
    %s29 = sor.u32 %s27, %s28
    %p30 = scmp.eq.s32.totalorder %s29, 0
    %s32 = sadd.s32 %s31, 1
    %s33 = scalar_select %p30, %s31, %s32
    %p36 = pneg %p30
    %p37 = scmp.eq.s32.totalorder %s7, 1
    %p38 = por %p36, %p37
    %p39 = scmp.ne.s32.totalorder %s31, %s34
    %p40 = scmp.eq.s32.totalorder %s7, 0
    %p41 = por %p39, %p40
    %p42 = scmp.ne.s32.totalorder %s31, %s34
    %p43 = scmp.eq.s32.totalorder %s12, 1
    %p44 = por %p42, %p43
    %p45 = scmp.ne.s32.totalorder %s34, %s35
    %p46 = scmp.eq.s32.totalorder %s12, 0
    %p47 = por %p45, %p46
    %p48 = scmp.ne.s32.totalorder %s34, %s35
    %p49 = scmp.eq.s32.totalorder %s13, 1
    %p50 = por %p48, %p49
    %p52 = scmp.ne.s32.totalorder %s35, %s51
    %p53 = scmp.eq.s32.totalorder %s13, 0
    %p54 = por %p52, %p53
    %s55 = ssub.s32 %s14, %s26
    %s56 = ssub.s32 %s15, %s22
    %s57 = sor.u32 %s55, %s56
    %p58 = scmp.eq.s32.totalorder %s57, 0
    %s60 = sadd.s32 %s59, 1
    %s61 = scalar_select %p58, %s59, %s60
    %p64 = pneg %p58
    %p65 = scmp.eq.s32.totalorder %s7, 1
    %p66 = por %p64, %p65
    %p67 = scmp.ne.s32.totalorder %s59, %s62
    %p68 = scmp.eq.s32.totalorder %s7, 0
    %p69 = por %p67, %p68
    %p70 = scmp.ne.s32.totalorder %s59, %s62
    %p71 = scmp.eq.s32.totalorder %s12, 1
    %p72 = por %p70, %p71
    %p73 = scmp.ne.s32.totalorder %s62, %s63
    %p74 = scmp.eq.s32.totalorder %s12, 0
    %p75 = por %p73, %p74
    %p76 = scmp.ne.s32.totalorder %s62, %s63
    %p77 = scmp.eq.s32.totalorder %s13, 1
    %p78 = por %p76, %p77
    %p80 = scmp.ne.s32.totalorder %s63, %s79
    %p81 = scmp.eq.s32.totalorder %s13, 0
    %p82 = por %p80, %p81
    %p83 = scmp.le.s32.totalorder 1, %s7
    %p84 = scmp.lt.s32.totalorder %s7, 3
    %p85 = pnand %p83, %p84
    %p86 = pneg %p85
    // Predicated region
    $region9: #{_lambda_.59} parent=5 // pred_check
      _
    $region10: #{_lambda_.59} parent=5 // pred_check_branch
      %88 = sbr.rel (%p85) target = $region12
    $region11: #{_lambda_.59} parent=5 // pred_region
      %s89 = ssub.s32 %s7, 1
    $region12: #{_lambda_.59} parent=5 // pred_fallthru
      _
    %p90 = scmp.lt.s32.totalorder %s7, 2
    // Predicated region
    $region13: #{_lambda_.59} parent=5 // pred_check
      %p91 = pneg %p90
    $region14: #{_lambda_.59} parent=5 // pred_check_branch
      %93 = sbr.rel (%p91) target = $region16
    $region15: #{_lambda_.59} parent=5 // pred_region
      // Predicated region
      $region17: #{_lambda_.59} parent=15 // pred_check
        %p94 = pneg %p41
      $region18: #{_lambda_.59} parent=15 // pred_check_branch
        %96 = sbr.rel (%p94) target = $region20
      $region19: #{_lambda_.59} parent=15 // pred_region
        %p97 = scmp.lt.s32.totalorder %s14, 1
        %s98 = scalar_select %p97, %s14, 1
        %p99 = scmp.lt.s32.totalorder %s15, 0
        %s100 = scalar_select %p99, %s15, 0
        %s101 = smul.addr %s98, 32
        %s102 = sadd.s32 %s100, %s101
        %s103 = smul.addr %s102, 4
        %s104 = scalar_lea.vmem %s0, %s103
      $region20: #{_lambda_.59} parent=15 // pred_fallthru
        _
    $region16: #{_lambda_.59} parent=5 // pred_fallthru
      _
    %p105 = scmp.le.s32.totalorder 1, %s7
    %p106 = scmp.lt.s32.totalorder %s7, 3
    %p107 = pnand %p105, %p106
    %p108 = pneg %p107
    // Predicated region
    $region21: #{_lambda_.59} parent=5 // pred_check
      _
    $region22: #{_lambda_.59} parent=5 // pred_check_branch
      %110 = sbr.rel (%p107) target = $region24
    $region23: #{_lambda_.59} parent=5 // pred_region
      %s111 = ssub.s32 %s7, 1
      %p112 = scmp.lt.s32.totalorder %s16, 1
      %s113 = scalar_select %p112, %s16, 1
      %p114 = scmp.lt.s32.totalorder %s17, 0
      %s115 = scalar_select %p114, %s17, 0
      %s116 = smul.addr %s113, 32
      %s117 = sadd.s32 %s115, %s116
      %s118 = smul.addr %s117, 4
      %s119 = scalar_lea.vmem %s0, %s118
      %p120 = pneg %p47
      %p121 = pneg %p44
      %p122 = pneg %p75
      %p123 = pneg %p72
      %p124 = scmp.lt.s32.totalorder %s16, 1
      %s125 = scalar_select %p124, %s16, 1
      %p126 = scmp.lt.s32.totalorder %s17, 0
      %s127 = scalar_select %p126, %s17, 0
      %s128 = smul.addr %s125, 32
      %s129 = sadd.s32 %s127, %s128
      %s130 = smul.addr %s129, 4
      %s131 = scalar_lea.vmem %s1, %s130
      %p132 = scmp.lt.s32.totalorder %s16, 1
      %s133 = scalar_select %p132, %s16, 1
      %p134 = scmp.lt.s32.totalorder %s17, 0
      %s135 = scalar_select %p134, %s17, 0
      %s136 = smul.addr %s133, 32
      %s137 = sadd.s32 %s135, %s136
      %s138 = smul.addr %s137, 4
      %s139 = scalar_lea.vmem %s0, %s138
      %p140 = scmp.lt.s32.totalorder %s16, 1
      %s141 = scalar_select %p140, %s16, 1
      %p142 = scmp.lt.s32.totalorder %s17, 0
      %s143 = scalar_select %p142, %s17, 0
      %s144 = smul.addr %s141, 32
      %s145 = sadd.s32 %s143, %s144
      %s146 = smul.addr %s145, 4
      %s147 = scalar_lea.vmem %s1, %s146
      %v148 = vld [vmem:[%s139] sm:$0xf]
      %v149 = vld [vmem:[%s139 + $0x4] sm:$0xf]
      %v150 = vld [vmem:[%s139 + $0x8] sm:$0xf]
      %v151 = vld [vmem:[%s139 + $0xc] sm:$0xf]
      %v152 = vld [vmem:[%s139 + $0x10] sm:$0xf]
      %v153 = vld [vmem:[%s139 + $0x14] sm:$0xf]
      %v154 = vld [vmem:[%s139 + $0x18] sm:$0xf]
      %v155 = vld [vmem:[%s139 + $0x1c] sm:$0xf]
      %v156 = vld [vmem:[%s139 + $0x20] sm:$0xf]
      %v157 = vld [vmem:[%s139 + $0x24] sm:$0xf]
      %v158 = vld [vmem:[%s139 + $0x28] sm:$0xf]
      %v159 = vld [vmem:[%s139 + $0x2c] sm:$0xf]
      %v160 = vld [vmem:[%s139 + $0x30] sm:$0xf]
      %v161 = vld [vmem:[%s139 + $0x34] sm:$0xf]
      %v162 = vld [vmem:[%s139 + $0x38] sm:$0xf]
      %v163 = vld [vmem:[%s139 + $0x3c] sm:$0xf]
      %v164 = vld [vmem:[%s139 + $0x40] sm:$0xf]
      %v165 = vld [vmem:[%s139 + $0x44] sm:$0xf]
      %v166 = vld [vmem:[%s139 + $0x48] sm:$0xf]
      %v167 = vld [vmem:[%s139 + $0x4c] sm:$0xf]
      %v168 = vld [vmem:[%s139 + $0x50] sm:$0xf]
      %v169 = vld [vmem:[%s139 + $0x54] sm:$0xf]
      %v170 = vld [vmem:[%s139 + $0x58] sm:$0xf]
      %v171 = vld [vmem:[%s139 + $0x5c] sm:$0xf]
      %v172 = vld [vmem:[%s139 + $0x60] sm:$0xf]
      %v173 = vld [vmem:[%s139 + $0x64] sm:$0xf]
      %v174 = vld [vmem:[%s139 + $0x68] sm:$0xf]
      %v175 = vld [vmem:[%s139 + $0x6c] sm:$0xf]
      %v176 = vld [vmem:[%s139 + $0x70] sm:$0xf]
      %v177 = vld [vmem:[%s139 + $0x74] sm:$0xf]
      %v178 = vld [vmem:[%s139 + $0x78] sm:$0xf]
      %v179 = vld [vmem:[%s139 + $0x7c] sm:$0xf]
      %v180 = vunpack.c.l.bf16 %v148
      %v181 = vunpack.c.l.bf16 %v149
      %v182 = vunpack.c.l.bf16 %v150
      %v183 = vunpack.c.l.bf16 %v151
      %v184 = vunpack.c.l.bf16 %v152
      %v185 = vunpack.c.l.bf16 %v153
      %v186 = vunpack.c.l.bf16 %v154
      %v187 = vunpack.c.l.bf16 %v155
      %v188 = vunpack.c.l.bf16 %v156
      %v189 = vunpack.c.l.bf16 %v157
      %v190 = vunpack.c.l.bf16 %v158
      %v191 = vunpack.c.l.bf16 %v159
      %v192 = vunpack.c.l.bf16 %v160
      %v193 = vunpack.c.l.bf16 %v161
      %v194 = vunpack.c.l.bf16 %v162
      %v195 = vunpack.c.l.bf16 %v163
      %v196 = vunpack.c.l.bf16 %v164
      %v197 = vunpack.c.l.bf16 %v165
      %v198 = vunpack.c.l.bf16 %v166
      %v199 = vunpack.c.l.bf16 %v167
      %v200 = vunpack.c.l.bf16 %v168
      %v201 = vunpack.c.l.bf16 %v169
      %v202 = vunpack.c.l.bf16 %v170
      %v203 = vunpack.c.l.bf16 %v171
      %v204 = vunpack.c.l.bf16 %v172
      %v205 = vunpack.c.l.bf16 %v173
      %v206 = vunpack.c.l.bf16 %v174
      %v207 = vunpack.c.l.bf16 %v175
      %v208 = vunpack.c.l.bf16 %v176
      %v209 = vunpack.c.l.bf16 %v177
      %v210 = vunpack.c.l.bf16 %v178
      %v211 = vunpack.c.l.bf16 %v179
      %vm212 = vcmask 64512
      %v213 = vsel %vm212, %v180, 0.0
      %v214 = vsel %vm212, %v181, 0.0
      %v215 = vadd.f32 %v213, %v214
      %v216 = vsel %vm212, %v182, 0.0
      %v217 = vadd.f32 %v215, %v216
      %v218 = vsel %vm212, %v183, 0.0
      %v219 = vadd.f32 %v217, %v218
      %v220 = vsel %vm212, %v184, 0.0
      %v221 = vadd.f32 %v219, %v220
      %v222 = vsel %vm212, %v185, 0.0
      %v223 = vadd.f32 %v221, %v222
      %v224 = vsel %vm212, %v186, 0.0
      %v225 = vadd.f32 %v223, %v224
      %v226 = vsel %vm212, %v187, 0.0
      %v227 = vadd.f32 %v225, %v226
      %v228 = vsel %vm212, %v188, 0.0
      %v229 = vadd.f32 %v227, %v228
      %v230 = vsel %vm212, %v189, 0.0
      %v231 = vadd.f32 %v229, %v230
      %v232 = vsel %vm212, %v190, 0.0
      %v233 = vadd.f32 %v231, %v232
      %v234 = vsel %vm212, %v191, 0.0
      %v235 = vadd.f32 %v233, %v234
      %v236 = vsel %vm212, %v192, 0.0
      %v237 = vadd.f32 %v235, %v236
      %v238 = vsel %vm212, %v193, 0.0
      %v239 = vadd.f32 %v237, %v238
      %v240 = vsel %vm212, %v194, 0.0
      %v241 = vadd.f32 %v239, %v240
      %v242 = vsel %vm212, %v195, 0.0
      %v243 = vadd.f32 %v241, %v242
      %v244 = vsel %vm212, %v196, 0.0
      %v245 = vadd.f32 %v243, %v244
      %v246 = vsel %vm212, %v197, 0.0
      %v247 = vadd.f32 %v245, %v246
      %v248 = vsel %vm212, %v198, 0.0
      %v249 = vadd.f32 %v247, %v248
      %v250 = vsel %vm212, %v199, 0.0
      %v251 = vadd.f32 %v249, %v250
      %v252 = vsel %vm212, %v200, 0.0
      %v253 = vadd.f32 %v251, %v252
      %v254 = vsel %vm212, %v201, 0.0
      %v255 = vadd.f32 %v253, %v254
      %v256 = vsel %vm212, %v202, 0.0
      %v257 = vadd.f32 %v255, %v256
      %v258 = vsel %vm212, %v203, 0.0
      %v259 = vadd.f32 %v257, %v258
      %v260 = vsel %vm212, %v204, 0.0
      %v261 = vadd.f32 %v259, %v260
      %v262 = vsel %vm212, %v205, 0.0
      %v263 = vadd.f32 %v261, %v262
      %v264 = vsel %vm212, %v206, 0.0
      %v265 = vadd.f32 %v263, %v264
      %v266 = vsel %vm212, %v207, 0.0
      %v267 = vadd.f32 %v265, %v266
      %v268 = vsel %vm212, %v208, 0.0
      %v269 = vadd.f32 %v267, %v268
      %v270 = vsel %vm212, %v209, 0.0
      %v271 = vadd.f32 %v269, %v270
      %v272 = vsel %vm212, %v210, 0.0
      %v273 = vadd.f32 %v271, %v272
      %v274 = vsel %vm212, %v211, 0.0
      %v275 = vadd.f32 %v273, %v274
      %v276 = vrot.slane %v275, 4
      %v277 = vadd.f32 %v275, %v276
      %v278 = vrot.slane %v277, 2
      %v279 = vadd.f32 %v277, %v278
      %v280 = vrot.slane %v279, 1
      %v281 = vadd.f32 %v279, %v280
      %v282 = vrcp.pop 256.0
      %v283 = vmul.f32 %v281, %v282
      %v284 = vsub.f32 %v180, %v283
      %v285 = vsub.f32 %v181, %v283
      %v286 = vsub.f32 %v182, %v283
      %v287 = vsub.f32 %v183, %v283
      %v288 = vsub.f32 %v184, %v283
      %v289 = vsub.f32 %v185, %v283
      %v290 = vsub.f32 %v186, %v283
      %v291 = vsub.f32 %v187, %v283
      %v292 = vsub.f32 %v188, %v283
      %v293 = vsub.f32 %v189, %v283
      %v294 = vsub.f32 %v190, %v283
      %v295 = vsub.f32 %v191, %v283
      %v296 = vsub.f32 %v192, %v283
      %v297 = vsub.f32 %v193, %v283
      %v298 = vsub.f32 %v194, %v283
      %v299 = vsub.f32 %v195, %v283
      %v300 = vsub.f32 %v196, %v283
      %v301 = vsub.f32 %v197, %v283
      %v302 = vsub.f32 %v198, %v283
      %v303 = vsub.f32 %v199, %v283
      %v304 = vsub.f32 %v200, %v283
      %v305 = vsub.f32 %v201, %v283
      %v306 = vsub.f32 %v202, %v283
      %v307 = vsub.f32 %v203, %v283
      %v308 = vsub.f32 %v204, %v283
      %v309 = vsub.f32 %v205, %v283
      %v310 = vsub.f32 %v206, %v283
      %v311 = vsub.f32 %v207, %v283
      %v312 = vsub.f32 %v208, %v283
      %v313 = vsub.f32 %v209, %v283
      %v314 = vsub.f32 %v210, %v283
      %v315 = vsub.f32 %v211, %v283
      %v316 = vmul.f32 %v284, %v284
      %v317 = vmul.f32 %v285, %v285
      %v318 = vmul.f32 %v286, %v286
      %v319 = vmul.f32 %v287, %v287
      %v320 = vmul.f32 %v288, %v288
      %v321 = vmul.f32 %v289, %v289
      %v322 = vmul.f32 %v290, %v290
      %v323 = vmul.f32 %v291, %v291
      %v324 = vmul.f32 %v292, %v292
      %v325 = vmul.f32 %v293, %v293
      %v326 = vmul.f32 %v294, %v294
      %v327 = vmul.f32 %v295, %v295
      %v328 = vmul.f32 %v296, %v296
      %v329 = vmul.f32 %v297, %v297
      %v330 = vmul.f32 %v298, %v298
      %v331 = vmul.f32 %v299, %v299
      %v332 = vmul.f32 %v300, %v300
      %v333 = vmul.f32 %v301, %v301
      %v334 = vmul.f32 %v302, %v302
      %v335 = vmul.f32 %v303, %v303
      %v336 = vmul.f32 %v304, %v304
      %v337 = vmul.f32 %v305, %v305
      %v338 = vmul.f32 %v306, %v306
      %v339 = vmul.f32 %v307, %v307
      %v340 = vmul.f32 %v308, %v308
      %v341 = vmul.f32 %v309, %v309
      %v342 = vmul.f32 %v310, %v310
      %v343 = vmul.f32 %v311, %v311
      %v344 = vmul.f32 %v312, %v312
      %v345 = vmul.f32 %v313, %v313
      %v346 = vmul.f32 %v314, %v314
      %v347 = vmul.f32 %v315, %v315
      %v348 = vsel %vm212, %v316, 0.0
      %v349 = vsel %vm212, %v317, 0.0
      %v350 = vadd.f32 %v348, %v349
      %v351 = vsel %vm212, %v318, 0.0
      %v352 = vadd.f32 %v350, %v351
      %v353 = vsel %vm212, %v319, 0.0
      %v354 = vadd.f32 %v352, %v353
      %v355 = vsel %vm212, %v320, 0.0
      %v356 = vadd.f32 %v354, %v355
      %v357 = vsel %vm212, %v321, 0.0
      %v358 = vadd.f32 %v356, %v357
      %v359 = vsel %vm212, %v322, 0.0
      %v360 = vadd.f32 %v358, %v359
      %v361 = vsel %vm212, %v323, 0.0
      %v362 = vadd.f32 %v360, %v361
      %v363 = vsel %vm212, %v324, 0.0
      %v364 = vadd.f32 %v362, %v363
      %v365 = vsel %vm212, %v325, 0.0
      %v366 = vadd.f32 %v364, %v365
      %v367 = vsel %vm212, %v326, 0.0
      %v368 = vadd.f32 %v366, %v367
      %v369 = vsel %vm212, %v327, 0.0
      %v370 = vadd.f32 %v368, %v369
      %v371 = vsel %vm212, %v328, 0.0
      %v372 = vadd.f32 %v370, %v371
      %v373 = vsel %vm212, %v329, 0.0
      %v374 = vadd.f32 %v372, %v373
      %v375 = vsel %vm212, %v330, 0.0
      %v376 = vadd.f32 %v374, %v375
      %v377 = vsel %vm212, %v331, 0.0
      %v378 = vadd.f32 %v376, %v377
      %v379 = vsel %vm212, %v332, 0.0
      %v380 = vadd.f32 %v378, %v379
      %v381 = vsel %vm212, %v333, 0.0
      %v382 = vadd.f32 %v380, %v381
      %v383 = vsel %vm212, %v334, 0.0
      %v384 = vadd.f32 %v382, %v383
      %v385 = vsel %vm212, %v335, 0.0
      %v386 = vadd.f32 %v384, %v385
      %v387 = vsel %vm212, %v336, 0.0
      %v388 = vadd.f32 %v386, %v387
      %v389 = vsel %vm212, %v337, 0.0
      %v390 = vadd.f32 %v388, %v389
      %v391 = vsel %vm212, %v338, 0.0
      %v392 = vadd.f32 %v390, %v391
      %v393 = vsel %vm212, %v339, 0.0
      %v394 = vadd.f32 %v392, %v393
      %v395 = vsel %vm212, %v340, 0.0
      %v396 = vadd.f32 %v394, %v395
      %v397 = vsel %vm212, %v341, 0.0
      %v398 = vadd.f32 %v396, %v397
      %v399 = vsel %vm212, %v342, 0.0
      %v400 = vadd.f32 %v398, %v399
      %v401 = vsel %vm212, %v343, 0.0
      %v402 = vadd.f32 %v400, %v401
      %v403 = vsel %vm212, %v344, 0.0
      %v404 = vadd.f32 %v402, %v403
      %v405 = vsel %vm212, %v345, 0.0
      %v406 = vadd.f32 %v404, %v405
      %v407 = vsel %vm212, %v346, 0.0
      %v408 = vadd.f32 %v406, %v407
      %v409 = vsel %vm212, %v347, 0.0
      %v410 = vadd.f32 %v408, %v409
      %v411 = vrot.slane %v410, 4
      %v412 = vadd.f32 %v410, %v411
      %v413 = vrot.slane %v412, 2
      %v414 = vadd.f32 %v412, %v413
      %v415 = vrot.slane %v414, 1
      %v416 = vadd.f32 %v414, %v415
      %v417 = vmul.f32 %v416, %v282
      %v418 = vadd.f32 %v417, 1e-05
      %v419 = vrsqrt.pop %v418
      %v420 = vmul.f32 %v284, %v419
      %v421 = vmul.f32 %v285, %v419
      %v422 = vmul.f32 %v286, %v419
      %v423 = vmul.f32 %v287, %v419
      %v424 = vmul.f32 %v288, %v419
      %v425 = vmul.f32 %v289, %v419
      %v426 = vmul.f32 %v290, %v419
      %v427 = vmul.f32 %v291, %v419
      %v428 = vmul.f32 %v292, %v419
      %v429 = vmul.f32 %v293, %v419
      %v430 = vmul.f32 %v294, %v419
      %v431 = vmul.f32 %v295, %v419
      %v432 = vmul.f32 %v296, %v419
      %v433 = vmul.f32 %v297, %v419
      %v434 = vmul.f32 %v298, %v419
      %v435 = vmul.f32 %v299, %v419
      %v436 = vmul.f32 %v300, %v419
      %v437 = vmul.f32 %v301, %v419
      %v438 = vmul.f32 %v302, %v419
      %v439 = vmul.f32 %v303, %v419
      %v440 = vmul.f32 %v304, %v419
      %v441 = vmul.f32 %v305, %v419
      %v442 = vmul.f32 %v306, %v419
      %v443 = vmul.f32 %v307, %v419
      %v444 = vmul.f32 %v308, %v419
      %v445 = vmul.f32 %v309, %v419
      %v446 = vmul.f32 %v310, %v419
      %v447 = vmul.f32 %v311, %v419
      %v448 = vmul.f32 %v312, %v419
      %v449 = vmul.f32 %v313, %v419
      %v450 = vmul.f32 %v314, %v419
      %v451 = vmul.f32 %v315, %v419
      %v452 = vmax.f32 %v420, 0.0
      %v453 = vmax.f32 %v421, 0.0
      %v454 = vmax.f32 %v422, 0.0
      %v455 = vmax.f32 %v423, 0.0
      %v456 = vmax.f32 %v424, 0.0
      %v457 = vmax.f32 %v425, 0.0
      %v458 = vmax.f32 %v426, 0.0
      %v459 = vmax.f32 %v427, 0.0
      %v460 = vmax.f32 %v428, 0.0
      %v461 = vmax.f32 %v429, 0.0
      %v462 = vmax.f32 %v430, 0.0
      %v463 = vmax.f32 %v431, 0.0
      %v464 = vmax.f32 %v432, 0.0
      %v465 = vmax.f32 %v433, 0.0
      %v466 = vmax.f32 %v434, 0.0
      %v467 = vmax.f32 %v435, 0.0
      %v468 = vmax.f32 %v436, 0.0
      %v469 = vmax.f32 %v437, 0.0
      %v470 = vmax.f32 %v438, 0.0
      %v471 = vmax.f32 %v439, 0.0
      %v472 = vmax.f32 %v440, 0.0
      %v473 = vmax.f32 %v441, 0.0
      %v474 = vmax.f32 %v442, 0.0
      %v475 = vmax.f32 %v443, 0.0
      %v476 = vmax.f32 %v444, 0.0
      %v477 = vmax.f32 %v445, 0.0
      %v478 = vmax.f32 %v446, 0.0
      %v479 = vmax.f32 %v447, 0.0
      %v480 = vmax.f32 %v448, 0.0
      %v481 = vmax.f32 %v449, 0.0
      %v482 = vmax.f32 %v450, 0.0
      %v483 = vmax.f32 %v451, 0.0
      %v484 = vpack.c.bf16 %v453, %v452
      %v485 = vpack.c.bf16 %v455, %v454
      %v486 = vpack.c.bf16 %v457, %v456
      %v487 = vpack.c.bf16 %v459, %v458
      %v488 = vpack.c.bf16 %v461, %v460
      %v489 = vpack.c.bf16 %v463, %v462
      %v490 = vpack.c.bf16 %v465, %v464
      %v491 = vpack.c.bf16 %v467, %v466
      %v492 = vpack.c.bf16 %v469, %v468
      %v493 = vpack.c.bf16 %v471, %v470
      %v494 = vpack.c.bf16 %v473, %v472
      %v495 = vpack.c.bf16 %v475, %v474
      %v496 = vpack.c.bf16 %v477, %v476
      %v497 = vpack.c.bf16 %v479, %v478
      %v498 = vpack.c.bf16 %v481, %v480
      %v499 = vpack.c.bf16 %v483, %v482
      %v516 = vunpack.c.l.b16 %v484
      %v517 = vunpack.c.h.b16 %v484
      %v518 = vunpack.c.l.b16 %v485
      %v519 = vunpack.c.h.b16 %v485
      %v520 = vunpack.c.l.b16 %v486
      %v521 = vunpack.c.h.b16 %v486
      %v522 = vunpack.c.l.b16 %v487
      %v523 = vunpack.c.h.b16 %v487
      %v524 = vunpack.c.l.b16 %v488
      %v525 = vunpack.c.h.b16 %v488
      %v526 = vunpack.c.l.b16 %v489
      %v527 = vunpack.c.h.b16 %v489
      %v528 = vunpack.c.l.b16 %v490
      %v529 = vunpack.c.h.b16 %v490
      %v530 = vunpack.c.l.b16 %v491
      %v531 = vunpack.c.h.b16 %v491
      %v532 = vunpack.c.l.b16 %v492
      %v533 = vunpack.c.h.b16 %v492
      %v534 = vunpack.c.l.b16 %v493
      %v535 = vunpack.c.h.b16 %v493
      %v536 = vunpack.c.l.b16 %v494
      %v537 = vunpack.c.h.b16 %v494
      %v538 = vunpack.c.l.b16 %v495
      %v539 = vunpack.c.h.b16 %v495
      %v540 = vunpack.c.l.b16 %v496
      %v541 = vunpack.c.h.b16 %v496
      %v542 = vunpack.c.l.b16 %v497
      %v543 = vunpack.c.h.b16 %v497
      %v544 = vunpack.c.l.b16 %v498
      %v545 = vunpack.c.h.b16 %v498
      %v546 = vunpack.c.l.b16 %v499
      %v547 = vunpack.c.h.b16 %v499
      %v548 = vpack.c.b16 %v516, %v516
      %v549 = vpack.c.b16 %v517, %v517
      %v550 = vpack.c.b16 %v518, %v518
      %v551 = vpack.c.b16 %v519, %v519
      %v552 = vpack.c.b16 %v520, %v520
      %v553 = vpack.c.b16 %v521, %v521
      %v554 = vpack.c.b16 %v522, %v522
      %v555 = vpack.c.b16 %v523, %v523
      %v556 = vpack.c.b16 %v524, %v524
      %v557 = vpack.c.b16 %v525, %v525
      %v558 = vpack.c.b16 %v526, %v526
      %v559 = vpack.c.b16 %v527, %v527
      %v560 = vpack.c.b16 %v528, %v528
      %v561 = vpack.c.b16 %v529, %v529
      %v562 = vpack.c.b16 %v530, %v530
      %v563 = vpack.c.b16 %v531, %v531
      %v564 = vpack.c.b16 %v532, %v532
      %v565 = vpack.c.b16 %v533, %v533
      %v566 = vpack.c.b16 %v534, %v534
      %v567 = vpack.c.b16 %v535, %v535
      %v568 = vpack.c.b16 %v536, %v536
      %v569 = vpack.c.b16 %v537, %v537
      %v570 = vpack.c.b16 %v538, %v538
      %v571 = vpack.c.b16 %v539, %v539
      %v572 = vpack.c.b16 %v540, %v540
      %v573 = vpack.c.b16 %v541, %v541
      %v574 = vpack.c.b16 %v542, %v542
      %v575 = vpack.c.b16 %v543, %v543
      %v576 = vpack.c.b16 %v544, %v544
      %v577 = vpack.c.b16 %v545, %v545
      %v578 = vpack.c.b16 %v546, %v546
      %v579 = vpack.c.b16 %v547, %v547
      %vm612 = vcmask 60416
      %613 = vst.msk [vmem:[%s147] sm:$0xf] %vm612, %v548
      %614 = vst.msk [vmem:[%s147 + $0x4] sm:$0xf] %vm612, %v549
      %615 = vst.msk [vmem:[%s147 + $0x8] sm:$0xf] %vm612, %v550
      %616 = vst.msk [vmem:[%s147 + $0xc] sm:$0xf] %vm612, %v551
      %617 = vst.msk [vmem:[%s147 + $0x10] sm:$0xf] %vm612, %v552
      %618 = vst.msk [vmem:[%s147 + $0x14] sm:$0xf] %vm612, %v553
      %619 = vst.msk [vmem:[%s147 + $0x18] sm:$0xf] %vm612, %v554
      %620 = vst.msk [vmem:[%s147 + $0x1c] sm:$0xf] %vm612, %v555
      %621 = vst.msk [vmem:[%s147 + $0x20] sm:$0xf] %vm612, %v556
      %622 = vst.msk [vmem:[%s147 + $0x24] sm:$0xf] %vm612, %v557
      %623 = vst.msk [vmem:[%s147 + $0x28] sm:$0xf] %vm612, %v558
      %624 = vst.msk [vmem:[%s147 + $0x2c] sm:$0xf] %vm612, %v559
      %625 = vst.msk [vmem:[%s147 + $0x30] sm:$0xf] %vm612, %v560
      %626 = vst.msk [vmem:[%s147 + $0x34] sm:$0xf] %vm612, %v561
      %627 = vst.msk [vmem:[%s147 + $0x38] sm:$0xf] %vm612, %v562
      %628 = vst.msk [vmem:[%s147 + $0x3c] sm:$0xf] %vm612, %v563
      %629 = vst.msk [vmem:[%s147 + $0x40] sm:$0xf] %vm612, %v564
      %630 = vst.msk [vmem:[%s147 + $0x44] sm:$0xf] %vm612, %v565
      %631 = vst.msk [vmem:[%s147 + $0x48] sm:$0xf] %vm612, %v566
      %632 = vst.msk [vmem:[%s147 + $0x4c] sm:$0xf] %vm612, %v567
      %633 = vst.msk [vmem:[%s147 + $0x50] sm:$0xf] %vm612, %v568
      %634 = vst.msk [vmem:[%s147 + $0x54] sm:$0xf] %vm612, %v569
      %635 = vst.msk [vmem:[%s147 + $0x58] sm:$0xf] %vm612, %v570
      %636 = vst.msk [vmem:[%s147 + $0x5c] sm:$0xf] %vm612, %v571
      %637 = vst.msk [vmem:[%s147 + $0x60] sm:$0xf] %vm612, %v572
      %638 = vst.msk [vmem:[%s147 + $0x64] sm:$0xf] %vm612, %v573
      %639 = vst.msk [vmem:[%s147 + $0x68] sm:$0xf] %vm612, %v574
      %640 = vst.msk [vmem:[%s147 + $0x6c] sm:$0xf] %vm612, %v575
      %641 = vst.msk [vmem:[%s147 + $0x70] sm:$0xf] %vm612, %v576
      %642 = vst.msk [vmem:[%s147 + $0x74] sm:$0xf] %vm612, %v577
      %643 = vst.msk [vmem:[%s147 + $0x78] sm:$0xf] %vm612, %v578
      %644 = vst.msk [vmem:[%s147 + $0x7c] sm:$0xf] %vm612, %v579
      %p645 = scmp.lt.s32.totalorder %s16, 1
      %s646 = scalar_select %p645, %s16, 1
      %p647 = scmp.lt.s32.totalorder %s17, 0
      %s648 = scalar_select %p647, %s17, 0
      %s649 = smul.addr %s646, 32
      %s650 = sadd.s32 %s648, %s649
      %s651 = smul.addr %s650, 4
      %s652 = scalar_lea.vmem %s1, %s651
      // Predicated region
      $region25: #{_lambda_.59} parent=23 // pred_check
        %p653 = pneg %p72
      $region26: #{_lambda_.59} parent=23 // pred_check_branch
        %655 = sbr.rel (%p653) target = $region28
      $region27: #{_lambda_.59} parent=23 // pred_region
        _
      $region28: #{_lambda_.59} parent=23 // pred_fallthru
        _
    $region24: #{_lambda_.59} parent=5 // pred_fallthru
      _
    %p656 = scmp.le.s32.totalorder 2, %s7
    // Predicated region
    $region29: #{_lambda_.59} parent=5 // pred_check
      %p657 = pneg %p656
    $region30: #{_lambda_.59} parent=5 // pred_check_branch
      %659 = sbr.rel (%p657) target = $region32
    $region31: #{_lambda_.59} parent=5 // pred_region
      %s660 = ssub.s32 %s7, 2
      // Predicated region
      $region33: #{_lambda_.59} parent=31 // pred_check
        %p661 = pneg %p78
      $region34: #{_lambda_.59} parent=31 // pred_check_branch
        %663 = sbr.rel (%p661) target = $region36
      $region35: #{_lambda_.59} parent=31 // pred_region
        %p664 = scmp.lt.s32.totalorder %s18, 1
        %s665 = scalar_select %p664, %s18, 1
        %p666 = scmp.lt.s32.totalorder %s19, 0
        %s667 = scalar_select %p666, %s19, 0
        %s668 = smul.addr %s665, 32
        %s669 = sadd.s32 %s667, %s668
        %s670 = smul.addr %s669, 4
        %s671 = scalar_lea.vmem %s1, %s670
      $region36: #{_lambda_.59} parent=31 // pred_fallthru
        _
    $region32: #{_lambda_.59} parent=5 // pred_fallthru
      _
  $region6: #{_lambda_.59} parent=0 // loop_footer
    %s11 = sadd.s32 1, %s7
  $region7: #{_lambda_.59} parent=0 // loop_footer_branch
    %6 = sbr.rel target = $region3
  $region8: #{_lambda_.59} parent=0 // loop_exit
    _

// kernel: _lambda_.60
$region0: #{_lambda_.60}
  #allocation0 [shape = 'u32[]', space=smem, size = 0x4, offset = 0x4, fixed_abs, tag = 'smem constant byte address 0x4 - core index']
  #allocation1 [shape = 'u32[144,128]{1,0:T(1,128)}', space=vmem, size = 0x12000, scoped, tag = 'internal scratch']
  #allocation2 [shape = 'f32[256,128]{1,0:T(8,128)}', space=vmem, size = 0x20000, scoped, tag = 'scratch operand']
  %s0 = inlined_call_operand.vmem [shape: bf16[512,128], index: 0, kind: input, shape index: {}]
  %s1 = inlined_call_operand.vmem [shape: bf16[128,128], index: 1, kind: input, shape index: {}]
  %s2 = inlined_call_operand.vmem [shape: f32[1,128], index: 2, kind: input, shape index: {}]
  %s3 = inlined_call_operand.vmem [shape: bf16[512,128], index: 3, kind: output, shape index: {}]
  %s4 = sld [smem:[#allocation0]]
  $region53: #{_lambda_.60} parent=0
    _
  %s6 = ssub.s32 1, %s4
  %s7 = scalar_select 0, %s6, %s4
  loop: start=0, step=1, limit=4
  $region2: #{_lambda_.60} parent=0 // loop_pre_header
    _
  $region3: #{_lambda_.60} parent=0 // loop_header
    %s9 = sphi 0, %s13
    %p10 = scmp.ge.s32.totalorder %s9, 4
    %s16 = sphi 0, %s35
    %s17 = sphi 0, %s31
    %s18 = sphi 0, %s27
    %s19 = sphi 0, %s16
    %s20 = sphi 0, %s17
    %s21 = sphi 0, %s18
    %s22 = sphi 0, %s19
    %s23 = sphi 0, %s20
    %s24 = sphi 0, %s21
    %s40 = sphi 0, %s42
    %s43 = sphi 0, %s40
    %s44 = sphi 0, %s43
    %s60 = sphi 0, %s44
    %s68 = sphi 0, %s70
    %s71 = sphi 0, %s68
    %s72 = sphi 0, %s71
    %s88 = sphi 0, %s72
    %s94 = sphi 0, %s96
    %s97 = sphi 0, %s94
    %s98 = sphi 0, %s97
    %s114 = sphi 0, %s98
    %s122 = sphi 0, %s124
    %s125 = sphi 0, %s122
    %s126 = sphi 0, %s125
    %s142 = sphi 0, %s126
  $region4: #{_lambda_.60} parent=0 // loop_header_branch
    %12 = sbr.rel (%p10) target = $region8
  $region5: #{_lambda_.60} parent=0 // loop_body
    %s14 = ssub.s32 %s9, 1
    %s15 = ssub.s32 %s9, 2
    %s25 = sadd.s32 1, %s18
    %p26 = scmp.ge.s32.totalorder %s25, 1
    %s27 = scalar_select %p26, 0, %s25
    %s28 = sadd.s32 1, %s17
    %s29 = scalar_select %p26, %s28, %s17
    %p30 = scmp.ge.s32.totalorder %s29, 1
    %s31 = scalar_select %p30, 0, %s29
    %s32 = sadd.s32 1, %s16
    %s33 = scalar_select %p30, %s32, %s16
    %p34 = scmp.ge.s32.totalorder %s33, 2
    %s35 = scalar_select %p34, 0, %s33
    %s36 = ssub.s32 %s16, %s35
    %s37 = ssub.s32 %s18, %s27
    %s38 = sor.u32 %s36, %s37
    %p39 = scmp.eq.s32.totalorder %s38, 0
    %s41 = sadd.s32 %s40, 1
    %s42 = scalar_select %p39, %s40, %s41
    %p45 = pneg %p39
    %p46 = scmp.eq.s32.totalorder %s9, 1
    %p47 = por %p45, %p46
    %p48 = scmp.ne.s32.totalorder %s40, %s43
    %p49 = scmp.eq.s32.totalorder %s9, 0
    %p50 = por %p48, %p49
    %p51 = scmp.ne.s32.totalorder %s40, %s43
    %p52 = scmp.eq.s32.totalorder %s14, 1
    %p53 = por %p51, %p52
    %p54 = scmp.ne.s32.totalorder %s43, %s44
    %p55 = scmp.eq.s32.totalorder %s14, 0
    %p56 = por %p54, %p55
    %p57 = scmp.ne.s32.totalorder %s43, %s44
    %p58 = scmp.eq.s32.totalorder %s15, 1
    %p59 = por %p57, %p58
    %p61 = scmp.ne.s32.totalorder %s44, %s60
    %p62 = scmp.eq.s32.totalorder %s15, 0
    %p63 = por %p61, %p62
    %s64 = ssub.s32 %s18, %s27
    %s65 = ssub.s32 %s17, %s31
    %s66 = sor.u32 %s64, %s65
    %p67 = scmp.eq.s32.totalorder %s66, 0
    %s69 = sadd.s32 %s68, 1
    %s70 = scalar_select %p67, %s68, %s69
    %p73 = pneg %p67
    %p74 = scmp.eq.s32.totalorder %s9, 1
    %p75 = por %p73, %p74
    %p76 = scmp.ne.s32.totalorder %s68, %s71
    %p77 = scmp.eq.s32.totalorder %s9, 0
    %p78 = por %p76, %p77
    %p79 = scmp.ne.s32.totalorder %s68, %s71
    %p80 = scmp.eq.s32.totalorder %s14, 1
    %p81 = por %p79, %p80
    %p82 = scmp.ne.s32.totalorder %s71, %s72
    %p83 = scmp.eq.s32.totalorder %s14, 0
    %p84 = por %p82, %p83
    %p85 = scmp.ne.s32.totalorder %s71, %s72
    %p86 = scmp.eq.s32.totalorder %s15, 1
    %p87 = por %p85, %p86
    %p89 = scmp.ne.s32.totalorder %s72, %s88
    %p90 = scmp.eq.s32.totalorder %s15, 0
    %p91 = por %p89, %p90
    %s92 = ssub.s32 %s17, %s31
    %p93 = scmp.eq.s32.totalorder %s92, 0
    %s95 = sadd.s32 %s94, 1
    %s96 = scalar_select %p93, %s94, %s95
    %p99 = pneg %p93
    %p100 = scmp.eq.s32.totalorder %s9, 1
    %p101 = por %p99, %p100
    %p102 = scmp.ne.s32.totalorder %s94, %s97
    %p103 = scmp.eq.s32.totalorder %s9, 0
    %p104 = por %p102, %p103
    %p105 = scmp.ne.s32.totalorder %s94, %s97
    %p106 = scmp.eq.s32.totalorder %s14, 1
    %p107 = por %p105, %p106
    %p108 = scmp.ne.s32.totalorder %s97, %s98
    %p109 = scmp.eq.s32.totalorder %s14, 0
    %p110 = por %p108, %p109
    %p111 = scmp.ne.s32.totalorder %s97, %s98
    %p112 = scmp.eq.s32.totalorder %s15, 1
    %p113 = por %p111, %p112
    %p115 = scmp.ne.s32.totalorder %s98, %s114
    %p116 = scmp.eq.s32.totalorder %s15, 0
    %p117 = por %p115, %p116
    %s118 = ssub.s32 %s16, %s35
    %s119 = ssub.s32 %s17, %s31
    %s120 = sor.u32 %s118, %s119
    %p121 = scmp.eq.s32.totalorder %s120, 0
    %s123 = sadd.s32 %s122, 1
    %s124 = scalar_select %p121, %s122, %s123
    %p127 = pneg %p121
    %p128 = scmp.eq.s32.totalorder %s9, 1
    %p129 = por %p127, %p128
    %p130 = scmp.ne.s32.totalorder %s122, %s125
    %p131 = scmp.eq.s32.totalorder %s9, 0
    %p132 = por %p130, %p131
    %p133 = scmp.ne.s32.totalorder %s122, %s125
    %p134 = scmp.eq.s32.totalorder %s14, 1
    %p135 = por %p133, %p134
    %p136 = scmp.ne.s32.totalorder %s125, %s126
    %p137 = scmp.eq.s32.totalorder %s14, 0
    %p138 = por %p136, %p137
    %p139 = scmp.ne.s32.totalorder %s125, %s126
    %p140 = scmp.eq.s32.totalorder %s15, 1
    %p141 = por %p139, %p140
    %p143 = scmp.ne.s32.totalorder %s126, %s142
    %p144 = scmp.eq.s32.totalorder %s15, 0
    %p145 = por %p143, %p144
    %p146 = scmp.le.s32.totalorder 1, %s9
    %p147 = scmp.lt.s32.totalorder %s9, 3
    %p148 = pnand %p146, %p147
    %p149 = pneg %p148
    // Predicated region
    $region9: #{_lambda_.60} parent=5 // pred_check
      _
    $region10: #{_lambda_.60} parent=5 // pred_check_branch
      %151 = sbr.rel (%p148) target = $region12
    $region11: #{_lambda_.60} parent=5 // pred_region
      %s152 = ssub.s32 %s9, 1
      // Predicated region
      $region13: #{_lambda_.60} parent=11 // pred_check
        %p153 = pneg %p84
      $region14: #{_lambda_.60} parent=11 // pred_check_branch
        %155 = sbr.rel (%p153) target = $region16
      $region15: #{_lambda_.60} parent=11 // pred_region
        %s156 = smul.u32 16, %s21
        %p157 = scmp.lt.s32.totalorder %s156, 15
        %s158 = scalar_select %p157, %s156, 15
        %p159 = scmp.lt.s32.totalorder %s20, 0
        %s160 = scalar_select %p159, %s20, 0
        %s161 = sadd.s32 %s160, %s158
        %s162 = smul.addr %s161, 4
        %s163 = scalar_lea.vmem %s1, %s162
        %s164 = smul.u32 16, %s21
      $region16: #{_lambda_.60} parent=11 // pred_fallthru
        _
      // Predicated region
      $region17: #{_lambda_.60} parent=11 // pred_check
        %p165 = pneg %p110
      $region18: #{_lambda_.60} parent=11 // pred_check_branch
        %167 = sbr.rel (%p165) target = $region20
      $region19: #{_lambda_.60} parent=11 // pred_region
        %p168 = scmp.lt.s32.totalorder %s20, 0
        %s169 = scalar_select %p168, %s20, 0
        %s170 = scalar_lea.vmem %s2, %s169
      $region20: #{_lambda_.60} parent=11 // pred_fallthru
        _
    $region12: #{_lambda_.60} parent=5 // pred_fallthru
      _
    %p171 = scmp.lt.s32.totalorder %s9, 2
    // Predicated region
    $region21: #{_lambda_.60} parent=5 // pred_check
      %p172 = pneg %p171
    $region22: #{_lambda_.60} parent=5 // pred_check_branch
      %174 = sbr.rel (%p172) target = $region24
    $region23: #{_lambda_.60} parent=5 // pred_region
      // Predicated region
      $region25: #{_lambda_.60} parent=23 // pred_check
        %p175 = pneg %p50
      $region26: #{_lambda_.60} parent=23 // pred_check_branch
        %177 = sbr.rel (%p175) target = $region28
      $region27: #{_lambda_.60} parent=23 // pred_region
        %s178 = smul.u32 32, %s16
        %p179 = scmp.lt.s32.totalorder %s178, 63
        %s180 = scalar_select %p179, %s178, 63
        %p181 = scmp.lt.s32.totalorder %s18, 0
        %s182 = scalar_select %p181, %s18, 0
        %s183 = sadd.s32 %s182, %s180
        %s184 = smul.addr %s183, 4
        %s185 = scalar_lea.vmem %s0, %s184
        %s186 = smul.u32 32, %s16
      $region28: #{_lambda_.60} parent=23 // pred_fallthru
        _
    $region24: #{_lambda_.60} parent=5 // pred_fallthru
      _
    %p187 = scmp.le.s32.totalorder 1, %s9
    %p188 = scmp.lt.s32.totalorder %s9, 3
    %p189 = pnand %p187, %p188
    %p190 = pneg %p189
    // Predicated region
    $region29: #{_lambda_.60} parent=5 // pred_check
      _
    $region30: #{_lambda_.60} parent=5 // pred_check_branch
      %192 = sbr.rel (%p189) target = $region32
    $region31: #{_lambda_.60} parent=5 // pred_region
      %s193 = ssub.s32 %s9, 1
      %s194 = smul.u32 32, %s19
      %p195 = scmp.lt.s32.totalorder %s194, 63
      %s196 = scalar_select %p195, %s194, 63
      %p197 = scmp.lt.s32.totalorder %s21, 0
      %s198 = scalar_select %p197, %s21, 0
      %s199 = sadd.s32 %s198, %s196
      %s200 = smul.addr %s199, 4
      %s201 = scalar_lea.vmem %s0, %s200
      %p202 = pneg %p56
      %p203 = pneg %p53
      %s204 = smul.u32 16, %s21
      %p205 = scmp.lt.s32.totalorder %s204, 15
      %s206 = scalar_select %p205, %s204, 15
      %p207 = scmp.lt.s32.totalorder %s20, 0
      %s208 = scalar_select %p207, %s20, 0
      %s209 = sadd.s32 %s208, %s206
      %s210 = smul.addr %s209, 4
      %s211 = scalar_lea.vmem %s1, %s210
      %p212 = pneg %p84
      %p213 = pneg %p81
      %p214 = scmp.lt.s32.totalorder %s20, 0
      %s215 = scalar_select %p214, %s20, 0
      %s216 = scalar_lea.vmem %s2, %s215
      %p217 = pneg %p110
      %p218 = pneg %p107
      %p219 = pneg %p138
      %p220 = pneg %p135
      %s221 = smul.u32 32, %s19
      %p222 = scmp.lt.s32.totalorder %s221, 63
      %s223 = scalar_select %p222, %s221, 63
      %p224 = scmp.lt.s32.totalorder %s20, 0
      %s225 = scalar_select %p224, %s20, 0
      %s226 = sadd.s32 %s225, %s223
      %s227 = smul.addr %s226, 4
      %s228 = scalar_lea.vmem %s3, %s227
      %s229 = smul.u32 32, %s19
      %p230 = scmp.lt.s32.totalorder %s229, 63
      %s231 = scalar_select %p230, %s229, 63
      %p232 = scmp.lt.s32.totalorder %s21, 0
      %s233 = scalar_select %p232, %s21, 0
      %s234 = sadd.s32 %s233, %s231
      %s235 = smul.addr %s234, 4
      %s236 = scalar_lea.vmem %s0, %s235
      %s237 = smul.u32 32, %s19
      %s238 = smul.u32 16, %s21
      %p239 = scmp.lt.s32.totalorder %s238, 15
      %s240 = scalar_select %p239, %s238, 15
      %p241 = scmp.lt.s32.totalorder %s20, 0
      %s242 = scalar_select %p241, %s20, 0
      %s243 = sadd.s32 %s242, %s240
      %s244 = smul.addr %s243, 4
      %s245 = scalar_lea.vmem %s1, %s244
      %s246 = smul.u32 16, %s21
      %p247 = scmp.lt.s32.totalorder %s20, 0
      %s248 = scalar_select %p247, %s20, 0
      %s249 = scalar_lea.vmem %s2, %s248
      %s250 = smul.u32 32, %s19
      %p251 = scmp.lt.s32.totalorder %s250, 63
      %s252 = scalar_select %p251, %s250, 63
      %p253 = scmp.lt.s32.totalorder %s20, 0
      %s254 = scalar_select %p253, %s20, 0
      %s255 = sadd.s32 %s254, %s252
      %s256 = smul.addr %s255, 4
      %s257 = scalar_lea.vmem %s3, %s256
      %s258 = smul.u32 32, %s19
      %p260 = scmp.eq.s32.totalorder %s21, 0
      // Predicated region
      $region33: #{_lambda_.60} parent=31 // pred_check
        %p261 = pneg %p260
      $region34: #{_lambda_.60} parent=31 // pred_check_branch
        %263 = sbr.rel (%p261) target = $region36
      $region35: #{_lambda_.60} parent=31 // pred_region
        %264 = vst [vmem:[#allocation2] sm:$0xff] 0.0
        %265 = vst [vmem:[#allocation2 + $0x8] sm:$0xff] 0.0
        %266 = vst [vmem:[#allocation2 + $0x10] sm:$0xff] 0.0
        %267 = vst [vmem:[#allocation2 + $0x18] sm:$0xff] 0.0
        %268 = vst [vmem:[#allocation2 + $0x20] sm:$0xff] 0.0
        %269 = vst [vmem:[#allocation2 + $0x28] sm:$0xff] 0.0
        %270 = vst [vmem:[#allocation2 + $0x30] sm:$0xff] 0.0
        %271 = vst [vmem:[#allocation2 + $0x38] sm:$0xff] 0.0
        %272 = vst [vmem:[#allocation2 + $0x40] sm:$0xff] 0.0
        %273 = vst [vmem:[#allocation2 + $0x48] sm:$0xff] 0.0
        %274 = vst [vmem:[#allocation2 + $0x50] sm:$0xff] 0.0
        %275 = vst [vmem:[#allocation2 + $0x58] sm:$0xff] 0.0
        %276 = vst [vmem:[#allocation2 + $0x60] sm:$0xff] 0.0
        %277 = vst [vmem:[#allocation2 + $0x68] sm:$0xff] 0.0
        %278 = vst [vmem:[#allocation2 + $0x70] sm:$0xff] 0.0
        %279 = vst [vmem:[#allocation2 + $0x78] sm:$0xff] 0.0
        %280 = vst [vmem:[#allocation2 + $0x80] sm:$0xff] 0.0
        %281 = vst [vmem:[#allocation2 + $0x88] sm:$0xff] 0.0
        %282 = vst [vmem:[#allocation2 + $0x90] sm:$0xff] 0.0
        %283 = vst [vmem:[#allocation2 + $0x98] sm:$0xff] 0.0
        %284 = vst [vmem:[#allocation2 + $0xa0] sm:$0xff] 0.0
        %285 = vst [vmem:[#allocation2 + $0xa8] sm:$0xff] 0.0
        %286 = vst [vmem:[#allocation2 + $0xb0] sm:$0xff] 0.0
        %287 = vst [vmem:[#allocation2 + $0xb8] sm:$0xff] 0.0
        %288 = vst [vmem:[#allocation2 + $0xc0] sm:$0xff] 0.0
        %289 = vst [vmem:[#allocation2 + $0xc8] sm:$0xff] 0.0
        %290 = vst [vmem:[#allocation2 + $0xd0] sm:$0xff] 0.0
        %291 = vst [vmem:[#allocation2 + $0xd8] sm:$0xff] 0.0
        %292 = vst [vmem:[#allocation2 + $0xe0] sm:$0xff] 0.0
        %293 = vst [vmem:[#allocation2 + $0xe8] sm:$0xff] 0.0
        %294 = vst [vmem:[#allocation2 + $0xf0] sm:$0xff] 0.0
        %295 = vst [vmem:[#allocation2 + $0xf8] sm:$0xff] 0.0
      $region36: #{_lambda_.60} parent=31 // pred_fallthru
        _
      %v296 = vld [vmem:[#allocation2] sm:$0xff]
      %v297 = vld [vmem:[#allocation2 + $0x8] sm:$0xff]
      %v298 = vld [vmem:[#allocation2 + $0x10] sm:$0xff]
      %v299 = vld [vmem:[#allocation2 + $0x18] sm:$0xff]
      %v300 = vld [vmem:[#allocation2 + $0x20] sm:$0xff]
      %v301 = vld [vmem:[#allocation2 + $0x28] sm:$0xff]
      %v302 = vld [vmem:[#allocation2 + $0x30] sm:$0xff]
      %v303 = vld [vmem:[#allocation2 + $0x38] sm:$0xff]
      %v304 = vld [vmem:[#allocation2 + $0x40] sm:$0xff]
      %v305 = vld [vmem:[#allocation2 + $0x48] sm:$0xff]
      %v306 = vld [vmem:[#allocation2 + $0x50] sm:$0xff]
      %v307 = vld [vmem:[#allocation2 + $0x58] sm:$0xff]
      %v308 = vld [vmem:[#allocation2 + $0x60] sm:$0xff]
      %v309 = vld [vmem:[#allocation2 + $0x68] sm:$0xff]
      %v310 = vld [vmem:[#allocation2 + $0x70] sm:$0xff]
      %v311 = vld [vmem:[#allocation2 + $0x78] sm:$0xff]
      %v312 = vld [vmem:[#allocation2 + $0x80] sm:$0xff]
      %v313 = vld [vmem:[#allocation2 + $0x88] sm:$0xff]
      %v314 = vld [vmem:[#allocation2 + $0x90] sm:$0xff]
      %v315 = vld [vmem:[#allocation2 + $0x98] sm:$0xff]
      %v316 = vld [vmem:[#allocation2 + $0xa0] sm:$0xff]
      %v317 = vld [vmem:[#allocation2 + $0xa8] sm:$0xff]
      %v318 = vld [vmem:[#allocation2 + $0xb0] sm:$0xff]
      %v319 = vld [vmem:[#allocation2 + $0xb8] sm:$0xff]
      %v320 = vld [vmem:[#allocation2 + $0xc0] sm:$0xff]
      %v321 = vld [vmem:[#allocation2 + $0xc8] sm:$0xff]
      %v322 = vld [vmem:[#allocation2 + $0xd0] sm:$0xff]
      %v323 = vld [vmem:[#allocation2 + $0xd8] sm:$0xff]
      %v324 = vld [vmem:[#allocation2 + $0xe0] sm:$0xff]
      %v325 = vld [vmem:[#allocation2 + $0xe8] sm:$0xff]
      %v326 = vld [vmem:[#allocation2 + $0xf0] sm:$0xff]
      %v327 = vld [vmem:[#allocation2 + $0xf8] sm:$0xff]
      %v328 = vld [vmem:[%s236] sm:$0xf]
      %v329 = vld [vmem:[%s236 + $0x4] sm:$0xf]
      %v330 = vld [vmem:[%s236 + $0x8] sm:$0xf]
      %v331 = vld [vmem:[%s236 + $0xc] sm:$0xf]
      %v332 = vld [vmem:[%s236 + $0x10] sm:$0xf]
      %v333 = vld [vmem:[%s236 + $0x14] sm:$0xf]
      %v334 = vld [vmem:[%s236 + $0x18] sm:$0xf]
      %v335 = vld [vmem:[%s236 + $0x1c] sm:$0xf]
      %v336 = vld [vmem:[%s236 + $0x20] sm:$0xf]
      %v337 = vld [vmem:[%s236 + $0x24] sm:$0xf]
      %v338 = vld [vmem:[%s236 + $0x28] sm:$0xf]
      %v339 = vld [vmem:[%s236 + $0x2c] sm:$0xf]
      %v340 = vld [vmem:[%s236 + $0x30] sm:$0xf]
      %v341 = vld [vmem:[%s236 + $0x34] sm:$0xf]
      %v342 = vld [vmem:[%s236 + $0x38] sm:$0xf]
      %v343 = vld [vmem:[%s236 + $0x3c] sm:$0xf]
      %v344 = vld [vmem:[%s236 + $0x40] sm:$0xf]
      %v345 = vld [vmem:[%s236 + $0x44] sm:$0xf]
      %v346 = vld [vmem:[%s236 + $0x48] sm:$0xf]
      %v347 = vld [vmem:[%s236 + $0x4c] sm:$0xf]
      %v348 = vld [vmem:[%s236 + $0x50] sm:$0xf]
      %v349 = vld [vmem:[%s236 + $0x54] sm:$0xf]
      %v350 = vld [vmem:[%s236 + $0x58] sm:$0xf]
      %v351 = vld [vmem:[%s236 + $0x5c] sm:$0xf]
      %v352 = vld [vmem:[%s236 + $0x60] sm:$0xf]
      %v353 = vld [vmem:[%s236 + $0x64] sm:$0xf]
      %v354 = vld [vmem:[%s236 + $0x68] sm:$0xf]
      %v355 = vld [vmem:[%s236 + $0x6c] sm:$0xf]
      %v356 = vld [vmem:[%s236 + $0x70] sm:$0xf]
      %v357 = vld [vmem:[%s236 + $0x74] sm:$0xf]
      %v358 = vld [vmem:[%s236 + $0x78] sm:$0xf]
      %v359 = vld [vmem:[%s236 + $0x7c] sm:$0xf]
      %v360 = vld [vmem:[%s245] sm:$0xf]
      %v361 = vld [vmem:[%s245 + $0x4] sm:$0xf]
      %v362 = vld [vmem:[%s245 + $0x8] sm:$0xf]
      %v363 = vld [vmem:[%s245 + $0xc] sm:$0xf]
      %v364 = vld [vmem:[%s245 + $0x10] sm:$0xf]
      %v365 = vld [vmem:[%s245 + $0x14] sm:$0xf]
      %v366 = vld [vmem:[%s245 + $0x18] sm:$0xf]
      %v367 = vld [vmem:[%s245 + $0x1c] sm:$0xf]
      %v368 = vld [vmem:[%s245 + $0x20] sm:$0xf]
      %v369 = vld [vmem:[%s245 + $0x24] sm:$0xf]
      %v370 = vld [vmem:[%s245 + $0x28] sm:$0xf]
      %v371 = vld [vmem:[%s245 + $0x2c] sm:$0xf]
      %v372 = vld [vmem:[%s245 + $0x30] sm:$0xf]
      %v373 = vld [vmem:[%s245 + $0x34] sm:$0xf]
      %v374 = vld [vmem:[%s245 + $0x38] sm:$0xf]
      %v375 = vld [vmem:[%s245 + $0x3c] sm:$0xf]
      %v408 = vunpack.c.l.b16 %v328
      %v409 = vunpack.c.l.b16 %v329
      %v410 = vunpack.c.l.b16 %v330
      %v411 = vunpack.c.l.b16 %v331
      %v412 = vunpack.c.l.b16 %v332
      %v413 = vunpack.c.l.b16 %v333
      %v414 = vunpack.c.l.b16 %v334
      %v415 = vunpack.c.l.b16 %v335
      %v416 = vunpack.c.l.b16 %v336
      %v417 = vunpack.c.l.b16 %v337
      %v418 = vunpack.c.l.b16 %v338
      %v419 = vunpack.c.l.b16 %v339
      %v420 = vunpack.c.l.b16 %v340
      %v421 = vunpack.c.l.b16 %v341
      %v422 = vunpack.c.l.b16 %v342
      %v423 = vunpack.c.l.b16 %v343
      %v424 = vunpack.c.l.b16 %v344
      %v425 = vunpack.c.l.b16 %v345
      %v426 = vunpack.c.l.b16 %v346
      %v427 = vunpack.c.l.b16 %v347
      %v428 = vunpack.c.l.b16 %v348
      %v429 = vunpack.c.l.b16 %v349
      %v430 = vunpack.c.l.b16 %v350
      %v431 = vunpack.c.l.b16 %v351
      %v432 = vunpack.c.l.b16 %v352
      %v433 = vunpack.c.l.b16 %v353
      %v434 = vunpack.c.l.b16 %v354
      %v435 = vunpack.c.l.b16 %v355
      %v436 = vunpack.c.l.b16 %v356
      %v437 = vunpack.c.l.b16 %v357
      %v438 = vunpack.c.l.b16 %v358
      %v439 = vunpack.c.l.b16 %v359
      %v440 = vpack.c.b16 %v409, %v408
      %v441 = vpack.c.b16 %v411, %v410
      %v442 = vpack.c.b16 %v413, %v412
      %v443 = vpack.c.b16 %v415, %v414
      %v444 = vpack.c.b16 %v417, %v416
      %v445 = vpack.c.b16 %v419, %v418
      %v446 = vpack.c.b16 %v421, %v420
      %v447 = vpack.c.b16 %v423, %v422
      %v448 = vpack.c.b16 %v425, %v424
      %v449 = vpack.c.b16 %v427, %v426
      %v450 = vpack.c.b16 %v429, %v428
      %v451 = vpack.c.b16 %v431, %v430
      %v452 = vpack.c.b16 %v433, %v432
      %v453 = vpack.c.b16 %v435, %v434
      %v454 = vpack.c.b16 %v437, %v436
      %v455 = vpack.c.b16 %v439, %v438
      %v488 = vunpack.c.l.b16 %v360
      %v489 = vunpack.c.l.b16 %v361
      %v490 = vunpack.c.l.b16 %v362
      %v491 = vunpack.c.l.b16 %v363
      %v492 = vunpack.c.l.b16 %v364
      %v493 = vunpack.c.l.b16 %v365
      %v494 = vunpack.c.l.b16 %v366
      %v495 = vunpack.c.l.b16 %v367
      %v496 = vunpack.c.l.b16 %v368
      %v497 = vunpack.c.l.b16 %v369
      %v498 = vunpack.c.l.b16 %v370
      %v499 = vunpack.c.l.b16 %v371
      %v500 = vunpack.c.l.b16 %v372
      %v501 = vunpack.c.l.b16 %v373
      %v502 = vunpack.c.l.b16 %v374
      %v503 = vunpack.c.l.b16 %v375
      %v504 = vpack.c.b16 %v489, %v488
      %v505 = vpack.c.b16 %v491, %v490
      %v506 = vpack.c.b16 %v493, %v492
      %v507 = vpack.c.b16 %v495, %v494
      %v508 = vpack.c.b16 %v497, %v496
      %v509 = vpack.c.b16 %v499, %v498
      %v510 = vpack.c.b16 %v501, %v500
      %v511 = vpack.c.b16 %v503, %v502
      %520 = vmatprep.subr.bf16.mxu0 0
      %521 = vmatpush1.bf16.msra.mxu0 %v504
      %522 = vmatprep.subr.bf16.mxu0 0
      %523 = vmatpush1.bf16.msra.mxu0 %v505
      %524 = vmatprep.subr.bf16.mxu0 0
      %525 = vmatpush1.bf16.msra.mxu0 %v506
      %526 = vmatprep.subr.bf16.mxu0 0
      %527 = vmatpush1.bf16.msra.mxu0 %v507
      %528 = vmatprep.subr.bf16.mxu0 0
      %529 = vmatpush1.bf16.msra.mxu0 %v508
      %530 = vmatprep.subr.bf16.mxu0 0
      %531 = vmatpush1.bf16.msra.mxu0 %v509
      %532 = vmatprep.subr.bf16.mxu0 0
      %533 = vmatpush1.bf16.msra.mxu0 %v510
      %534 = vmatprep.subr.bf16.mxu0 0
      %535 = vmatpush1.bf16.msra.mxu0 %v511
      %536 = vmatprep.subr.bf16.mxu0 0
      %537 = vmatpush1.bf16.msra.mxu0 0
      %538 = vmatprep.subr.bf16.mxu0 0
      %539 = vmatpush1.bf16.msra.mxu0 0
      %540 = vmatprep.subr.bf16.mxu0 0
      %541 = vmatpush1.bf16.msra.mxu0 0
      %542 = vmatprep.subr.bf16.mxu0 0
      %543 = vmatpush1.bf16.msra.mxu0 0
      %544 = vmatprep.subr.bf16.mxu0 0
      %545 = vmatpush1.bf16.msra.mxu0 0
      %546 = vmatprep.subr.bf16.mxu0 0
      %547 = vmatpush1.bf16.msra.mxu0 0
      %548 = vmatprep.subr.bf16.mxu0 0
      %549 = vmatpush1.bf16.msra.mxu0 0
      %550 = vmatprep.subr.bf16.mxu0 0
      %551 = vmatpush1.bf16.msra.mxu0 0
      %552 = vmatprep.mubr.bf16.mxu0 0
      %553 = vmatmul.mubr.bf16.gmra.mrb[0].mxu0 %v440
      %v554 = vpop.f32.mrb[0].mxu0
      %v555 = vadd.f32 0.0, %v554
      %v556 = vpop.f32.mrb[0].mxu0
      %v557 = vpop.f32.mrb[0].mxu0
      %v558 = vadd.f32 0.0, %v557
      %v559 = vpop.f32.mrb[0].mxu0
      %560 = vmatprep.mubr.bf16.mxu0 0
      %561 = vmatmul.mubr.bf16.gmra.mrb[0].mxu0 %v441
      %v562 = vpop.f32.mrb[0].mxu0
      %v563 = vadd.f32 0.0, %v562
      %v564 = vpop.f32.mrb[0].mxu0
      %v565 = vpop.f32.mrb[0].mxu0
      %v566 = vadd.f32 0.0, %v565
      %v567 = vpop.f32.mrb[0].mxu0
      %568 = vmatprep.mubr.bf16.mxu0 0
      %569 = vmatmul.mubr.bf16.gmra.mrb[0].mxu0 %v442
      %v570 = vpop.f32.mrb[0].mxu0
      %v571 = vadd.f32 0.0, %v570
      %v572 = vpop.f32.mrb[0].mxu0
      %v573 = vpop.f32.mrb[0].mxu0
      %v574 = vadd.f32 0.0, %v573
      %v575 = vpop.f32.mrb[0].mxu0
      %576 = vmatprep.mubr.bf16.mxu0 0
      %577 = vmatmul.mubr.bf16.gmra.mrb[0].mxu0 %v443
      %v578 = vpop.f32.mrb[0].mxu0
      %v579 = vadd.f32 0.0, %v578
      %v580 = vpop.f32.mrb[0].mxu0
      %v581 = vpop.f32.mrb[0].mxu0
      %v582 = vadd.f32 0.0, %v581
      %v583 = vpop.f32.mrb[0].mxu0
      %584 = vmatprep.mubr.bf16.mxu0 0
      %585 = vmatmul.mubr.bf16.gmra.mrb[0].mxu0 %v444
      %v586 = vpop.f32.mrb[0].mxu0
      %v587 = vadd.f32 0.0, %v586
      %v588 = vpop.f32.mrb[0].mxu0
      %v589 = vpop.f32.mrb[0].mxu0
      %v590 = vadd.f32 0.0, %v589
      %v591 = vpop.f32.mrb[0].mxu0
      %592 = vmatprep.mubr.bf16.mxu0 0
      %593 = vmatmul.mubr.bf16.gmra.mrb[0].mxu0 %v445
      %v594 = vpop.f32.mrb[0].mxu0
      %v595 = vadd.f32 0.0, %v594
      %v596 = vpop.f32.mrb[0].mxu0
      %v597 = vpop.f32.mrb[0].mxu0
      %v598 = vadd.f32 0.0, %v597
      %v599 = vpop.f32.mrb[0].mxu0
      %600 = vmatprep.mubr.bf16.mxu0 0
      %601 = vmatmul.mubr.bf16.gmra.mrb[0].mxu0 %v446
      %v602 = vpop.f32.mrb[0].mxu0
      %v603 = vadd.f32 0.0, %v602
      %v604 = vpop.f32.mrb[0].mxu0
      %v605 = vpop.f32.mrb[0].mxu0
      %v606 = vadd.f32 0.0, %v605
      %v607 = vpop.f32.mrb[0].mxu0
      %608 = vmatprep.mubr.bf16.mxu0 0
      %609 = vmatmul.mubr.bf16.gmra.mrb[0].mxu0 %v447
      %v610 = vpop.f32.mrb[0].mxu0
      %v611 = vadd.f32 0.0, %v610
      %v612 = vpop.f32.mrb[0].mxu0
      %v613 = vpop.f32.mrb[0].mxu0
      %v614 = vadd.f32 0.0, %v613
      %v615 = vpop.f32.mrb[0].mxu0
      %616 = vmatprep.mubr.bf16.mxu0 0
      %617 = vmatmul.mubr.bf16.gmra.mrb[0].mxu0 %v448
      %v618 = vpop.f32.mrb[0].mxu0
      %v619 = vadd.f32 0.0, %v618
      %v620 = vpop.f32.mrb[0].mxu0
      %v621 = vpop.f32.mrb[0].mxu0
      %v622 = vadd.f32 0.0, %v621
      %v623 = vpop.f32.mrb[0].mxu0
      %624 = vmatprep.mubr.bf16.mxu0 0
      %625 = vmatmul.mubr.bf16.gmra.mrb[0].mxu0 %v449
      %v626 = vpop.f32.mrb[0].mxu0
      %v627 = vadd.f32 0.0, %v626
      %v628 = vpop.f32.mrb[0].mxu0
      %v629 = vpop.f32.mrb[0].mxu0
      %v630 = vadd.f32 0.0, %v629
      %v631 = vpop.f32.mrb[0].mxu0
      %632 = vmatprep.mubr.bf16.mxu0 0
      %633 = vmatmul.mubr.bf16.gmra.mrb[0].mxu0 %v450
      %v634 = vpop.f32.mrb[0].mxu0
      %v635 = vadd.f32 0.0, %v634
      %v636 = vpop.f32.mrb[0].mxu0
      %v637 = vpop.f32.mrb[0].mxu0
      %v638 = vadd.f32 0.0, %v637
      %v639 = vpop.f32.mrb[0].mxu0
      %640 = vmatprep.mubr.bf16.mxu0 0
      %641 = vmatmul.mubr.bf16.gmra.mrb[0].mxu0 %v451
      %v642 = vpop.f32.mrb[0].mxu0
      %v643 = vadd.f32 0.0, %v642
      %v644 = vpop.f32.mrb[0].mxu0
      %v645 = vpop.f32.mrb[0].mxu0
      %v646 = vadd.f32 0.0, %v645
      %v647 = vpop.f32.mrb[0].mxu0
      %648 = vmatprep.mubr.bf16.mxu0 0
      %649 = vmatmul.mubr.bf16.gmra.mrb[0].mxu0 %v452
      %v650 = vpop.f32.mrb[0].mxu0
      %v651 = vadd.f32 0.0, %v650
      %v652 = vpop.f32.mrb[0].mxu0
      %v653 = vpop.f32.mrb[0].mxu0
      %v654 = vadd.f32 0.0, %v653
      %v655 = vpop.f32.mrb[0].mxu0
      %656 = vmatprep.mubr.bf16.mxu0 0
      %657 = vmatmul.mubr.bf16.gmra.mrb[0].mxu0 %v453
      %v658 = vpop.f32.mrb[0].mxu0
      %v659 = vadd.f32 0.0, %v658
      %v660 = vpop.f32.mrb[0].mxu0
      %v661 = vpop.f32.mrb[0].mxu0
      %v662 = vadd.f32 0.0, %v661
      %v663 = vpop.f32.mrb[0].mxu0
      %664 = vmatprep.mubr.bf16.mxu0 0
      %665 = vmatmul.mubr.bf16.gmra.mrb[0].mxu0 %v454
      %v666 = vpop.f32.mrb[0].mxu0
      %v667 = vadd.f32 0.0, %v666
      %v668 = vpop.f32.mrb[0].mxu0
      %v669 = vpop.f32.mrb[0].mxu0
      %v670 = vadd.f32 0.0, %v669
      %v671 = vpop.f32.mrb[0].mxu0
      %672 = vmatprep.mubr.bf16.mxu0 0
      %673 = vmatmul.mubr.bf16.gmra.mrb[0].mxu0 %v455
      %v674 = vpop.f32.mrb[0].mxu0
      %v675 = vadd.f32 0.0, %v674
      %v676 = vpop.f32.mrb[0].mxu0
      %v677 = vpop.f32.mrb[0].mxu0
      %v678 = vadd.f32 0.0, %v677
      %v679 = vpop.f32.mrb[0].mxu0
      %680 = vdwg.mxu0
      %v681 = vadd.f32 %v296, %v555
      %v682 = vadd.f32 %v297, %v558
      %v683 = vadd.f32 %v298, %v563
      %v684 = vadd.f32 %v299, %v566
      %v685 = vadd.f32 %v300, %v571
      %v686 = vadd.f32 %v301, %v574
      %v687 = vadd.f32 %v302, %v579
      %v688 = vadd.f32 %v303, %v582
      %v689 = vadd.f32 %v304, %v587
      %v690 = vadd.f32 %v305, %v590
      %v691 = vadd.f32 %v306, %v595
      %v692 = vadd.f32 %v307, %v598
      %v693 = vadd.f32 %v308, %v603
      %v694 = vadd.f32 %v309, %v606
      %v695 = vadd.f32 %v310, %v611
      %v696 = vadd.f32 %v311, %v614
      %v697 = vadd.f32 %v312, %v619
      %v698 = vadd.f32 %v313, %v622
      %v699 = vadd.f32 %v314, %v627
      %v700 = vadd.f32 %v315, %v630
      %v701 = vadd.f32 %v316, %v635
      %v702 = vadd.f32 %v317, %v638
      %v703 = vadd.f32 %v318, %v643
      %v704 = vadd.f32 %v319, %v646
      %v705 = vadd.f32 %v320, %v651
      %v706 = vadd.f32 %v321, %v654
      %v707 = vadd.f32 %v322, %v659
      %v708 = vadd.f32 %v323, %v662
      %v709 = vadd.f32 %v324, %v667
      %v710 = vadd.f32 %v325, %v670
      %v711 = vadd.f32 %v326, %v675
      %v712 = vadd.f32 %v327, %v678
      %713 = vst [vmem:[#allocation2] sm:$0xff] %v681
      %714 = vst [vmem:[#allocation2 + $0x8] sm:$0xff] %v682
      %715 = vst [vmem:[#allocation2 + $0x10] sm:$0xff] %v683
      %716 = vst [vmem:[#allocation2 + $0x18] sm:$0xff] %v684
      %717 = vst [vmem:[#allocation2 + $0x20] sm:$0xff] %v685
      %718 = vst [vmem:[#allocation2 + $0x28] sm:$0xff] %v686
      %719 = vst [vmem:[#allocation2 + $0x30] sm:$0xff] %v687
      %720 = vst [vmem:[#allocation2 + $0x38] sm:$0xff] %v688
      %721 = vst [vmem:[#allocation2 + $0x40] sm:$0xff] %v689
      %722 = vst [vmem:[#allocation2 + $0x48] sm:$0xff] %v690
      %723 = vst [vmem:[#allocation2 + $0x50] sm:$0xff] %v691
      %724 = vst [vmem:[#allocation2 + $0x58] sm:$0xff] %v692
      %725 = vst [vmem:[#allocation2 + $0x60] sm:$0xff] %v693
      %726 = vst [vmem:[#allocation2 + $0x68] sm:$0xff] %v694
      %727 = vst [vmem:[#allocation2 + $0x70] sm:$0xff] %v695
      %728 = vst [vmem:[#allocation2 + $0x78] sm:$0xff] %v696
      %729 = vst [vmem:[#allocation2 + $0x80] sm:$0xff] %v697
      %730 = vst [vmem:[#allocation2 + $0x88] sm:$0xff] %v698
      %731 = vst [vmem:[#allocation2 + $0x90] sm:$0xff] %v699
      %732 = vst [vmem:[#allocation2 + $0x98] sm:$0xff] %v700
      %733 = vst [vmem:[#allocation2 + $0xa0] sm:$0xff] %v701
      %734 = vst [vmem:[#allocation2 + $0xa8] sm:$0xff] %v702
      %735 = vst [vmem:[#allocation2 + $0xb0] sm:$0xff] %v703
      %736 = vst [vmem:[#allocation2 + $0xb8] sm:$0xff] %v704
      %737 = vst [vmem:[#allocation2 + $0xc0] sm:$0xff] %v705
      %738 = vst [vmem:[#allocation2 + $0xc8] sm:$0xff] %v706
      %739 = vst [vmem:[#allocation2 + $0xd0] sm:$0xff] %v707
      %740 = vst [vmem:[#allocation2 + $0xd8] sm:$0xff] %v708
      %741 = vst [vmem:[#allocation2 + $0xe0] sm:$0xff] %v709
      %742 = vst [vmem:[#allocation2 + $0xe8] sm:$0xff] %v710
      %743 = vst [vmem:[#allocation2 + $0xf0] sm:$0xff] %v711
      %744 = vst [vmem:[#allocation2 + $0xf8] sm:$0xff] %v712
      // Predicated region
      $region37: #{_lambda_.60} parent=31 // pred_check
        %p745 = pneg %p260
      $region38: #{_lambda_.60} parent=31 // pred_check_branch
        %747 = sbr.rel (%p745) target = $region40
      $region39: #{_lambda_.60} parent=31 // pred_region
        %v748 = vld [vmem:[#allocation2] sm:$0xff]
        %v749 = vld [vmem:[#allocation2 + $0x8] sm:$0xff]
        %v750 = vld [vmem:[#allocation2 + $0x10] sm:$0xff]
        %v751 = vld [vmem:[#allocation2 + $0x18] sm:$0xff]
        %v752 = vld [vmem:[#allocation2 + $0x20] sm:$0xff]
        %v753 = vld [vmem:[#allocation2 + $0x28] sm:$0xff]
        %v754 = vld [vmem:[#allocation2 + $0x30] sm:$0xff]
        %v755 = vld [vmem:[#allocation2 + $0x38] sm:$0xff]
        %v756 = vld [vmem:[#allocation2 + $0x40] sm:$0xff]
        %v757 = vld [vmem:[#allocation2 + $0x48] sm:$0xff]
        %v758 = vld [vmem:[#allocation2 + $0x50] sm:$0xff]
        %v759 = vld [vmem:[#allocation2 + $0x58] sm:$0xff]
        %v760 = vld [vmem:[#allocation2 + $0x60] sm:$0xff]
        %v761 = vld [vmem:[#allocation2 + $0x68] sm:$0xff]
        %v762 = vld [vmem:[#allocation2 + $0x70] sm:$0xff]
        %v763 = vld [vmem:[#allocation2 + $0x78] sm:$0xff]
        %v764 = vld [vmem:[#allocation2 + $0x80] sm:$0xff]
        %v765 = vld [vmem:[#allocation2 + $0x88] sm:$0xff]
        %v766 = vld [vmem:[#allocation2 + $0x90] sm:$0xff]
        %v767 = vld [vmem:[#allocation2 + $0x98] sm:$0xff]
        %v768 = vld [vmem:[#allocation2 + $0xa0] sm:$0xff]
        %v769 = vld [vmem:[#allocation2 + $0xa8] sm:$0xff]
        %v770 = vld [vmem:[#allocation2 + $0xb0] sm:$0xff]
        %v771 = vld [vmem:[#allocation2 + $0xb8] sm:$0xff]
        %v772 = vld [vmem:[#allocation2 + $0xc0] sm:$0xff]
        %v773 = vld [vmem:[#allocation2 + $0xc8] sm:$0xff]
        %v774 = vld [vmem:[#allocation2 + $0xd0] sm:$0xff]
        %v775 = vld [vmem:[#allocation2 + $0xd8] sm:$0xff]
        %v776 = vld [vmem:[#allocation2 + $0xe0] sm:$0xff]
        %v777 = vld [vmem:[#allocation2 + $0xe8] sm:$0xff]
        %v778 = vld [vmem:[#allocation2 + $0xf0] sm:$0xff]
        %v779 = vld [vmem:[#allocation2 + $0xf8] sm:$0xff]
        %v780 = vld [vmem:[%s249] sm:$0x1]
        %v782 = vlaneseq
        %v783 = vshrl.u32 %v782, 7
        %v784 = vsub.s32 0, %v783
        %v785 = vrot.slane %v780, %v784
        %v787 = vadd.f32 %v748, %v785
        %v788 = vadd.f32 %v749, %v785
        %v789 = vadd.f32 %v750, %v785
        %v790 = vadd.f32 %v751, %v785
        %v791 = vadd.f32 %v752, %v785
        %v792 = vadd.f32 %v753, %v785
        %v793 = vadd.f32 %v754, %v785
        %v794 = vadd.f32 %v755, %v785
        %v795 = vadd.f32 %v756, %v785
        %v796 = vadd.f32 %v757, %v785
        %v797 = vadd.f32 %v758, %v785
        %v798 = vadd.f32 %v759, %v785
        %v799 = vadd.f32 %v760, %v785
        %v800 = vadd.f32 %v761, %v785
        %v801 = vadd.f32 %v762, %v785
        %v802 = vadd.f32 %v763, %v785
        %v803 = vadd.f32 %v764, %v785
        %v804 = vadd.f32 %v765, %v785
        %v805 = vadd.f32 %v766, %v785
        %v806 = vadd.f32 %v767, %v785
        %v807 = vadd.f32 %v768, %v785
        %v808 = vadd.f32 %v769, %v785
        %v809 = vadd.f32 %v770, %v785
        %v810 = vadd.f32 %v771, %v785
        %v811 = vadd.f32 %v772, %v785
        %v812 = vadd.f32 %v773, %v785
        %v813 = vadd.f32 %v774, %v785
        %v814 = vadd.f32 %v775, %v785
        %v815 = vadd.f32 %v776, %v785
        %v816 = vadd.f32 %v777, %v785
        %v817 = vadd.f32 %v778, %v785
        %v818 = vadd.f32 %v779, %v785
        %v819 = vtanh.pop %v787
        %v820 = vtanh.pop %v788
        %v821 = vtanh.pop %v789
        %v822 = vtanh.pop %v790
        %v823 = vtanh.pop %v791
        %v824 = vtanh.pop %v792
        %v825 = vtanh.pop %v793
        %v826 = vtanh.pop %v794
        %v827 = vtanh.pop %v795
        %v828 = vtanh.pop %v796
        %v829 = vtanh.pop %v797
        %v830 = vtanh.pop %v798
        %v831 = vtanh.pop %v799
        %v832 = vtanh.pop %v800
        %v833 = vtanh.pop %v801
        %v834 = vtanh.pop %v802
        %v835 = vtanh.pop %v803
        %v836 = vtanh.pop %v804
        %v837 = vtanh.pop %v805
        %v838 = vtanh.pop %v806
        %v839 = vtanh.pop %v807
        %v840 = vtanh.pop %v808
        %v841 = vtanh.pop %v809
        %v842 = vtanh.pop %v810
        %v843 = vtanh.pop %v811
        %v844 = vtanh.pop %v812
        %v845 = vtanh.pop %v813
        %v846 = vtanh.pop %v814
        %v847 = vtanh.pop %v815
        %v848 = vtanh.pop %v816
        %v849 = vtanh.pop %v817
        %v850 = vtanh.pop %v818
        %v851 = vpack.c.bf16 %v820, %v819
        %v852 = vpack.c.bf16 %v822, %v821
        %v853 = vpack.c.bf16 %v824, %v823
        %v854 = vpack.c.bf16 %v826, %v825
        %v855 = vpack.c.bf16 %v828, %v827
        %v856 = vpack.c.bf16 %v830, %v829
        %v857 = vpack.c.bf16 %v832, %v831
        %v858 = vpack.c.bf16 %v834, %v833
        %v859 = vpack.c.bf16 %v836, %v835
        %v860 = vpack.c.bf16 %v838, %v837
        %v861 = vpack.c.bf16 %v840, %v839
        %v862 = vpack.c.bf16 %v842, %v841
        %v863 = vpack.c.bf16 %v844, %v843
        %v864 = vpack.c.bf16 %v846, %v845
        %v865 = vpack.c.bf16 %v848, %v847
        %v866 = vpack.c.bf16 %v850, %v849
        %v883 = vunpack.c.l.b16 %v851
        %v884 = vunpack.c.h.b16 %v851
        %v885 = vunpack.c.l.b16 %v852
        %v886 = vunpack.c.h.b16 %v852
        %v887 = vunpack.c.l.b16 %v853
        %v888 = vunpack.c.h.b16 %v853
        %v889 = vunpack.c.l.b16 %v854
        %v890 = vunpack.c.h.b16 %v854
        %v891 = vunpack.c.l.b16 %v855
        %v892 = vunpack.c.h.b16 %v855
        %v893 = vunpack.c.l.b16 %v856
        %v894 = vunpack.c.h.b16 %v856
        %v895 = vunpack.c.l.b16 %v857
        %v896 = vunpack.c.h.b16 %v857
        %v897 = vunpack.c.l.b16 %v858
        %v898 = vunpack.c.h.b16 %v858
        %v899 = vunpack.c.l.b16 %v859
        %v900 = vunpack.c.h.b16 %v859
        %v901 = vunpack.c.l.b16 %v860
        %v902 = vunpack.c.h.b16 %v860
        %v903 = vunpack.c.l.b16 %v861
        %v904 = vunpack.c.h.b16 %v861
        %v905 = vunpack.c.l.b16 %v862
        %v906 = vunpack.c.h.b16 %v862
        %v907 = vunpack.c.l.b16 %v863
        %v908 = vunpack.c.h.b16 %v863
        %v909 = vunpack.c.l.b16 %v864
        %v910 = vunpack.c.h.b16 %v864
        %v911 = vunpack.c.l.b16 %v865
        %v912 = vunpack.c.h.b16 %v865
        %v913 = vunpack.c.l.b16 %v866
        %v914 = vunpack.c.h.b16 %v866
        %v915 = vpack.c.b16 %v883, %v883
        %v916 = vpack.c.b16 %v884, %v884
        %v917 = vpack.c.b16 %v885, %v885
        %v918 = vpack.c.b16 %v886, %v886
        %v919 = vpack.c.b16 %v887, %v887
        %v920 = vpack.c.b16 %v888, %v888
        %v921 = vpack.c.b16 %v889, %v889
        %v922 = vpack.c.b16 %v890, %v890
        %v923 = vpack.c.b16 %v891, %v891
        %v924 = vpack.c.b16 %v892, %v892
        %v925 = vpack.c.b16 %v893, %v893
        %v926 = vpack.c.b16 %v894, %v894
        %v927 = vpack.c.b16 %v895, %v895
        %v928 = vpack.c.b16 %v896, %v896
        %v929 = vpack.c.b16 %v897, %v897
        %v930 = vpack.c.b16 %v898, %v898
        %v931 = vpack.c.b16 %v899, %v899
        %v932 = vpack.c.b16 %v900, %v900
        %v933 = vpack.c.b16 %v901, %v901
        %v934 = vpack.c.b16 %v902, %v902
        %v935 = vpack.c.b16 %v903, %v903
        %v936 = vpack.c.b16 %v904, %v904
        %v937 = vpack.c.b16 %v905, %v905
        %v938 = vpack.c.b16 %v906, %v906
        %v939 = vpack.c.b16 %v907, %v907
        %v940 = vpack.c.b16 %v908, %v908
        %v941 = vpack.c.b16 %v909, %v909
        %v942 = vpack.c.b16 %v910, %v910
        %v943 = vpack.c.b16 %v911, %v911
        %v944 = vpack.c.b16 %v912, %v912
        %v945 = vpack.c.b16 %v913, %v913
        %v946 = vpack.c.b16 %v914, %v914
        %979 = vst [vmem:[%s257] sm:$0xf] %v915
        %980 = vst [vmem:[%s257 + $0x4] sm:$0xf] %v916
        %981 = vst [vmem:[%s257 + $0x8] sm:$0xf] %v917
        %982 = vst [vmem:[%s257 + $0xc] sm:$0xf] %v918
        %983 = vst [vmem:[%s257 + $0x10] sm:$0xf] %v919
        %984 = vst [vmem:[%s257 + $0x14] sm:$0xf] %v920
        %985 = vst [vmem:[%s257 + $0x18] sm:$0xf] %v921
        %986 = vst [vmem:[%s257 + $0x1c] sm:$0xf] %v922
        %987 = vst [vmem:[%s257 + $0x20] sm:$0xf] %v923
        %988 = vst [vmem:[%s257 + $0x24] sm:$0xf] %v924
        %989 = vst [vmem:[%s257 + $0x28] sm:$0xf] %v925
        %990 = vst [vmem:[%s257 + $0x2c] sm:$0xf] %v926
        %991 = vst [vmem:[%s257 + $0x30] sm:$0xf] %v927
        %992 = vst [vmem:[%s257 + $0x34] sm:$0xf] %v928
        %993 = vst [vmem:[%s257 + $0x38] sm:$0xf] %v929
        %994 = vst [vmem:[%s257 + $0x3c] sm:$0xf] %v930
        %995 = vst [vmem:[%s257 + $0x40] sm:$0xf] %v931
        %996 = vst [vmem:[%s257 + $0x44] sm:$0xf] %v932
        %997 = vst [vmem:[%s257 + $0x48] sm:$0xf] %v933
        %998 = vst [vmem:[%s257 + $0x4c] sm:$0xf] %v934
        %999 = vst [vmem:[%s257 + $0x50] sm:$0xf] %v935
        %1000 = vst [vmem:[%s257 + $0x54] sm:$0xf] %v936
        %1001 = vst [vmem:[%s257 + $0x58] sm:$0xf] %v937
        %1002 = vst [vmem:[%s257 + $0x5c] sm:$0xf] %v938
        %1003 = vst [vmem:[%s257 + $0x60] sm:$0xf] %v939
        %1004 = vst [vmem:[%s257 + $0x64] sm:$0xf] %v940
        %1005 = vst [vmem:[%s257 + $0x68] sm:$0xf] %v941
        %1006 = vst [vmem:[%s257 + $0x6c] sm:$0xf] %v942
        %1007 = vst [vmem:[%s257 + $0x70] sm:$0xf] %v943
        %1008 = vst [vmem:[%s257 + $0x74] sm:$0xf] %v944
        %1009 = vst [vmem:[%s257 + $0x78] sm:$0xf] %v945
        %1010 = vst [vmem:[%s257 + $0x7c] sm:$0xf] %v946
      $region40: #{_lambda_.60} parent=31 // pred_fallthru
        _
      %s1011 = smul.u32 32, %s19
      %p1012 = scmp.lt.s32.totalorder %s1011, 63
      %s1013 = scalar_select %p1012, %s1011, 63
      %p1014 = scmp.lt.s32.totalorder %s20, 0
      %s1015 = scalar_select %p1014, %s20, 0
      %s1016 = sadd.s32 %s1015, %s1013
      %s1017 = smul.addr %s1016, 4
      %s1018 = scalar_lea.vmem %s3, %s1017
      // Predicated region
      $region41: #{_lambda_.60} parent=31 // pred_check
        %p1019 = pneg %p135
      $region42: #{_lambda_.60} parent=31 // pred_check_branch
        %1021 = sbr.rel (%p1019) target = $region44
      $region43: #{_lambda_.60} parent=31 // pred_region
        %s1022 = smul.u32 32, %s19
      $region44: #{_lambda_.60} parent=31 // pred_fallthru
        _
    $region32: #{_lambda_.60} parent=5 // pred_fallthru
      _
    %p1023 = scmp.le.s32.totalorder 2, %s9
    // Predicated region
    $region45: #{_lambda_.60} parent=5 // pred_check
      %p1024 = pneg %p1023
    $region46: #{_lambda_.60} parent=5 // pred_check_branch
      %1026 = sbr.rel (%p1024) target = $region48
    $region47: #{_lambda_.60} parent=5 // pred_region
      %s1027 = ssub.s32 %s9, 2
      // Predicated region
      $region49: #{_lambda_.60} parent=47 // pred_check
        %p1028 = pneg %p141
      $region50: #{_lambda_.60} parent=47 // pred_check_branch
        %1030 = sbr.rel (%p1028) target = $region52
      $region51: #{_lambda_.60} parent=47 // pred_region
        %s1031 = smul.u32 32, %s22
        %p1032 = scmp.lt.s32.totalorder %s1031, 63
        %s1033 = scalar_select %p1032, %s1031, 63
        %p1034 = scmp.lt.s32.totalorder %s23, 0
        %s1035 = scalar_select %p1034, %s23, 0
        %s1036 = sadd.s32 %s1035, %s1033
        %s1037 = smul.addr %s1036, 4
        %s1038 = scalar_lea.vmem %s3, %s1037
      $region52: #{_lambda_.60} parent=47 // pred_fallthru
        _
    $region48: #{_lambda_.60} parent=5 // pred_fallthru
      _
  $region6: #{_lambda_.60} parent=0 // loop_footer
    %s13 = sadd.s32 1, %s9
  $region7: #{_lambda_.60} parent=0 // loop_footer_branch
    %8 = sbr.rel target = $region3
  $region8: #{_lambda_.60} parent=0 // loop_exit
    _

</llo_original>
